<compile_context>
chip_gen: v6e
topology: v6e:2x2x1
jax: 0.10.0
libtpu: 0.0.40
codegen_flags: <defaults>
</compile_context>

<pallas_src>
import functools
import math

import jax
import jax.numpy as jnp
from jax.experimental import pallas as pl
from jax.experimental.pallas import tpu as pltpu

EPS = 1e-8     # GroupNorm eps
EPS_T = 1e-6   # LayerNorm eps (module explicitly uses EPS_T)
MAX_TB = 8     # samples per transformer grid step (drop to 4 on v7x for realistic F/T)


def _round_up(n, m):
    return ((n + m - 1) // m) * m


# ----------------------------- fused transformer block kernel -----------------------------

def _tblock_kernel(x_ref, pe_ref, ln1g_ref, ln1b_ref, win_ref, bin_ref,
                   wout_ref, bout_ref, ln2g_ref, ln2b_ref,
                   w1_ref, b1_ref, w2_ref, b2_ref, lng_ref, lnb_ref,
                   o_ref, *, n_heads, eps):
    """grid = (row_tiles,).  All layers run inside a fori_loop; weights are full VMEM stacks."""
    TB, T, D = o_ref.shape
    H = n_heads
    dh = D // H
    n_layers = win_ref.shape[0]

    def ln(v, g, b):                              # v: (R, D), g/b: (1, D)
        m = jnp.mean(v, axis=-1, keepdims=True)
        var = jnp.mean(jnp.square(v - m), axis=-1, keepdims=True)
        return (v - m) * jax.lax.rsqrt(var + eps) * g + b

    # pos-enc add, then flatten samples so every projection below sees an MXU-friendly
    # (TB*T, D) M-dim instead of per-sample (T, D) slivers.
    x0 = (x_ref[...] + pe_ref[...]).reshape(TB * T, D)

    def layer(l, xf):
        # ---------------- multi-head self-attention ----------------
        xn = ln(xf, ln1g_ref[l], ln1b_ref[l])
        qkv = jnp.dot(xn.astype(jnp.bfloat16), win_ref[l],
                      preferred_element_type=jnp.float32) + bin_ref[l]        # (TB*T, 3D)
        qkv = qkv.reshape(TB, T, 3 * D)           # free reshape (leading-dim split)
        heads = []
        for h in range(H):                        # small static head loop; batched over TB
            qh = qkv[:, :, h * dh:(h + 1) * dh].astype(jnp.bfloat16)
            kh = qkv[:, :, D + h * dh:D + (h + 1) * dh].astype(jnp.bfloat16)
            vh = qkv[:, :, 2 * D + h * dh:2 * D + (h + 1) * dh].astype(jnp.bfloat16)
            # 1/sqrt(dh) scale is pre-folded into the Q columns of win (see init_params)
            s = jnp.einsum('bqd,bkd->bqk', qh, kh,
                           preferred_element_type=jnp.float32)                # (TB, T, T)
            s = s - jnp.max(s, axis=-1, keepdims=True)
            pr = jnp.exp(s)
            pr = pr * pl.reciprocal(jnp.sum(pr, axis=-1, keepdims=True), approx=True)
            heads.append(jnp.einsum('bqk,bkd->bqd', pr.astype(jnp.bfloat16), vh,
                                    preferred_element_type=jnp.float32))      # (TB, T, dh)
        ctx = jnp.concatenate(heads, axis=-1).reshape(TB * T, D)
        attn = jnp.dot(ctx.astype(jnp.bfloat16), wout_ref[l],
                       preferred_element_type=jnp.float32) + bout_ref[l]
        xf = xf + attn                                                        # residual

        # ---------------- feed-forward ----------------
        xn2 = ln(xf, ln2g_ref[l], ln2b_ref[l])
        h1 = jnp.maximum(jnp.dot(xn2.astype(jnp.bfloat16), w1_ref[l],
                                 preferred_element_type=jnp.float32) + b1_ref[l], 0.0)
        h2 = jnp.dot(h1.astype(jnp.bfloat16), w2_ref[l],
                     preferred_element_type=jnp.float32) + b2_ref[l]
        return xf + h2                                                        # residual

    xf = jax.lax.fori_loop(0, n_layers, layer, x0)
    # final LayerNorm of the TransformerBlock before the single HBM writeback
    o_ref[...] = ln(xf, lng_ref[0], lnb_ref[0]).reshape(TB, T, D)


def positional_encoding(T, D):
    pos = jnp.arange(T, dtype=jnp.float32)[:, None]
    den = jnp.exp(jnp.arange(0, D, 2, dtype=jnp.float32) * (-(math.log(10000.0) / D)))
    angles = pos * den
    pe = jnp.zeros((T, D), jnp.float32)
    pe = pe.at[:, 0::2].set(jnp.sin(angles))
    pe = pe.at[:, 1::2].set(jnp.cos(angles))
    return pe[None]                                    # (1, T, D)


def transformer_block(x, p, n_heads):
    """x: [N, T, D] channels-last.  One fused pallas_call: pos-add + all layers + final norm."""
    N, T, D = x.shape
    L = p["win"].shape[0]
    n_ffn = p["w1"].shape[2]

    # keep >= 2 row tiles when possible so both v7x TensorCores get work
    TB = max(1, min(MAX_TB, pl.cdiv(N, 2)))
    tiles = pl.cdiv(N, TB)
    Np = tiles * TB
    if Np != N:
        # replicate real rows (avoids zero-variance LayerNorm rows); result sliced off below
        x = jnp.pad(x, ((0, Np - N), (0, 0), (0, 0)), mode="edge")
    pe = positional_encoding(T, D)

    row = lambda i: (i, 0, 0)
    cst = lambda i: (0, 0, 0)

    # NOTE: for realistic (F=256, T~250) configs re-budget VMEM (activation tile + all-layer
    # weight slab) against v7x's 64 MiB and set vmem_limit_bytes / lower MAX_TB accordingly.
    out = pl.pallas_call(
        functools.partial(_tblock_kernel, n_heads=n_heads, eps=EPS_T),
        grid=(tiles,),
        in_specs=[
            pl.BlockSpec((TB, T, D), row),               # x
            pl.BlockSpec((1, T, D), cst),                # positional encoding
            pl.BlockSpec((L, 1, D), cst),                # ln1_g (all layers)
            pl.BlockSpec((L, 1, D), cst),                # ln1_b
            pl.BlockSpec((L, D, 3 * D), cst),            # win   (bf16, q-scale folded)
            pl.BlockSpec((L, 1, 3 * D), cst),            # bin
            pl.BlockSpec((L, D, D), cst),                # wout  (bf16)
            pl.BlockSpec((L, 1, D), cst),                # bout
            pl.BlockSpec((L, 1, D), cst),                # ln2_g
            pl.BlockSpec((L, 1, D), cst),                # ln2_b
            pl.BlockSpec((L, D, n_ffn), cst),            # w1    (bf16)
            pl.BlockSpec((L, 1, n_ffn), cst),            # b1
            pl.BlockSpec((L, n_ffn, D), cst),            # w2    (bf16)
            pl.BlockSpec((L, 1, D), cst),                # b2
            pl.BlockSpec((1, 1, D), cst),                # final ln_g
            pl.BlockSpec((1, 1, D), cst),                # final ln_b
        ],
        out_specs=pl.BlockSpec((TB, T, D), row),
        out_shape=jax.ShapeDtypeStruct((Np, T, D), jnp.float32),
        compiler_params=pltpu.CompilerParams(dimension_semantics=("parallel",)),
    )(x, pe, p["ln1_g"], p["ln1_b"], p["win"], p["bin"], p["wout"], p["bout"],
      p["ln2_g"], p["ln2_b"], p["w1"], p["b1"], p["w2"], p["b2"],
      p["ln_g"], p["ln_b"])
    return out[:N] if Np != N else out


# ----------------------------- tiled two-sweep GroupNorm kernels -----------------------------
# grid = (B, 2, m_tiles): sweep 0 accumulates sum / sum-of-squares into VMEM scalars,
# sweep 1 normalizes tile-by-tile (then conv / residual-add).  Zero-padded rows add 0 to the
# sums and `count` uses the true element count, so stats stay exact.

def _gn_conv1d_kernel(x_ref, g_ref, b_ref, w_ref, o_ref, s_ref, q_ref, *, eps, count):
    p = pl.program_id(1)
    m = pl.program_id(2)

    @pl.when(jnp.logical_and(p == 0, m == 0))
    def _():
        s_ref[...] = jnp.zeros_like(s_ref)
        q_ref[...] = jnp.zeros_like(q_ref)

    x = x_ref[...]                                         # (1, TM, F)

    @pl.when(p == 0)
    def _():
        s_ref[...] = s_ref[...] + jnp.sum(x)
        q_ref[...] = q_ref[...] + jnp.sum(x * x)
        o_ref[...] = jnp.zeros_like(o_ref)                 # placeholder, overwritten in sweep 1

    @pl.when(p == 1)
    def _():
        mean = s_ref[...] * (1.0 / count)
        var = jnp.maximum(q_ref[...] * (1.0 / count) - mean * mean, 0.0)
        xn = (x - mean) * jax.lax.rsqrt(var + eps) * g_ref[...] + b_ref[...]
        o_ref[0] = jnp.dot(xn[0].astype(jnp.bfloat16), w_ref[...],
                           preferred_element_type=jnp.float32)


def groupnorm_conv1d(x_cl, g, b, w_bf16, tile=512):
    """GroupNorm(1 group) + 1x1 Conv1d (no bias), channels-last x: [B, T, F]."""
    B, T, F = x_cl.shape
    tiles = max(1, pl.cdiv(T, tile))
    TM = _round_up(pl.cdiv(T, tiles), 8)
    Tp = TM * tiles
    xp = jnp.pad(x_cl, ((0, 0), (0, Tp - T), (0, 0))) if Tp != T else x_cl
    out = pl.pallas_call(
        functools.partial(_gn_conv1d_kernel, eps=EPS, count=float(T * F)),
        grid=(B, 2, tiles),
        in_specs=[pl.BlockSpec((1, TM, F), lambda bb, pp, mm: (bb, mm, 0)),
                  pl.BlockSpec((1, 1, F), lambda bb, pp, mm: (0, 0, 0)),
                  pl.BlockSpec((1, 1, F), lambda bb, pp, mm: (0, 0, 0)),
                  pl.BlockSpec((F, F), lambda bb, pp, mm: (0, 0))],
        out_specs=pl.BlockSpec((1, TM, F), lambda bb, pp, mm: (bb, mm, 0)),
        out_shape=jax.ShapeDtypeStruct((B, Tp, F), jnp.float32),
        scratch_shapes=[pltpu.VMEM((1, 1), jnp.float32),
                        pltpu.VMEM((1, 1), jnp.float32)],
        compiler_params=pltpu.CompilerParams(
            dimension_semantics=("parallel", "arbitrary", "arbitrary")),
    )(xp, g.reshape(1, 1, F), b.reshape(1, 1, F), w_bf16)
    return out[:, :T] if Tp != T else out


def _gn_add_kernel(x_ref, g_ref, b_ref, r_ref, o_ref, s_ref, q_ref, *, eps, count):
    p = pl.program_id(1)
    m = pl.program_id(2)

    @pl.when(jnp.logical_and(p == 0, m == 0))
    def _():
        s_ref[...] = jnp.zeros_like(s_ref)
        q_ref[...] = jnp.zeros_like(q_ref)

    x = x_ref[...]                                         # (1, TM, F)

    @pl.when(p == 0)
    def _():
        s_ref[...] = s_ref[...] + jnp.sum(x)
        q_ref[...] = q_ref[...] + jnp.sum(x * x)
        o_ref[...] = jnp.zeros_like(o_ref)

    @pl.when(p == 1)
    def _():
        mean = s_ref[...] * (1.0 / count)
        var = jnp.maximum(q_ref[...] * (1.0 / count) - mean * mean, 0.0)
        o_ref[...] = ((x - mean) * jax.lax.rsqrt(var + eps) * g_ref[...]
                      + b_ref[...] + r_ref[...])


def groupnorm_add(x3, g, b, r3, tile=512):
    """GroupNorm(1 group) over [B, M, F] fused with residual add, tiled along M."""
    B, M, F = x3.shape
    tiles = max(1, pl.cdiv(M, tile))
    TM = _round_up(pl.cdiv(M, tiles), 8)
    Mp = TM * tiles
    if Mp != M:
        pad = ((0, 0), (0, Mp - M), (0, 0))
        x3 = jnp.pad(x3, pad)
        r3 = jnp.pad(r3, pad)
    out = pl.pallas_call(
        functools.partial(_gn_add_kernel, eps=EPS, count=float(M * F)),
        grid=(B, 2, tiles),
        in_specs=[pl.BlockSpec((1, TM, F), lambda bb, pp, mm: (bb, mm, 0)),
                  pl.BlockSpec((1, 1, F), lambda bb, pp, mm: (0, 0, 0)),
                  pl.BlockSpec((1, 1, F), lambda bb, pp, mm: (0, 0, 0)),
                  pl.BlockSpec((1, TM, F), lambda bb, pp, mm: (bb, mm, 0))],
        out_specs=pl.BlockSpec((1, TM, F), lambda bb, pp, mm: (bb, mm, 0)),
        out_shape=jax.ShapeDtypeStruct((B, Mp, F), jnp.float32),
        scratch_shapes=[pltpu.VMEM((1, 1), jnp.float32),
                        pltpu.VMEM((1, 1), jnp.float32)],
        compiler_params=pltpu.CompilerParams(
            dimension_semantics=("parallel", "arbitrary", "arbitrary")),
    )(x3, g.reshape(1, 1, F), b.reshape(1, 1, F), r3)
    return out[:, :M] if Mp != M else out


# ----------------------------- lane-dense row-tiled epilogue kernels -----------------------------
# G = 128 // F consecutive rows are packed into one >=128-lane row (free row-major reshape
# outside the kernel); the 1x1 convs become block-diagonal matmuls kron(I_G, W), so both the
# input and output blocks are lane-dense (unmasked vst / dense DMA).

def _dense_group(c):
    if c >= 128 or 128 % c != 0:
        return 1
    return 128 // c


def _row_tiled_call(kernel, x2d, extras, out_cols, tile=1024):
    M, Cin = x2d.shape
    # cdiv-balanced tiling; keep >= 2 tiles when there is enough work (v7x: 2 TensorCores)
    tiles = max(pl.cdiv(M, tile), 2 if M >= 16 else 1)
    TM = _round_up(pl.cdiv(M, tiles), 8)
    Mp = TM * tiles
    xp = jnp.pad(x2d, ((0, Mp - M), (0, 0))) if Mp != M else x2d
    in_specs = [pl.BlockSpec((TM, Cin), lambda i: (i, 0))]
    in_specs += [pl.BlockSpec(e.shape, lambda i: (0, 0)) for e in extras]
    out = pl.pallas_call(
        kernel,
        grid=(tiles,),
        in_specs=in_specs,
        out_specs=pl.BlockSpec((TM, out_cols), lambda i: (i, 0)),
        out_shape=jax.ShapeDtypeStruct((Mp, out_cols), jnp.float32),
        compiler_params=pltpu.CompilerParams(dimension_semantics=("parallel",)),
    )(xp, *extras)
    return out[:M] if Mp != M else out


def _prelu_linear_kernel(x_ref, a_ref, w_ref, b_ref, o_ref):
    x = x_ref[...]
    xp = jnp.where(x >= 0.0, x, x * a_ref[...])
    o_ref[...] = jnp.dot(xp.astype(jnp.bfloat16), w_ref[...],
                         preferred_element_type=jnp.float32) + b_ref[...]


def prelu_conv2d(x2d, alpha, w_bf16, b):
    """PReLU fused with the 1x1 Conv2d (lane-dense block-diagonal matmul)."""
    M, Cin = x2d.shape
    Cout = w_bf16.shape[1]
    G = _dense_group(Cin)
    Mg = _round_up(M, G)
    if Mg != M:
        x2d = jnp.pad(x2d, ((0, Mg - M), (0, 0)))
    xd = x2d.reshape(Mg // G, G * Cin)                       # free row-major collapse
    w_d = jnp.kron(jnp.eye(G, dtype=w_bf16.dtype), w_bf16)   # block-diagonal (G*Cin, G*Cout)
    b_d = jnp.tile(b, G).reshape(1, G * Cout)
    yd = _row_tiled_call(_prelu_linear_kernel, xd,
                         [alpha.reshape(1, 1), w_d, b_d], G * Cout)
    return yd.reshape(Mg, Cout)[:M]


def _gated_end_kernel(x_ref, wo_ref, bo_ref, wg_ref, bg_ref, we_ref, o_ref):
    x = x_ref[...].astype(jnp.bfloat16)
    yo = jnp.tanh(jnp.dot(x, wo_ref[...], preferred_element_type=jnp.float32) + bo_ref[...])
    yg = jax.nn.sigmoid(jnp.dot(x, wg_ref[...], preferred_element_type=jnp.float32) + bg_ref[...])
    y = jnp.dot((yo * yg).astype(jnp.bfloat16), we_ref[...],
                preferred_element_type=jnp.float32)
    o_ref[...] = jnp.maximum(y, 0.0)


def gated_end_conv(x2d, wo, bo, wg, bg, we):
    """net_out(tanh) * net_gate(sigmoid) -> end_conv(1x1, no bias) -> ReLU, lane-dense fused."""
    M, Cin = x2d.shape
    G = _dense_group(Cin)
    Mg = _round_up(M, G)
    if Mg != M:
        x2d = jnp.pad(x2d, ((0, Mg - M), (0, 0)))
    xd = x2d.reshape(Mg // G, G * Cin)
    eye = jnp.eye(G, dtype=wo.dtype)
    wo_d = jnp.kron(eye, wo)
    wg_d = jnp.kron(eye, wg)
    we_d = jnp.kron(eye, we)
    bo_d = jnp.tile(bo, G).reshape(1, -1)
    bg_d = jnp.tile(bg, G).reshape(1, -1)
    yd = _row_tiled_call(_gated_end_kernel, xd,
                         [wo_d, bo_d, wg_d, bg_d, we_d], G * we.shape[1])
    return yd.reshape(Mg, we.shape[1])[:M]


# ----------------------------- channels-last segmentation / overlap-add glue -----------------------------

def segmentation_cl(x, K):
    """x: [B, L, F] channels-last -> ([B, S, K, F], gap)."""
    B, L, F = x.shape
    P = K // 2
    gap = K - (P + L % K) % K
    if gap > 0:
        x = jnp.pad(x, ((0, 0), (0, gap), (0, 0)))
    x = jnp.pad(x, ((0, 0), (P, P), (0, 0)))
    L2 = x.shape[1]
    input1 = x[:, :L2 - P].reshape(B, -1, K, F)
    input2 = x[:, P:].reshape(B, -1, K, F)
    seg = jnp.stack([input1, input2], axis=2).reshape(B, -1, K, F)   # [B, S, K, F]
    return seg, gap


def over_add_cl(z, gap, K):
    """z: [B, S, K, C] channels-last -> [B, L, C] via overlap-and-add."""
    B, S, _, C = z.shape
    P = K // 2
    z = z.reshape(B, S // 2, 2 * K, C)
    in1 = z[:, :, :K, :].reshape(B, -1, C)[:, P:, :]
    in2 = z[:, :, K:, :].reshape(B, -1, C)[:, :-P, :]
    out = in1 + in2
    if gap > 0:
        out = out[:, :out.shape[1] - gap, :]
    return out


# ----------------------------- model (glue + kernels) -----------------------------

def dual_path_block(x, p, n_heads):
    """x: [B, S, K, F] channels-last."""
    B, S, K, F = x.shape

    intra = transformer_block(x.reshape(B * S, K, F), p["intra_tb"], n_heads)
    intra = groupnorm_add(intra.reshape(B, S * K, F),
                          p["intra_gn_g"], p["intra_gn_b"],
                          x.reshape(B, S * K, F)).reshape(B, S, K, F)

    inter_in = jnp.swapaxes(intra, 1, 2)                             # [B, K, S, F]
    inter = transformer_block(inter_in.reshape(B * K, S, F), p["inter_tb"], n_heads)
    inter = groupnorm_add(inter.reshape(B, K * S, F),
                          p["inter_gn_g"], p["inter_gn_b"],
                          inter_in.reshape(B, K * S, F)).reshape(B, K, S, F)
    return jnp.swapaxes(inter, 1, 2)                                 # back to [B, S, K, F]


def mask_generator_forward(x, params, *, n_srcs, chunk_size, n_heads):
    B, F, T = x.shape
    x_cl = jnp.swapaxes(x, 1, 2)                                     # [B, T, F] channels-last

    # fused (tiled) GroupNorm + 1x1 Conv1d (no bias)
    xc = groupnorm_conv1d(x_cl, params["gn_g"], params["gn_b"], params["conv1d_w"])

    seg, gap = segmentation_cl(xc, chunk_size)                       # [B, S, K, F]
    for lp in params["dpb"]:
        seg = dual_path_block(seg, lp, n_heads)

    _, S, K, Fq = seg.shape
    # fused PReLU + 1x1 Conv2d (with bias); output channel index = src * F + f
    y = prelu_conv2d(seg.reshape(B * S * K, Fq), params["prelu_a"],
                     params["conv2d_w"], params["conv2d_b"])
    y = y.reshape(B, S, K, n_srcs * Fq)

    x_oa = over_add_cl(y, gap, chunk_size)                           # [B, L, n_srcs*F]
    L = x_oa.shape[1]

    # fused gated conv (tanh * sigmoid) + end conv + ReLU, per (batch, time, src) row
    g = gated_end_conv(x_oa.reshape(B * L * n_srcs, Fq),
                       params["out_w"], params["out_b"],
                       params["gate_w"], params["gate_b"],
                       params["end_w"])
    out = g.reshape(B, L, n_srcs, Fq)
    return jnp.transpose(out, (0, 2, 3, 1))                          # [B, n_srcs, F, L]


# ----------------------------- deterministic parameter init -----------------------------

class _KeyGen:
    def __init__(self, key):
        self.key = key

    def __call__(self):
        self.key, sub = jax.random.split(self.key)
        return sub


def init_params(key, n_srcs, F, n_heads, n_ffn, n_repeats, num_layers=8):
    kg = _KeyGen(key)

    def wf32(shape, scale=0.05):
        return jax.random.normal(kg(), shape, jnp.float32) * scale

    def w(shape, scale=0.05):
        # matmul weights stored in bf16 (cast happens at the MXU boundary)
        return wf32(shape, scale).astype(jnp.bfloat16)

    ones = lambda *s: jnp.ones(s, jnp.float32)
    zeros = lambda *s: jnp.zeros(s, jnp.float32)
    L = num_layers
    q_scale = 1.0 / math.sqrt(F // n_heads)

    def tb_params():
        # the 1/sqrt(d_head) attention scale is folded into the Q projection here
        # (when importing PyTorch weights: pre-scale W_q / b_q, transpose in_proj/out_proj)
        win = wf32((L, F, 3 * F))
        win = win.at[:, :, :F].multiply(q_scale)
        return dict(
            ln1_g=ones(L, 1, F), ln1_b=zeros(L, 1, F),
            ln2_g=ones(L, 1, F), ln2_b=zeros(L, 1, F),
            win=win.astype(jnp.bfloat16), bin=zeros(L, 1, 3 * F),
            wout=w((L, F, F)), bout=zeros(L, 1, F),
            w1=w((L, F, n_ffn)), b1=zeros(L, 1, n_ffn),
            w2=w((L, n_ffn, F)), b2=zeros(L, 1, F),
            ln_g=ones(1, 1, F), ln_b=zeros(1, 1, F),
        )

    def dpb_params():
        return dict(intra_tb=tb_params(), inter_tb=tb_params(),
                    intra_gn_g=ones(F), intra_gn_b=zeros(F),
                    inter_gn_g=ones(F), inter_gn_b=zeros(F))

    return dict(
        gn_g=ones(F), gn_b=zeros(F),
        conv1d_w=w((F, F)),                                  # Conv1d 1x1, no bias
        dpb=[dpb_params() for _ in range(n_repeats)],
        conv2d_w=w((F, n_srcs * F)), conv2d_b=zeros(n_srcs * F),
        prelu_a=jnp.full((1,), 0.25, jnp.float32),           # nn.PReLU() default
        out_w=w((F, F)), out_b=zeros(F),                     # net_out conv
        gate_w=w((F, F)), gate_b=zeros(F),                   # net_gate conv
        end_w=w((F, F)),                                     # end_conv, no bias
    )


# ----------------------------- main -----------------------------

if __name__ == "__main__":
    # small config: n_srcs=2, n_filters=32, n_heads=4, chunk_size=8, n_ffn=64, n_repeats=1
    # (num_layers per TransformerBlock stays at the module's hard-coded default of 8)
    n_srcs, n_filters, n_heads, n_ffn, chunk_size, n_repeats = 2, 32, 4, 64, 8, 1
    B, T = 2, 20

    key = jax.random.PRNGKey(0)
    kx, kp = jax.random.split(key)
    x = jax.random.normal(kx, (B, n_filters, T), jnp.float32)
    params = init_params(kp, n_srcs, n_filters, n_heads, n_ffn, n_repeats)

    fwd = jax.jit(functools.partial(mask_generator_forward,
                                    n_srcs=n_srcs, chunk_size=chunk_size, n_heads=n_heads))
    out = jax.block_until_ready(fwd(x, params))

    assert out.shape == (B, n_srcs, n_filters, T), out.shape
    assert bool(jnp.all(jnp.isfinite(out)))
    print("KERNEL_OK")
</pallas_src>

<mosaic_0001>
module attributes {stable_mosaic.version = 11 : i64} {
  func.func @_gn_conv1d_kernel(%arg0: i32, %arg1: i32, %arg2: i32, %arg3: memref<1x24x32xf32, #tpu.memory_space<vmem>>, %arg4: memref<1x1x32xf32, #tpu.memory_space<vmem>>, %arg5: memref<1x1x32xf32, #tpu.memory_space<vmem>>, %arg6: memref<32x32xbf16, #tpu.memory_space<vmem>>, %arg7: memref<1x24x32xf32, #tpu.memory_space<vmem>>, %arg8: memref<1x1xf32, #tpu.memory_space<vmem>>, %arg9: memref<1x1xf32, #tpu.memory_space<vmem>>) attributes {dimension_semantics = [#tpu.dimension_semantics<parallel>, #tpu.dimension_semantics<arbitrary>, #tpu.dimension_semantics<arbitrary>], iteration_bounds = array<i64: 2, 2, 1>, scalar_prefetch = 0 : i64, scratch_operands = 2 : i64, tpu.core_type = #tpu.core_type<tc>, window_params = [{transform_indices = @transform_0, window_bounds = array<i64: 1, 24, 32>}, {pipeline_mode = #tpu.pipeline_mode<synchronous>, transform_indices = @transform_1, window_bounds = array<i64: 1, 1, 32>}, {pipeline_mode = #tpu.pipeline_mode<synchronous>, transform_indices = @transform_2, window_bounds = array<i64: 1, 1, 32>}, {pipeline_mode = #tpu.pipeline_mode<synchronous>, transform_indices = @transform_3, window_bounds = array<i64: 32, 32>}, {transform_indices = @transform_4, window_bounds = array<i64: 1, 24, 32>}]} {
    %c0_i32 = arith.constant 0 : i32
    %0 = arith.cmpi eq, %arg1, %c0_i32 : i32
    %c0_i32_0 = arith.constant 0 : i32
    %1 = arith.cmpi eq, %arg2, %c0_i32_0 : i32
    %2 = arith.andi %0, %1 : i1
    %3 = arith.extui %2 : i1 to i32
    %c0_i32_1 = arith.constant 0 : i32
    %4 = arith.cmpi ne, %3, %c0_i32_1 : i32
    scf.if %4 {
      %cst = arith.constant 0.000000e+00 : f32
      %12 = vector.broadcast %cst : f32 to vector<1x1xf32>
      %c0_7 = arith.constant 0 : index
      %c0_8 = arith.constant 0 : index
      %13 = vector.load %arg8[%c0_7, %c0_8] : memref<1x1xf32, #tpu.memory_space<vmem>>, vector<1x1xf32>
      tpu.vector_store %arg8[%c0_7, %c0_8], %12 {strides = array<i32>} : memref<1x1xf32, #tpu.memory_space<vmem>>, vector<1x1xf32>,
      %cst_9 = arith.constant 0.000000e+00 : f32
      %14 = vector.broadcast %cst_9 : f32 to vector<1x1xf32>
      %c0_10 = arith.constant 0 : index
      %c0_11 = arith.constant 0 : index
      %15 = vector.load %arg9[%c0_10, %c0_11] : memref<1x1xf32, #tpu.memory_space<vmem>>, vector<1x1xf32>
      tpu.vector_store %arg9[%c0_10, %c0_11], %14 {strides = array<i32>} : memref<1x1xf32, #tpu.memory_space<vmem>>, vector<1x1xf32>,
    } else {
    }
    %c0 = arith.constant 0 : index
    %c0_2 = arith.constant 0 : index
    %c0_3 = arith.constant 0 : index
    %5 = vector.load %arg3[%c0, %c0_2, %c0_3] : memref<1x24x32xf32, #tpu.memory_space<vmem>>, vector<1x24x32xf32>
    %c0_i32_4 = arith.constant 0 : i32
    %6 = arith.cmpi eq, %arg1, %c0_i32_4 : i32
    %7 = arith.extui %6 : i1 to i32
    %c0_i32_5 = arith.constant 0 : i32
    %8 = arith.cmpi ne, %7, %c0_i32_5 : i32
    scf.if %8 {
      %c0_7 = arith.constant 0 : index
      %c0_8 = arith.constant 0 : index
      %12 = vector.load %arg8[%c0_7, %c0_8] : memref<1x1xf32, #tpu.memory_space<vmem>>, vector<1x1xf32>
      %13 = vector.shape_cast %5 : vector<1x24x32xf32> to vector<1x1x24x32xf32>
      %cst = arith.constant dense<0.000000e+00> : vector<1xf32>
      %14 = vector.multi_reduction <add>, %13, %cst [1, 2, 3] : vector<1x1x24x32xf32> to vector<1xf32>
      %15 = vector.shape_cast %14 : vector<1xf32> to vector<1x1x1x1xf32>
      %16 = vector.extract %15[0, 0, 0, 0] : f32 from vector<1x1x1x1xf32>
      %17 = vector.broadcast %16 : f32 to vector<1x1xf32>
      %18 = arith.addf %12, %17 : vector<1x1xf32>
      %c0_9 = arith.constant 0 : index
      %c0_10 = arith.constant 0 : index
      %19 = vector.load %arg8[%c0_9, %c0_10] : memref<1x1xf32, #tpu.memory_space<vmem>>, vector<1x1xf32>
      tpu.vector_store %arg8[%c0_9, %c0_10], %18 {strides = array<i32>} : memref<1x1xf32, #tpu.memory_space<vmem>>, vector<1x1xf32>,
      %c0_11 = arith.constant 0 : index
      %c0_12 = arith.constant 0 : index
      %20 = vector.load %arg9[%c0_11, %c0_12] : memref<1x1xf32, #tpu.memory_space<vmem>>, vector<1x1xf32>
      %21 = arith.mulf %5, %5 : vector<1x24x32xf32>
      %22 = vector.shape_cast %21 : vector<1x24x32xf32> to vector<1x1x24x32xf32>
      %cst_13 = arith.constant dense<0.000000e+00> : vector<1xf32>
      %23 = vector.multi_reduction <add>, %22, %cst_13 [1, 2, 3] : vector<1x1x24x32xf32> to vector<1xf32>
      %24 = vector.shape_cast %23 : vector<1xf32> to vector<1x1x1x1xf32>
      %25 = vector.extract %24[0, 0, 0, 0] : f32 from vector<1x1x1x1xf32>
      %26 = vector.broadcast %25 : f32 to vector<1x1xf32>
      %27 = arith.addf %20, %26 : vector<1x1xf32>
      %c0_14 = arith.constant 0 : index
      %c0_15 = arith.constant 0 : index
      %28 = vector.load %arg9[%c0_14, %c0_15] : memref<1x1xf32, #tpu.memory_space<vmem>>, vector<1x1xf32>
      tpu.vector_store %arg9[%c0_14, %c0_15], %27 {strides = array<i32>} : memref<1x1xf32, #tpu.memory_space<vmem>>, vector<1x1xf32>,
      %cst_16 = arith.constant 0.000000e+00 : f32
      %29 = vector.broadcast %cst_16 : f32 to vector<1x24x32xf32>
      %c0_17 = arith.constant 0 : index
      %c0_18 = arith.constant 0 : index
      %c0_19 = arith.constant 0 : index
      %30 = vector.load %arg7[%c0_17, %c0_18, %c0_19] : memref<1x24x32xf32, #tpu.memory_space<vmem>>, vector<1x24x32xf32>
      tpu.vector_store %arg7[%c0_17, %c0_18, %c0_19], %29 {strides = array<i32>} : memref<1x24x32xf32, #tpu.memory_space<vmem>>, vector<1x24x32xf32>,
    } else {
    }
    %c1_i32 = arith.constant 1 : i32
    %9 = arith.cmpi eq, %arg1, %c1_i32 : i32
    %10 = arith.extui %9 : i1 to i32
    %c0_i32_6 = arith.constant 0 : i32
    %11 = arith.cmpi ne, %10, %c0_i32_6 : i32
    scf.if %11 {
      %c0_7 = arith.constant 0 : index
      %c0_8 = arith.constant 0 : index
      %12 = vector.load %arg8[%c0_7, %c0_8] : memref<1x1xf32, #tpu.memory_space<vmem>>, vector<1x1xf32>
      %cst = arith.constant 1.562500e-03 : f32
      %13 = vector.broadcast %cst : f32 to vector<1x1xf32>
      %14 = arith.mulf %12, %13 : vector<1x1xf32>
      %c0_9 = arith.constant 0 : index
      %c0_10 = arith.constant 0 : index
      %15 = vector.load %arg9[%c0_9, %c0_10] : memref<1x1xf32, #tpu.memory_space<vmem>>, vector<1x1xf32>
      %cst_11 = arith.constant 1.562500e-03 : f32
      %16 = vector.broadcast %cst_11 : f32 to vector<1x1xf32>
      %17 = arith.mulf %15, %16 : vector<1x1xf32>
      %18 = arith.mulf %14, %14 : vector<1x1xf32>
      %19 = arith.subf %17, %18 : vector<1x1xf32>
      %cst_12 = arith.constant 0.000000e+00 : f32
      %20 = vector.broadcast %cst_12 : f32 to vector<1x1xf32>
      %21 = arith.maximumf %19, %20 : vector<1x1xf32>
      %22 = vector.shape_cast %14 : vector<1x1xf32> to vector<1x1x1xf32>
      %23 = vector.broadcast %22 : vector<1x1x1xf32> to vector<1x24x32xf32>
      %24 = arith.subf %5, %23 : vector<1x24x32xf32>
      %cst_13 = arith.constant 9.99999993E-9 : f32
      %25 = vector.broadcast %cst_13 : f32 to vector<1x1xf32>
      %26 = arith.addf %21, %25 : vector<1x1xf32>
      %27 = math.rsqrt %26 : vector<1x1xf32>
      %28 = vector.shape_cast %27 : vector<1x1xf32> to vector<1x1x1xf32>
      %29 = vector.broadcast %28 : vector<1x1x1xf32> to vector<1x24x32xf32>
      %30 = arith.mulf %24, %29 : vector<1x24x32xf32>
      %c0_14 = arith.constant 0 : index
      %c0_15 = arith.constant 0 : index
      %c0_16 = arith.constant 0 : index
      %31 = vector.load %arg4[%c0_14, %c0_15, %c0_16] : memref<1x1x32xf32, #tpu.memory_space<vmem>>, vector<1x1x32xf32>
      %32 = vector.broadcast %31 : vector<1x1x32xf32> to vector<1x24x32xf32>
      %33 = arith.mulf %30, %32 : vector<1x24x32xf32>
      %c0_17 = arith.constant 0 : index
      %c0_18 = arith.constant 0 : index
      %c0_19 = arith.constant 0 : index
      %34 = vector.load %arg5[%c0_17, %c0_18, %c0_19] : memref<1x1x32xf32, #tpu.memory_space<vmem>>, vector<1x1x32xf32>
      %35 = vector.broadcast %34 : vector<1x1x32xf32> to vector<1x24x32xf32>
      %36 = arith.addf %33, %35 : vector<1x24x32xf32>
      %37 = vector.shape_cast %36 : vector<1x24x32xf32> to vector<24x32xf32>
      %38 = arith.truncf %37 : vector<24x32xf32> to vector<24x32xbf16>
      %c0_20 = arith.constant 0 : index
      %c0_21 = arith.constant 0 : index
      %39 = vector.load %arg6[%c0_20, %c0_21] : memref<32x32xbf16, #tpu.memory_space<vmem>>, vector<32x32xbf16>
      %cst_22 = arith.constant dense<0.000000e+00> : vector<24x32xf32>
      %40 = tpu.matmul %38, %39, %cst_22 {dimension_numbers = #tpu.dot_dimension_numbers<[1], [0], [0], [1], [0, 0, 1, 1], [], []>} : vector<24x32xbf16>, vector<32x32xbf16>, vector<24x32xf32> -> vector<24x32xf32>
      %c0_23 = arith.constant 0 : index
      %c0_24 = arith.constant 0 : index
      %c0_25 = arith.constant 0 : index
      %41 = vector.load %arg7[%c0_23, %c0_24, %c0_25] : memref<1x24x32xf32, #tpu.memory_space<vmem>>, vector<1x24x32xf32>
      %42 = vector.shape_cast %41 : vector<1x24x32xf32> to vector<24x32xf32>
      %43 = vector.shape_cast %40 : vector<24x32xf32> to vector<1x24x32xf32>
      tpu.vector_store %arg7[%c0_23, %c0_24, %c0_25], %43 {strides = array<i32>} : memref<1x24x32xf32, #tpu.memory_space<vmem>>, vector<1x24x32xf32>,
    } else {
    }
    return
  }
  func.func @transform_0(%arg0: i32, %arg1: i32, %arg2: i32) -> (i32, i32, i32) {
    %c0_i32 = arith.constant 0 : i32
    %c0_i32_0 = arith.constant 0 : i32
    return %arg0, %arg2, %c0_i32 : i32, i32, i32
  }
  func.func @transform_1(%arg0: i32, %arg1: i32, %arg2: i32) -> (i32, i32, i32) {
    %c0_i32 = arith.constant 0 : i32
    %c0_i32_0 = arith.constant 0 : i32
    %c0_i32_1 = arith.constant 0 : i32
    %c0_i32_2 = arith.constant 0 : i32
    return %c0_i32, %c0_i32_0, %c0_i32_1 : i32, i32, i32
  }
  func.func @transform_2(%arg0: i32, %arg1: i32, %arg2: i32) -> (i32, i32, i32) {
    %c0_i32 = arith.constant 0 : i32
    %c0_i32_0 = arith.constant 0 : i32
    %c0_i32_1 = arith.constant 0 : i32
    %c0_i32_2 = arith.constant 0 : i32
    return %c0_i32, %c0_i32_0, %c0_i32_1 : i32, i32, i32
  }
  func.func @transform_3(%arg0: i32, %arg1: i32, %arg2: i32) -> (i32, i32) {
    %c0_i32 = arith.constant 0 : i32
    %c0_i32_0 = arith.constant 0 : i32
    %c0_i32_1 = arith.constant 0 : i32
    return %c0_i32, %c0_i32_0 : i32, i32
  }
  func.func @transform_4(%arg0: i32, %arg1: i32, %arg2: i32) -> (i32, i32, i32) {
    %c0_i32 = arith.constant 0 : i32
    %c0_i32_0 = arith.constant 0 : i32
    return %arg0, %arg2, %c0_i32 : i32, i32, i32
  }
}

module attributes {stable_mosaic.version = 11 : i64} {
  func.func @_tblock_kernel(%arg0: i32, %arg1: memref<8x8x32xf32, #tpu.memory_space<vmem>>, %arg2: memref<1x8x32xf32, #tpu.memory_space<vmem>>, %arg3: memref<8x1x32xf32, #tpu.memory_space<vmem>>, %arg4: memref<8x1x32xf32, #tpu.memory_space<vmem>>, %arg5: memref<8x32x96xbf16, #tpu.memory_space<vmem>>, %arg6: memref<8x1x96xf32, #tpu.memory_space<vmem>>, %arg7: memref<8x32x32xbf16, #tpu.memory_space<vmem>>, %arg8: memref<8x1x32xf32, #tpu.memory_space<vmem>>, %arg9: memref<8x1x32xf32, #tpu.memory_space<vmem>>, %arg10: memref<8x1x32xf32, #tpu.memory_space<vmem>>, %arg11: memref<8x32x64xbf16, #tpu.memory_space<vmem>>, %arg12: memref<8x1x64xf32, #tpu.memory_space<vmem>>, %arg13: memref<8x64x32xbf16, #tpu.memory_space<vmem>>, %arg14: memref<8x1x32xf32, #tpu.memory_space<vmem>>, %arg15: memref<1x1x32xf32, #tpu.memory_space<vmem>>, %arg16: memref<1x1x32xf32, #tpu.memory_space<vmem>>, %arg17: memref<8x8x32xf32, #tpu.memory_space<vmem>>) attributes {dimension_semantics = [#tpu.dimension_semantics<parallel>], iteration_bounds = array<i64: 2>, scalar_prefetch = 0 : i64, scratch_operands = 0 : i64, tpu.core_type = #tpu.core_type<tc>, window_params = [{transform_indices = @transform_0, window_bounds = array<i64: 8, 8, 32>}, {pipeline_mode = #tpu.pipeline_mode<synchronous>, transform_indices = @transform_1, window_bounds = array<i64: 1, 8, 32>}, {pipeline_mode = #tpu.pipeline_mode<synchronous>, transform_indices = @transform_2, window_bounds = array<i64: 8, 1, 32>}, {pipeline_mode = #tpu.pipeline_mode<synchronous>, transform_indices = @transform_3, window_bounds = array<i64: 8, 1, 32>}, {pipeline_mode = #tpu.pipeline_mode<synchronous>, transform_indices = @transform_4, window_bounds = array<i64: 8, 32, 96>}, {pipeline_mode = #tpu.pipeline_mode<synchronous>, transform_indices = @transform_5, window_bounds = array<i64: 8, 1, 96>}, {pipeline_mode = #tpu.pipeline_mode<synchronous>, transform_indices = @transform_6, window_bounds = array<i64: 8, 32, 32>}, {pipeline_mode = #tpu.pipeline_mode<synchronous>, transform_indices = @transform_7, window_bounds = array<i64: 8, 1, 32>}, {pipeline_mode = #tpu.pipeline_mode<synchronous>, transform_indices = @transform_8, window_bounds = array<i64: 8, 1, 32>}, {pipeline_mode = #tpu.pipeline_mode<synchronous>, transform_indices = @transform_9, window_bounds = array<i64: 8, 1, 32>}, {pipeline_mode = #tpu.pipeline_mode<synchronous>, transform_indices = @transform_10, window_bounds = array<i64: 8, 32, 64>}, {pipeline_mode = #tpu.pipeline_mode<synchronous>, transform_indices = @transform_11, window_bounds = array<i64: 8, 1, 64>}, {pipeline_mode = #tpu.pipeline_mode<synchronous>, transform_indices = @transform_12, window_bounds = array<i64: 8, 64, 32>}, {pipeline_mode = #tpu.pipeline_mode<synchronous>, transform_indices = @transform_13, window_bounds = array<i64: 8, 1, 32>}, {pipeline_mode = #tpu.pipeline_mode<synchronous>, transform_indices = @transform_14, window_bounds = array<i64: 1, 1, 32>}, {pipeline_mode = #tpu.pipeline_mode<synchronous>, transform_indices = @transform_15, window_bounds = array<i64: 1, 1, 32>}, {transform_indices = @transform_16, window_bounds = array<i64: 8, 8, 32>}]} {
    %c0 = arith.constant 0 : index
    %c0_0 = arith.constant 0 : index
    %c0_1 = arith.constant 0 : index
    %0 = vector.load %arg1[%c0, %c0_0, %c0_1] : memref<8x8x32xf32, #tpu.memory_space<vmem>>, vector<8x8x32xf32>
    %c0_2 = arith.constant 0 : index
    %c0_3 = arith.constant 0 : index
    %c0_4 = arith.constant 0 : index
    %1 = vector.load %arg2[%c0_2, %c0_3, %c0_4] : memref<1x8x32xf32, #tpu.memory_space<vmem>>, vector<1x8x32xf32>
    %2 = vector.broadcast %1 : vector<1x8x32xf32> to vector<8x8x32xf32>
    %3 = arith.addf %0, %2 : vector<8x8x32xf32>
    %4 = vector.shape_cast %3 : vector<8x8x32xf32> to vector<64x32xf32>
    %c0_i32 = arith.constant 0 : i32
    %c8_i32 = arith.constant 8 : i32
    %5 = arith.addi %c0_i32, %c8_i32 : i32
    %c1_i32 = arith.constant 1 : i32
    %6 = scf.for %arg18 = %c0_i32 to %5 step %c1_i32 iter_args(%arg19 = %4) -> (vector<64x32xf32>)  : i32 {
      %35 = arith.index_cast %arg18 : i32 to index
      %c0_19 = arith.constant 0 : index
      %c0_20 = arith.constant 0 : index
      %36 = vector.load %arg3[%35, %c0_19, %c0_20] : memref<8x1x32xf32, #tpu.memory_space<vmem>>, vector<1x1x32xf32>
      %37 = vector.shape_cast %36 : vector<1x1x32xf32> to vector<1x32xf32>
      %38 = arith.index_cast %arg18 : i32 to index
      %c0_21 = arith.constant 0 : index
      %c0_22 = arith.constant 0 : index
      %39 = vector.load %arg4[%38, %c0_21, %c0_22] : memref<8x1x32xf32, #tpu.memory_space<vmem>>, vector<1x1x32xf32>
      %40 = vector.shape_cast %39 : vector<1x1x32xf32> to vector<1x32xf32>
      %cst_23 = arith.constant dense<0.000000e+00> : vector<64xf32>
      %41 = vector.multi_reduction <add>, %arg19, %cst_23 [1] : vector<64x32xf32> to vector<64xf32>
      %42 = vector.shape_cast %41 : vector<64xf32> to vector<64x1xf32>
      %cst_24 = arith.constant 3.200000e+01 : f32
      %43 = vector.broadcast %cst_24 : f32 to vector<64x1xf32>
      %44 = arith.divf %42, %43 : vector<64x1xf32>
      %45 = vector.broadcast %44 : vector<64x1xf32> to vector<64x32xf32>
      %46 = arith.subf %arg19, %45 : vector<64x32xf32>
      %47 = arith.mulf %46, %46 : vector<64x32xf32>
      %cst_25 = arith.constant dense<0.000000e+00> : vector<64xf32>
      %48 = vector.multi_reduction <add>, %47, %cst_25 [1] : vector<64x32xf32> to vector<64xf32>
      %49 = vector.shape_cast %48 : vector<64xf32> to vector<64x1xf32>
      %cst_26 = arith.constant 3.200000e+01 : f32
      %50 = vector.broadcast %cst_26 : f32 to vector<64x1xf32>
      %51 = arith.divf %49, %50 : vector<64x1xf32>
      %52 = vector.broadcast %44 : vector<64x1xf32> to vector<64x32xf32>
      %53 = arith.subf %arg19, %52 : vector<64x32xf32>
      %cst_27 = arith.constant 9.99999997E-7 : f32
      %54 = vector.broadcast %cst_27 : f32 to vector<64x1xf32>
      %55 = arith.addf %51, %54 : vector<64x1xf32>
      %56 = math.rsqrt %55 : vector<64x1xf32>
      %57 = vector.broadcast %56 : vector<64x1xf32> to vector<64x32xf32>
      %58 = arith.mulf %53, %57 : vector<64x32xf32>
      %59 = vector.broadcast %37 : vector<1x32xf32> to vector<64x32xf32>
      %60 = arith.mulf %58, %59 : vector<64x32xf32>
      %61 = vector.broadcast %40 : vector<1x32xf32> to vector<64x32xf32>
      %62 = arith.addf %60, %61 : vector<64x32xf32>
      %63 = arith.truncf %62 : vector<64x32xf32> to vector<64x32xbf16>
      %64 = arith.index_cast %arg18 : i32 to index
      %c0_28 = arith.constant 0 : index
      %c0_29 = arith.constant 0 : index
      %65 = vector.load %arg5[%64, %c0_28, %c0_29] : memref<8x32x96xbf16, #tpu.memory_space<vmem>>, vector<1x32x96xbf16>
      %66 = vector.shape_cast %65 : vector<1x32x96xbf16> to vector<32x96xbf16>
      %cst_30 = arith.constant dense<0.000000e+00> : vector<64x96xf32>
      %67 = tpu.matmul %63, %66, %cst_30 {dimension_numbers = #tpu.dot_dimension_numbers<[1], [0], [0], [1], [0, 0, 1, 1], [], []>} : vector<64x32xbf16>, vector<32x96xbf16>, vector<64x96xf32> -> vector<64x96xf32>
      %68 = arith.index_cast %arg18 : i32 to index
      %c0_31 = arith.constant 0 : index
      %c0_32 = arith.constant 0 : index
      %69 = vector.load %arg6[%68, %c0_31, %c0_32] : memref<8x1x96xf32, #tpu.memory_space<vmem>>, vector<1x1x96xf32>
      %70 = vector.shape_cast %69 : vector<1x1x96xf32> to vector<1x96xf32>
      %71 = vector.broadcast %70 : vector<1x96xf32> to vector<64x96xf32>
      %72 = arith.addf %67, %71 : vector<64x96xf32>
      %73 = vector.shape_cast %72 : vector<64x96xf32> to vector<8x8x96xf32>
      %74 = vector.extract_strided_slice %73 {offsets = [0, 0, 0], sizes = [8, 8, 8], strides = [1, 1, 1]} : vector<8x8x96xf32> to vector<8x8x8xf32>
      %75 = arith.truncf %74 : vector<8x8x8xf32> to vector<8x8x8xbf16>
      %76 = vector.extract_strided_slice %73 {offsets = [0, 0, 32], sizes = [8, 8, 8], strides = [1, 1, 1]} : vector<8x8x96xf32> to vector<8x8x8xf32>
      %77 = arith.truncf %76 : vector<8x8x8xf32> to vector<8x8x8xbf16>
      %78 = vector.extract_strided_slice %73 {offsets = [0, 0, 64], sizes = [8, 8, 8], strides = [1, 1, 1]} : vector<8x8x96xf32> to vector<8x8x8xf32>
      %79 = arith.truncf %78 : vector<8x8x8xf32> to vector<8x8x8xbf16>
      "tpu.trace_start"() <{level = 10 : i32, message = "bqd,bkd->bqk"}> : () -> ()
      %cst_33 = arith.constant dense<0.000000e+00> : vector<8x8x8xf32>
      %80 = tpu.matmul %75, %77, %cst_33 {dimension_numbers = #tpu.dot_dimension_numbers<[2], [2], [1], [1], [0, 0, 0, 1, 1, 1], [0], [0]>} : vector<8x8x8xbf16>, vector<8x8x8xbf16>, vector<8x8x8xf32> -> vector<8x8x8xf32>
      "tpu.trace_stop"() : () -> ()
      %cst_34 = arith.constant dense<0xFF800000> : vector<8x8xf32>
      %81 = vector.multi_reduction <maximumf>, %80, %cst_34 [2] : vector<8x8x8xf32> to vector<8x8xf32>
      %82 = vector.shape_cast %81 : vector<8x8xf32> to vector<8x8x1xf32>
      %83 = vector.broadcast %82 : vector<8x8x1xf32> to vector<8x8x8xf32>
      %84 = arith.subf %80, %83 : vector<8x8x8xf32>
      %85 = math.exp %84 : vector<8x8x8xf32>
      %cst_35 = arith.constant dense<0.000000e+00> : vector<8x8xf32>
      %86 = vector.multi_reduction <add>, %85, %cst_35 [2] : vector<8x8x8xf32> to vector<8x8xf32>
      %87 = vector.shape_cast %86 : vector<8x8xf32> to vector<8x8x1xf32>
      %88 = tpu.reciprocal %87 {approx = true} : vector<8x8x1xf32> -> vector<8x8x1xf32>
      %89 = vector.broadcast %88 : vector<8x8x1xf32> to vector<8x8x8xf32>
      %90 = arith.mulf %85, %89 : vector<8x8x8xf32>
      %91 = arith.truncf %90 : vector<8x8x8xf32> to vector<8x8x8xbf16>
      "tpu.trace_start"() <{level = 10 : i32, message = "bqk,bkd->bqd"}> : () -> ()
      %cst_36 = arith.constant dense<0.000000e+00> : vector<8x8x8xf32>
      %92 = tpu.matmul %91, %79, %cst_36 {dimension_numbers = #tpu.dot_dimension_numbers<[2], [1], [1], [2], [0, 0, 0, 1, 1, 2], [0], [0]>} : vector<8x8x8xbf16>, vector<8x8x8xbf16>, vector<8x8x8xf32> -> vector<8x8x8xf32>
      "tpu.trace_stop"() : () -> ()
      %93 = vector.extract_strided_slice %73 {offsets = [0, 0, 8], sizes = [8, 8, 8], strides = [1, 1, 1]} : vector<8x8x96xf32> to vector<8x8x8xf32>
      %94 = arith.truncf %93 : vector<8x8x8xf32> to vector<8x8x8xbf16>
      %95 = vector.extract_strided_slice %73 {offsets = [0, 0, 40], sizes = [8, 8, 8], strides = [1, 1, 1]} : vector<8x8x96xf32> to vector<8x8x8xf32>
      %96 = arith.truncf %95 : vector<8x8x8xf32> to vector<8x8x8xbf16>
      %97 = vector.extract_strided_slice %73 {offsets = [0, 0, 72], sizes = [8, 8, 8], strides = [1, 1, 1]} : vector<8x8x96xf32> to vector<8x8x8xf32>
      %98 = arith.truncf %97 : vector<8x8x8xf32> to vector<8x8x8xbf16>
      "tpu.trace_start"() <{level = 10 : i32, message = "bqd,bkd->bqk"}> : () -> ()
      %cst_37 = arith.constant dense<0.000000e+00> : vector<8x8x8xf32>
      %99 = tpu.matmul %94, %96, %cst_37 {dimension_numbers = #tpu.dot_dimension_numbers<[2], [2], [1], [1], [0, 0, 0, 1, 1, 1], [0], [0]>} : vector<8x8x8xbf16>, vector<8x8x8xbf16>, vector<8x8x8xf32> -> vector<8x8x8xf32>
      "tpu.trace_stop"() : () -> ()
      %cst_38 = arith.constant dense<0xFF800000> : vector<8x8xf32>
      %100 = vector.multi_reduction <maximumf>, %99, %cst_38 [2] : vector<8x8x8xf32> to vector<8x8xf32>
      %101 = vector.shape_cast %100 : vector<8x8xf32> to vector<8x8x1xf32>
      %102 = vector.broadcast %101 : vector<8x8x1xf32> to vector<8x8x8xf32>
      %103 = arith.subf %99, %102 : vector<8x8x8xf32>
      %104 = math.exp %103 : vector<8x8x8xf32>
      %cst_39 = arith.constant dense<0.000000e+00> : vector<8x8xf32>
      %105 = vector.multi_reduction <add>, %104, %cst_39 [2] : vector<8x8x8xf32> to vector<8x8xf32>
      %106 = vector.shape_cast %105 : vector<8x8xf32> to vector<8x8x1xf32>
      %107 = tpu.reciprocal %106 {approx = true} : vector<8x8x1xf32> -> vector<8x8x1xf32>
      %108 = vector.broadcast %107 : vector<8x8x1xf32> to vector<8x8x8xf32>
      %109 = arith.mulf %104, %108 : vector<8x8x8xf32>
      %110 = arith.truncf %109 : vector<8x8x8xf32> to vector<8x8x8xbf16>
      "tpu.trace_start"() <{level = 10 : i32, message = "bqk,bkd->bqd"}> : () -> ()
      %cst_40 = arith.constant dense<0.000000e+00> : vector<8x8x8xf32>
      %111 = tpu.matmul %110, %98, %cst_40 {dimension_numbers = #tpu.dot_dimension_numbers<[2], [1], [1], [2], [0, 0, 0, 1, 1, 2], [0], [0]>} : vector<8x8x8xbf16>, vector<8x8x8xbf16>, vector<8x8x8xf32> -> vector<8x8x8xf32>
      "tpu.trace_stop"() : () -> ()
      %112 = vector.extract_strided_slice %73 {offsets = [0, 0, 16], sizes = [8, 8, 8], strides = [1, 1, 1]} : vector<8x8x96xf32> to vector<8x8x8xf32>
      %113 = arith.truncf %112 : vector<8x8x8xf32> to vector<8x8x8xbf16>
      %114 = vector.extract_strided_slice %73 {offsets = [0, 0, 48], sizes = [8, 8, 8], strides = [1, 1, 1]} : vector<8x8x96xf32> to vector<8x8x8xf32>
      %115 = arith.truncf %114 : vector<8x8x8xf32> to vector<8x8x8xbf16>
      %116 = vector.extract_strided_slice %73 {offsets = [0, 0, 80], sizes = [8, 8, 8], strides = [1, 1, 1]} : vector<8x8x96xf32> to vector<8x8x8xf32>
      %117 = arith.truncf %116 : vector<8x8x8xf32> to vector<8x8x8xbf16>
      "tpu.trace_start"() <{level = 10 : i32, message = "bqd,bkd->bqk"}> : () -> ()
      %cst_41 = arith.constant dense<0.000000e+00> : vector<8x8x8xf32>
      %118 = tpu.matmul %113, %115, %cst_41 {dimension_numbers = #tpu.dot_dimension_numbers<[2], [2], [1], [1], [0, 0, 0, 1, 1, 1], [0], [0]>} : vector<8x8x8xbf16>, vector<8x8x8xbf16>, vector<8x8x8xf32> -> vector<8x8x8xf32>
      "tpu.trace_stop"() : () -> ()
      %cst_42 = arith.constant dense<0xFF800000> : vector<8x8xf32>
      %119 = vector.multi_reduction <maximumf>, %118, %cst_42 [2] : vector<8x8x8xf32> to vector<8x8xf32>
      %120 = vector.shape_cast %119 : vector<8x8xf32> to vector<8x8x1xf32>
      %121 = vector.broadcast %120 : vector<8x8x1xf32> to vector<8x8x8xf32>
      %122 = arith.subf %118, %121 : vector<8x8x8xf32>
      %123 = math.exp %122 : vector<8x8x8xf32>
      %cst_43 = arith.constant dense<0.000000e+00> : vector<8x8xf32>
      %124 = vector.multi_reduction <add>, %123, %cst_43 [2] : vector<8x8x8xf32> to vector<8x8xf32>
      %125 = vector.shape_cast %124 : vector<8x8xf32> to vector<8x8x1xf32>
      %126 = tpu.reciprocal %125 {approx = true} : vector<8x8x1xf32> -> vector<8x8x1xf32>
      %127 = vector.broadcast %126 : vector<8x8x1xf32> to vector<8x8x8xf32>
      %128 = arith.mulf %123, %127 : vector<8x8x8xf32>
      %129 = arith.truncf %128 : vector<8x8x8xf32> to vector<8x8x8xbf16>
      "tpu.trace_start"() <{level = 10 : i32, message = "bqk,bkd->bqd"}> : () -> ()
      %cst_44 = arith.constant dense<0.000000e+00> : vector<8x8x8xf32>
      %130 = tpu.matmul %129, %117, %cst_44 {dimension_numbers = #tpu.dot_dimension_numbers<[2], [1], [1], [2], [0, 0, 0, 1, 1, 2], [0], [0]>} : vector<8x8x8xbf16>, vector<8x8x8xbf16>, vector<8x8x8xf32> -> vector<8x8x8xf32>
      "tpu.trace_stop"() : () -> ()
      %131 = vector.extract_strided_slice %73 {offsets = [0, 0, 24], sizes = [8, 8, 8], strides = [1, 1, 1]} : vector<8x8x96xf32> to vector<8x8x8xf32>
      %132 = arith.truncf %131 : vector<8x8x8xf32> to vector<8x8x8xbf16>
      %133 = vector.extract_strided_slice %73 {offsets = [0, 0, 56], sizes = [8, 8, 8], strides = [1, 1, 1]} : vector<8x8x96xf32> to vector<8x8x8xf32>
      %134 = arith.truncf %133 : vector<8x8x8xf32> to vector<8x8x8xbf16>
      %135 = vector.extract_strided_slice %73 {offsets = [0, 0, 88], sizes = [8, 8, 8], strides = [1, 1, 1]} : vector<8x8x96xf32> to vector<8x8x8xf32>
      %136 = arith.truncf %135 : vector<8x8x8xf32> to vector<8x8x8xbf16>
      "tpu.trace_start"() <{level = 10 : i32, message = "bqd,bkd->bqk"}> : () -> ()
      %cst_45 = arith.constant dense<0.000000e+00> : vector<8x8x8xf32>
      %137 = tpu.matmul %132, %134, %cst_45 {dimension_numbers = #tpu.dot_dimension_numbers<[2], [2], [1], [1], [0, 0, 0, 1, 1, 1], [0], [0]>} : vector<8x8x8xbf16>, vector<8x8x8xbf16>, vector<8x8x8xf32> -> vector<8x8x8xf32>
      "tpu.trace_stop"() : () -> ()
      %cst_46 = arith.constant dense<0xFF800000> : vector<8x8xf32>
      %138 = vector.multi_reduction <maximumf>, %137, %cst_46 [2] : vector<8x8x8xf32> to vector<8x8xf32>
      %139 = vector.shape_cast %138 : vector<8x8xf32> to vector<8x8x1xf32>
      %140 = vector.broadcast %139 : vector<8x8x1xf32> to vector<8x8x8xf32>
      %141 = arith.subf %137, %140 : vector<8x8x8xf32>
      %142 = math.exp %141 : vector<8x8x8xf32>
      %cst_47 = arith.constant dense<0.000000e+00> : vector<8x8xf32>
      %143 = vector.multi_reduction <add>, %142, %cst_47 [2] : vector<8x8x8xf32> to vector<8x8xf32>
      %144 = vector.shape_cast %143 : vector<8x8xf32> to vector<8x8x1xf32>
      %145 = tpu.reciprocal %144 {approx = true} : vector<8x8x1xf32> -> vector<8x8x1xf32>
      %146 = vector.broadcast %145 : vector<8x8x1xf32> to vector<8x8x8xf32>
      %147 = arith.mulf %142, %146 : vector<8x8x8xf32>
      %148 = arith.truncf %147 : vector<8x8x8xf32> to vector<8x8x8xbf16>
      "tpu.trace_start"() <{level = 10 : i32, message = "bqk,bkd->bqd"}> : () -> ()
      %cst_48 = arith.constant dense<0.000000e+00> : vector<8x8x8xf32>
      %149 = tpu.matmul %148, %136, %cst_48 {dimension_numbers = #tpu.dot_dimension_numbers<[2], [1], [1], [2], [0, 0, 0, 1, 1, 2], [0], [0]>} : vector<8x8x8xbf16>, vector<8x8x8xbf16>, vector<8x8x8xf32> -> vector<8x8x8xf32>
      "tpu.trace_stop"() : () -> ()
      %150 = tpu.concatenate %92, %111, %130, %149 in 2 : vector<8x8x8xf32>, vector<8x8x8xf32>, vector<8x8x8xf32>, vector<8x8x8xf32> -> vector<8x8x32xf32>
      %151 = vector.shape_cast %150 : vector<8x8x32xf32> to vector<64x32xf32>
      %152 = arith.truncf %151 : vector<64x32xf32> to vector<64x32xbf16>
      %153 = arith.index_cast %arg18 : i32 to index
      %c0_49 = arith.constant 0 : index
      %c0_50 = arith.constant 0 : index
      %154 = vector.load %arg7[%153, %c0_49, %c0_50] : memref<8x32x32xbf16, #tpu.memory_space<vmem>>, vector<1x32x32xbf16>
      %155 = vector.shape_cast %154 : vector<1x32x32xbf16> to vector<32x32xbf16>
      %cst_51 = arith.constant dense<0.000000e+00> : vector<64x32xf32>
      %156 = tpu.matmul %152, %155, %cst_51 {dimension_numbers = #tpu.dot_dimension_numbers<[1], [0], [0], [1], [0, 0, 1, 1], [], []>} : vector<64x32xbf16>, vector<32x32xbf16>, vector<64x32xf32> -> vector<64x32xf32>
      %157 = arith.index_cast %arg18 : i32 to index
      %c0_52 = arith.constant 0 : index
      %c0_53 = arith.constant 0 : index
      %158 = vector.load %arg8[%157, %c0_52, %c0_53] : memref<8x1x32xf32, #tpu.memory_space<vmem>>, vector<1x1x32xf32>
      %159 = vector.shape_cast %158 : vector<1x1x32xf32> to vector<1x32xf32>
      %160 = vector.broadcast %159 : vector<1x32xf32> to vector<64x32xf32>
      %161 = arith.addf %156, %160 : vector<64x32xf32>
      %162 = arith.addf %arg19, %161 : vector<64x32xf32>
      %163 = arith.index_cast %arg18 : i32 to index
      %c0_54 = arith.constant 0 : index
      %c0_55 = arith.constant 0 : index
      %164 = vector.load %arg9[%163, %c0_54, %c0_55] : memref<8x1x32xf32, #tpu.memory_space<vmem>>, vector<1x1x32xf32>
      %165 = vector.shape_cast %164 : vector<1x1x32xf32> to vector<1x32xf32>
      %166 = arith.index_cast %arg18 : i32 to index
      %c0_56 = arith.constant 0 : index
      %c0_57 = arith.constant 0 : index
      %167 = vector.load %arg10[%166, %c0_56, %c0_57] : memref<8x1x32xf32, #tpu.memory_space<vmem>>, vector<1x1x32xf32>
      %168 = vector.shape_cast %167 : vector<1x1x32xf32> to vector<1x32xf32>
      %cst_58 = arith.constant dense<0.000000e+00> : vector<64xf32>
      %169 = vector.multi_reduction <add>, %162, %cst_58 [1] : vector<64x32xf32> to vector<64xf32>
      %170 = vector.shape_cast %169 : vector<64xf32> to vector<64x1xf32>
      %cst_59 = arith.constant 3.200000e+01 : f32
      %171 = vector.broadcast %cst_59 : f32 to vector<64x1xf32>
      %172 = arith.divf %170, %171 : vector<64x1xf32>
      %173 = vector.broadcast %172 : vector<64x1xf32> to vector<64x32xf32>
      %174 = arith.subf %162, %173 : vector<64x32xf32>
      %175 = arith.mulf %174, %174 : vector<64x32xf32>
      %cst_60 = arith.constant dense<0.000000e+00> : vector<64xf32>
      %176 = vector.multi_reduction <add>, %175, %cst_60 [1] : vector<64x32xf32> to vector<64xf32>
      %177 = vector.shape_cast %176 : vector<64xf32> to vector<64x1xf32>
      %cst_61 = arith.constant 3.200000e+01 : f32
      %178 = vector.broadcast %cst_61 : f32 to vector<64x1xf32>
      %179 = arith.divf %177, %178 : vector<64x1xf32>
      %180 = vector.broadcast %172 : vector<64x1xf32> to vector<64x32xf32>
      %181 = arith.subf %162, %180 : vector<64x32xf32>
      %cst_62 = arith.constant 9.99999997E-7 : f32
      %182 = vector.broadcast %cst_62 : f32 to vector<64x1xf32>
      %183 = arith.addf %179, %182 : vector<64x1xf32>
      %184 = math.rsqrt %183 : vector<64x1xf32>
      %185 = vector.broadcast %184 : vector<64x1xf32> to vector<64x32xf32>
      %186 = arith.mulf %181, %185 : vector<64x32xf32>
      %187 = vector.broadcast %165 : vector<1x32xf32> to vector<64x32xf32>
      %188 = arith.mulf %186, %187 : vector<64x32xf32>
      %189 = vector.broadcast %168 : vector<1x32xf32> to vector<64x32xf32>
      %190 = arith.addf %188, %189 : vector<64x32xf32>
      %191 = arith.truncf %190 : vector<64x32xf32> to vector<64x32xbf16>
      %192 = arith.index_cast %arg18 : i32 to index
      %c0_63 = arith.constant 0 : index
      %c0_64 = arith.constant 0 : index
      %193 = vector.load %arg11[%192, %c0_63, %c0_64] : memref<8x32x64xbf16, #tpu.memory_space<vmem>>, vector<1x32x64xbf16>
      %194 = vector.shape_cast %193 : vector<1x32x64xbf16> to vector<32x64xbf16>
      %cst_65 = arith.constant dense<0.000000e+00> : vector<64x64xf32>
      %195 = tpu.matmul %191, %194, %cst_65 {dimension_numbers = #tpu.dot_dimension_numbers<[1], [0], [0], [1], [0, 0, 1, 1], [], []>} : vector<64x32xbf16>, vector<32x64xbf16>, vector<64x64xf32> -> vector<64x64xf32>
      %196 = arith.index_cast %arg18 : i32 to index
      %c0_66 = arith.constant 0 : index
      %c0_67 = arith.constant 0 : index
      %197 = vector.load %arg12[%196, %c0_66, %c0_67] : memref<8x1x64xf32, #tpu.memory_space<vmem>>, vector<1x1x64xf32>
      %198 = vector.shape_cast %197 : vector<1x1x64xf32> to vector<1x64xf32>
      %199 = vector.broadcast %198 : vector<1x64xf32> to vector<64x64xf32>
      %200 = arith.addf %195, %199 : vector<64x64xf32>
      %cst_68 = arith.constant 0.000000e+00 : f32
      %201 = vector.broadcast %cst_68 : f32 to vector<64x64xf32>
      %202 = arith.maximumf %200, %201 : vector<64x64xf32>
      %203 = arith.truncf %202 : vector<64x64xf32> to vector<64x64xbf16>
      %204 = arith.index_cast %arg18 : i32 to index
      %c0_69 = arith.constant 0 : index
      %c0_70 = arith.constant 0 : index
      %205 = vector.load %arg13[%204, %c0_69, %c0_70] : memref<8x64x32xbf16, #tpu.memory_space<vmem>>, vector<1x64x32xbf16>
      %206 = vector.shape_cast %205 : vector<1x64x32xbf16> to vector<64x32xbf16>
      %cst_71 = arith.constant dense<0.000000e+00> : vector<64x32xf32>
      %207 = tpu.matmul %203, %206, %cst_71 {dimension_numbers = #tpu.dot_dimension_numbers<[1], [0], [0], [1], [0, 0, 1, 1], [], []>} : vector<64x64xbf16>, vector<64x32xbf16>, vector<64x32xf32> -> vector<64x32xf32>
      %208 = arith.index_cast %arg18 : i32 to index
      %c0_72 = arith.constant 0 : index
      %c0_73 = arith.constant 0 : index
      %209 = vector.load %arg14[%208, %c0_72, %c0_73] : memref<8x1x32xf32, #tpu.memory_space<vmem>>, vector<1x1x32xf32>
      %210 = vector.shape_cast %209 : vector<1x1x32xf32> to vector<1x32xf32>
      %211 = vector.broadcast %210 : vector<1x32xf32> to vector<64x32xf32>
      %212 = arith.addf %207, %211 : vector<64x32xf32>
      %213 = arith.addf %162, %212 : vector<64x32xf32>
      scf.yield %213 : vector<64x32xf32>
    }
    %c8_i32_5 = arith.constant 8 : i32
    %c0_6 = arith.constant 0 : index
    %c0_7 = arith.constant 0 : index
    %c0_8 = arith.constant 0 : index
    %7 = vector.load %arg15[%c0_6, %c0_7, %c0_8] : memref<1x1x32xf32, #tpu.memory_space<vmem>>, vector<1x1x32xf32>
    %8 = vector.shape_cast %7 : vector<1x1x32xf32> to vector<1x32xf32>
    %c0_9 = arith.constant 0 : index
    %c0_10 = arith.constant 0 : index
    %c0_11 = arith.constant 0 : index
    %9 = vector.load %arg16[%c0_9, %c0_10, %c0_11] : memref<1x1x32xf32, #tpu.memory_space<vmem>>, vector<1x1x32xf32>
    %10 = vector.shape_cast %9 : vector<1x1x32xf32> to vector<1x32xf32>
    %cst = arith.constant dense<0.000000e+00> : vector<64xf32>
    %11 = vector.multi_reduction <add>, %6, %cst [1] : vector<64x32xf32> to vector<64xf32>
    %12 = vector.shape_cast %11 : vector<64xf32> to vector<64x1xf32>
    %cst_12 = arith.constant 3.200000e+01 : f32
    %13 = vector.broadcast %cst_12 : f32 to vector<64x1xf32>
    %14 = arith.divf %12, %13 : vector<64x1xf32>
    %15 = vector.broadcast %14 : vector<64x1xf32> to vector<64x32xf32>
    %16 = arith.subf %6, %15 : vector<64x32xf32>
    %17 = arith.mulf %16, %16 : vector<64x32xf32>
    %cst_13 = arith.constant dense<0.000000e+00> : vector<64xf32>
    %18 = vector.multi_reduction <add>, %17, %cst_13 [1] : vector<64x32xf32> to vector<64xf32>
    %19 = vector.shape_cast %18 : vector<64xf32> to vector<64x1xf32>
    %cst_14 = arith.constant 3.200000e+01 : f32
    %20 = vector.broadcast %cst_14 : f32 to vector<64x1xf32>
    %21 = arith.divf %19, %20 : vector<64x1xf32>
    %22 = vector.broadcast %14 : vector<64x1xf32> to vector<64x32xf32>
    %23 = arith.subf %6, %22 : vector<64x32xf32>
    %cst_15 = arith.constant 9.99999997E-7 : f32
    %24 = vector.broadcast %cst_15 : f32 to vector<64x1xf32>
    %25 = arith.addf %21, %24 : vector<64x1xf32>
    %26 = math.rsqrt %25 : vector<64x1xf32>
    %27 = vector.broadcast %26 : vector<64x1xf32> to vector<64x32xf32>
    %28 = arith.mulf %23, %27 : vector<64x32xf32>
    %29 = vector.broadcast %8 : vector<1x32xf32> to vector<64x32xf32>
    %30 = arith.mulf %28, %29 : vector<64x32xf32>
    %31 = vector.broadcast %10 : vector<1x32xf32> to vector<64x32xf32>
    %32 = arith.addf %30, %31 : vector<64x32xf32>
    %33 = vector.shape_cast %32 : vector<64x32xf32> to vector<8x8x32xf32>
    %c0_16 = arith.constant 0 : index
    %c0_17 = arith.constant 0 : index
    %c0_18 = arith.constant 0 : index
    %34 = vector.load %arg17[%c0_16, %c0_17, %c0_18] : memref<8x8x32xf32, #tpu.memory_space<vmem>>, vector<8x8x32xf32>
    tpu.vector_store %arg17[%c0_16, %c0_17, %c0_18], %33 {strides = array<i32>} : memref<8x8x32xf32, #tpu.memory_space<vmem>>, vector<8x8x32xf32>,
    return
  }
  func.func @transform_0(%arg0: i32) -> (i32, i32, i32) {
    %c0_i32 = arith.constant 0 : i32
    %c0_i32_0 = arith.constant 0 : i32
    %c0_i32_1 = arith.constant 0 : i32
    return %arg0, %c0_i32, %c0_i32_0 : i32, i32, i32
  }
  func.func @transform_1(%arg0: i32) -> (i32, i32, i32) {
    %c0_i32 = arith.constant 0 : i32
    %c0_i32_0 = arith.constant 0 : i32
    %c0_i32_1 = arith.constant 0 : i32
    %c0_i32_2 = arith.constant 0 : i32
    return %c0_i32, %c0_i32_0, %c0_i32_1 : i32, i32, i32
  }
  func.func @transform_2(%arg0: i32) -> (i32, i32, i32) {
    %c0_i32 = arith.constant 0 : i32
    %c0_i32_0 = arith.constant 0 : i32
    %c0_i32_1 = arith.constant 0 : i32
    %c0_i32_2 = arith.constant 0 : i32
    return %c0_i32, %c0_i32_0, %c0_i32_1 : i32, i32, i32
  }
  func.func @transform_3(%arg0: i32) -> (i32, i32, i32) {
    %c0_i32 = arith.constant 0 : i32
    %c0_i32_0 = arith.constant 0 : i32
    %c0_i32_1 = arith.constant 0 : i32
    %c0_i32_2 = arith.constant 0 : i32
    return %c0_i32, %c0_i32_0, %c0_i32_1 : i32, i32, i32
  }
  func.func @transform_4(%arg0: i32) -> (i32, i32, i32) {
    %c0_i32 = arith.constant 0 : i32
    %c0_i32_0 = arith.constant 0 : i32
    %c0_i32_1 = arith.constant 0 : i32
    %c0_i32_2 = arith.constant 0 : i32
    return %c0_i32, %c0_i32_0, %c0_i32_1 : i32, i32, i32
  }
  func.func @transform_5(%arg0: i32) -> (i32, i32, i32) {
    %c0_i32 = arith.constant 0 : i32
    %c0_i32_0 = arith.constant 0 : i32
    %c0_i32_1 = arith.constant 0 : i32
    %c0_i32_2 = arith.constant 0 : i32
    return %c0_i32, %c0_i32_0, %c0_i32_1 : i32, i32, i32
  }
  func.func @transform_6(%arg0: i32) -> (i32, i32, i32) {
    %c0_i32 = arith.constant 0 : i32
    %c0_i32_0 = arith.constant 0 : i32
    %c0_i32_1 = arith.constant 0 : i32
    %c0_i32_2 = arith.constant 0 : i32
    return %c0_i32, %c0_i32_0, %c0_i32_1 : i32, i32, i32
  }
  func.func @transform_7(%arg0: i32) -> (i32, i32, i32) {
    %c0_i32 = arith.constant 0 : i32
    %c0_i32_0 = arith.constant 0 : i32
    %c0_i32_1 = arith.constant 0 : i32
    %c0_i32_2 = arith.constant 0 : i32
    return %c0_i32, %c0_i32_0, %c0_i32_1 : i32, i32, i32
  }
  func.func @transform_8(%arg0: i32) -> (i32, i32, i32) {
    %c0_i32 = arith.constant 0 : i32
    %c0_i32_0 = arith.constant 0 : i32
    %c0_i32_1 = arith.constant 0 : i32
    %c0_i32_2 = arith.constant 0 : i32
    return %c0_i32, %c0_i32_0, %c0_i32_1 : i32, i32, i32
  }
  func.func @transform_9(%arg0: i32) -> (i32, i32, i32) {
    %c0_i32 = arith.constant 0 : i32
    %c0_i32_0 = arith.constant 0 : i32
    %c0_i32_1 = arith.constant 0 : i32
    %c0_i32_2 = arith.constant 0 : i32
    return %c0_i32, %c0_i32_0, %c0_i32_1 : i32, i32, i32
  }
  func.func @transform_10(%arg0: i32) -> (i32, i32, i32) {
    %c0_i32 = arith.constant 0 : i32
    %c0_i32_0 = arith.constant 0 : i32
    %c0_i32_1 = arith.constant 0 : i32
    %c0_i32_2 = arith.constant 0 : i32
    return %c0_i32, %c0_i32_0, %c0_i32_1 : i32, i32, i32
  }
  func.func @transform_11(%arg0: i32) -> (i32, i32, i32) {
    %c0_i32 = arith.constant 0 : i32
    %c0_i32_0 = arith.constant 0 : i32
    %c0_i32_1 = arith.constant 0 : i32
    %c0_i32_2 = arith.constant 0 : i32
    return %c0_i32, %c0_i32_0, %c0_i32_1 : i32, i32, i32
  }
  func.func @transform_12(%arg0: i32) -> (i32, i32, i32) {
    %c0_i32 = arith.constant 0 : i32
    %c0_i32_0 = arith.constant 0 : i32
    %c0_i32_1 = arith.constant 0 : i32
    %c0_i32_2 = arith.constant 0 : i32
    return %c0_i32, %c0_i32_0, %c0_i32_1 : i32, i32, i32
  }
  func.func @transform_13(%arg0: i32) -> (i32, i32, i32) {
    %c0_i32 = arith.constant 0 : i32
    %c0_i32_0 = arith.constant 0 : i32
    %c0_i32_1 = arith.constant 0 : i32
    %c0_i32_2 = arith.constant 0 : i32
    return %c0_i32, %c0_i32_0, %c0_i32_1 : i32, i32, i32
  }
  func.func @transform_14(%arg0: i32) -> (i32, i32, i32) {
    %c0_i32 = arith.constant 0 : i32
    %c0_i32_0 = arith.constant 0 : i32
    %c0_i32_1 = arith.constant 0 : i32
    %c0_i32_2 = arith.constant 0 : i32
    return %c0_i32, %c0_i32_0, %c0_i32_1 : i32, i32, i32
  }
  func.func @transform_15(%arg0: i32) -> (i32, i32, i32) {
    %c0_i32 = arith.constant 0 : i32
    %c0_i32_0 = arith.constant 0 : i32
    %c0_i32_1 = arith.constant 0 : i32
    %c0_i32_2 = arith.constant 0 : i32
    return %c0_i32, %c0_i32_0, %c0_i32_1 : i32, i32, i32
  }
  func.func @transform_16(%arg0: i32) -> (i32, i32, i32) {
    %c0_i32 = arith.constant 0 : i32
    %c0_i32_0 = arith.constant 0 : i32
    %c0_i32_1 = arith.constant 0 : i32
    return %arg0, %c0_i32, %c0_i32_0 : i32, i32, i32
  }
}

module attributes {stable_mosaic.version = 11 : i64} {
  func.func @_gn_add_kernel(%arg0: i32, %arg1: i32, %arg2: i32, %arg3: memref<1x64x32xf32, #tpu.memory_space<vmem>>, %arg4: memref<1x1x32xf32, #tpu.memory_space<vmem>>, %arg5: memref<1x1x32xf32, #tpu.memory_space<vmem>>, %arg6: memref<1x64x32xf32, #tpu.memory_space<vmem>>, %arg7: memref<1x64x32xf32, #tpu.memory_space<vmem>>, %arg8: memref<1x1xf32, #tpu.memory_space<vmem>>, %arg9: memref<1x1xf32, #tpu.memory_space<vmem>>) attributes {dimension_semantics = [#tpu.dimension_semantics<parallel>, #tpu.dimension_semantics<arbitrary>, #tpu.dimension_semantics<arbitrary>], iteration_bounds = array<i64: 2, 2, 1>, scalar_prefetch = 0 : i64, scratch_operands = 2 : i64, tpu.core_type = #tpu.core_type<tc>, window_params = [{transform_indices = @transform_0, window_bounds = array<i64: 1, 64, 32>}, {pipeline_mode = #tpu.pipeline_mode<synchronous>, transform_indices = @transform_1, window_bounds = array<i64: 1, 1, 32>}, {pipeline_mode = #tpu.pipeline_mode<synchronous>, transform_indices = @transform_2, window_bounds = array<i64: 1, 1, 32>}, {transform_indices = @transform_3, window_bounds = array<i64: 1, 64, 32>}, {transform_indices = @transform_4, window_bounds = array<i64: 1, 64, 32>}]} {
    %c0_i32 = arith.constant 0 : i32
    %0 = arith.cmpi eq, %arg1, %c0_i32 : i32
    %c0_i32_0 = arith.constant 0 : i32
    %1 = arith.cmpi eq, %arg2, %c0_i32_0 : i32
    %2 = arith.andi %0, %1 : i1
    %3 = arith.extui %2 : i1 to i32
    %c0_i32_1 = arith.constant 0 : i32
    %4 = arith.cmpi ne, %3, %c0_i32_1 : i32
    scf.if %4 {
      %cst = arith.constant 0.000000e+00 : f32
      %12 = vector.broadcast %cst : f32 to vector<1x1xf32>
      %c0_7 = arith.constant 0 : index
      %c0_8 = arith.constant 0 : index
      %13 = vector.load %arg8[%c0_7, %c0_8] : memref<1x1xf32, #tpu.memory_space<vmem>>, vector<1x1xf32>
      tpu.vector_store %arg8[%c0_7, %c0_8], %12 {strides = array<i32>} : memref<1x1xf32, #tpu.memory_space<vmem>>, vector<1x1xf32>,
      %cst_9 = arith.constant 0.000000e+00 : f32
      %14 = vector.broadcast %cst_9 : f32 to vector<1x1xf32>
      %c0_10 = arith.constant 0 : index
      %c0_11 = arith.constant 0 : index
      %15 = vector.load %arg9[%c0_10, %c0_11] : memref<1x1xf32, #tpu.memory_space<vmem>>, vector<1x1xf32>
      tpu.vector_store %arg9[%c0_10, %c0_11], %14 {strides = array<i32>} : memref<1x1xf32, #tpu.memory_space<vmem>>, vector<1x1xf32>,
    } else {
    }
    %c0 = arith.constant 0 : index
    %c0_2 = arith.constant 0 : index
    %c0_3 = arith.constant 0 : index
    %5 = vector.load %arg3[%c0, %c0_2, %c0_3] : memref<1x64x32xf32, #tpu.memory_space<vmem>>, vector<1x64x32xf32>
    %c0_i32_4 = arith.constant 0 : i32
    %6 = arith.cmpi eq, %arg1, %c0_i32_4 : i32
    %7 = arith.extui %6 : i1 to i32
    %c0_i32_5 = arith.constant 0 : i32
    %8 = arith.cmpi ne, %7, %c0_i32_5 : i32
    scf.if %8 {
      %c0_7 = arith.constant 0 : index
      %c0_8 = arith.constant 0 : index
      %12 = vector.load %arg8[%c0_7, %c0_8] : memref<1x1xf32, #tpu.memory_space<vmem>>, vector<1x1xf32>
      %13 = vector.shape_cast %5 : vector<1x64x32xf32> to vector<1x1x64x32xf32>
      %cst = arith.constant dense<0.000000e+00> : vector<1xf32>
      %14 = vector.multi_reduction <add>, %13, %cst [1, 2, 3] : vector<1x1x64x32xf32> to vector<1xf32>
      %15 = vector.shape_cast %14 : vector<1xf32> to vector<1x1x1x1xf32>
      %16 = vector.extract %15[0, 0, 0, 0] : f32 from vector<1x1x1x1xf32>
      %17 = vector.broadcast %16 : f32 to vector<1x1xf32>
      %18 = arith.addf %12, %17 : vector<1x1xf32>
      %c0_9 = arith.constant 0 : index
      %c0_10 = arith.constant 0 : index
      %19 = vector.load %arg8[%c0_9, %c0_10] : memref<1x1xf32, #tpu.memory_space<vmem>>, vector<1x1xf32>
      tpu.vector_store %arg8[%c0_9, %c0_10], %18 {strides = array<i32>} : memref<1x1xf32, #tpu.memory_space<vmem>>, vector<1x1xf32>,
      %c0_11 = arith.constant 0 : index
      %c0_12 = arith.constant 0 : index
      %20 = vector.load %arg9[%c0_11, %c0_12] : memref<1x1xf32, #tpu.memory_space<vmem>>, vector<1x1xf32>
      %21 = arith.mulf %5, %5 : vector<1x64x32xf32>
      %22 = vector.shape_cast %21 : vector<1x64x32xf32> to vector<1x1x64x32xf32>
      %cst_13 = arith.constant dense<0.000000e+00> : vector<1xf32>
      %23 = vector.multi_reduction <add>, %22, %cst_13 [1, 2, 3] : vector<1x1x64x32xf32> to vector<1xf32>
      %24 = vector.shape_cast %23 : vector<1xf32> to vector<1x1x1x1xf32>
      %25 = vector.extract %24[0, 0, 0, 0] : f32 from vector<1x1x1x1xf32>
      %26 = vector.broadcast %25 : f32 to vector<1x1xf32>
      %27 = arith.addf %20, %26 : vector<1x1xf32>
      %c0_14 = arith.constant 0 : index
      %c0_15 = arith.constant 0 : index
      %28 = vector.load %arg9[%c0_14, %c0_15] : memref<1x1xf32, #tpu.memory_space<vmem>>, vector<1x1xf32>
      tpu.vector_store %arg9[%c0_14, %c0_15], %27 {strides = array<i32>} : memref<1x1xf32, #tpu.memory_space<vmem>>, vector<1x1xf32>,
      %cst_16 = arith.constant 0.000000e+00 : f32
      %29 = vector.broadcast %cst_16 : f32 to vector<1x64x32xf32>
      %c0_17 = arith.constant 0 : index
      %c0_18 = arith.constant 0 : index
      %c0_19 = arith.constant 0 : index
      %30 = vector.load %arg7[%c0_17, %c0_18, %c0_19] : memref<1x64x32xf32, #tpu.memory_space<vmem>>, vector<1x64x32xf32>
      tpu.vector_store %arg7[%c0_17, %c0_18, %c0_19], %29 {strides = array<i32>} : memref<1x64x32xf32, #tpu.memory_space<vmem>>, vector<1x64x32xf32>,
    } else {
    }
    %c1_i32 = arith.constant 1 : i32
    %9 = arith.cmpi eq, %arg1, %c1_i32 : i32
    %10 = arith.extui %9 : i1 to i32
    %c0_i32_6 = arith.constant 0 : i32
    %11 = arith.cmpi ne, %10, %c0_i32_6 : i32
    scf.if %11 {
      %c0_7 = arith.constant 0 : index
      %c0_8 = arith.constant 0 : index
      %12 = vector.load %arg8[%c0_7, %c0_8] : memref<1x1xf32, #tpu.memory_space<vmem>>, vector<1x1xf32>
      %cst = arith.constant 4.8828125E-4 : f32
      %13 = vector.broadcast %cst : f32 to vector<1x1xf32>
      %14 = arith.mulf %12, %13 : vector<1x1xf32>
      %c0_9 = arith.constant 0 : index
      %c0_10 = arith.constant 0 : index
      %15 = vector.load %arg9[%c0_9, %c0_10] : memref<1x1xf32, #tpu.memory_space<vmem>>, vector<1x1xf32>
      %cst_11 = arith.constant 4.8828125E-4 : f32
      %16 = vector.broadcast %cst_11 : f32 to vector<1x1xf32>
      %17 = arith.mulf %15, %16 : vector<1x1xf32>
      %18 = arith.mulf %14, %14 : vector<1x1xf32>
      %19 = arith.subf %17, %18 : vector<1x1xf32>
      %cst_12 = arith.constant 0.000000e+00 : f32
      %20 = vector.broadcast %cst_12 : f32 to vector<1x1xf32>
      %21 = arith.maximumf %19, %20 : vector<1x1xf32>
      %22 = vector.shape_cast %14 : vector<1x1xf32> to vector<1x1x1xf32>
      %23 = vector.broadcast %22 : vector<1x1x1xf32> to vector<1x64x32xf32>
      %24 = arith.subf %5, %23 : vector<1x64x32xf32>
      %cst_13 = arith.constant 9.99999993E-9 : f32
      %25 = vector.broadcast %cst_13 : f32 to vector<1x1xf32>
      %26 = arith.addf %21, %25 : vector<1x1xf32>
      %27 = math.rsqrt %26 : vector<1x1xf32>
      %28 = vector.shape_cast %27 : vector<1x1xf32> to vector<1x1x1xf32>
      %29 = vector.broadcast %28 : vector<1x1x1xf32> to vector<1x64x32xf32>
      %30 = arith.mulf %24, %29 : vector<1x64x32xf32>
      %c0_14 = arith.constant 0 : index
      %c0_15 = arith.constant 0 : index
      %c0_16 = arith.constant 0 : index
      %31 = vector.load %arg4[%c0_14, %c0_15, %c0_16] : memref<1x1x32xf32, #tpu.memory_space<vmem>>, vector<1x1x32xf32>
      %32 = vector.broadcast %31 : vector<1x1x32xf32> to vector<1x64x32xf32>
      %33 = arith.mulf %30, %32 : vector<1x64x32xf32>
      %c0_17 = arith.constant 0 : index
      %c0_18 = arith.constant 0 : index
      %c0_19 = arith.constant 0 : index
      %34 = vector.load %arg5[%c0_17, %c0_18, %c0_19] : memref<1x1x32xf32, #tpu.memory_space<vmem>>, vector<1x1x32xf32>
      %35 = vector.broadcast %34 : vector<1x1x32xf32> to vector<1x64x32xf32>
      %36 = arith.addf %33, %35 : vector<1x64x32xf32>
      %c0_20 = arith.constant 0 : index
      %c0_21 = arith.constant 0 : index
      %c0_22 = arith.constant 0 : index
      %37 = vector.load %arg6[%c0_20, %c0_21, %c0_22] : memref<1x64x32xf32, #tpu.memory_space<vmem>>, vector<1x64x32xf32>
      %38 = arith.addf %36, %37 : vector<1x64x32xf32>
      %c0_23 = arith.constant 0 : index
      %c0_24 = arith.constant 0 : index
      %c0_25 = arith.constant 0 : index
      %39 = vector.load %arg7[%c0_23, %c0_24, %c0_25] : memref<1x64x32xf32, #tpu.memory_space<vmem>>, vector<1x64x32xf32>
      tpu.vector_store %arg7[%c0_23, %c0_24, %c0_25], %38 {strides = array<i32>} : memref<1x64x32xf32, #tpu.memory_space<vmem>>, vector<1x64x32xf32>,
    } else {
    }
    return
  }
  func.func @transform_0(%arg0: i32, %arg1: i32, %arg2: i32) -> (i32, i32, i32) {
    %c0_i32 = arith.constant 0 : i32
    %c0_i32_0 = arith.constant 0 : i32
    return %arg0, %arg2, %c0_i32 : i32, i32, i32
  }
  func.func @transform_1(%arg0: i32, %arg1: i32, %arg2: i32) -> (i32, i32, i32) {
    %c0_i32 = arith.constant 0 : i32
    %c0_i32_0 = arith.constant 0 : i32
    %c0_i32_1 = arith.constant 0 : i32
    %c0_i32_2 = arith.constant 0 : i32
    return %c0_i32, %c0_i32_0, %c0_i32_1 : i32, i32, i32
  }
  func.func @transform_2(%arg0: i32, %arg1: i32, %arg2: i32) -> (i32, i32, i32) {
    %c0_i32 = arith.constant 0 : i32
    %c0_i32_0 = arith.constant 0 : i32
    %c0_i32_1 = arith.constant 0 : i32
    %c0_i32_2 = arith.constant 0 : i32
    return %c0_i32, %c0_i32_0, %c0_i32_1 : i32, i32, i32
  }
  func.func @transform_3(%arg0: i32, %arg1: i32, %arg2: i32) -> (i32, i32, i32) {
    %c0_i32 = arith.constant 0 : i32
    %c0_i32_0 = arith.constant 0 : i32
    return %arg0, %arg2, %c0_i32 : i32, i32, i32
  }
  func.func @transform_4(%arg0: i32, %arg1: i32, %arg2: i32) -> (i32, i32, i32) {
    %c0_i32 = arith.constant 0 : i32
    %c0_i32_0 = arith.constant 0 : i32
    return %arg0, %arg2, %c0_i32 : i32, i32, i32
  }
}

module attributes {stable_mosaic.version = 11 : i64} {
  func.func @_prelu_linear_kernel(%arg0: i32, %arg1: memref<16x128xf32, #tpu.memory_space<vmem>>, %arg2: memref<1x1xf32, #tpu.memory_space<vmem>>, %arg3: memref<128x256xbf16, #tpu.memory_space<vmem>>, %arg4: memref<1x256xf32, #tpu.memory_space<vmem>>, %arg5: memref<16x256xf32, #tpu.memory_space<vmem>>) attributes {dimension_semantics = [#tpu.dimension_semantics<parallel>], iteration_bounds = array<i64: 2>, scalar_prefetch = 0 : i64, scratch_operands = 0 : i64, tpu.core_type = #tpu.core_type<tc>, window_params = [{transform_indices = @transform_0, window_bounds = array<i64: 16, 128>}, {pipeline_mode = #tpu.pipeline_mode<synchronous>, transform_indices = @transform_1, window_bounds = array<i64: 1, 1>}, {pipeline_mode = #tpu.pipeline_mode<synchronous>, transform_indices = @transform_2, window_bounds = array<i64: 128, 256>}, {pipeline_mode = #tpu.pipeline_mode<synchronous>, transform_indices = @transform_3, window_bounds = array<i64: 1, 256>}, {transform_indices = @transform_4, window_bounds = array<i64: 16, 256>}]} {
    %c0 = arith.constant 0 : index
    %c0_0 = arith.constant 0 : index
    %0 = vector.load %arg1[%c0, %c0_0] : memref<16x128xf32, #tpu.memory_space<vmem>>, vector<16x128xf32>
    %cst = arith.constant 0.000000e+00 : f32
    %1 = vector.broadcast %cst : f32 to vector<16x128xf32>
    %2 = arith.cmpf oge, %0, %1 : vector<16x128xf32>
    %c0_1 = arith.constant 0 : index
    %c0_2 = arith.constant 0 : index
    %3 = vector.load %arg2[%c0_1, %c0_2] : memref<1x1xf32, #tpu.memory_space<vmem>>, vector<1x1xf32>
    %4 = vector.broadcast %3 : vector<1x1xf32> to vector<16x128xf32>
    %5 = arith.mulf %0, %4 : vector<16x128xf32>
    %6 = arith.select %2, %0, %5 : vector<16x128xi1>, vector<16x128xf32>
    %7 = arith.truncf %6 : vector<16x128xf32> to vector<16x128xbf16>
    %c0_3 = arith.constant 0 : index
    %c0_4 = arith.constant 0 : index
    %8 = vector.load %arg3[%c0_3, %c0_4] : memref<128x256xbf16, #tpu.memory_space<vmem>>, vector<128x256xbf16>
    %cst_5 = arith.constant dense<0.000000e+00> : vector<16x256xf32>
    %9 = tpu.matmul %7, %8, %cst_5 {dimension_numbers = #tpu.dot_dimension_numbers<[1], [0], [0], [1], [0, 0, 1, 1], [], []>} : vector<16x128xbf16>, vector<128x256xbf16>, vector<16x256xf32> -> vector<16x256xf32>
    %c0_6 = arith.constant 0 : index
    %c0_7 = arith.constant 0 : index
    %10 = vector.load %arg4[%c0_6, %c0_7] : memref<1x256xf32, #tpu.memory_space<vmem>>, vector<1x256xf32>
    %11 = vector.broadcast %10 : vector<1x256xf32> to vector<16x256xf32>
    %12 = arith.addf %9, %11 : vector<16x256xf32>
    %c0_8 = arith.constant 0 : index
    %c0_9 = arith.constant 0 : index
    %13 = vector.load %arg5[%c0_8, %c0_9] : memref<16x256xf32, #tpu.memory_space<vmem>>, vector<16x256xf32>
    tpu.vector_store %arg5[%c0_8, %c0_9], %12 {strides = array<i32>} : memref<16x256xf32, #tpu.memory_space<vmem>>, vector<16x256xf32>,
    return
  }
  func.func @transform_0(%arg0: i32) -> (i32, i32) {
    %c0_i32 = arith.constant 0 : i32
    %c0_i32_0 = arith.constant 0 : i32
    return %arg0, %c0_i32 : i32, i32
  }
  func.func @transform_1(%arg0: i32) -> (i32, i32) {
    %c0_i32 = arith.constant 0 : i32
    %c0_i32_0 = arith.constant 0 : i32
    %c0_i32_1 = arith.constant 0 : i32
    return %c0_i32, %c0_i32_0 : i32, i32
  }
  func.func @transform_2(%arg0: i32) -> (i32, i32) {
    %c0_i32 = arith.constant 0 : i32
    %c0_i32_0 = arith.constant 0 : i32
    %c0_i32_1 = arith.constant 0 : i32
    return %c0_i32, %c0_i32_0 : i32, i32
  }
  func.func @transform_3(%arg0: i32) -> (i32, i32) {
    %c0_i32 = arith.constant 0 : i32
    %c0_i32_0 = arith.constant 0 : i32
    %c0_i32_1 = arith.constant 0 : i32
    return %c0_i32, %c0_i32_0 : i32, i32
  }
  func.func @transform_4(%arg0: i32) -> (i32, i32) {
    %c0_i32 = arith.constant 0 : i32
    %c0_i32_0 = arith.constant 0 : i32
    return %arg0, %c0_i32 : i32, i32
  }
}

module attributes {stable_mosaic.version = 11 : i64} {
  func.func @_gated_end_kernel(%arg0: i32, %arg1: memref<16x128xf32, #tpu.memory_space<vmem>>, %arg2: memref<128x128xbf16, #tpu.memory_space<vmem>>, %arg3: memref<1x128xf32, #tpu.memory_space<vmem>>, %arg4: memref<128x128xbf16, #tpu.memory_space<vmem>>, %arg5: memref<1x128xf32, #tpu.memory_space<vmem>>, %arg6: memref<128x128xbf16, #tpu.memory_space<vmem>>, %arg7: memref<16x128xf32, #tpu.memory_space<vmem>>) attributes {dimension_semantics = [#tpu.dimension_semantics<parallel>], iteration_bounds = array<i64: 2>, scalar_prefetch = 0 : i64, scratch_operands = 0 : i64, tpu.core_type = #tpu.core_type<tc>, window_params = [{transform_indices = @transform_0, window_bounds = array<i64: 16, 128>}, {pipeline_mode = #tpu.pipeline_mode<synchronous>, transform_indices = @transform_1, window_bounds = array<i64: 128, 128>}, {pipeline_mode = #tpu.pipeline_mode<synchronous>, transform_indices = @transform_2, window_bounds = array<i64: 1, 128>}, {pipeline_mode = #tpu.pipeline_mode<synchronous>, transform_indices = @transform_3, window_bounds = array<i64: 128, 128>}, {pipeline_mode = #tpu.pipeline_mode<synchronous>, transform_indices = @transform_4, window_bounds = array<i64: 1, 128>}, {pipeline_mode = #tpu.pipeline_mode<synchronous>, transform_indices = @transform_5, window_bounds = array<i64: 128, 128>}, {transform_indices = @transform_6, window_bounds = array<i64: 16, 128>}]} {
    %c0 = arith.constant 0 : index
    %c0_0 = arith.constant 0 : index
    %0 = vector.load %arg1[%c0, %c0_0] : memref<16x128xf32, #tpu.memory_space<vmem>>, vector<16x128xf32>
    %1 = arith.truncf %0 : vector<16x128xf32> to vector<16x128xbf16>
    %c0_1 = arith.constant 0 : index
    %c0_2 = arith.constant 0 : index
    %2 = vector.load %arg2[%c0_1, %c0_2] : memref<128x128xbf16, #tpu.memory_space<vmem>>, vector<128x128xbf16>
    %cst = arith.constant dense<0.000000e+00> : vector<16x128xf32>
    %3 = tpu.matmul %1, %2, %cst {dimension_numbers = #tpu.dot_dimension_numbers<[1], [0], [0], [1], [0, 0, 1, 1], [], []>} : vector<16x128xbf16>, vector<128x128xbf16>, vector<16x128xf32> -> vector<16x128xf32>
    %c0_3 = arith.constant 0 : index
    %c0_4 = arith.constant 0 : index
    %4 = vector.load %arg3[%c0_3, %c0_4] : memref<1x128xf32, #tpu.memory_space<vmem>>, vector<1x128xf32>
    %5 = vector.broadcast %4 : vector<1x128xf32> to vector<16x128xf32>
    %6 = arith.addf %3, %5 : vector<16x128xf32>
    %7 = math.tanh %6 : vector<16x128xf32>
    %c0_5 = arith.constant 0 : index
    %c0_6 = arith.constant 0 : index
    %8 = vector.load %arg4[%c0_5, %c0_6] : memref<128x128xbf16, #tpu.memory_space<vmem>>, vector<128x128xbf16>
    %cst_7 = arith.constant dense<0.000000e+00> : vector<16x128xf32>
    %9 = tpu.matmul %1, %8, %cst_7 {dimension_numbers = #tpu.dot_dimension_numbers<[1], [0], [0], [1], [0, 0, 1, 1], [], []>} : vector<16x128xbf16>, vector<128x128xbf16>, vector<16x128xf32> -> vector<16x128xf32>
    %c0_8 = arith.constant 0 : index
    %c0_9 = arith.constant 0 : index
    %10 = vector.load %arg5[%c0_8, %c0_9] : memref<1x128xf32, #tpu.memory_space<vmem>>, vector<1x128xf32>
    %11 = vector.broadcast %10 : vector<1x128xf32> to vector<16x128xf32>
    %12 = arith.addf %9, %11 : vector<16x128xf32>
    %13 = arith.negf %12 : vector<16x128xf32>
    %14 = math.exp %13 : vector<16x128xf32>
    %cst_10 = arith.constant 1.000000e+00 : f32
    %15 = vector.broadcast %cst_10 : f32 to vector<16x128xf32>
    %16 = arith.addf %15, %14 : vector<16x128xf32>
    %17 = arith.divf %15, %16 : vector<16x128xf32>
    %18 = arith.mulf %7, %17 : vector<16x128xf32>
    %19 = arith.truncf %18 : vector<16x128xf32> to vector<16x128xbf16>
    %c0_11 = arith.constant 0 : index
    %c0_12 = arith.constant 0 : index
    %20 = vector.load %arg6[%c0_11, %c0_12] : memref<128x128xbf16, #tpu.memory_space<vmem>>, vector<128x128xbf16>
    %cst_13 = arith.constant dense<0.000000e+00> : vector<16x128xf32>
    %21 = tpu.matmul %19, %20, %cst_13 {dimension_numbers = #tpu.dot_dimension_numbers<[1], [0], [0], [1], [0, 0, 1, 1], [], []>} : vector<16x128xbf16>, vector<128x128xbf16>, vector<16x128xf32> -> vector<16x128xf32>
    %cst_14 = arith.constant 0.000000e+00 : f32
    %22 = vector.broadcast %cst_14 : f32 to vector<16x128xf32>
    %23 = arith.maximumf %21, %22 : vector<16x128xf32>
    %c0_15 = arith.constant 0 : index
    %c0_16 = arith.constant 0 : index
    %24 = vector.load %arg7[%c0_15, %c0_16] : memref<16x128xf32, #tpu.memory_space<vmem>>, vector<16x128xf32>
    tpu.vector_store %arg7[%c0_15, %c0_16], %23 {strides = array<i32>} : memref<16x128xf32, #tpu.memory_space<vmem>>, vector<16x128xf32>,
    return
  }
  func.func @transform_0(%arg0: i32) -> (i32, i32) {
    %c0_i32 = arith.constant 0 : i32
    %c0_i32_0 = arith.constant 0 : i32
    return %arg0, %c0_i32 : i32, i32
  }
  func.func @transform_1(%arg0: i32) -> (i32, i32) {
    %c0_i32 = arith.constant 0 : i32
    %c0_i32_0 = arith.constant 0 : i32
    %c0_i32_1 = arith.constant 0 : i32
    return %c0_i32, %c0_i32_0 : i32, i32
  }
  func.func @transform_2(%arg0: i32) -> (i32, i32) {
    %c0_i32 = arith.constant 0 : i32
    %c0_i32_0 = arith.constant 0 : i32
    %c0_i32_1 = arith.constant 0 : i32
    return %c0_i32, %c0_i32_0 : i32, i32
  }
  func.func @transform_3(%arg0: i32) -> (i32, i32) {
    %c0_i32 = arith.constant 0 : i32
    %c0_i32_0 = arith.constant 0 : i32
    %c0_i32_1 = arith.constant 0 : i32
    return %c0_i32, %c0_i32_0 : i32, i32
  }
  func.func @transform_4(%arg0: i32) -> (i32, i32) {
    %c0_i32 = arith.constant 0 : i32
    %c0_i32_0 = arith.constant 0 : i32
    %c0_i32_1 = arith.constant 0 : i32
    return %c0_i32, %c0_i32_0 : i32, i32
  }
  func.func @transform_5(%arg0: i32) -> (i32, i32) {
    %c0_i32 = arith.constant 0 : i32
    %c0_i32_0 = arith.constant 0 : i32
    %c0_i32_1 = arith.constant 0 : i32
    return %c0_i32, %c0_i32_0 : i32, i32
  }
  func.func @transform_6(%arg0: i32) -> (i32, i32) {
    %c0_i32 = arith.constant 0 : i32
    %c0_i32_0 = arith.constant 0 : i32
    return %arg0, %c0_i32 : i32, i32
  }
}

</mosaic_0001>

<llo_original>
// kernel: mask_generator_forward.7
$region0: #{mask_generator_forward.7}
  #allocation0 [shape = 'u32[]', space=smem, size = 0x4, offset = 0x4, fixed_abs, tag = 'smem constant byte address 0x4 - core index']
  #allocation1 [shape = 'u32[144,128]{1,0:T(1,128)}', space=vmem, size = 0x12000, scoped, tag = 'internal scratch']
  #allocation2 [shape = 'f32[1,1]{1,0:T(1,128)}', space=vmem, size = 0x200, scoped, tag = 'scratch operand']
  #allocation3 [shape = 'f32[1,1]{1,0:T(1,128)}', space=vmem, size = 0x200, scoped, tag = 'scratch operand']
  %s0 = inlined_call_operand.vmem [shape: f32[2,24,32], index: 0, kind: input, shape index: {}]
  %s1 = inlined_call_operand.vmem [shape: f32[1,1,32], index: 1, kind: input, shape index: {}]
  %s2 = inlined_call_operand.vmem [shape: f32[1,1,32], index: 2, kind: input, shape index: {}]
  %s3 = inlined_call_operand.vmem [shape: bf16[32,32], index: 3, kind: input, shape index: {}]
  %s4 = inlined_call_operand.vmem [shape: f32[2,24,32], index: 4, kind: output, shape index: {}]
  %s5 = sld [smem:[#allocation0]]
  $region61: #{mask_generator_forward.7} parent=0
    _
  %s7 = ssub.s32 1, %s5
  %s8 = scalar_select 0, %s7, %s5
  loop: start=0, step=1, limit=6
  $region2: #{mask_generator_forward.7} parent=0 // loop_pre_header
    _
  $region3: #{mask_generator_forward.7} parent=0 // loop_header
    %s10 = sphi 0, %s14
    %p11 = scmp.ge.s32.totalorder %s10, 6
    %s17 = sphi 0, %s36
    %s18 = sphi 0, %s32
    %s19 = sphi 0, %s28
    %s20 = sphi 0, %s17
    %s21 = sphi 0, %s18
    %s22 = sphi 0, %s19
    %s23 = sphi 0, %s20
    %s24 = sphi 0, %s21
    %s25 = sphi 0, %s22
    %s41 = sphi 0, %s43
    %s44 = sphi 0, %s41
    %s45 = sphi 0, %s44
    %s61 = sphi 0, %s45
    %s65 = sphi 0, %s65
    %s67 = sphi 0, %s65
    %s68 = sphi 0, %s67
    %s82 = sphi 0, %s68
    %s86 = sphi 0, %s86
    %s88 = sphi 0, %s86
    %s89 = sphi 0, %s88
    %s103 = sphi 0, %s89
    %s107 = sphi 0, %s107
    %s109 = sphi 0, %s107
    %s110 = sphi 0, %s109
    %s124 = sphi 0, %s110
    %s132 = sphi 0, %s134
    %s135 = sphi 0, %s132
    %s136 = sphi 0, %s135
    %s152 = sphi 0, %s136
  $region4: #{mask_generator_forward.7} parent=0 // loop_header_branch
    %13 = sbr.rel (%p11) target = $region8
  $region5: #{mask_generator_forward.7} parent=0 // loop_body
    %s15 = ssub.s32 %s10, 1
    %s16 = ssub.s32 %s10, 2
    %s26 = sadd.s32 1, %s19
    %p27 = scmp.ge.s32.totalorder %s26, 1
    %s28 = scalar_select %p27, 0, %s26
    %s29 = sadd.s32 1, %s18
    %s30 = scalar_select %p27, %s29, %s18
    %p31 = scmp.ge.s32.totalorder %s30, 2
    %s32 = scalar_select %p31, 0, %s30
    %s33 = sadd.s32 1, %s17
    %s34 = scalar_select %p31, %s33, %s17
    %p35 = scmp.ge.s32.totalorder %s34, 2
    %s36 = scalar_select %p35, 0, %s34
    %s37 = ssub.s32 %s17, %s36
    %s38 = ssub.s32 %s19, %s28
    %s39 = sor.u32 %s37, %s38
    %p40 = scmp.eq.s32.totalorder %s39, 0
    %s42 = sadd.s32 %s41, 1
    %s43 = scalar_select %p40, %s41, %s42
    %p46 = pneg %p40
    %p47 = scmp.eq.s32.totalorder %s10, 3
    %p48 = por %p46, %p47
    %p49 = scmp.ne.s32.totalorder %s41, %s44
    %p50 = scmp.eq.s32.totalorder %s10, 0
    %p51 = por %p49, %p50
    %p52 = scmp.ne.s32.totalorder %s41, %s44
    %p53 = scmp.eq.s32.totalorder %s15, 3
    %p54 = por %p52, %p53
    %p55 = scmp.ne.s32.totalorder %s44, %s45
    %p56 = scmp.eq.s32.totalorder %s15, 0
    %p57 = por %p55, %p56
    %p58 = scmp.ne.s32.totalorder %s44, %s45
    %p59 = scmp.eq.s32.totalorder %s16, 3
    %p60 = por %p58, %p59
    %p62 = scmp.ne.s32.totalorder %s45, %s61
    %p63 = scmp.eq.s32.totalorder %s16, 0
    %p64 = por %p62, %p63
    %s66 = sadd.s32 %s65, 1
    %p69 = scmp.eq.s32.totalorder %s10, 3
    %p70 = scmp.ne.s32.totalorder %s65, %s67
    %p71 = scmp.eq.s32.totalorder %s10, 0
    %p72 = por %p70, %p71
    %p73 = scmp.ne.s32.totalorder %s65, %s67
    %p74 = scmp.eq.s32.totalorder %s15, 3
    %p75 = por %p73, %p74
    %p76 = scmp.ne.s32.totalorder %s67, %s68
    %p77 = scmp.eq.s32.totalorder %s15, 0
    %p78 = por %p76, %p77
    %p79 = scmp.ne.s32.totalorder %s67, %s68
    %p80 = scmp.eq.s32.totalorder %s16, 3
    %p81 = por %p79, %p80
    %p83 = scmp.ne.s32.totalorder %s68, %s82
    %p84 = scmp.eq.s32.totalorder %s16, 0
    %p85 = por %p83, %p84
    %s87 = sadd.s32 %s86, 1
    %p90 = scmp.eq.s32.totalorder %s10, 3
    %p91 = scmp.ne.s32.totalorder %s86, %s88
    %p92 = scmp.eq.s32.totalorder %s10, 0
    %p93 = por %p91, %p92
    %p94 = scmp.ne.s32.totalorder %s86, %s88
    %p95 = scmp.eq.s32.totalorder %s15, 3
    %p96 = por %p94, %p95
    %p97 = scmp.ne.s32.totalorder %s88, %s89
    %p98 = scmp.eq.s32.totalorder %s15, 0
    %p99 = por %p97, %p98
    %p100 = scmp.ne.s32.totalorder %s88, %s89
    %p101 = scmp.eq.s32.totalorder %s16, 3
    %p102 = por %p100, %p101
    %p104 = scmp.ne.s32.totalorder %s89, %s103
    %p105 = scmp.eq.s32.totalorder %s16, 0
    %p106 = por %p104, %p105
    %s108 = sadd.s32 %s107, 1
    %p111 = scmp.eq.s32.totalorder %s10, 3
    %p112 = scmp.ne.s32.totalorder %s107, %s109
    %p113 = scmp.eq.s32.totalorder %s10, 0
    %p114 = por %p112, %p113
    %p115 = scmp.ne.s32.totalorder %s107, %s109
    %p116 = scmp.eq.s32.totalorder %s15, 3
    %p117 = por %p115, %p116
    %p118 = scmp.ne.s32.totalorder %s109, %s110
    %p119 = scmp.eq.s32.totalorder %s15, 0
    %p120 = por %p118, %p119
    %p121 = scmp.ne.s32.totalorder %s109, %s110
    %p122 = scmp.eq.s32.totalorder %s16, 3
    %p123 = por %p121, %p122
    %p125 = scmp.ne.s32.totalorder %s110, %s124
    %p126 = scmp.eq.s32.totalorder %s16, 0
    %p127 = por %p125, %p126
    %s128 = ssub.s32 %s17, %s36
    %s129 = ssub.s32 %s19, %s28
    %s130 = sor.u32 %s128, %s129
    %p131 = scmp.eq.s32.totalorder %s130, 0
    %s133 = sadd.s32 %s132, 1
    %s134 = scalar_select %p131, %s132, %s133
    %p137 = pneg %p131
    %p138 = scmp.eq.s32.totalorder %s10, 3
    %p139 = por %p137, %p138
    %p140 = scmp.ne.s32.totalorder %s132, %s135
    %p141 = scmp.eq.s32.totalorder %s10, 0
    %p142 = por %p140, %p141
    %p143 = scmp.ne.s32.totalorder %s132, %s135
    %p144 = scmp.eq.s32.totalorder %s15, 3
    %p145 = por %p143, %p144
    %p146 = scmp.ne.s32.totalorder %s135, %s136
    %p147 = scmp.eq.s32.totalorder %s15, 0
    %p148 = por %p146, %p147
    %p149 = scmp.ne.s32.totalorder %s135, %s136
    %p150 = scmp.eq.s32.totalorder %s16, 3
    %p151 = por %p149, %p150
    %p153 = scmp.ne.s32.totalorder %s136, %s152
    %p154 = scmp.eq.s32.totalorder %s16, 0
    %p155 = por %p153, %p154
    %p156 = scmp.le.s32.totalorder 1, %s10
    %p157 = scmp.lt.s32.totalorder %s10, 5
    %p158 = pnand %p156, %p157
    %p159 = pneg %p158
    // Predicated region
    $region9: #{mask_generator_forward.7} parent=5 // pred_check
      _
    $region10: #{mask_generator_forward.7} parent=5 // pred_check_branch
      %161 = sbr.rel (%p158) target = $region12
    $region11: #{mask_generator_forward.7} parent=5 // pred_region
      %s162 = ssub.s32 %s10, 1
      // Predicated region
      $region13: #{mask_generator_forward.7} parent=11 // pred_check
        %p163 = pneg %p78
      $region14: #{mask_generator_forward.7} parent=11 // pred_check_branch
        %165 = sbr.rel (%p163) target = $region16
      $region15: #{mask_generator_forward.7} parent=11 // pred_region
        _
      $region16: #{mask_generator_forward.7} parent=11 // pred_fallthru
        _
      // Predicated region
      $region17: #{mask_generator_forward.7} parent=11 // pred_check
        %p166 = pneg %p99
      $region18: #{mask_generator_forward.7} parent=11 // pred_check_branch
        %168 = sbr.rel (%p166) target = $region20
      $region19: #{mask_generator_forward.7} parent=11 // pred_region
        _
      $region20: #{mask_generator_forward.7} parent=11 // pred_fallthru
        _
      // Predicated region
      $region21: #{mask_generator_forward.7} parent=11 // pred_check
        %p169 = pneg %p120
      $region22: #{mask_generator_forward.7} parent=11 // pred_check_branch
        %171 = sbr.rel (%p169) target = $region24
      $region23: #{mask_generator_forward.7} parent=11 // pred_region
        _
      $region24: #{mask_generator_forward.7} parent=11 // pred_fallthru
        _
    $region12: #{mask_generator_forward.7} parent=5 // pred_fallthru
      _
    %p172 = scmp.lt.s32.totalorder %s10, 4
    // Predicated region
    $region25: #{mask_generator_forward.7} parent=5 // pred_check
      %p173 = pneg %p172
    $region26: #{mask_generator_forward.7} parent=5 // pred_check_branch
      %175 = sbr.rel (%p173) target = $region28
    $region27: #{mask_generator_forward.7} parent=5 // pred_region
      // Predicated region
      $region29: #{mask_generator_forward.7} parent=27 // pred_check
        %p176 = pneg %p51
      $region30: #{mask_generator_forward.7} parent=27 // pred_check_branch
        %178 = sbr.rel (%p176) target = $region32
      $region31: #{mask_generator_forward.7} parent=27 // pred_region
        %s179 = smul.u32 3, %s19
        %p180 = scmp.lt.s32.totalorder %s17, 1
        %s181 = scalar_select %p180, %s17, 1
        %p182 = scmp.lt.s32.totalorder %s179, 2
        %s183 = scalar_select %p182, %s179, 2
        %s184 = smul.addr %s181, 3
        %s185 = sadd.s32 %s183, %s184
        %s186 = smul.addr %s185, 8
        %s187 = scalar_lea.vmem %s0, %s186
        %s188 = smul.u32 3, %s19
      $region32: #{mask_generator_forward.7} parent=27 // pred_fallthru
        _
    $region28: #{mask_generator_forward.7} parent=5 // pred_fallthru
      _
    %p189 = scmp.le.s32.totalorder 1, %s10
    %p190 = scmp.lt.s32.totalorder %s10, 5
    %p191 = pnand %p189, %p190
    %p192 = pneg %p191
    // Predicated region
    $region33: #{mask_generator_forward.7} parent=5 // pred_check
      _
    $region34: #{mask_generator_forward.7} parent=5 // pred_check_branch
      %194 = sbr.rel (%p191) target = $region36
    $region35: #{mask_generator_forward.7} parent=5 // pred_region
      %s195 = ssub.s32 %s10, 1
      %s196 = smul.u32 3, %s22
      %p197 = scmp.lt.s32.totalorder %s20, 1
      %s198 = scalar_select %p197, %s20, 1
      %p199 = scmp.lt.s32.totalorder %s196, 2
      %s200 = scalar_select %p199, %s196, 2
      %s201 = smul.addr %s198, 3
      %s202 = sadd.s32 %s200, %s201
      %s203 = smul.addr %s202, 8
      %s204 = scalar_lea.vmem %s0, %s203
      %p205 = pneg %p57
      %p206 = pneg %p54
      %p207 = pneg %p78
      %p208 = pneg %p75
      %p209 = pneg %p99
      %p210 = pneg %p96
      %p211 = pneg %p120
      %p212 = pneg %p117
      %p213 = pneg %p148
      %p214 = pneg %p145
      %s215 = smul.u32 3, %s22
      %p216 = scmp.lt.s32.totalorder %s20, 1
      %s217 = scalar_select %p216, %s20, 1
      %p218 = scmp.lt.s32.totalorder %s215, 2
      %s219 = scalar_select %p218, %s215, 2
      %s220 = smul.addr %s217, 3
      %s221 = sadd.s32 %s219, %s220
      %s222 = smul.addr %s221, 8
      %s223 = scalar_lea.vmem %s4, %s222
      %s224 = smul.u32 3, %s22
      %p225 = scmp.lt.s32.totalorder %s20, 1
      %s226 = scalar_select %p225, %s20, 1
      %p227 = scmp.lt.s32.totalorder %s224, 2
      %s228 = scalar_select %p227, %s224, 2
      %s229 = smul.addr %s226, 3
      %s230 = sadd.s32 %s228, %s229
      %s231 = smul.addr %s230, 8
      %s232 = scalar_lea.vmem %s0, %s231
      %s233 = smul.u32 3, %s22
      %s234 = smul.u32 3, %s22
      %p235 = scmp.lt.s32.totalorder %s20, 1
      %s236 = scalar_select %p235, %s20, 1
      %p237 = scmp.lt.s32.totalorder %s234, 2
      %s238 = scalar_select %p237, %s234, 2
      %s239 = smul.addr %s236, 3
      %s240 = sadd.s32 %s238, %s239
      %s241 = smul.addr %s240, 8
      %s242 = scalar_lea.vmem %s4, %s241
      %s243 = smul.u32 3, %s22
      %p245 = scmp.eq.s32.totalorder %s21, 0
      %p246 = scmp.eq.s32.totalorder %s22, 0
      %p247 = pnand %p245, %p246
      %p248 = pneg %p247
      // Predicated region
      $region37: #{mask_generator_forward.7} parent=35 // pred_check
        _
      $region38: #{mask_generator_forward.7} parent=35 // pred_check_branch
        %250 = sbr.rel (%p247) target = $region40
      $region39: #{mask_generator_forward.7} parent=35 // pred_region
        %vm251 = vcmask 0
        %252 = vst.msk [vmem:[#allocation2] sm:$0x1] %vm251, 0.0
        %253 = vst.msk [vmem:[#allocation3] sm:$0x1] %vm251, 0.0
      $region40: #{mask_generator_forward.7} parent=35 // pred_fallthru
        _
      %v254 = vld [vmem:[%s232] sm:$0xff]
      %v255 = vld [vmem:[%s232 + $0x8] sm:$0xff]
      %v256 = vld [vmem:[%s232 + $0x10] sm:$0xff]
      // Predicated region
      $region41: #{mask_generator_forward.7} parent=35 // pred_check
        %p257 = pneg %p245
      $region42: #{mask_generator_forward.7} parent=35 // pred_check_branch
        %259 = sbr.rel (%p257) target = $region44
      $region43: #{mask_generator_forward.7} parent=35 // pred_region
        %v260 = vld [vmem:[#allocation2] sm:$0x1]
        %vm261 = vcmask 261120
        %v262 = vsel %vm261, %v254, 0.0
        %v263 = vsel %vm261, %v255, 0.0
        %v264 = vadd.f32 %v262, %v263
        %v265 = vsel %vm261, %v256, 0.0
        %v266 = vadd.f32 %v264, %v265
        %267 = vadd.xlane.f32.xlu0 %v266
        %v268 = vpop.xlane.xlu0 %267
        %v269 = vrot.slane %v268, 4
        %v270 = vadd.f32 %v268, %v269
        %v271 = vrot.slane %v270, 2
        %v272 = vadd.f32 %v270, %v271
        %v273 = vrot.slane %v272, 1
        %v274 = vadd.f32 %v272, %v273
        %s275 = vtos %v274
        %v276 = vstv %s275
        %v277 = vadd.f32 %v260, %v276
        %vm278 = vcmask 0
        %279 = vst.msk [vmem:[#allocation2] sm:$0x1] %vm278, %v277
        %v280 = vld [vmem:[#allocation3] sm:$0x1]
        %v281 = vmul.f32 %v254, %v254
        %v282 = vmul.f32 %v255, %v255
        %v283 = vmul.f32 %v256, %v256
        %v284 = vsel %vm261, %v281, 0.0
        %v285 = vsel %vm261, %v282, 0.0
        %v286 = vadd.f32 %v284, %v285
        %v287 = vsel %vm261, %v283, 0.0
        %v288 = vadd.f32 %v286, %v287
        %289 = vadd.xlane.f32.xlu0 %v288
        %v290 = vpop.xlane.xlu0 %289
        %v291 = vrot.slane %v290, 4
        %v292 = vadd.f32 %v290, %v291
        %v293 = vrot.slane %v292, 2
        %v294 = vadd.f32 %v292, %v293
        %v295 = vrot.slane %v294, 1
        %v296 = vadd.f32 %v294, %v295
        %s297 = vtos %v296
        %v298 = vstv %s297
        %v299 = vadd.f32 %v280, %v298
        %300 = vst.msk [vmem:[#allocation3] sm:$0x1] %vm278, %v299
        %301 = vst.msk [vmem:[%s242] sm:$0xff] %vm261, 0.0
        %302 = vst.msk [vmem:[%s242 + $0x8] sm:$0xff] %vm261, 0.0
        %303 = vst.msk [vmem:[%s242 + $0x10] sm:$0xff] %vm261, 0.0
      $region44: #{mask_generator_forward.7} parent=35 // pred_fallthru
        _
      %p304 = scmp.eq.s32.totalorder %s21, 1
      // Predicated region
      $region45: #{mask_generator_forward.7} parent=35 // pred_check
        %p305 = pneg %p304
      $region46: #{mask_generator_forward.7} parent=35 // pred_check_branch
        %307 = sbr.rel (%p305) target = $region48
      $region47: #{mask_generator_forward.7} parent=35 // pred_region
        %v308 = vld [vmem:[#allocation2] sm:$0x1]
        %v309 = vmul.f32 %v308, 0.0015625
        %v310 = vld [vmem:[#allocation3] sm:$0x1]
        %v311 = vmul.f32 %v310, 0.0015625
        %v312 = vmul.f32 %v309, %v309
        %v313 = vsub.f32 %v311, %v312
        %v314 = vmax.f32 %v313, 0.0
        %v316 = vlaneseq
        %v317 = vshrl.u32 %v316, 7
        %v318 = vsub.s32 0, %v317
        %v319 = vrot.slane %v309, %v318
        %320 = vset.pattern.permute.xlu0 0
        %321 = vperm.xlu0 %320, %v319
        %v322 = vpop.permute.xlu0 %321
        %v324 = vsub.f32 %v254, %v322
        %v325 = vsub.f32 %v255, %v322
        %v326 = vsub.f32 %v256, %v322
        %v327 = vadd.f32 %v314, 1e-08
        %v328 = vrsqrt.pop %v327
        %v330 = vlaneseq
        %v331 = vshrl.u32 %v330, 7
        %v332 = vsub.s32 0, %v331
        %v333 = vrot.slane %v328, %v332
        %334 = vset.pattern.permute.xlu0 0
        %335 = vperm.xlu0 %334, %v333
        %v336 = vpop.permute.xlu0 %335
        %v338 = vmul.f32 %v324, %v336
        %v339 = vmul.f32 %v325, %v336
        %v340 = vmul.f32 %v326, %v336
        %v341 = vld [vmem:[%s1] sm:$0x1]
        %v343 = vlaneseq
        %v344 = vshrl.u32 %v343, 7
        %v345 = vsub.s32 0, %v344
        %v346 = vrot.slane %v341, %v345
        %v348 = vmul.f32 %v338, %v346
        %v349 = vmul.f32 %v339, %v346
        %v350 = vmul.f32 %v340, %v346
        %v351 = vld [vmem:[%s2] sm:$0x1]
        %v353 = vlaneseq
        %v354 = vshrl.u32 %v353, 7
        %v355 = vsub.s32 0, %v354
        %v356 = vrot.slane %v351, %v355
        %v358 = vadd.f32 %v348, %v356
        %v359 = vadd.f32 %v349, %v356
        %v360 = vadd.f32 %v350, %v356
        %v361 = vpack.c.bf16 %v359, %v358
        %v362 = vpack.c.bf16 %v360, %v360
        %v363 = vld [vmem:[%s3] sm:$0xf]
        %v364 = vld [vmem:[%s3 + $0x4] sm:$0xf]
        %v365 = vld [vmem:[%s3 + $0x8] sm:$0xf]
        %v366 = vld [vmem:[%s3 + $0xc] sm:$0xf]
        %v371 = vunpack.c.l.b16 %v363
        %v372 = vunpack.c.l.b16 %v364
        %v373 = vunpack.c.l.b16 %v365
        %v374 = vunpack.c.l.b16 %v366
        %v375 = vpack.c.b16 %v372, %v371
        %v376 = vpack.c.b16 %v374, %v373
        %vm379 = vcmask 261120
        %v381 = vsel %vm379, %v361, 0
        %v384 = vsel %vm379, %v362, 0
        %386 = vmatprep.subr.bf16.mxu0 0
        %387 = vmatpush1.bf16.msra.mxu0 0
        %388 = vmatprep.subr.bf16.mxu0 0
        %389 = vmatpush1.bf16.msra.mxu0 0
        %390 = vmatprep.subr.bf16.mxu0 0
        %391 = vmatpush1.bf16.msra.mxu0 0
        %392 = vmatprep.subr.bf16.mxu0 0
        %393 = vmatpush1.bf16.msra.mxu0 0
        %394 = vmatprep.subr.bf16.mxu0 0
        %395 = vmatpush1.bf16.msra.mxu0 0
        %396 = vmatprep.subr.bf16.mxu0 0
        %397 = vmatpush1.bf16.msra.mxu0 0
        %398 = vmatprep.subr.bf16.mxu0 0
        %399 = vmatpush1.bf16.msra.mxu0 %v376
        %400 = vmatprep.subr.bf16.mxu0 0
        %401 = vmatpush1.bf16.msra.mxu0 %v375
        %402 = vmatprep.subr.bf16.mxu0 0
        %403 = vmatpush2.bf16.msra.mxu0 0
        %404 = vmatprep.subr.bf16.mxu0 0
        %405 = vmatpush2.bf16.msra.mxu0 0
        %406 = vmatprep.subr.bf16.mxu0 0
        %407 = vmatpush2.bf16.msra.mxu0 0
        %408 = vmatprep.subr.bf16.mxu0 0
        %409 = vmatpush2.bf16.msra.mxu0 0
        %410 = vmatprep.subr.bf16.mxu0 0
        %411 = vmatpush2.bf16.msra.mxu0 0
        %412 = vmatprep.subr.bf16.mxu0 0
        %413 = vmatpush2.bf16.msra.mxu0 0
        %414 = vmatprep.subr.bf16.mxu0 0
        %415 = vmatpush2.bf16.msra.mxu0 0
        %416 = vmatprep.subr.bf16.mxu0 0
        %417 = vmatpush2.bf16.msra.mxu0 0
        %418 = vmatprep.mubr.bf16.mxu0 0
        %419 = vmatmul.mubr.bf16.gmra.mxu0 %v381
        %v420 = vpop.f32.mrf.mxu0
        %v421 = vadd.f32 0.0, %v420
        %v422 = vpop.f32.mrf.mxu0
        %v423 = vpop.f32.mrf.mxu0
        %v424 = vadd.f32 0.0, %v423
        %v425 = vpop.f32.mrf.mxu0
        %426 = vmatprep.mubr.bf16.mxu0 0
        %427 = vmatmul.mubr.bf16.gmra.mxu0 %v384
        %v428 = vpop.f32.mrf.mxu0
        %v429 = vadd.f32 0.0, %v428
        %v430 = vpop.f32.mrf.mxu0
        %v431 = vpop.f32.mrf.mxu0
        %v432 = vpop.f32.mrf.mxu0
        %433 = vdwg.mxu0
        %434 = vst.msk [vmem:[%s242] sm:$0xff] %vm379, %v421
        %435 = vst.msk [vmem:[%s242 + $0x8] sm:$0xff] %vm379, %v424
        %436 = vst.msk [vmem:[%s242 + $0x10] sm:$0xff] %vm379, %v429
      $region48: #{mask_generator_forward.7} parent=35 // pred_fallthru
        _
      %s437 = smul.u32 3, %s22
      %p438 = scmp.lt.s32.totalorder %s20, 1
      %s439 = scalar_select %p438, %s20, 1
      %p440 = scmp.lt.s32.totalorder %s437, 2
      %s441 = scalar_select %p440, %s437, 2
      %s442 = smul.addr %s439, 3
      %s443 = sadd.s32 %s441, %s442
      %s444 = smul.addr %s443, 8
      %s445 = scalar_lea.vmem %s4, %s444
      // Predicated region
      $region49: #{mask_generator_forward.7} parent=35 // pred_check
        %p446 = pneg %p145
      $region50: #{mask_generator_forward.7} parent=35 // pred_check_branch
        %448 = sbr.rel (%p446) target = $region52
      $region51: #{mask_generator_forward.7} parent=35 // pred_region
        %s449 = smul.u32 3, %s22
      $region52: #{mask_generator_forward.7} parent=35 // pred_fallthru
        _
    $region36: #{mask_generator_forward.7} parent=5 // pred_fallthru
      _
    %p450 = scmp.le.s32.totalorder 2, %s10
    // Predicated region
    $region53: #{mask_generator_forward.7} parent=5 // pred_check
      %p451 = pneg %p450
    $region54: #{mask_generator_forward.7} parent=5 // pred_check_branch
      %453 = sbr.rel (%p451) target = $region56
    $region55: #{mask_generator_forward.7} parent=5 // pred_region
      %s454 = ssub.s32 %s10, 2
      // Predicated region
      $region57: #{mask_generator_forward.7} parent=55 // pred_check
        %p455 = pneg %p151
      $region58: #{mask_generator_forward.7} parent=55 // pred_check_branch
        %457 = sbr.rel (%p455) target = $region60
      $region59: #{mask_generator_forward.7} parent=55 // pred_region
        %s458 = smul.u32 3, %s25
        %p459 = scmp.lt.s32.totalorder %s23, 1
        %s460 = scalar_select %p459, %s23, 1
        %p461 = scmp.lt.s32.totalorder %s458, 2
        %s462 = scalar_select %p461, %s458, 2
        %s463 = smul.addr %s460, 3
        %s464 = sadd.s32 %s462, %s463
        %s465 = smul.addr %s464, 8
        %s466 = scalar_lea.vmem %s4, %s465
      $region60: #{mask_generator_forward.7} parent=55 // pred_fallthru
        _
    $region56: #{mask_generator_forward.7} parent=5 // pred_fallthru
      _
  $region6: #{mask_generator_forward.7} parent=0 // loop_footer
    %s14 = sadd.s32 1, %s10
  $region7: #{mask_generator_forward.7} parent=0 // loop_footer_branch
    %9 = sbr.rel target = $region3
  $region8: #{mask_generator_forward.7} parent=0 // loop_exit
    _

// kernel: tile.18
$region0: #{tile.18}
  #allocation0 [shape = 's32[1]{0}', space=sflag, size = 0x4, scoped, tag = 'scoped memory for tile.18']
  %s0 = inlined_call_operand.vmem [shape: f32[64], index: 0, kind: input, shape index: {}]
  %s1 = inlined_call_operand.vmem [shape: f32[4,64], index: 1, kind: output, shape index: {}]
  // Predicated region
  $region2: #{tile.18} parent=0 // pred_check
    _
  $region3: #{tile.18} parent=0 // pred_check_branch
    %3 = sbr.rel (0) target = $region5
  $region4: #{tile.18} parent=0 // pred_region
    _
  $region5: #{tile.18} parent=0 // pred_fallthru
    _
  %v4 = vld [vmem:[%s0] ss:$0 sm:$0xff]
  %5 = vst [vmem:[%s1] sm:$0xf] %v4

// kernel: tile.19
$region0: #{tile.19}
  %s0 = inlined_call_operand.vmem [shape: f32[4,64], index: 0, kind: input, shape index: {}]
  %s1 = inlined_call_operand.vmem [shape: f32[1,256], index: 1, kind: output, shape index: {}]
  $region1: #{tile.19} parent=0
    #allocation0 [shape = 'u8[8192]{0}', space=vmem, size = 0x2000, scoped, tag = 'scoped mem for output reshape']
    #allocation1 [shape = 'u8[4096]{0}', space=vmem, size = 0x1000, scoped, tag = 'scoped mem for input reshape']
    %s3 = sshll.u32 1, 4
    %s4 = ssub.s32 %s3, 1
    %v5 = vld [vmem:[%s0] sm:%s4]
    %6 = vst [vmem:[#allocation1] sm:%s4] %v5
    %s7 = smov 3
    %v8 = vld [vmem:[#allocation1] ss:$2 sm:%s7]
    %vm9 = vcmask 523264
    %10 = vst.msk [vmem:[#allocation0] ss:$8 sm:$0x3] %vm9, %v8
    %s11 = scalar_lea.vmem [#allocation1], 1
    %s12 = smov 3
    %v13 = vld [vmem:[%s11] ss:$2 sm:%s12]
    %14 = vrot.lane.b32.xlu0 %v13, 64
    %v15 = vpop.permute.xlu0 %14
    %vm16 = vcmask 1048064
    %17 = vst.msk [vmem:[#allocation0] ss:$8 sm:$0x3] %vm16, %v15
    %s19 = sshll.u32 1, 1
    %s20 = ssub.s32 %s19, 1
    %v22 = vld [vmem:[#allocation0] sm:%s20]
    %s23 = sshll.u32 1, 1
    %s24 = ssub.s32 %s23, 1
    %25 = vst [vmem:[%s1] sm:%s24] %v22
    %s26 = scalar_lea.vmem [#allocation0], 8
    %v27 = vld [vmem:[%s26] sm:%s20]
    %s28 = sshll.u32 1, 1
    %s29 = ssub.s32 %s28, 1
    %s30 = scalar_lea.vmem %s1, 1
    %31 = vst [vmem:[%s30] sm:%s29] %v27

// kernel: mask_generator_forward.9
$region0: #{mask_generator_forward.9}
  #allocation0 [shape = 'u32[]', space=smem, size = 0x4, offset = 0x4, fixed_abs, tag = 'smem constant byte address 0x4 - core index']
  #allocation1 [shape = 'u32[144,128]{1,0:T(1,128)}', space=vmem, size = 0x12000, scoped, tag = 'internal scratch']
  #allocation2 [shape = 'f32[1,1]{1,0:T(1,128)}', space=vmem, size = 0x200, scoped, tag = 'scratch operand']
  #allocation3 [shape = 'f32[1,1]{1,0:T(1,128)}', space=vmem, size = 0x200, scoped, tag = 'scratch operand']
  %s0 = inlined_call_operand.vmem [shape: f32[2,64,32], index: 0, kind: input, shape index: {}]
  %s1 = inlined_call_operand.vmem [shape: f32[1,1,32], index: 1, kind: input, shape index: {}]
  %s2 = inlined_call_operand.vmem [shape: f32[1,1,32], index: 2, kind: input, shape index: {}]
  %s3 = inlined_call_operand.vmem [shape: f32[2,64,32], index: 3, kind: input, shape index: {}]
  %s4 = inlined_call_operand.vmem [shape: f32[2,64,32], index: 4, kind: output, shape index: {}]
  %s5 = sld [smem:[#allocation0]]
  $region61: #{mask_generator_forward.9} parent=0
    _
  %s7 = ssub.s32 1, %s5
  %s8 = scalar_select 0, %s7, %s5
  loop: start=0, step=1, limit=6
  $region2: #{mask_generator_forward.9} parent=0 // loop_pre_header
    _
  $region3: #{mask_generator_forward.9} parent=0 // loop_header
    %s10 = sphi 0, %s14
    %p11 = scmp.ge.s32.totalorder %s10, 6
    %s17 = sphi 0, %s36
    %s18 = sphi 0, %s32
    %s19 = sphi 0, %s28
    %s20 = sphi 0, %s17
    %s21 = sphi 0, %s18
    %s22 = sphi 0, %s19
    %s23 = sphi 0, %s20
    %s24 = sphi 0, %s21
    %s25 = sphi 0, %s22
    %s41 = sphi 0, %s43
    %s44 = sphi 0, %s41
    %s45 = sphi 0, %s44
    %s61 = sphi 0, %s45
    %s65 = sphi 0, %s65
    %s67 = sphi 0, %s65
    %s68 = sphi 0, %s67
    %s82 = sphi 0, %s68
    %s86 = sphi 0, %s86
    %s88 = sphi 0, %s86
    %s89 = sphi 0, %s88
    %s103 = sphi 0, %s89
    %s111 = sphi 0, %s113
    %s114 = sphi 0, %s111
    %s115 = sphi 0, %s114
    %s131 = sphi 0, %s115
    %s139 = sphi 0, %s141
    %s142 = sphi 0, %s139
    %s143 = sphi 0, %s142
    %s159 = sphi 0, %s143
  $region4: #{mask_generator_forward.9} parent=0 // loop_header_branch
    %13 = sbr.rel (%p11) target = $region8
  $region5: #{mask_generator_forward.9} parent=0 // loop_body
    %s15 = ssub.s32 %s10, 1
    %s16 = ssub.s32 %s10, 2
    %s26 = sadd.s32 1, %s19
    %p27 = scmp.ge.s32.totalorder %s26, 1
    %s28 = scalar_select %p27, 0, %s26
    %s29 = sadd.s32 1, %s18
    %s30 = scalar_select %p27, %s29, %s18
    %p31 = scmp.ge.s32.totalorder %s30, 2
    %s32 = scalar_select %p31, 0, %s30
    %s33 = sadd.s32 1, %s17
    %s34 = scalar_select %p31, %s33, %s17
    %p35 = scmp.ge.s32.totalorder %s34, 2
    %s36 = scalar_select %p35, 0, %s34
    %s37 = ssub.s32 %s17, %s36
    %s38 = ssub.s32 %s19, %s28
    %s39 = sor.u32 %s37, %s38
    %p40 = scmp.eq.s32.totalorder %s39, 0
    %s42 = sadd.s32 %s41, 1
    %s43 = scalar_select %p40, %s41, %s42
    %p46 = pneg %p40
    %p47 = scmp.eq.s32.totalorder %s10, 3
    %p48 = por %p46, %p47
    %p49 = scmp.ne.s32.totalorder %s41, %s44
    %p50 = scmp.eq.s32.totalorder %s10, 0
    %p51 = por %p49, %p50
    %p52 = scmp.ne.s32.totalorder %s41, %s44
    %p53 = scmp.eq.s32.totalorder %s15, 3
    %p54 = por %p52, %p53
    %p55 = scmp.ne.s32.totalorder %s44, %s45
    %p56 = scmp.eq.s32.totalorder %s15, 0
    %p57 = por %p55, %p56
    %p58 = scmp.ne.s32.totalorder %s44, %s45
    %p59 = scmp.eq.s32.totalorder %s16, 3
    %p60 = por %p58, %p59
    %p62 = scmp.ne.s32.totalorder %s45, %s61
    %p63 = scmp.eq.s32.totalorder %s16, 0
    %p64 = por %p62, %p63
    %s66 = sadd.s32 %s65, 1
    %p69 = scmp.eq.s32.totalorder %s10, 3
    %p70 = scmp.ne.s32.totalorder %s65, %s67
    %p71 = scmp.eq.s32.totalorder %s10, 0
    %p72 = por %p70, %p71
    %p73 = scmp.ne.s32.totalorder %s65, %s67
    %p74 = scmp.eq.s32.totalorder %s15, 3
    %p75 = por %p73, %p74
    %p76 = scmp.ne.s32.totalorder %s67, %s68
    %p77 = scmp.eq.s32.totalorder %s15, 0
    %p78 = por %p76, %p77
    %p79 = scmp.ne.s32.totalorder %s67, %s68
    %p80 = scmp.eq.s32.totalorder %s16, 3
    %p81 = por %p79, %p80
    %p83 = scmp.ne.s32.totalorder %s68, %s82
    %p84 = scmp.eq.s32.totalorder %s16, 0
    %p85 = por %p83, %p84
    %s87 = sadd.s32 %s86, 1
    %p90 = scmp.eq.s32.totalorder %s10, 3
    %p91 = scmp.ne.s32.totalorder %s86, %s88
    %p92 = scmp.eq.s32.totalorder %s10, 0
    %p93 = por %p91, %p92
    %p94 = scmp.ne.s32.totalorder %s86, %s88
    %p95 = scmp.eq.s32.totalorder %s15, 3
    %p96 = por %p94, %p95
    %p97 = scmp.ne.s32.totalorder %s88, %s89
    %p98 = scmp.eq.s32.totalorder %s15, 0
    %p99 = por %p97, %p98
    %p100 = scmp.ne.s32.totalorder %s88, %s89
    %p101 = scmp.eq.s32.totalorder %s16, 3
    %p102 = por %p100, %p101
    %p104 = scmp.ne.s32.totalorder %s89, %s103
    %p105 = scmp.eq.s32.totalorder %s16, 0
    %p106 = por %p104, %p105
    %s107 = ssub.s32 %s17, %s36
    %s108 = ssub.s32 %s19, %s28
    %s109 = sor.u32 %s107, %s108
    %p110 = scmp.eq.s32.totalorder %s109, 0
    %s112 = sadd.s32 %s111, 1
    %s113 = scalar_select %p110, %s111, %s112
    %p116 = pneg %p110
    %p117 = scmp.eq.s32.totalorder %s10, 3
    %p118 = por %p116, %p117
    %p119 = scmp.ne.s32.totalorder %s111, %s114
    %p120 = scmp.eq.s32.totalorder %s10, 0
    %p121 = por %p119, %p120
    %p122 = scmp.ne.s32.totalorder %s111, %s114
    %p123 = scmp.eq.s32.totalorder %s15, 3
    %p124 = por %p122, %p123
    %p125 = scmp.ne.s32.totalorder %s114, %s115
    %p126 = scmp.eq.s32.totalorder %s15, 0
    %p127 = por %p125, %p126
    %p128 = scmp.ne.s32.totalorder %s114, %s115
    %p129 = scmp.eq.s32.totalorder %s16, 3
    %p130 = por %p128, %p129
    %p132 = scmp.ne.s32.totalorder %s115, %s131
    %p133 = scmp.eq.s32.totalorder %s16, 0
    %p134 = por %p132, %p133
    %s135 = ssub.s32 %s17, %s36
    %s136 = ssub.s32 %s19, %s28
    %s137 = sor.u32 %s135, %s136
    %p138 = scmp.eq.s32.totalorder %s137, 0
    %s140 = sadd.s32 %s139, 1
    %s141 = scalar_select %p138, %s139, %s140
    %p144 = pneg %p138
    %p145 = scmp.eq.s32.totalorder %s10, 3
    %p146 = por %p144, %p145
    %p147 = scmp.ne.s32.totalorder %s139, %s142
    %p148 = scmp.eq.s32.totalorder %s10, 0
    %p149 = por %p147, %p148
    %p150 = scmp.ne.s32.totalorder %s139, %s142
    %p151 = scmp.eq.s32.totalorder %s15, 3
    %p152 = por %p150, %p151
    %p153 = scmp.ne.s32.totalorder %s142, %s143
    %p154 = scmp.eq.s32.totalorder %s15, 0
    %p155 = por %p153, %p154
    %p156 = scmp.ne.s32.totalorder %s142, %s143
    %p157 = scmp.eq.s32.totalorder %s16, 3
    %p158 = por %p156, %p157
    %p160 = scmp.ne.s32.totalorder %s143, %s159
    %p161 = scmp.eq.s32.totalorder %s16, 0
    %p162 = por %p160, %p161
    %p163 = scmp.le.s32.totalorder 1, %s10
    %p164 = scmp.lt.s32.totalorder %s10, 5
    %p165 = pnand %p163, %p164
    %p166 = pneg %p165
    // Predicated region
    $region9: #{mask_generator_forward.9} parent=5 // pred_check
      _
    $region10: #{mask_generator_forward.9} parent=5 // pred_check_branch
      %168 = sbr.rel (%p165) target = $region12
    $region11: #{mask_generator_forward.9} parent=5 // pred_region
      %s169 = ssub.s32 %s10, 1
      // Predicated region
      $region13: #{mask_generator_forward.9} parent=11 // pred_check
        %p170 = pneg %p78
      $region14: #{mask_generator_forward.9} parent=11 // pred_check_branch
        %172 = sbr.rel (%p170) target = $region16
      $region15: #{mask_generator_forward.9} parent=11 // pred_region
        _
      $region16: #{mask_generator_forward.9} parent=11 // pred_fallthru
        _
      // Predicated region
      $region17: #{mask_generator_forward.9} parent=11 // pred_check
        %p173 = pneg %p99
      $region18: #{mask_generator_forward.9} parent=11 // pred_check_branch
        %175 = sbr.rel (%p173) target = $region20
      $region19: #{mask_generator_forward.9} parent=11 // pred_region
        _
      $region20: #{mask_generator_forward.9} parent=11 // pred_fallthru
        _
    $region12: #{mask_generator_forward.9} parent=5 // pred_fallthru
      _
    %p176 = scmp.lt.s32.totalorder %s10, 4
    // Predicated region
    $region21: #{mask_generator_forward.9} parent=5 // pred_check
      %p177 = pneg %p176
    $region22: #{mask_generator_forward.9} parent=5 // pred_check_branch
      %179 = sbr.rel (%p177) target = $region24
    $region23: #{mask_generator_forward.9} parent=5 // pred_region
      // Predicated region
      $region25: #{mask_generator_forward.9} parent=23 // pred_check
        %p180 = pneg %p51
      $region26: #{mask_generator_forward.9} parent=23 // pred_check_branch
        %182 = sbr.rel (%p180) target = $region28
      $region27: #{mask_generator_forward.9} parent=23 // pred_region
        %s183 = smul.u32 8, %s19
        %p184 = scmp.lt.s32.totalorder %s17, 1
        %s185 = scalar_select %p184, %s17, 1
        %p186 = scmp.lt.s32.totalorder %s183, 7
        %s187 = scalar_select %p186, %s183, 7
        %s188 = smul.addr %s185, 8
        %s189 = sadd.s32 %s187, %s188
        %s190 = smul.addr %s189, 8
        %s191 = scalar_lea.vmem %s0, %s190
        %s192 = smul.u32 8, %s19
      $region28: #{mask_generator_forward.9} parent=23 // pred_fallthru
        _
      // Predicated region
      $region29: #{mask_generator_forward.9} parent=23 // pred_check
        %p193 = pneg %p121
      $region30: #{mask_generator_forward.9} parent=23 // pred_check_branch
        %195 = sbr.rel (%p193) target = $region32
      $region31: #{mask_generator_forward.9} parent=23 // pred_region
        %s196 = smul.u32 8, %s19
        %p197 = scmp.lt.s32.totalorder %s17, 1
        %s198 = scalar_select %p197, %s17, 1
        %p199 = scmp.lt.s32.totalorder %s196, 7
        %s200 = scalar_select %p199, %s196, 7
        %s201 = smul.addr %s198, 8
        %s202 = sadd.s32 %s200, %s201
        %s203 = smul.addr %s202, 8
        %s204 = scalar_lea.vmem %s3, %s203
        %s205 = smul.u32 8, %s19
      $region32: #{mask_generator_forward.9} parent=23 // pred_fallthru
        _
    $region24: #{mask_generator_forward.9} parent=5 // pred_fallthru
      _
    %p206 = scmp.le.s32.totalorder 1, %s10
    %p207 = scmp.lt.s32.totalorder %s10, 5
    %p208 = pnand %p206, %p207
    %p209 = pneg %p208
    // Predicated region
    $region33: #{mask_generator_forward.9} parent=5 // pred_check
      _
    $region34: #{mask_generator_forward.9} parent=5 // pred_check_branch
      %211 = sbr.rel (%p208) target = $region36
    $region35: #{mask_generator_forward.9} parent=5 // pred_region
      %s212 = ssub.s32 %s10, 1
      %s213 = smul.u32 8, %s22
      %p214 = scmp.lt.s32.totalorder %s20, 1
      %s215 = scalar_select %p214, %s20, 1
      %p216 = scmp.lt.s32.totalorder %s213, 7
      %s217 = scalar_select %p216, %s213, 7
      %s218 = smul.addr %s215, 8
      %s219 = sadd.s32 %s217, %s218
      %s220 = smul.addr %s219, 8
      %s221 = scalar_lea.vmem %s0, %s220
      %p222 = pneg %p57
      %p223 = pneg %p54
      %p224 = pneg %p78
      %p225 = pneg %p75
      %p226 = pneg %p99
      %p227 = pneg %p96
      %s228 = smul.u32 8, %s22
      %p229 = scmp.lt.s32.totalorder %s20, 1
      %s230 = scalar_select %p229, %s20, 1
      %p231 = scmp.lt.s32.totalorder %s228, 7
      %s232 = scalar_select %p231, %s228, 7
      %s233 = smul.addr %s230, 8
      %s234 = sadd.s32 %s232, %s233
      %s235 = smul.addr %s234, 8
      %s236 = scalar_lea.vmem %s3, %s235
      %p237 = pneg %p127
      %p238 = pneg %p124
      %p239 = pneg %p155
      %p240 = pneg %p152
      %s241 = smul.u32 8, %s22
      %p242 = scmp.lt.s32.totalorder %s20, 1
      %s243 = scalar_select %p242, %s20, 1
      %p244 = scmp.lt.s32.totalorder %s241, 7
      %s245 = scalar_select %p244, %s241, 7
      %s246 = smul.addr %s243, 8
      %s247 = sadd.s32 %s245, %s246
      %s248 = smul.addr %s247, 8
      %s249 = scalar_lea.vmem %s4, %s248
      %s250 = smul.u32 8, %s22
      %p251 = scmp.lt.s32.totalorder %s20, 1
      %s252 = scalar_select %p251, %s20, 1
      %p253 = scmp.lt.s32.totalorder %s250, 7
      %s254 = scalar_select %p253, %s250, 7
      %s255 = smul.addr %s252, 8
      %s256 = sadd.s32 %s254, %s255
      %s257 = smul.addr %s256, 8
      %s258 = scalar_lea.vmem %s0, %s257
      %s259 = smul.u32 8, %s22
      %s260 = smul.u32 8, %s22
      %p261 = scmp.lt.s32.totalorder %s20, 1
      %s262 = scalar_select %p261, %s20, 1
      %p263 = scmp.lt.s32.totalorder %s260, 7
      %s264 = scalar_select %p263, %s260, 7
      %s265 = smul.addr %s262, 8
      %s266 = sadd.s32 %s264, %s265
      %s267 = smul.addr %s266, 8
      %s268 = scalar_lea.vmem %s3, %s267
      %s269 = smul.u32 8, %s22
      %s270 = smul.u32 8, %s22
      %p271 = scmp.lt.s32.totalorder %s20, 1
      %s272 = scalar_select %p271, %s20, 1
      %p273 = scmp.lt.s32.totalorder %s270, 7
      %s274 = scalar_select %p273, %s270, 7
      %s275 = smul.addr %s272, 8
      %s276 = sadd.s32 %s274, %s275
      %s277 = smul.addr %s276, 8
      %s278 = scalar_lea.vmem %s4, %s277
      %s279 = smul.u32 8, %s22
      %p280 = scmp.eq.s32.totalorder %s21, 0
      %p281 = scmp.eq.s32.totalorder %s22, 0
      %p282 = pnand %p280, %p281
      %p283 = pneg %p282
      // Predicated region
      $region37: #{mask_generator_forward.9} parent=35 // pred_check
        _
      $region38: #{mask_generator_forward.9} parent=35 // pred_check_branch
        %285 = sbr.rel (%p282) target = $region40
      $region39: #{mask_generator_forward.9} parent=35 // pred_region
        %vm286 = vcmask 0
        %287 = vst.msk [vmem:[#allocation2] sm:$0x1] %vm286, 0.0
        %288 = vst.msk [vmem:[#allocation3] sm:$0x1] %vm286, 0.0
      $region40: #{mask_generator_forward.9} parent=35 // pred_fallthru
        _
      %v289 = vld [vmem:[%s258] sm:$0xff]
      %v290 = vld [vmem:[%s258 + $0x8] sm:$0xff]
      %v291 = vld [vmem:[%s258 + $0x10] sm:$0xff]
      %v292 = vld [vmem:[%s258 + $0x18] sm:$0xff]
      %v293 = vld [vmem:[%s258 + $0x20] sm:$0xff]
      %v294 = vld [vmem:[%s258 + $0x28] sm:$0xff]
      %v295 = vld [vmem:[%s258 + $0x30] sm:$0xff]
      %v296 = vld [vmem:[%s258 + $0x38] sm:$0xff]
      // Predicated region
      $region41: #{mask_generator_forward.9} parent=35 // pred_check
        %p297 = pneg %p280
      $region42: #{mask_generator_forward.9} parent=35 // pred_check_branch
        %299 = sbr.rel (%p297) target = $region44
      $region43: #{mask_generator_forward.9} parent=35 // pred_region
        %v300 = vld [vmem:[#allocation2] sm:$0x1]
        %vm301 = vcmask 261120
        %v302 = vsel %vm301, %v289, 0.0
        %v303 = vsel %vm301, %v290, 0.0
        %v304 = vadd.f32 %v302, %v303
        %v305 = vsel %vm301, %v291, 0.0
        %v306 = vadd.f32 %v304, %v305
        %v307 = vsel %vm301, %v292, 0.0
        %v308 = vadd.f32 %v306, %v307
        %v309 = vsel %vm301, %v293, 0.0
        %v310 = vadd.f32 %v308, %v309
        %v311 = vsel %vm301, %v294, 0.0
        %v312 = vadd.f32 %v310, %v311
        %v313 = vsel %vm301, %v295, 0.0
        %v314 = vadd.f32 %v312, %v313
        %v315 = vsel %vm301, %v296, 0.0
        %v316 = vadd.f32 %v314, %v315
        %317 = vadd.xlane.f32.xlu0 %v316
        %v318 = vpop.xlane.xlu0 %317
        %v319 = vrot.slane %v318, 4
        %v320 = vadd.f32 %v318, %v319
        %v321 = vrot.slane %v320, 2
        %v322 = vadd.f32 %v320, %v321
        %v323 = vrot.slane %v322, 1
        %v324 = vadd.f32 %v322, %v323
        %s325 = vtos %v324
        %v326 = vstv %s325
        %v327 = vadd.f32 %v300, %v326
        %vm328 = vcmask 0
        %329 = vst.msk [vmem:[#allocation2] sm:$0x1] %vm328, %v327
        %v330 = vld [vmem:[#allocation3] sm:$0x1]
        %v331 = vmul.f32 %v289, %v289
        %v332 = vmul.f32 %v290, %v290
        %v333 = vmul.f32 %v291, %v291
        %v334 = vmul.f32 %v292, %v292
        %v335 = vmul.f32 %v293, %v293
        %v336 = vmul.f32 %v294, %v294
        %v337 = vmul.f32 %v295, %v295
        %v338 = vmul.f32 %v296, %v296
        %v339 = vsel %vm301, %v331, 0.0
        %v340 = vsel %vm301, %v332, 0.0
        %v341 = vadd.f32 %v339, %v340
        %v342 = vsel %vm301, %v333, 0.0
        %v343 = vadd.f32 %v341, %v342
        %v344 = vsel %vm301, %v334, 0.0
        %v345 = vadd.f32 %v343, %v344
        %v346 = vsel %vm301, %v335, 0.0
        %v347 = vadd.f32 %v345, %v346
        %v348 = vsel %vm301, %v336, 0.0
        %v349 = vadd.f32 %v347, %v348
        %v350 = vsel %vm301, %v337, 0.0
        %v351 = vadd.f32 %v349, %v350
        %v352 = vsel %vm301, %v338, 0.0
        %v353 = vadd.f32 %v351, %v352
        %354 = vadd.xlane.f32.xlu0 %v353
        %v355 = vpop.xlane.xlu0 %354
        %v356 = vrot.slane %v355, 4
        %v357 = vadd.f32 %v355, %v356
        %v358 = vrot.slane %v357, 2
        %v359 = vadd.f32 %v357, %v358
        %v360 = vrot.slane %v359, 1
        %v361 = vadd.f32 %v359, %v360
        %s362 = vtos %v361
        %v363 = vstv %s362
        %v364 = vadd.f32 %v330, %v363
        %365 = vst.msk [vmem:[#allocation3] sm:$0x1] %vm328, %v364
        %366 = vst.msk [vmem:[%s278] sm:$0xff] %vm301, 0.0
        %367 = vst.msk [vmem:[%s278 + $0x8] sm:$0xff] %vm301, 0.0
        %368 = vst.msk [vmem:[%s278 + $0x10] sm:$0xff] %vm301, 0.0
        %369 = vst.msk [vmem:[%s278 + $0x18] sm:$0xff] %vm301, 0.0
        %370 = vst.msk [vmem:[%s278 + $0x20] sm:$0xff] %vm301, 0.0
        %371 = vst.msk [vmem:[%s278 + $0x28] sm:$0xff] %vm301, 0.0
        %372 = vst.msk [vmem:[%s278 + $0x30] sm:$0xff] %vm301, 0.0
        %373 = vst.msk [vmem:[%s278 + $0x38] sm:$0xff] %vm301, 0.0
      $region44: #{mask_generator_forward.9} parent=35 // pred_fallthru
        _
      %p374 = scmp.eq.s32.totalorder %s21, 1
      // Predicated region
      $region45: #{mask_generator_forward.9} parent=35 // pred_check
        %p375 = pneg %p374
      $region46: #{mask_generator_forward.9} parent=35 // pred_check_branch
        %377 = sbr.rel (%p375) target = $region48
      $region47: #{mask_generator_forward.9} parent=35 // pred_region
        %v378 = vld [vmem:[#allocation2] sm:$0x1]
        %v379 = vmul.f32 %v378, 0.00048828125
        %v380 = vld [vmem:[#allocation3] sm:$0x1]
        %v381 = vmul.f32 %v380, 0.00048828125
        %v382 = vmul.f32 %v379, %v379
        %v383 = vsub.f32 %v381, %v382
        %v384 = vmax.f32 %v383, 0.0
        %v386 = vlaneseq
        %v387 = vshrl.u32 %v386, 7
        %v388 = vsub.s32 0, %v387
        %v389 = vrot.slane %v379, %v388
        %390 = vset.pattern.permute.xlu0 0
        %391 = vperm.xlu0 %390, %v389
        %v392 = vpop.permute.xlu0 %391
        %v394 = vsub.f32 %v289, %v392
        %v395 = vsub.f32 %v290, %v392
        %v396 = vsub.f32 %v291, %v392
        %v397 = vsub.f32 %v292, %v392
        %v398 = vsub.f32 %v293, %v392
        %v399 = vsub.f32 %v294, %v392
        %v400 = vsub.f32 %v295, %v392
        %v401 = vsub.f32 %v296, %v392
        %v402 = vadd.f32 %v384, 1e-08
        %v403 = vrsqrt.pop %v402
        %v405 = vlaneseq
        %v406 = vshrl.u32 %v405, 7
        %v407 = vsub.s32 0, %v406
        %v408 = vrot.slane %v403, %v407
        %409 = vset.pattern.permute.xlu0 0
        %410 = vperm.xlu0 %409, %v408
        %v411 = vpop.permute.xlu0 %410
        %v413 = vmul.f32 %v394, %v411
        %v414 = vmul.f32 %v395, %v411
        %v415 = vmul.f32 %v396, %v411
        %v416 = vmul.f32 %v397, %v411
        %v417 = vmul.f32 %v398, %v411
        %v418 = vmul.f32 %v399, %v411
        %v419 = vmul.f32 %v400, %v411
        %v420 = vmul.f32 %v401, %v411
        %v421 = vld [vmem:[%s1] sm:$0x1]
        %v423 = vlaneseq
        %v424 = vshrl.u32 %v423, 7
        %v425 = vsub.s32 0, %v424
        %v426 = vrot.slane %v421, %v425
        %v428 = vmul.f32 %v413, %v426
        %v429 = vmul.f32 %v414, %v426
        %v430 = vmul.f32 %v415, %v426
        %v431 = vmul.f32 %v416, %v426
        %v432 = vmul.f32 %v417, %v426
        %v433 = vmul.f32 %v418, %v426
        %v434 = vmul.f32 %v419, %v426
        %v435 = vmul.f32 %v420, %v426
        %v436 = vld [vmem:[%s2] sm:$0x1]
        %v438 = vlaneseq
        %v439 = vshrl.u32 %v438, 7
        %v440 = vsub.s32 0, %v439
        %v441 = vrot.slane %v436, %v440
        %v443 = vadd.f32 %v428, %v441
        %v444 = vadd.f32 %v429, %v441
        %v445 = vadd.f32 %v430, %v441
        %v446 = vadd.f32 %v431, %v441
        %v447 = vadd.f32 %v432, %v441
        %v448 = vadd.f32 %v433, %v441
        %v449 = vadd.f32 %v434, %v441
        %v450 = vadd.f32 %v435, %v441
        %v451 = vld [vmem:[%s268] sm:$0xff]
        %v452 = vld [vmem:[%s268 + $0x8] sm:$0xff]
        %v453 = vld [vmem:[%s268 + $0x10] sm:$0xff]
        %v454 = vld [vmem:[%s268 + $0x18] sm:$0xff]
        %v455 = vld [vmem:[%s268 + $0x20] sm:$0xff]
        %v456 = vld [vmem:[%s268 + $0x28] sm:$0xff]
        %v457 = vld [vmem:[%s268 + $0x30] sm:$0xff]
        %v458 = vld [vmem:[%s268 + $0x38] sm:$0xff]
        %v459 = vadd.f32 %v443, %v451
        %v460 = vadd.f32 %v444, %v452
        %v461 = vadd.f32 %v445, %v453
        %v462 = vadd.f32 %v446, %v454
        %v463 = vadd.f32 %v447, %v455
        %v464 = vadd.f32 %v448, %v456
        %v465 = vadd.f32 %v449, %v457
        %v466 = vadd.f32 %v450, %v458
        %vm467 = vcmask 261120
        %468 = vst.msk [vmem:[%s278] sm:$0xff] %vm467, %v459
        %469 = vst.msk [vmem:[%s278 + $0x8] sm:$0xff] %vm467, %v460
        %470 = vst.msk [vmem:[%s278 + $0x10] sm:$0xff] %vm467, %v461
        %471 = vst.msk [vmem:[%s278 + $0x18] sm:$0xff] %vm467, %v462
        %472 = vst.msk [vmem:[%s278 + $0x20] sm:$0xff] %vm467, %v463
        %473 = vst.msk [vmem:[%s278 + $0x28] sm:$0xff] %vm467, %v464
        %474 = vst.msk [vmem:[%s278 + $0x30] sm:$0xff] %vm467, %v465
        %475 = vst.msk [vmem:[%s278 + $0x38] sm:$0xff] %vm467, %v466
      $region48: #{mask_generator_forward.9} parent=35 // pred_fallthru
        _
      %s476 = smul.u32 8, %s22
      %p477 = scmp.lt.s32.totalorder %s20, 1
      %s478 = scalar_select %p477, %s20, 1
      %p479 = scmp.lt.s32.totalorder %s476, 7
      %s480 = scalar_select %p479, %s476, 7
      %s481 = smul.addr %s478, 8
      %s482 = sadd.s32 %s480, %s481
      %s483 = smul.addr %s482, 8
      %s484 = scalar_lea.vmem %s4, %s483
      // Predicated region
      $region49: #{mask_generator_forward.9} parent=35 // pred_check
        %p485 = pneg %p152
      $region50: #{mask_generator_forward.9} parent=35 // pred_check_branch
        %487 = sbr.rel (%p485) target = $region52
      $region51: #{mask_generator_forward.9} parent=35 // pred_region
        %s488 = smul.u32 8, %s22
      $region52: #{mask_generator_forward.9} parent=35 // pred_fallthru
        _
    $region36: #{mask_generator_forward.9} parent=5 // pred_fallthru
      _
    %p489 = scmp.le.s32.totalorder 2, %s10
    // Predicated region
    $region53: #{mask_generator_forward.9} parent=5 // pred_check
      %p490 = pneg %p489
    $region54: #{mask_generator_forward.9} parent=5 // pred_check_branch
      %492 = sbr.rel (%p490) target = $region56
    $region55: #{mask_generator_forward.9} parent=5 // pred_region
      %s493 = ssub.s32 %s10, 2
      // Predicated region
      $region57: #{mask_generator_forward.9} parent=55 // pred_check
        %p494 = pneg %p158
      $region58: #{mask_generator_forward.9} parent=55 // pred_check_branch
        %496 = sbr.rel (%p494) target = $region60
      $region59: #{mask_generator_forward.9} parent=55 // pred_region
        %s497 = smul.u32 8, %s25
        %p498 = scmp.lt.s32.totalorder %s23, 1
        %s499 = scalar_select %p498, %s23, 1
        %p500 = scmp.lt.s32.totalorder %s497, 7
        %s501 = scalar_select %p500, %s497, 7
        %s502 = smul.addr %s499, 8
        %s503 = sadd.s32 %s501, %s502
        %s504 = smul.addr %s503, 8
        %s505 = scalar_lea.vmem %s4, %s504
      $region60: #{mask_generator_forward.9} parent=55 // pred_fallthru
        _
    $region56: #{mask_generator_forward.9} parent=5 // pred_fallthru
      _
  $region6: #{mask_generator_forward.9} parent=0 // loop_footer
    %s14 = sadd.s32 1, %s10
  $region7: #{mask_generator_forward.9} parent=0 // loop_footer_branch
    %9 = sbr.rel target = $region3
  $region8: #{mask_generator_forward.9} parent=0 // loop_exit
    _

// kernel: mask_generator_forward.12
$region0: #{mask_generator_forward.12}
  #allocation0 [shape = 'u32[]', space=smem, size = 0x4, offset = 0x4, fixed_abs, tag = 'smem constant byte address 0x4 - core index']
  #allocation1 [shape = 'u32[144,128]{1,0:T(1,128)}', space=vmem, size = 0x12000, scoped, tag = 'internal scratch']
  #allocation2 [shape = 'f32[1,1]{1,0:T(1,128)S(1)}', space=vmem, size = 0x200, scoped, tag = 'scoped memory for mask_generator_forward.12']
  %s0 = inlined_call_operand.vmem [shape: f32[32,128], index: 0, kind: input, shape index: {}]
  %s1 = inlined_call_operand.<no memory space> [shape: f32[1,1], index: 1, kind: input, shape index: {}]
  %s2 = inlined_call_operand.vmem [shape: bf16[128,256], index: 2, kind: input, shape index: {}]
  %s3 = inlined_call_operand.vmem [shape: f32[1,256], index: 3, kind: input, shape index: {}]
  %s4 = inlined_call_operand.vmem [shape: f32[32,256], index: 4, kind: output, shape index: {}]
  %s5 = sld [smem:[#allocation0]]
  $region49: #{mask_generator_forward.12} parent=0
    _
  %s7 = ssub.s32 1, %s5
  %s8 = scalar_select 0, %s7, %s5
  %v9 = vstv %s1
  %10 = vst [vmem:[#allocation2] sm:$0x1] %v9
  loop: start=0, step=1, limit=4
  $region2: #{mask_generator_forward.12} parent=0 // loop_pre_header
    _
  $region3: #{mask_generator_forward.12} parent=0 // loop_header
    %s12 = sphi 0, %s16
    %p13 = scmp.ge.s32.totalorder %s12, 4
    %s22 = sphi 0, %s24
    %s25 = sphi 0, %s22
    %s26 = sphi 0, %s25
    %s42 = sphi 0, %s26
    %s46 = sphi 0, %s46
    %s48 = sphi 0, %s46
    %s49 = sphi 0, %s48
    %s63 = sphi 0, %s49
    %s67 = sphi 0, %s67
    %s69 = sphi 0, %s67
    %s70 = sphi 0, %s69
    %s84 = sphi 0, %s70
    %s88 = sphi 0, %s88
    %s90 = sphi 0, %s88
    %s91 = sphi 0, %s90
    %s105 = sphi 0, %s91
    %s111 = sphi 0, %s113
    %s114 = sphi 0, %s111
    %s115 = sphi 0, %s114
    %s131 = sphi 0, %s115
  $region4: #{mask_generator_forward.12} parent=0 // loop_header_branch
    %15 = sbr.rel (%p13) target = $region8
  $region5: #{mask_generator_forward.12} parent=0 // loop_body
    %s17 = ssub.s32 %s12, 1
    %s18 = ssub.s32 %s12, 2
    %s19 = sadd.s32 %s12, 1
    %s20 = ssub.s32 %s12, %s19
    %p21 = scmp.eq.s32.totalorder %s20, 0
    %s23 = sadd.s32 %s22, 1
    %s24 = scalar_select %p21, %s22, %s23
    %p27 = pneg %p21
    %p28 = scmp.eq.s32.totalorder %s12, 1
    %p29 = por %p27, %p28
    %p30 = scmp.ne.s32.totalorder %s22, %s25
    %p31 = scmp.eq.s32.totalorder %s12, 0
    %p32 = por %p30, %p31
    %p33 = scmp.ne.s32.totalorder %s22, %s25
    %p34 = scmp.eq.s32.totalorder %s17, 1
    %p35 = por %p33, %p34
    %p36 = scmp.ne.s32.totalorder %s25, %s26
    %p37 = scmp.eq.s32.totalorder %s17, 0
    %p38 = por %p36, %p37
    %p39 = scmp.ne.s32.totalorder %s25, %s26
    %p40 = scmp.eq.s32.totalorder %s18, 1
    %p41 = por %p39, %p40
    %p43 = scmp.ne.s32.totalorder %s26, %s42
    %p44 = scmp.eq.s32.totalorder %s18, 0
    %p45 = por %p43, %p44
    %s47 = sadd.s32 %s46, 1
    %p50 = scmp.eq.s32.totalorder %s12, 1
    %p51 = scmp.ne.s32.totalorder %s46, %s48
    %p52 = scmp.eq.s32.totalorder %s12, 0
    %p53 = por %p51, %p52
    %p54 = scmp.ne.s32.totalorder %s46, %s48
    %p55 = scmp.eq.s32.totalorder %s17, 1
    %p56 = por %p54, %p55
    %p57 = scmp.ne.s32.totalorder %s48, %s49
    %p58 = scmp.eq.s32.totalorder %s17, 0
    %p59 = por %p57, %p58
    %p60 = scmp.ne.s32.totalorder %s48, %s49
    %p61 = scmp.eq.s32.totalorder %s18, 1
    %p62 = por %p60, %p61
    %p64 = scmp.ne.s32.totalorder %s49, %s63
    %p65 = scmp.eq.s32.totalorder %s18, 0
    %p66 = por %p64, %p65
    %s68 = sadd.s32 %s67, 1
    %p71 = scmp.eq.s32.totalorder %s12, 1
    %p72 = scmp.ne.s32.totalorder %s67, %s69
    %p73 = scmp.eq.s32.totalorder %s12, 0
    %p74 = por %p72, %p73
    %p75 = scmp.ne.s32.totalorder %s67, %s69
    %p76 = scmp.eq.s32.totalorder %s17, 1
    %p77 = por %p75, %p76
    %p78 = scmp.ne.s32.totalorder %s69, %s70
    %p79 = scmp.eq.s32.totalorder %s17, 0
    %p80 = por %p78, %p79
    %p81 = scmp.ne.s32.totalorder %s69, %s70
    %p82 = scmp.eq.s32.totalorder %s18, 1
    %p83 = por %p81, %p82
    %p85 = scmp.ne.s32.totalorder %s70, %s84
    %p86 = scmp.eq.s32.totalorder %s18, 0
    %p87 = por %p85, %p86
    %s89 = sadd.s32 %s88, 1
    %p92 = scmp.eq.s32.totalorder %s12, 1
    %p93 = scmp.ne.s32.totalorder %s88, %s90
    %p94 = scmp.eq.s32.totalorder %s12, 0
    %p95 = por %p93, %p94
    %p96 = scmp.ne.s32.totalorder %s88, %s90
    %p97 = scmp.eq.s32.totalorder %s17, 1
    %p98 = por %p96, %p97
    %p99 = scmp.ne.s32.totalorder %s90, %s91
    %p100 = scmp.eq.s32.totalorder %s17, 0
    %p101 = por %p99, %p100
    %p102 = scmp.ne.s32.totalorder %s90, %s91
    %p103 = scmp.eq.s32.totalorder %s18, 1
    %p104 = por %p102, %p103
    %p106 = scmp.ne.s32.totalorder %s91, %s105
    %p107 = scmp.eq.s32.totalorder %s18, 0
    %p108 = por %p106, %p107
    %s109 = ssub.s32 %s12, %s19
    %p110 = scmp.eq.s32.totalorder %s109, 0
    %s112 = sadd.s32 %s111, 1
    %s113 = scalar_select %p110, %s111, %s112
    %p116 = pneg %p110
    %p117 = scmp.eq.s32.totalorder %s12, 1
    %p118 = por %p116, %p117
    %p119 = scmp.ne.s32.totalorder %s111, %s114
    %p120 = scmp.eq.s32.totalorder %s12, 0
    %p121 = por %p119, %p120
    %p122 = scmp.ne.s32.totalorder %s111, %s114
    %p123 = scmp.eq.s32.totalorder %s17, 1
    %p124 = por %p122, %p123
    %p125 = scmp.ne.s32.totalorder %s114, %s115
    %p126 = scmp.eq.s32.totalorder %s17, 0
    %p127 = por %p125, %p126
    %p128 = scmp.ne.s32.totalorder %s114, %s115
    %p129 = scmp.eq.s32.totalorder %s18, 1
    %p130 = por %p128, %p129
    %p132 = scmp.ne.s32.totalorder %s115, %s131
    %p133 = scmp.eq.s32.totalorder %s18, 0
    %p134 = por %p132, %p133
    %p135 = scmp.le.s32.totalorder 1, %s12
    %p136 = scmp.lt.s32.totalorder %s12, 3
    %p137 = pnand %p135, %p136
    %p138 = pneg %p137
    // Predicated region
    $region9: #{mask_generator_forward.12} parent=5 // pred_check
      _
    $region10: #{mask_generator_forward.12} parent=5 // pred_check_branch
      %140 = sbr.rel (%p137) target = $region12
    $region11: #{mask_generator_forward.12} parent=5 // pred_region
      %s141 = ssub.s32 %s12, 1
      // Predicated region
      $region13: #{mask_generator_forward.12} parent=11 // pred_check
        %p142 = pneg %p59
      $region14: #{mask_generator_forward.12} parent=11 // pred_check_branch
        %144 = sbr.rel (%p142) target = $region16
      $region15: #{mask_generator_forward.12} parent=11 // pred_region
        _
      $region16: #{mask_generator_forward.12} parent=11 // pred_fallthru
        _
      // Predicated region
      $region17: #{mask_generator_forward.12} parent=11 // pred_check
        %p145 = pneg %p80
      $region18: #{mask_generator_forward.12} parent=11 // pred_check_branch
        %147 = sbr.rel (%p145) target = $region20
      $region19: #{mask_generator_forward.12} parent=11 // pred_region
        _
      $region20: #{mask_generator_forward.12} parent=11 // pred_fallthru
        _
      // Predicated region
      $region21: #{mask_generator_forward.12} parent=11 // pred_check
        %p148 = pneg %p101
      $region22: #{mask_generator_forward.12} parent=11 // pred_check_branch
        %150 = sbr.rel (%p148) target = $region24
      $region23: #{mask_generator_forward.12} parent=11 // pred_region
        _
      $region24: #{mask_generator_forward.12} parent=11 // pred_fallthru
        _
    $region12: #{mask_generator_forward.12} parent=5 // pred_fallthru
      _
    %p151 = scmp.lt.s32.totalorder %s12, 2
    // Predicated region
    $region25: #{mask_generator_forward.12} parent=5 // pred_check
      %p152 = pneg %p151
    $region26: #{mask_generator_forward.12} parent=5 // pred_check_branch
      %154 = sbr.rel (%p152) target = $region28
    $region27: #{mask_generator_forward.12} parent=5 // pred_region
      // Predicated region
      $region29: #{mask_generator_forward.12} parent=27 // pred_check
        %p155 = pneg %p32
      $region30: #{mask_generator_forward.12} parent=27 // pred_check_branch
        %157 = sbr.rel (%p155) target = $region32
      $region31: #{mask_generator_forward.12} parent=27 // pred_region
        %s158 = smul.u32 2, %s12
        %p159 = scmp.lt.s32.totalorder %s158, 3
        %s160 = scalar_select %p159, %s158, 3
        %s161 = smul.addr %s160, 8
        %s162 = scalar_lea.vmem %s0, %s161
        %s163 = smul.u32 2, %s12
      $region32: #{mask_generator_forward.12} parent=27 // pred_fallthru
        _
    $region28: #{mask_generator_forward.12} parent=5 // pred_fallthru
      _
    %p164 = scmp.le.s32.totalorder 1, %s12
    %p165 = scmp.lt.s32.totalorder %s12, 3
    %p166 = pnand %p164, %p165
    %p167 = pneg %p166
    // Predicated region
    $region33: #{mask_generator_forward.12} parent=5 // pred_check
      _
    $region34: #{mask_generator_forward.12} parent=5 // pred_check_branch
      %169 = sbr.rel (%p166) target = $region36
    $region35: #{mask_generator_forward.12} parent=5 // pred_region
      %s170 = ssub.s32 %s12, 1
      %s171 = smul.u32 2, %s17
      %p172 = scmp.lt.s32.totalorder %s171, 3
      %s173 = scalar_select %p172, %s171, 3
      %s174 = smul.addr %s173, 8
      %s175 = scalar_lea.vmem %s0, %s174
      %p176 = pneg %p38
      %p177 = pneg %p35
      %p178 = pneg %p59
      %p179 = pneg %p56
      %p180 = pneg %p80
      %p181 = pneg %p77
      %p182 = pneg %p101
      %p183 = pneg %p98
      %p184 = pneg %p127
      %p185 = pneg %p124
      %s186 = smul.u32 2, %s17
      %p187 = scmp.lt.s32.totalorder %s186, 3
      %s188 = scalar_select %p187, %s186, 3
      %s189 = smul.addr %s188, 2
      %s190 = smul.addr %s189, 8
      %s191 = scalar_lea.vmem %s4, %s190
      %s192 = smul.u32 2, %s17
      %p193 = scmp.lt.s32.totalorder %s192, 3
      %s194 = scalar_select %p193, %s192, 3
      %s195 = smul.addr %s194, 8
      %s196 = scalar_lea.vmem %s0, %s195
      %s197 = smul.u32 2, %s17
      %s198 = smul.u32 2, %s17
      %p199 = scmp.lt.s32.totalorder %s198, 3
      %s200 = scalar_select %p199, %s198, 3
      %s201 = smul.addr %s200, 2
      %s202 = smul.addr %s201, 8
      %s203 = scalar_lea.vmem %s4, %s202
      %s204 = smul.u32 2, %s17
      %v206 = vld [vmem:[%s196] sm:$0xff]
      %v207 = vld [vmem:[%s196 + $0x8] sm:$0xff]
      %vm208 = vcmp.ge.f32.partialorder %v206, 0.0
      %vm209 = vcmp.ge.f32.partialorder %v207, 0.0
      %v210 = vld [vmem:[#allocation2] sm:$0x1]
      %v212 = vlaneseq
      %v213 = vshrl.u32 %v212, 7
      %v214 = vsub.s32 0, %v213
      %v215 = vrot.slane %v210, %v214
      %216 = vset.pattern.permute.xlu0 0
      %217 = vperm.xlu0 %216, %v215
      %v218 = vpop.permute.xlu0 %217
      %v220 = vmul.f32 %v206, %v218
      %v221 = vmul.f32 %v207, %v218
      %v222 = vsel %vm208, %v206, %v220
      %v223 = vsel %vm209, %v207, %v221
      %v224 = vpack.c.bf16 %v223, %v222
      %v225 = vld [vmem:[%s2] sm:$0xff]
      %v226 = vld [vmem:[%s2 + $0x8] sm:$0xff]
      %v227 = vld [vmem:[%s2 + $0x10] sm:$0xff]
      %v228 = vld [vmem:[%s2 + $0x18] sm:$0xff]
      %v229 = vld [vmem:[%s2 + $0x20] sm:$0xff]
      %v230 = vld [vmem:[%s2 + $0x28] sm:$0xff]
      %v231 = vld [vmem:[%s2 + $0x30] sm:$0xff]
      %v232 = vld [vmem:[%s2 + $0x38] sm:$0xff]
      %v233 = vld [vmem:[%s2 + $0x40] sm:$0xff]
      %v234 = vld [vmem:[%s2 + $0x48] sm:$0xff]
      %v235 = vld [vmem:[%s2 + $0x50] sm:$0xff]
      %v236 = vld [vmem:[%s2 + $0x58] sm:$0xff]
      %v237 = vld [vmem:[%s2 + $0x60] sm:$0xff]
      %v238 = vld [vmem:[%s2 + $0x68] sm:$0xff]
      %v239 = vld [vmem:[%s2 + $0x70] sm:$0xff]
      %v240 = vld [vmem:[%s2 + $0x78] sm:$0xff]
      %v241 = vld [vmem:[%s3] sm:$0x3]
      %v243 = vlaneseq
      %v244 = vshrl.u32 %v243, 7
      %v245 = vsub.s32 0, %v244
      %v246 = vrot.slane %v241, %v245
      %v247 = vlaneseq
      %v248 = vshrl.u32 %v247, 7
      %v249 = vsub.s32 1, %v248
      %v250 = vrot.slane %v241, %v249
      %v269 = vunpack.c.l.b16 %v225
      %v270 = vunpack.c.h.b16 %v225
      %v271 = vunpack.c.l.b16 %v226
      %v272 = vunpack.c.h.b16 %v226
      %v273 = vunpack.c.l.b16 %v227
      %v274 = vunpack.c.h.b16 %v227
      %v275 = vunpack.c.l.b16 %v228
      %v276 = vunpack.c.h.b16 %v228
      %v277 = vunpack.c.l.b16 %v229
      %v278 = vunpack.c.h.b16 %v229
      %v279 = vunpack.c.l.b16 %v230
      %v280 = vunpack.c.h.b16 %v230
      %v281 = vunpack.c.l.b16 %v231
      %v282 = vunpack.c.h.b16 %v231
      %v283 = vunpack.c.l.b16 %v232
      %v284 = vunpack.c.h.b16 %v232
      %v285 = vunpack.c.l.b16 %v233
      %v286 = vunpack.c.h.b16 %v233
      %v287 = vunpack.c.l.b16 %v234
      %v288 = vunpack.c.h.b16 %v234
      %v289 = vunpack.c.l.b16 %v235
      %v290 = vunpack.c.h.b16 %v235
      %v291 = vunpack.c.l.b16 %v236
      %v292 = vunpack.c.h.b16 %v236
      %v293 = vunpack.c.l.b16 %v237
      %v294 = vunpack.c.h.b16 %v237
      %v295 = vunpack.c.l.b16 %v238
      %v296 = vunpack.c.h.b16 %v238
      %v297 = vunpack.c.l.b16 %v239
      %v298 = vunpack.c.h.b16 %v239
      %v299 = vunpack.c.l.b16 %v240
      %v300 = vunpack.c.h.b16 %v240
      %v301 = vpack.c.b16 %v271, %v269
      %v302 = vpack.c.b16 %v272, %v270
      %v303 = vpack.c.b16 %v275, %v273
      %v304 = vpack.c.b16 %v276, %v274
      %v305 = vpack.c.b16 %v279, %v277
      %v306 = vpack.c.b16 %v280, %v278
      %v307 = vpack.c.b16 %v283, %v281
      %v308 = vpack.c.b16 %v284, %v282
      %v309 = vpack.c.b16 %v287, %v285
      %v310 = vpack.c.b16 %v288, %v286
      %v311 = vpack.c.b16 %v291, %v289
      %v312 = vpack.c.b16 %v292, %v290
      %v313 = vpack.c.b16 %v295, %v293
      %v314 = vpack.c.b16 %v296, %v294
      %v315 = vpack.c.b16 %v299, %v297
      %v316 = vpack.c.b16 %v300, %v298
      %333 = vmatprep.subr.bf16.mxu0 %v316
      %334 = vmatpush1.bf16.msra.mxu0 %v315
      %335 = vmatprep.subr.bf16.mxu0 %v314
      %336 = vmatpush1.bf16.msra.mxu0 %v313
      %337 = vmatprep.subr.bf16.mxu0 %v312
      %338 = vmatpush1.bf16.msra.mxu0 %v311
      %339 = vmatprep.subr.bf16.mxu0 %v310
      %340 = vmatpush1.bf16.msra.mxu0 %v309
      %341 = vmatprep.subr.bf16.mxu0 %v308
      %342 = vmatpush1.bf16.msra.mxu0 %v307
      %343 = vmatprep.subr.bf16.mxu0 %v306
      %344 = vmatpush1.bf16.msra.mxu0 %v305
      %345 = vmatprep.subr.bf16.mxu0 %v304
      %346 = vmatpush1.bf16.msra.mxu0 %v303
      %347 = vmatprep.subr.bf16.mxu0 %v302
      %348 = vmatpush1.bf16.msra.mxu0 %v301
      %349 = vmatprep.subr.bf16.mxu0 0
      %350 = vmatpush2.bf16.msra.mxu0 0
      %351 = vmatprep.subr.bf16.mxu0 0
      %352 = vmatpush2.bf16.msra.mxu0 0
      %353 = vmatprep.subr.bf16.mxu0 0
      %354 = vmatpush2.bf16.msra.mxu0 0
      %355 = vmatprep.subr.bf16.mxu0 0
      %356 = vmatpush2.bf16.msra.mxu0 0
      %357 = vmatprep.subr.bf16.mxu0 0
      %358 = vmatpush2.bf16.msra.mxu0 0
      %359 = vmatprep.subr.bf16.mxu0 0
      %360 = vmatpush2.bf16.msra.mxu0 0
      %361 = vmatprep.subr.bf16.mxu0 0
      %362 = vmatpush2.bf16.msra.mxu0 0
      %363 = vmatprep.subr.bf16.mxu0 0
      %364 = vmatpush2.bf16.msra.mxu0 0
      %365 = vmatprep.mubr.bf16.mxu0 0
      %366 = vmatmul.mubr.bf16.gmra.mxu0 %v224
      %v367 = vpop.f32.mrf.mxu0
      %v368 = vadd.f32 %v246, %v367
      %v369 = vpop.f32.mrf.mxu0
      %v370 = vadd.f32 %v250, %v369
      %v371 = vpop.f32.mrf.mxu0
      %v372 = vadd.f32 %v246, %v371
      %v373 = vpop.f32.mrf.mxu0
      %v374 = vadd.f32 %v250, %v373
      %375 = vdwg.mxu0
      %376 = vst [vmem:[%s203] sm:$0xff] %v368
      %377 = vst [vmem:[%s203 + $0x8] sm:$0xff] %v370
      %378 = vst [vmem:[%s203 + $0x10] sm:$0xff] %v372
      %379 = vst [vmem:[%s203 + $0x18] sm:$0xff] %v374
      %s380 = smul.u32 2, %s17
      %p381 = scmp.lt.s32.totalorder %s380, 3
      %s382 = scalar_select %p381, %s380, 3
      %s383 = smul.addr %s382, 2
      %s384 = smul.addr %s383, 8
      %s385 = scalar_lea.vmem %s4, %s384
      // Predicated region
      $region37: #{mask_generator_forward.12} parent=35 // pred_check
        %p386 = pneg %p124
      $region38: #{mask_generator_forward.12} parent=35 // pred_check_branch
        %388 = sbr.rel (%p386) target = $region40
      $region39: #{mask_generator_forward.12} parent=35 // pred_region
        %s389 = smul.u32 2, %s17
      $region40: #{mask_generator_forward.12} parent=35 // pred_fallthru
        _
    $region36: #{mask_generator_forward.12} parent=5 // pred_fallthru
      _
    %p390 = scmp.le.s32.totalorder 2, %s12
    // Predicated region
    $region41: #{mask_generator_forward.12} parent=5 // pred_check
      %p391 = pneg %p390
    $region42: #{mask_generator_forward.12} parent=5 // pred_check_branch
      %393 = sbr.rel (%p391) target = $region44
    $region43: #{mask_generator_forward.12} parent=5 // pred_region
      %s394 = ssub.s32 %s12, 2
      // Predicated region
      $region45: #{mask_generator_forward.12} parent=43 // pred_check
        %p395 = pneg %p130
      $region46: #{mask_generator_forward.12} parent=43 // pred_check_branch
        %397 = sbr.rel (%p395) target = $region48
      $region47: #{mask_generator_forward.12} parent=43 // pred_region
        %s398 = smul.u32 2, %s18
        %p399 = scmp.lt.s32.totalorder %s398, 3
        %s400 = scalar_select %p399, %s398, 3
        %s401 = smul.addr %s400, 2
        %s402 = smul.addr %s401, 8
        %s403 = scalar_lea.vmem %s4, %s402
      $region48: #{mask_generator_forward.12} parent=43 // pred_fallthru
        _
    $region44: #{mask_generator_forward.12} parent=5 // pred_fallthru
      _
  $region6: #{mask_generator_forward.12} parent=0 // loop_footer
    %s16 = sadd.s32 1, %s12
  $region7: #{mask_generator_forward.12} parent=0 // loop_footer_branch
    %11 = sbr.rel target = $region3
  $region8: #{mask_generator_forward.12} parent=0 // loop_exit
    _

// kernel: tile.23
$region0: #{tile.23}
  #allocation0 [shape = 's32[1]{0}', space=sflag, size = 0x4, scoped, tag = 'scoped memory for tile.23']
  %s0 = inlined_call_operand.vmem [shape: f32[32], index: 0, kind: input, shape index: {}]
  %s1 = inlined_call_operand.vmem [shape: f32[4,32], index: 1, kind: output, shape index: {}]
  // Predicated region
  $region2: #{tile.23} parent=0 // pred_check
    _
  $region3: #{tile.23} parent=0 // pred_check_branch
    %3 = sbr.rel (0) target = $region5
  $region4: #{tile.23} parent=0 // pred_region
    _
  $region5: #{tile.23} parent=0 // pred_fallthru
    _
  %v4 = vld [vmem:[%s0] ss:$0 sm:$0xff]
  %5 = vst [vmem:[%s1] sm:$0xf] %v4

// kernel: tile.24
$region0: #{tile.24}
  %s0 = inlined_call_operand.vmem [shape: f32[4,32], index: 0, kind: input, shape index: {}]
  %s1 = inlined_call_operand.vmem [shape: f32[1,128], index: 1, kind: output, shape index: {}]
  $region1: #{tile.24} parent=0
    #allocation0 [shape = 'u8[4096]{0}', space=vmem, size = 0x1000, scoped, tag = 'scoped mem for output reshape']
    #allocation1 [shape = 'u8[4096]{0}', space=vmem, size = 0x1000, scoped, tag = 'scoped mem for input reshape']
    %s3 = sshll.u32 1, 4
    %s4 = ssub.s32 %s3, 1
    %v5 = vld [vmem:[%s0] sm:%s4]
    %6 = vst [vmem:[#allocation1] sm:%s4] %v5
    %v7 = vld [vmem:[#allocation1] sm:$0x1]
    %vm8 = vcmask 261120
    %9 = vst.msk [vmem:[#allocation0] sm:$0x1] %vm8, %v7
    %s10 = scalar_lea.vmem [#allocation1], 3
    %v11 = vld [vmem:[%s10] sm:$0x1]
    %12 = vrot.lane.b32.xlu0 %v11, 96
    %v13 = vpop.permute.xlu0 %12
    %vm14 = vcmask 1048320
    %15 = vst.msk [vmem:[#allocation0] sm:$0x1] %vm14, %v13
    %s16 = scalar_lea.vmem [#allocation1], 2
    %v17 = vld [vmem:[%s16] sm:$0x1]
    %18 = vrot.lane.b32.xlu0 %v17, 64
    %v19 = vpop.permute.xlu0 %18
    %vm20 = vcmask 785920
    %21 = vst.msk [vmem:[#allocation0] sm:$0x1] %vm20, %v19
    %s22 = scalar_lea.vmem [#allocation1], 1
    %v23 = vld [vmem:[%s22] sm:$0x1]
    %24 = vrot.lane.b32.xlu0 %v23, 32
    %v25 = vpop.permute.xlu0 %24
    %vm26 = vcmask 523520
    %27 = vst.msk [vmem:[#allocation0] sm:$0x1] %vm26, %v25
    %s29 = sshll.u32 1, 1
    %s30 = ssub.s32 %s29, 1
    %v32 = vld [vmem:[#allocation0] sm:%s30]
    %s33 = sshll.u32 1, 1
    %s34 = ssub.s32 %s33, 1
    %35 = vst [vmem:[%s1] sm:%s34] %v32

// kernel: mask_generator_forward.13
$region0: #{mask_generator_forward.13}
  #allocation0 [shape = 'u32[]', space=smem, size = 0x4, offset = 0x4, fixed_abs, tag = 'smem constant byte address 0x4 - core index']
  #allocation1 [shape = 'u32[144,128]{1,0:T(1,128)}', space=vmem, size = 0x12000, scoped, tag = 'internal scratch']
  %s0 = inlined_call_operand.vmem [shape: f32[32,128], index: 0, kind: input, shape index: {}]
  %s1 = inlined_call_operand.vmem [shape: bf16[128,128], index: 1, kind: input, shape index: {}]
  %s2 = inlined_call_operand.vmem [shape: f32[1,128], index: 2, kind: input, shape index: {}]
  %s3 = inlined_call_operand.vmem [shape: bf16[128,128], index: 3, kind: input, shape index: {}]
  %s4 = inlined_call_operand.vmem [shape: f32[1,128], index: 4, kind: input, shape index: {}]
  %s5 = inlined_call_operand.vmem [shape: bf16[128,128], index: 5, kind: input, shape index: {}]
  %s6 = inlined_call_operand.vmem [shape: f32[32,128], index: 6, kind: output, shape index: {}]
  %s7 = sld [smem:[#allocation0]]
  $region57: #{mask_generator_forward.13} parent=0
    _
  %s9 = ssub.s32 1, %s7
  %s10 = scalar_select 0, %s9, %s7
  loop: start=0, step=1, limit=4
  $region2: #{mask_generator_forward.13} parent=0 // loop_pre_header
    _
  $region3: #{mask_generator_forward.13} parent=0 // loop_header
    %s12 = sphi 0, %s16
    %p13 = scmp.ge.s32.totalorder %s12, 4
    %s22 = sphi 0, %s24
    %s25 = sphi 0, %s22
    %s26 = sphi 0, %s25
    %s42 = sphi 0, %s26
    %s46 = sphi 0, %s46
    %s48 = sphi 0, %s46
    %s49 = sphi 0, %s48
    %s63 = sphi 0, %s49
    %s67 = sphi 0, %s67
    %s69 = sphi 0, %s67
    %s70 = sphi 0, %s69
    %s84 = sphi 0, %s70
    %s88 = sphi 0, %s88
    %s90 = sphi 0, %s88
    %s91 = sphi 0, %s90
    %s105 = sphi 0, %s91
    %s109 = sphi 0, %s109
    %s111 = sphi 0, %s109
    %s112 = sphi 0, %s111
    %s126 = sphi 0, %s112
    %s130 = sphi 0, %s130
    %s132 = sphi 0, %s130
    %s133 = sphi 0, %s132
    %s147 = sphi 0, %s133
    %s153 = sphi 0, %s155
    %s156 = sphi 0, %s153
    %s157 = sphi 0, %s156
    %s173 = sphi 0, %s157
  $region4: #{mask_generator_forward.13} parent=0 // loop_header_branch
    %15 = sbr.rel (%p13) target = $region8
  $region5: #{mask_generator_forward.13} parent=0 // loop_body
    %s17 = ssub.s32 %s12, 1
    %s18 = ssub.s32 %s12, 2
    %s19 = sadd.s32 %s12, 1
    %s20 = ssub.s32 %s12, %s19
    %p21 = scmp.eq.s32.totalorder %s20, 0
    %s23 = sadd.s32 %s22, 1
    %s24 = scalar_select %p21, %s22, %s23
    %p27 = pneg %p21
    %p28 = scmp.eq.s32.totalorder %s12, 1
    %p29 = por %p27, %p28
    %p30 = scmp.ne.s32.totalorder %s22, %s25
    %p31 = scmp.eq.s32.totalorder %s12, 0
    %p32 = por %p30, %p31
    %p33 = scmp.ne.s32.totalorder %s22, %s25
    %p34 = scmp.eq.s32.totalorder %s17, 1
    %p35 = por %p33, %p34
    %p36 = scmp.ne.s32.totalorder %s25, %s26
    %p37 = scmp.eq.s32.totalorder %s17, 0
    %p38 = por %p36, %p37
    %p39 = scmp.ne.s32.totalorder %s25, %s26
    %p40 = scmp.eq.s32.totalorder %s18, 1
    %p41 = por %p39, %p40
    %p43 = scmp.ne.s32.totalorder %s26, %s42
    %p44 = scmp.eq.s32.totalorder %s18, 0
    %p45 = por %p43, %p44
    %s47 = sadd.s32 %s46, 1
    %p50 = scmp.eq.s32.totalorder %s12, 1
    %p51 = scmp.ne.s32.totalorder %s46, %s48
    %p52 = scmp.eq.s32.totalorder %s12, 0
    %p53 = por %p51, %p52
    %p54 = scmp.ne.s32.totalorder %s46, %s48
    %p55 = scmp.eq.s32.totalorder %s17, 1
    %p56 = por %p54, %p55
    %p57 = scmp.ne.s32.totalorder %s48, %s49
    %p58 = scmp.eq.s32.totalorder %s17, 0
    %p59 = por %p57, %p58
    %p60 = scmp.ne.s32.totalorder %s48, %s49
    %p61 = scmp.eq.s32.totalorder %s18, 1
    %p62 = por %p60, %p61
    %p64 = scmp.ne.s32.totalorder %s49, %s63
    %p65 = scmp.eq.s32.totalorder %s18, 0
    %p66 = por %p64, %p65
    %s68 = sadd.s32 %s67, 1
    %p71 = scmp.eq.s32.totalorder %s12, 1
    %p72 = scmp.ne.s32.totalorder %s67, %s69
    %p73 = scmp.eq.s32.totalorder %s12, 0
    %p74 = por %p72, %p73
    %p75 = scmp.ne.s32.totalorder %s67, %s69
    %p76 = scmp.eq.s32.totalorder %s17, 1
    %p77 = por %p75, %p76
    %p78 = scmp.ne.s32.totalorder %s69, %s70
    %p79 = scmp.eq.s32.totalorder %s17, 0
    %p80 = por %p78, %p79
    %p81 = scmp.ne.s32.totalorder %s69, %s70
    %p82 = scmp.eq.s32.totalorder %s18, 1
    %p83 = por %p81, %p82
    %p85 = scmp.ne.s32.totalorder %s70, %s84
    %p86 = scmp.eq.s32.totalorder %s18, 0
    %p87 = por %p85, %p86
    %s89 = sadd.s32 %s88, 1
    %p92 = scmp.eq.s32.totalorder %s12, 1
    %p93 = scmp.ne.s32.totalorder %s88, %s90
    %p94 = scmp.eq.s32.totalorder %s12, 0
    %p95 = por %p93, %p94
    %p96 = scmp.ne.s32.totalorder %s88, %s90
    %p97 = scmp.eq.s32.totalorder %s17, 1
    %p98 = por %p96, %p97
    %p99 = scmp.ne.s32.totalorder %s90, %s91
    %p100 = scmp.eq.s32.totalorder %s17, 0
    %p101 = por %p99, %p100
    %p102 = scmp.ne.s32.totalorder %s90, %s91
    %p103 = scmp.eq.s32.totalorder %s18, 1
    %p104 = por %p102, %p103
    %p106 = scmp.ne.s32.totalorder %s91, %s105
    %p107 = scmp.eq.s32.totalorder %s18, 0
    %p108 = por %p106, %p107
    %s110 = sadd.s32 %s109, 1
    %p113 = scmp.eq.s32.totalorder %s12, 1
    %p114 = scmp.ne.s32.totalorder %s109, %s111
    %p115 = scmp.eq.s32.totalorder %s12, 0
    %p116 = por %p114, %p115
    %p117 = scmp.ne.s32.totalorder %s109, %s111
    %p118 = scmp.eq.s32.totalorder %s17, 1
    %p119 = por %p117, %p118
    %p120 = scmp.ne.s32.totalorder %s111, %s112
    %p121 = scmp.eq.s32.totalorder %s17, 0
    %p122 = por %p120, %p121
    %p123 = scmp.ne.s32.totalorder %s111, %s112
    %p124 = scmp.eq.s32.totalorder %s18, 1
    %p125 = por %p123, %p124
    %p127 = scmp.ne.s32.totalorder %s112, %s126
    %p128 = scmp.eq.s32.totalorder %s18, 0
    %p129 = por %p127, %p128
    %s131 = sadd.s32 %s130, 1
    %p134 = scmp.eq.s32.totalorder %s12, 1
    %p135 = scmp.ne.s32.totalorder %s130, %s132
    %p136 = scmp.eq.s32.totalorder %s12, 0
    %p137 = por %p135, %p136
    %p138 = scmp.ne.s32.totalorder %s130, %s132
    %p139 = scmp.eq.s32.totalorder %s17, 1
    %p140 = por %p138, %p139
    %p141 = scmp.ne.s32.totalorder %s132, %s133
    %p142 = scmp.eq.s32.totalorder %s17, 0
    %p143 = por %p141, %p142
    %p144 = scmp.ne.s32.totalorder %s132, %s133
    %p145 = scmp.eq.s32.totalorder %s18, 1
    %p146 = por %p144, %p145
    %p148 = scmp.ne.s32.totalorder %s133, %s147
    %p149 = scmp.eq.s32.totalorder %s18, 0
    %p150 = por %p148, %p149
    %s151 = ssub.s32 %s12, %s19
    %p152 = scmp.eq.s32.totalorder %s151, 0
    %s154 = sadd.s32 %s153, 1
    %s155 = scalar_select %p152, %s153, %s154
    %p158 = pneg %p152
    %p159 = scmp.eq.s32.totalorder %s12, 1
    %p160 = por %p158, %p159
    %p161 = scmp.ne.s32.totalorder %s153, %s156
    %p162 = scmp.eq.s32.totalorder %s12, 0
    %p163 = por %p161, %p162
    %p164 = scmp.ne.s32.totalorder %s153, %s156
    %p165 = scmp.eq.s32.totalorder %s17, 1
    %p166 = por %p164, %p165
    %p167 = scmp.ne.s32.totalorder %s156, %s157
    %p168 = scmp.eq.s32.totalorder %s17, 0
    %p169 = por %p167, %p168
    %p170 = scmp.ne.s32.totalorder %s156, %s157
    %p171 = scmp.eq.s32.totalorder %s18, 1
    %p172 = por %p170, %p171
    %p174 = scmp.ne.s32.totalorder %s157, %s173
    %p175 = scmp.eq.s32.totalorder %s18, 0
    %p176 = por %p174, %p175
    %p177 = scmp.le.s32.totalorder 1, %s12
    %p178 = scmp.lt.s32.totalorder %s12, 3
    %p179 = pnand %p177, %p178
    %p180 = pneg %p179
    // Predicated region
    $region9: #{mask_generator_forward.13} parent=5 // pred_check
      _
    $region10: #{mask_generator_forward.13} parent=5 // pred_check_branch
      %182 = sbr.rel (%p179) target = $region12
    $region11: #{mask_generator_forward.13} parent=5 // pred_region
      %s183 = ssub.s32 %s12, 1
      // Predicated region
      $region13: #{mask_generator_forward.13} parent=11 // pred_check
        %p184 = pneg %p59
      $region14: #{mask_generator_forward.13} parent=11 // pred_check_branch
        %186 = sbr.rel (%p184) target = $region16
      $region15: #{mask_generator_forward.13} parent=11 // pred_region
        _
      $region16: #{mask_generator_forward.13} parent=11 // pred_fallthru
        _
      // Predicated region
      $region17: #{mask_generator_forward.13} parent=11 // pred_check
        %p187 = pneg %p80
      $region18: #{mask_generator_forward.13} parent=11 // pred_check_branch
        %189 = sbr.rel (%p187) target = $region20
      $region19: #{mask_generator_forward.13} parent=11 // pred_region
        _
      $region20: #{mask_generator_forward.13} parent=11 // pred_fallthru
        _
      // Predicated region
      $region21: #{mask_generator_forward.13} parent=11 // pred_check
        %p190 = pneg %p101
      $region22: #{mask_generator_forward.13} parent=11 // pred_check_branch
        %192 = sbr.rel (%p190) target = $region24
      $region23: #{mask_generator_forward.13} parent=11 // pred_region
        _
      $region24: #{mask_generator_forward.13} parent=11 // pred_fallthru
        _
      // Predicated region
      $region25: #{mask_generator_forward.13} parent=11 // pred_check
        %p193 = pneg %p122
      $region26: #{mask_generator_forward.13} parent=11 // pred_check_branch
        %195 = sbr.rel (%p193) target = $region28
      $region27: #{mask_generator_forward.13} parent=11 // pred_region
        _
      $region28: #{mask_generator_forward.13} parent=11 // pred_fallthru
        _
      // Predicated region
      $region29: #{mask_generator_forward.13} parent=11 // pred_check
        %p196 = pneg %p143
      $region30: #{mask_generator_forward.13} parent=11 // pred_check_branch
        %198 = sbr.rel (%p196) target = $region32
      $region31: #{mask_generator_forward.13} parent=11 // pred_region
        _
      $region32: #{mask_generator_forward.13} parent=11 // pred_fallthru
        _
    $region12: #{mask_generator_forward.13} parent=5 // pred_fallthru
      _
    %p199 = scmp.lt.s32.totalorder %s12, 2
    // Predicated region
    $region33: #{mask_generator_forward.13} parent=5 // pred_check
      %p200 = pneg %p199
    $region34: #{mask_generator_forward.13} parent=5 // pred_check_branch
      %202 = sbr.rel (%p200) target = $region36
    $region35: #{mask_generator_forward.13} parent=5 // pred_region
      // Predicated region
      $region37: #{mask_generator_forward.13} parent=35 // pred_check
        %p203 = pneg %p32
      $region38: #{mask_generator_forward.13} parent=35 // pred_check_branch
        %205 = sbr.rel (%p203) target = $region40
      $region39: #{mask_generator_forward.13} parent=35 // pred_region
        %s206 = smul.u32 2, %s12
        %p207 = scmp.lt.s32.totalorder %s206, 3
        %s208 = scalar_select %p207, %s206, 3
        %s209 = smul.addr %s208, 8
        %s210 = scalar_lea.vmem %s0, %s209
        %s211 = smul.u32 2, %s12
      $region40: #{mask_generator_forward.13} parent=35 // pred_fallthru
        _
    $region36: #{mask_generator_forward.13} parent=5 // pred_fallthru
      _
    %p212 = scmp.le.s32.totalorder 1, %s12
    %p213 = scmp.lt.s32.totalorder %s12, 3
    %p214 = pnand %p212, %p213
    %p215 = pneg %p214
    // Predicated region
    $region41: #{mask_generator_forward.13} parent=5 // pred_check
      _
    $region42: #{mask_generator_forward.13} parent=5 // pred_check_branch
      %217 = sbr.rel (%p214) target = $region44
    $region43: #{mask_generator_forward.13} parent=5 // pred_region
      %s218 = ssub.s32 %s12, 1
      %s219 = smul.u32 2, %s17
      %p220 = scmp.lt.s32.totalorder %s219, 3
      %s221 = scalar_select %p220, %s219, 3
      %s222 = smul.addr %s221, 8
      %s223 = scalar_lea.vmem %s0, %s222
      %p224 = pneg %p38
      %p225 = pneg %p35
      %p226 = pneg %p59
      %p227 = pneg %p56
      %p228 = pneg %p80
      %p229 = pneg %p77
      %p230 = pneg %p101
      %p231 = pneg %p98
      %p232 = pneg %p122
      %p233 = pneg %p119
      %p234 = pneg %p143
      %p235 = pneg %p140
      %p236 = pneg %p169
      %p237 = pneg %p166
      %s238 = smul.u32 2, %s17
      %p239 = scmp.lt.s32.totalorder %s238, 3
      %s240 = scalar_select %p239, %s238, 3
      %s241 = smul.addr %s240, 8
      %s242 = scalar_lea.vmem %s6, %s241
      %s243 = smul.u32 2, %s17
      %p244 = scmp.lt.s32.totalorder %s243, 3
      %s245 = scalar_select %p244, %s243, 3
      %s246 = smul.addr %s245, 8
      %s247 = scalar_lea.vmem %s0, %s246
      %s248 = smul.u32 2, %s17
      %s249 = smul.u32 2, %s17
      %p250 = scmp.lt.s32.totalorder %s249, 3
      %s251 = scalar_select %p250, %s249, 3
      %s252 = smul.addr %s251, 8
      %s253 = scalar_lea.vmem %s6, %s252
      %s254 = smul.u32 2, %s17
      %v256 = vld [vmem:[%s247] sm:$0xff]
      %v257 = vld [vmem:[%s247 + $0x8] sm:$0xff]
      %v258 = vpack.c.bf16 %v257, %v256
      %v259 = vld [vmem:[%s1] sm:$0xf]
      %v260 = vld [vmem:[%s1 + $0x4] sm:$0xf]
      %v261 = vld [vmem:[%s1 + $0x8] sm:$0xf]
      %v262 = vld [vmem:[%s1 + $0xc] sm:$0xf]
      %v263 = vld [vmem:[%s1 + $0x10] sm:$0xf]
      %v264 = vld [vmem:[%s1 + $0x14] sm:$0xf]
      %v265 = vld [vmem:[%s1 + $0x18] sm:$0xf]
      %v266 = vld [vmem:[%s1 + $0x1c] sm:$0xf]
      %v267 = vld [vmem:[%s1 + $0x20] sm:$0xf]
      %v268 = vld [vmem:[%s1 + $0x24] sm:$0xf]
      %v269 = vld [vmem:[%s1 + $0x28] sm:$0xf]
      %v270 = vld [vmem:[%s1 + $0x2c] sm:$0xf]
      %v271 = vld [vmem:[%s1 + $0x30] sm:$0xf]
      %v272 = vld [vmem:[%s1 + $0x34] sm:$0xf]
      %v273 = vld [vmem:[%s1 + $0x38] sm:$0xf]
      %v274 = vld [vmem:[%s1 + $0x3c] sm:$0xf]
      %v275 = vld [vmem:[%s2] sm:$0x1]
      %v277 = vlaneseq
      %v278 = vshrl.u32 %v277, 7
      %v279 = vsub.s32 0, %v278
      %v280 = vrot.slane %v275, %v279
      %v298 = vunpack.c.l.b16 %v259
      %v299 = vunpack.c.l.b16 %v260
      %v300 = vunpack.c.l.b16 %v261
      %v301 = vunpack.c.l.b16 %v262
      %v302 = vunpack.c.l.b16 %v263
      %v303 = vunpack.c.l.b16 %v264
      %v304 = vunpack.c.l.b16 %v265
      %v305 = vunpack.c.l.b16 %v266
      %v306 = vunpack.c.l.b16 %v267
      %v307 = vunpack.c.l.b16 %v268
      %v308 = vunpack.c.l.b16 %v269
      %v309 = vunpack.c.l.b16 %v270
      %v310 = vunpack.c.l.b16 %v271
      %v311 = vunpack.c.l.b16 %v272
      %v312 = vunpack.c.l.b16 %v273
      %v313 = vunpack.c.l.b16 %v274
      %v314 = vpack.c.b16 %v299, %v298
      %v315 = vpack.c.b16 %v301, %v300
      %v316 = vpack.c.b16 %v303, %v302
      %v317 = vpack.c.b16 %v305, %v304
      %v318 = vpack.c.b16 %v307, %v306
      %v319 = vpack.c.b16 %v309, %v308
      %v320 = vpack.c.b16 %v311, %v310
      %v321 = vpack.c.b16 %v313, %v312
      %330 = vmatprep.subr.bf16.mxu0 0
      %331 = vmatpush1.bf16.msra.mxu0 %v321
      %332 = vmatprep.subr.bf16.mxu0 0
      %333 = vmatpush1.bf16.msra.mxu0 %v320
      %334 = vmatprep.subr.bf16.mxu0 0
      %335 = vmatpush1.bf16.msra.mxu0 %v319
      %336 = vmatprep.subr.bf16.mxu0 0
      %337 = vmatpush1.bf16.msra.mxu0 %v318
      %338 = vmatprep.subr.bf16.mxu0 0
      %339 = vmatpush1.bf16.msra.mxu0 %v317
      %340 = vmatprep.subr.bf16.mxu0 0
      %341 = vmatpush1.bf16.msra.mxu0 %v316
      %342 = vmatprep.subr.bf16.mxu0 0
      %343 = vmatpush1.bf16.msra.mxu0 %v315
      %344 = vmatprep.subr.bf16.mxu0 0
      %345 = vmatpush1.bf16.msra.mxu0 %v314
      %346 = vmatprep.subr.bf16.mxu0 0
      %347 = vmatpush2.bf16.msra.mxu0 0
      %348 = vmatprep.subr.bf16.mxu0 0
      %349 = vmatpush2.bf16.msra.mxu0 0
      %350 = vmatprep.subr.bf16.mxu0 0
      %351 = vmatpush2.bf16.msra.mxu0 0
      %352 = vmatprep.subr.bf16.mxu0 0
      %353 = vmatpush2.bf16.msra.mxu0 0
      %354 = vmatprep.subr.bf16.mxu0 0
      %355 = vmatpush2.bf16.msra.mxu0 0
      %356 = vmatprep.subr.bf16.mxu0 0
      %357 = vmatpush2.bf16.msra.mxu0 0
      %358 = vmatprep.subr.bf16.mxu0 0
      %359 = vmatpush2.bf16.msra.mxu0 0
      %360 = vmatprep.subr.bf16.mxu0 0
      %361 = vmatpush2.bf16.msra.mxu0 0
      %362 = vmatprep.mubr.bf16.mxu0 0
      %363 = vmatmul.mubr.bf16.gmra.mxu0 %v258
      %v364 = vpop.f32.mrf.mxu0
      %v365 = vadd.f32 %v280, %v364
      %v366 = vpop.f32.mrf.mxu0
      %v367 = vpop.f32.mrf.mxu0
      %v368 = vadd.f32 %v280, %v367
      %v369 = vpop.f32.mrf.mxu0
      %370 = vdwg.mxu0
      %v371 = vtanh.pop %v365
      %v372 = vtanh.pop %v368
      %v373 = vld [vmem:[%s3] sm:$0xf]
      %v374 = vld [vmem:[%s3 + $0x4] sm:$0xf]
      %v375 = vld [vmem:[%s3 + $0x8] sm:$0xf]
      %v376 = vld [vmem:[%s3 + $0xc] sm:$0xf]
      %v377 = vld [vmem:[%s3 + $0x10] sm:$0xf]
      %v378 = vld [vmem:[%s3 + $0x14] sm:$0xf]
      %v379 = vld [vmem:[%s3 + $0x18] sm:$0xf]
      %v380 = vld [vmem:[%s3 + $0x1c] sm:$0xf]
      %v381 = vld [vmem:[%s3 + $0x20] sm:$0xf]
      %v382 = vld [vmem:[%s3 + $0x24] sm:$0xf]
      %v383 = vld [vmem:[%s3 + $0x28] sm:$0xf]
      %v384 = vld [vmem:[%s3 + $0x2c] sm:$0xf]
      %v385 = vld [vmem:[%s3 + $0x30] sm:$0xf]
      %v386 = vld [vmem:[%s3 + $0x34] sm:$0xf]
      %v387 = vld [vmem:[%s3 + $0x38] sm:$0xf]
      %v388 = vld [vmem:[%s3 + $0x3c] sm:$0xf]
      %v389 = vld [vmem:[%s4] sm:$0x1]
      %v391 = vlaneseq
      %v392 = vshrl.u32 %v391, 7
      %v393 = vsub.s32 0, %v392
      %v394 = vrot.slane %v389, %v393
      %v412 = vunpack.c.l.b16 %v373
      %v413 = vunpack.c.l.b16 %v374
      %v414 = vunpack.c.l.b16 %v375
      %v415 = vunpack.c.l.b16 %v376
      %v416 = vunpack.c.l.b16 %v377
      %v417 = vunpack.c.l.b16 %v378
      %v418 = vunpack.c.l.b16 %v379
      %v419 = vunpack.c.l.b16 %v380
      %v420 = vunpack.c.l.b16 %v381
      %v421 = vunpack.c.l.b16 %v382
      %v422 = vunpack.c.l.b16 %v383
      %v423 = vunpack.c.l.b16 %v384
      %v424 = vunpack.c.l.b16 %v385
      %v425 = vunpack.c.l.b16 %v386
      %v426 = vunpack.c.l.b16 %v387
      %v427 = vunpack.c.l.b16 %v388
      %v428 = vpack.c.b16 %v413, %v412
      %v429 = vpack.c.b16 %v415, %v414
      %v430 = vpack.c.b16 %v417, %v416
      %v431 = vpack.c.b16 %v419, %v418
      %v432 = vpack.c.b16 %v421, %v420
      %v433 = vpack.c.b16 %v423, %v422
      %v434 = vpack.c.b16 %v425, %v424
      %v435 = vpack.c.b16 %v427, %v426
      %444 = vmatprep.subr.bf16.mxu0 0
      %445 = vmatpush1.bf16.msra.mxu0 %v435
      %446 = vmatprep.subr.bf16.mxu0 0
      %447 = vmatpush1.bf16.msra.mxu0 %v434
      %448 = vmatprep.subr.bf16.mxu0 0
      %449 = vmatpush1.bf16.msra.mxu0 %v433
      %450 = vmatprep.subr.bf16.mxu0 0
      %451 = vmatpush1.bf16.msra.mxu0 %v432
      %452 = vmatprep.subr.bf16.mxu0 0
      %453 = vmatpush1.bf16.msra.mxu0 %v431
      %454 = vmatprep.subr.bf16.mxu0 0
      %455 = vmatpush1.bf16.msra.mxu0 %v430
      %456 = vmatprep.subr.bf16.mxu0 0
      %457 = vmatpush1.bf16.msra.mxu0 %v429
      %458 = vmatprep.subr.bf16.mxu0 0
      %459 = vmatpush1.bf16.msra.mxu0 %v428
      %460 = vmatprep.subr.bf16.mxu0 0
      %461 = vmatpush2.bf16.msra.mxu0 0
      %462 = vmatprep.subr.bf16.mxu0 0
      %463 = vmatpush2.bf16.msra.mxu0 0
      %464 = vmatprep.subr.bf16.mxu0 0
      %465 = vmatpush2.bf16.msra.mxu0 0
      %466 = vmatprep.subr.bf16.mxu0 0
      %467 = vmatpush2.bf16.msra.mxu0 0
      %468 = vmatprep.subr.bf16.mxu0 0
      %469 = vmatpush2.bf16.msra.mxu0 0
      %470 = vmatprep.subr.bf16.mxu0 0
      %471 = vmatpush2.bf16.msra.mxu0 0
      %472 = vmatprep.subr.bf16.mxu0 0
      %473 = vmatpush2.bf16.msra.mxu0 0
      %474 = vmatprep.subr.bf16.mxu0 0
      %475 = vmatpush2.bf16.msra.mxu0 0
      %476 = vmatprep.mubr.bf16.mxu0 0
      %477 = vmatmul.mubr.bf16.gmra.mxu0 %v258
      %v478 = vpop.f32.mrf.mxu0
      %v479 = vadd.f32 %v394, %v478
      %v480 = vpop.f32.mrf.mxu0
      %v481 = vpop.f32.mrf.mxu0
      %v482 = vadd.f32 %v394, %v481
      %v483 = vpop.f32.mrf.mxu0
      %484 = vdwg.mxu0
      %v485 = vxor.u32 %v479, 2147483648
      %v486 = vxor.u32 %v482, 2147483648
      %v487 = vmul.f32 %v485, 1.442695
      %v488 = vpow.pop %v487
      %v489 = vmul.f32 %v486, 1.442695
      %v490 = vpow.pop %v489
      %v491 = vadd.f32 %v488, 1.0
      %v492 = vadd.f32 %v490, 1.0
      %v493 = vrcp.pop %v491
      %v494 = vmul.f32 1.0, %v493
      %v495 = vrcp.pop %v492
      %v496 = vmul.f32 1.0, %v495
      %v497 = vmul.f32 %v371, %v494
      %v498 = vmul.f32 %v372, %v496
      %v499 = vpack.c.bf16 %v498, %v497
      %v500 = vld [vmem:[%s5] sm:$0xf]
      %v501 = vld [vmem:[%s5 + $0x4] sm:$0xf]
      %v502 = vld [vmem:[%s5 + $0x8] sm:$0xf]
      %v503 = vld [vmem:[%s5 + $0xc] sm:$0xf]
      %v504 = vld [vmem:[%s5 + $0x10] sm:$0xf]
      %v505 = vld [vmem:[%s5 + $0x14] sm:$0xf]
      %v506 = vld [vmem:[%s5 + $0x18] sm:$0xf]
      %v507 = vld [vmem:[%s5 + $0x1c] sm:$0xf]
      %v508 = vld [vmem:[%s5 + $0x20] sm:$0xf]
      %v509 = vld [vmem:[%s5 + $0x24] sm:$0xf]
      %v510 = vld [vmem:[%s5 + $0x28] sm:$0xf]
      %v511 = vld [vmem:[%s5 + $0x2c] sm:$0xf]
      %v512 = vld [vmem:[%s5 + $0x30] sm:$0xf]
      %v513 = vld [vmem:[%s5 + $0x34] sm:$0xf]
      %v514 = vld [vmem:[%s5 + $0x38] sm:$0xf]
      %v515 = vld [vmem:[%s5 + $0x3c] sm:$0xf]
      %v532 = vunpack.c.l.b16 %v500
      %v533 = vunpack.c.l.b16 %v501
      %v534 = vunpack.c.l.b16 %v502
      %v535 = vunpack.c.l.b16 %v503
      %v536 = vunpack.c.l.b16 %v504
      %v537 = vunpack.c.l.b16 %v505
      %v538 = vunpack.c.l.b16 %v506
      %v539 = vunpack.c.l.b16 %v507
      %v540 = vunpack.c.l.b16 %v508
      %v541 = vunpack.c.l.b16 %v509
      %v542 = vunpack.c.l.b16 %v510
      %v543 = vunpack.c.l.b16 %v511
      %v544 = vunpack.c.l.b16 %v512
      %v545 = vunpack.c.l.b16 %v513
      %v546 = vunpack.c.l.b16 %v514
      %v547 = vunpack.c.l.b16 %v515
      %v548 = vpack.c.b16 %v533, %v532
      %v549 = vpack.c.b16 %v535, %v534
      %v550 = vpack.c.b16 %v537, %v536
      %v551 = vpack.c.b16 %v539, %v538
      %v552 = vpack.c.b16 %v541, %v540
      %v553 = vpack.c.b16 %v543, %v542
      %v554 = vpack.c.b16 %v545, %v544
      %v555 = vpack.c.b16 %v547, %v546
      %564 = vmatprep.subr.bf16.mxu0 0
      %565 = vmatpush1.bf16.msra.mxu0 %v555
      %566 = vmatprep.subr.bf16.mxu0 0
      %567 = vmatpush1.bf16.msra.mxu0 %v554
      %568 = vmatprep.subr.bf16.mxu0 0
      %569 = vmatpush1.bf16.msra.mxu0 %v553
      %570 = vmatprep.subr.bf16.mxu0 0
      %571 = vmatpush1.bf16.msra.mxu0 %v552
      %572 = vmatprep.subr.bf16.mxu0 0
      %573 = vmatpush1.bf16.msra.mxu0 %v551
      %574 = vmatprep.subr.bf16.mxu0 0
      %575 = vmatpush1.bf16.msra.mxu0 %v550
      %576 = vmatprep.subr.bf16.mxu0 0
      %577 = vmatpush1.bf16.msra.mxu0 %v549
      %578 = vmatprep.subr.bf16.mxu0 0
      %579 = vmatpush1.bf16.msra.mxu0 %v548
      %580 = vmatprep.subr.bf16.mxu0 0
      %581 = vmatpush2.bf16.msra.mxu0 0
      %582 = vmatprep.subr.bf16.mxu0 0
      %583 = vmatpush2.bf16.msra.mxu0 0
      %584 = vmatprep.subr.bf16.mxu0 0
      %585 = vmatpush2.bf16.msra.mxu0 0
      %586 = vmatprep.subr.bf16.mxu0 0
      %587 = vmatpush2.bf16.msra.mxu0 0
      %588 = vmatprep.subr.bf16.mxu0 0
      %589 = vmatpush2.bf16.msra.mxu0 0
      %590 = vmatprep.subr.bf16.mxu0 0
      %591 = vmatpush2.bf16.msra.mxu0 0
      %592 = vmatprep.subr.bf16.mxu0 0
      %593 = vmatpush2.bf16.msra.mxu0 0
      %594 = vmatprep.subr.bf16.mxu0 0
      %595 = vmatpush2.bf16.msra.mxu0 0
      %596 = vmatprep.mubr.bf16.mxu0 0
      %597 = vmatmul.mubr.bf16.gmra.mxu0 %v499
      %v598 = vpop.f32.mrf.mxu0
      %v599 = vadd.f32 0.0, %v598
      %v600 = vpop.f32.mrf.mxu0
      %v601 = vpop.f32.mrf.mxu0
      %v602 = vadd.f32 0.0, %v601
      %v603 = vpop.f32.mrf.mxu0
      %604 = vdwg.mxu0
      %v605 = vmax.f32 %v599, 0.0
      %v606 = vmax.f32 %v602, 0.0
      %607 = vst [vmem:[%s253] sm:$0xff] %v605
      %608 = vst [vmem:[%s253 + $0x8] sm:$0xff] %v606
      %s609 = smul.u32 2, %s17
      %p610 = scmp.lt.s32.totalorder %s609, 3
      %s611 = scalar_select %p610, %s609, 3
      %s612 = smul.addr %s611, 8
      %s613 = scalar_lea.vmem %s6, %s612
      // Predicated region
      $region45: #{mask_generator_forward.13} parent=43 // pred_check
        %p614 = pneg %p166
      $region46: #{mask_generator_forward.13} parent=43 // pred_check_branch
        %616 = sbr.rel (%p614) target = $region48
      $region47: #{mask_generator_forward.13} parent=43 // pred_region
        %s617 = smul.u32 2, %s17
      $region48: #{mask_generator_forward.13} parent=43 // pred_fallthru
        _
    $region44: #{mask_generator_forward.13} parent=5 // pred_fallthru
      _
    %p618 = scmp.le.s32.totalorder 2, %s12
    // Predicated region
    $region49: #{mask_generator_forward.13} parent=5 // pred_check
      %p619 = pneg %p618
    $region50: #{mask_generator_forward.13} parent=5 // pred_check_branch
      %621 = sbr.rel (%p619) target = $region52
    $region51: #{mask_generator_forward.13} parent=5 // pred_region
      %s622 = ssub.s32 %s12, 2
      // Predicated region
      $region53: #{mask_generator_forward.13} parent=51 // pred_check
        %p623 = pneg %p172
      $region54: #{mask_generator_forward.13} parent=51 // pred_check_branch
        %625 = sbr.rel (%p623) target = $region56
      $region55: #{mask_generator_forward.13} parent=51 // pred_region
        %s626 = smul.u32 2, %s18
        %p627 = scmp.lt.s32.totalorder %s626, 3
        %s628 = scalar_select %p627, %s626, 3
        %s629 = smul.addr %s628, 8
        %s630 = scalar_lea.vmem %s6, %s629
      $region56: #{mask_generator_forward.13} parent=51 // pred_fallthru
        _
    $region52: #{mask_generator_forward.13} parent=5 // pred_fallthru
      _
  $region6: #{mask_generator_forward.13} parent=0 // loop_footer
    %s16 = sadd.s32 1, %s12
  $region7: #{mask_generator_forward.13} parent=0 // loop_footer_branch
    %11 = sbr.rel target = $region3
  $region8: #{mask_generator_forward.13} parent=0 // loop_exit
    _

// kernel: mask_generator_forward.8
$region0: #{mask_generator_forward.8}
  #allocation0 [shape = 'u32[]', space=smem, size = 0x4, offset = 0x4, fixed_abs, tag = 'smem constant byte address 0x4 - core index']
  #allocation1 [shape = 'u32[144,128]{1,0:T(1,128)}', space=vmem, size = 0x12000, scoped, tag = 'internal scratch']
  %s0 = inlined_call_operand.vmem [shape: f32[16,8,32], index: 0, kind: input, shape index: {}]
  %s1 = inlined_call_operand.vmem [shape: f32[1,8,32], index: 1, kind: input, shape index: {}]
  %s2 = inlined_call_operand.vmem [shape: f32[8,1,32], index: 2, kind: input, shape index: {}]
  %s3 = inlined_call_operand.vmem [shape: f32[8,1,32], index: 3, kind: input, shape index: {}]
  %s4 = inlined_call_operand.vmem [shape: bf16[8,32,96], index: 4, kind: input, shape index: {}]
  %s5 = inlined_call_operand.vmem [shape: f32[8,1,96], index: 5, kind: input, shape index: {}]
  %s6 = inlined_call_operand.vmem [shape: bf16[8,32,32], index: 6, kind: input, shape index: {}]
  %s7 = inlined_call_operand.vmem [shape: f32[8,1,32], index: 7, kind: input, shape index: {}]
  %s8 = inlined_call_operand.vmem [shape: f32[8,1,32], index: 8, kind: input, shape index: {}]
  %s9 = inlined_call_operand.vmem [shape: f32[8,1,32], index: 9, kind: input, shape index: {}]
  %s10 = inlined_call_operand.vmem [shape: bf16[8,32,64], index: 10, kind: input, shape index: {}]
  %s11 = inlined_call_operand.vmem [shape: f32[8,1,64], index: 11, kind: input, shape index: {}]
  %s12 = inlined_call_operand.vmem [shape: bf16[8,64,32], index: 12, kind: input, shape index: {}]
  %s13 = inlined_call_operand.vmem [shape: f32[8,1,32], index: 13, kind: input, shape index: {}]
  %s14 = inlined_call_operand.vmem [shape: f32[1,1,32], index: 14, kind: input, shape index: {}]
  %s15 = inlined_call_operand.vmem [shape: f32[1,1,32], index: 15, kind: input, shape index: {}]
  %s16 = inlined_call_operand.vmem [shape: f32[16,8,32], index: 16, kind: output, shape index: {}]
  %s17 = sld [smem:[#allocation0]]
  $region104: #{mask_generator_forward.8} parent=0
    _
  %s19 = ssub.s32 1, %s17
  %s20 = scalar_select 0, %s19, %s17
  loop: start=0, step=1, limit=4
  $region2: #{mask_generator_forward.8} parent=0 // loop_pre_header
    _
  $region3: #{mask_generator_forward.8} parent=0 // loop_header
    %s22 = sphi 0, %s26
    %p23 = scmp.ge.s32.totalorder %s22, 4
    %s32 = sphi 0, %s34
    %s35 = sphi 0, %s32
    %s36 = sphi 0, %s35
    %s52 = sphi 0, %s36
    %s56 = sphi 0, %s56
    %s58 = sphi 0, %s56
    %s59 = sphi 0, %s58
    %s73 = sphi 0, %s59
    %s77 = sphi 0, %s77
    %s79 = sphi 0, %s77
    %s80 = sphi 0, %s79
    %s94 = sphi 0, %s80
    %s98 = sphi 0, %s98
    %s100 = sphi 0, %s98
    %s101 = sphi 0, %s100
    %s115 = sphi 0, %s101
    %s119 = sphi 0, %s119
    %s121 = sphi 0, %s119
    %s122 = sphi 0, %s121
    %s136 = sphi 0, %s122
    %s140 = sphi 0, %s140
    %s142 = sphi 0, %s140
    %s143 = sphi 0, %s142
    %s157 = sphi 0, %s143
    %s161 = sphi 0, %s161
    %s163 = sphi 0, %s161
    %s164 = sphi 0, %s163
    %s178 = sphi 0, %s164
    %s182 = sphi 0, %s182
    %s184 = sphi 0, %s182
    %s185 = sphi 0, %s184
    %s199 = sphi 0, %s185
    %s203 = sphi 0, %s203
    %s205 = sphi 0, %s203
    %s206 = sphi 0, %s205
    %s220 = sphi 0, %s206
    %s224 = sphi 0, %s224
    %s226 = sphi 0, %s224
    %s227 = sphi 0, %s226
    %s241 = sphi 0, %s227
    %s245 = sphi 0, %s245
    %s247 = sphi 0, %s245
    %s248 = sphi 0, %s247
    %s262 = sphi 0, %s248
    %s266 = sphi 0, %s266
    %s268 = sphi 0, %s266
    %s269 = sphi 0, %s268
    %s283 = sphi 0, %s269
    %s287 = sphi 0, %s287
    %s289 = sphi 0, %s287
    %s290 = sphi 0, %s289
    %s304 = sphi 0, %s290
    %s308 = sphi 0, %s308
    %s310 = sphi 0, %s308
    %s311 = sphi 0, %s310
    %s325 = sphi 0, %s311
    %s329 = sphi 0, %s329
    %s331 = sphi 0, %s329
    %s332 = sphi 0, %s331
    %s346 = sphi 0, %s332
    %s350 = sphi 0, %s350
    %s352 = sphi 0, %s350
    %s353 = sphi 0, %s352
    %s367 = sphi 0, %s353
    %s373 = sphi 0, %s375
    %s376 = sphi 0, %s373
    %s377 = sphi 0, %s376
    %s393 = sphi 0, %s377
  $region4: #{mask_generator_forward.8} parent=0 // loop_header_branch
    %25 = sbr.rel (%p23) target = $region8
  $region5: #{mask_generator_forward.8} parent=0 // loop_body
    %s27 = ssub.s32 %s22, 1
    %s28 = ssub.s32 %s22, 2
    %s29 = sadd.s32 %s22, 1
    %s30 = ssub.s32 %s22, %s29
    %p31 = scmp.eq.s32.totalorder %s30, 0
    %s33 = sadd.s32 %s32, 1
    %s34 = scalar_select %p31, %s32, %s33
    %p37 = pneg %p31
    %p38 = scmp.eq.s32.totalorder %s22, 1
    %p39 = por %p37, %p38
    %p40 = scmp.ne.s32.totalorder %s32, %s35
    %p41 = scmp.eq.s32.totalorder %s22, 0
    %p42 = por %p40, %p41
    %p43 = scmp.ne.s32.totalorder %s32, %s35
    %p44 = scmp.eq.s32.totalorder %s27, 1
    %p45 = por %p43, %p44
    %p46 = scmp.ne.s32.totalorder %s35, %s36
    %p47 = scmp.eq.s32.totalorder %s27, 0
    %p48 = por %p46, %p47
    %p49 = scmp.ne.s32.totalorder %s35, %s36
    %p50 = scmp.eq.s32.totalorder %s28, 1
    %p51 = por %p49, %p50
    %p53 = scmp.ne.s32.totalorder %s36, %s52
    %p54 = scmp.eq.s32.totalorder %s28, 0
    %p55 = por %p53, %p54
    %s57 = sadd.s32 %s56, 1
    %p60 = scmp.eq.s32.totalorder %s22, 1
    %p61 = scmp.ne.s32.totalorder %s56, %s58
    %p62 = scmp.eq.s32.totalorder %s22, 0
    %p63 = por %p61, %p62
    %p64 = scmp.ne.s32.totalorder %s56, %s58
    %p65 = scmp.eq.s32.totalorder %s27, 1
    %p66 = por %p64, %p65
    %p67 = scmp.ne.s32.totalorder %s58, %s59
    %p68 = scmp.eq.s32.totalorder %s27, 0
    %p69 = por %p67, %p68
    %p70 = scmp.ne.s32.totalorder %s58, %s59
    %p71 = scmp.eq.s32.totalorder %s28, 1
    %p72 = por %p70, %p71
    %p74 = scmp.ne.s32.totalorder %s59, %s73
    %p75 = scmp.eq.s32.totalorder %s28, 0
    %p76 = por %p74, %p75
    %s78 = sadd.s32 %s77, 1
    %p81 = scmp.eq.s32.totalorder %s22, 1
    %p82 = scmp.ne.s32.totalorder %s77, %s79
    %p83 = scmp.eq.s32.totalorder %s22, 0
    %p84 = por %p82, %p83
    %p85 = scmp.ne.s32.totalorder %s77, %s79
    %p86 = scmp.eq.s32.totalorder %s27, 1
    %p87 = por %p85, %p86
    %p88 = scmp.ne.s32.totalorder %s79, %s80
    %p89 = scmp.eq.s32.totalorder %s27, 0
    %p90 = por %p88, %p89
    %p91 = scmp.ne.s32.totalorder %s79, %s80
    %p92 = scmp.eq.s32.totalorder %s28, 1
    %p93 = por %p91, %p92
    %p95 = scmp.ne.s32.totalorder %s80, %s94
    %p96 = scmp.eq.s32.totalorder %s28, 0
    %p97 = por %p95, %p96
    %s99 = sadd.s32 %s98, 1
    %p102 = scmp.eq.s32.totalorder %s22, 1
    %p103 = scmp.ne.s32.totalorder %s98, %s100
    %p104 = scmp.eq.s32.totalorder %s22, 0
    %p105 = por %p103, %p104
    %p106 = scmp.ne.s32.totalorder %s98, %s100
    %p107 = scmp.eq.s32.totalorder %s27, 1
    %p108 = por %p106, %p107
    %p109 = scmp.ne.s32.totalorder %s100, %s101
    %p110 = scmp.eq.s32.totalorder %s27, 0
    %p111 = por %p109, %p110
    %p112 = scmp.ne.s32.totalorder %s100, %s101
    %p113 = scmp.eq.s32.totalorder %s28, 1
    %p114 = por %p112, %p113
    %p116 = scmp.ne.s32.totalorder %s101, %s115
    %p117 = scmp.eq.s32.totalorder %s28, 0
    %p118 = por %p116, %p117
    %s120 = sadd.s32 %s119, 1
    %p123 = scmp.eq.s32.totalorder %s22, 1
    %p124 = scmp.ne.s32.totalorder %s119, %s121
    %p125 = scmp.eq.s32.totalorder %s22, 0
    %p126 = por %p124, %p125
    %p127 = scmp.ne.s32.totalorder %s119, %s121
    %p128 = scmp.eq.s32.totalorder %s27, 1
    %p129 = por %p127, %p128
    %p130 = scmp.ne.s32.totalorder %s121, %s122
    %p131 = scmp.eq.s32.totalorder %s27, 0
    %p132 = por %p130, %p131
    %p133 = scmp.ne.s32.totalorder %s121, %s122
    %p134 = scmp.eq.s32.totalorder %s28, 1
    %p135 = por %p133, %p134
    %p137 = scmp.ne.s32.totalorder %s122, %s136
    %p138 = scmp.eq.s32.totalorder %s28, 0
    %p139 = por %p137, %p138
    %s141 = sadd.s32 %s140, 1
    %p144 = scmp.eq.s32.totalorder %s22, 1
    %p145 = scmp.ne.s32.totalorder %s140, %s142
    %p146 = scmp.eq.s32.totalorder %s22, 0
    %p147 = por %p145, %p146
    %p148 = scmp.ne.s32.totalorder %s140, %s142
    %p149 = scmp.eq.s32.totalorder %s27, 1
    %p150 = por %p148, %p149
    %p151 = scmp.ne.s32.totalorder %s142, %s143
    %p152 = scmp.eq.s32.totalorder %s27, 0
    %p153 = por %p151, %p152
    %p154 = scmp.ne.s32.totalorder %s142, %s143
    %p155 = scmp.eq.s32.totalorder %s28, 1
    %p156 = por %p154, %p155
    %p158 = scmp.ne.s32.totalorder %s143, %s157
    %p159 = scmp.eq.s32.totalorder %s28, 0
    %p160 = por %p158, %p159
    %s162 = sadd.s32 %s161, 1
    %p165 = scmp.eq.s32.totalorder %s22, 1
    %p166 = scmp.ne.s32.totalorder %s161, %s163
    %p167 = scmp.eq.s32.totalorder %s22, 0
    %p168 = por %p166, %p167
    %p169 = scmp.ne.s32.totalorder %s161, %s163
    %p170 = scmp.eq.s32.totalorder %s27, 1
    %p171 = por %p169, %p170
    %p172 = scmp.ne.s32.totalorder %s163, %s164
    %p173 = scmp.eq.s32.totalorder %s27, 0
    %p174 = por %p172, %p173
    %p175 = scmp.ne.s32.totalorder %s163, %s164
    %p176 = scmp.eq.s32.totalorder %s28, 1
    %p177 = por %p175, %p176
    %p179 = scmp.ne.s32.totalorder %s164, %s178
    %p180 = scmp.eq.s32.totalorder %s28, 0
    %p181 = por %p179, %p180
    %s183 = sadd.s32 %s182, 1
    %p186 = scmp.eq.s32.totalorder %s22, 1
    %p187 = scmp.ne.s32.totalorder %s182, %s184
    %p188 = scmp.eq.s32.totalorder %s22, 0
    %p189 = por %p187, %p188
    %p190 = scmp.ne.s32.totalorder %s182, %s184
    %p191 = scmp.eq.s32.totalorder %s27, 1
    %p192 = por %p190, %p191
    %p193 = scmp.ne.s32.totalorder %s184, %s185
    %p194 = scmp.eq.s32.totalorder %s27, 0
    %p195 = por %p193, %p194
    %p196 = scmp.ne.s32.totalorder %s184, %s185
    %p197 = scmp.eq.s32.totalorder %s28, 1
    %p198 = por %p196, %p197
    %p200 = scmp.ne.s32.totalorder %s185, %s199
    %p201 = scmp.eq.s32.totalorder %s28, 0
    %p202 = por %p200, %p201
    %s204 = sadd.s32 %s203, 1
    %p207 = scmp.eq.s32.totalorder %s22, 1
    %p208 = scmp.ne.s32.totalorder %s203, %s205
    %p209 = scmp.eq.s32.totalorder %s22, 0
    %p210 = por %p208, %p209
    %p211 = scmp.ne.s32.totalorder %s203, %s205
    %p212 = scmp.eq.s32.totalorder %s27, 1
    %p213 = por %p211, %p212
    %p214 = scmp.ne.s32.totalorder %s205, %s206
    %p215 = scmp.eq.s32.totalorder %s27, 0
    %p216 = por %p214, %p215
    %p217 = scmp.ne.s32.totalorder %s205, %s206
    %p218 = scmp.eq.s32.totalorder %s28, 1
    %p219 = por %p217, %p218
    %p221 = scmp.ne.s32.totalorder %s206, %s220
    %p222 = scmp.eq.s32.totalorder %s28, 0
    %p223 = por %p221, %p222
    %s225 = sadd.s32 %s224, 1
    %p228 = scmp.eq.s32.totalorder %s22, 1
    %p229 = scmp.ne.s32.totalorder %s224, %s226
    %p230 = scmp.eq.s32.totalorder %s22, 0
    %p231 = por %p229, %p230
    %p232 = scmp.ne.s32.totalorder %s224, %s226
    %p233 = scmp.eq.s32.totalorder %s27, 1
    %p234 = por %p232, %p233
    %p235 = scmp.ne.s32.totalorder %s226, %s227
    %p236 = scmp.eq.s32.totalorder %s27, 0
    %p237 = por %p235, %p236
    %p238 = scmp.ne.s32.totalorder %s226, %s227
    %p239 = scmp.eq.s32.totalorder %s28, 1
    %p240 = por %p238, %p239
    %p242 = scmp.ne.s32.totalorder %s227, %s241
    %p243 = scmp.eq.s32.totalorder %s28, 0
    %p244 = por %p242, %p243
    %s246 = sadd.s32 %s245, 1
    %p249 = scmp.eq.s32.totalorder %s22, 1
    %p250 = scmp.ne.s32.totalorder %s245, %s247
    %p251 = scmp.eq.s32.totalorder %s22, 0
    %p252 = por %p250, %p251
    %p253 = scmp.ne.s32.totalorder %s245, %s247
    %p254 = scmp.eq.s32.totalorder %s27, 1
    %p255 = por %p253, %p254
    %p256 = scmp.ne.s32.totalorder %s247, %s248
    %p257 = scmp.eq.s32.totalorder %s27, 0
    %p258 = por %p256, %p257
    %p259 = scmp.ne.s32.totalorder %s247, %s248
    %p260 = scmp.eq.s32.totalorder %s28, 1
    %p261 = por %p259, %p260
    %p263 = scmp.ne.s32.totalorder %s248, %s262
    %p264 = scmp.eq.s32.totalorder %s28, 0
    %p265 = por %p263, %p264
    %s267 = sadd.s32 %s266, 1
    %p270 = scmp.eq.s32.totalorder %s22, 1
    %p271 = scmp.ne.s32.totalorder %s266, %s268
    %p272 = scmp.eq.s32.totalorder %s22, 0
    %p273 = por %p271, %p272
    %p274 = scmp.ne.s32.totalorder %s266, %s268
    %p275 = scmp.eq.s32.totalorder %s27, 1
    %p276 = por %p274, %p275
    %p277 = scmp.ne.s32.totalorder %s268, %s269
    %p278 = scmp.eq.s32.totalorder %s27, 0
    %p279 = por %p277, %p278
    %p280 = scmp.ne.s32.totalorder %s268, %s269
    %p281 = scmp.eq.s32.totalorder %s28, 1
    %p282 = por %p280, %p281
    %p284 = scmp.ne.s32.totalorder %s269, %s283
    %p285 = scmp.eq.s32.totalorder %s28, 0
    %p286 = por %p284, %p285
    %s288 = sadd.s32 %s287, 1
    %p291 = scmp.eq.s32.totalorder %s22, 1
    %p292 = scmp.ne.s32.totalorder %s287, %s289
    %p293 = scmp.eq.s32.totalorder %s22, 0
    %p294 = por %p292, %p293
    %p295 = scmp.ne.s32.totalorder %s287, %s289
    %p296 = scmp.eq.s32.totalorder %s27, 1
    %p297 = por %p295, %p296
    %p298 = scmp.ne.s32.totalorder %s289, %s290
    %p299 = scmp.eq.s32.totalorder %s27, 0
    %p300 = por %p298, %p299
    %p301 = scmp.ne.s32.totalorder %s289, %s290
    %p302 = scmp.eq.s32.totalorder %s28, 1
    %p303 = por %p301, %p302
    %p305 = scmp.ne.s32.totalorder %s290, %s304
    %p306 = scmp.eq.s32.totalorder %s28, 0
    %p307 = por %p305, %p306
    %s309 = sadd.s32 %s308, 1
    %p312 = scmp.eq.s32.totalorder %s22, 1
    %p313 = scmp.ne.s32.totalorder %s308, %s310
    %p314 = scmp.eq.s32.totalorder %s22, 0
    %p315 = por %p313, %p314
    %p316 = scmp.ne.s32.totalorder %s308, %s310
    %p317 = scmp.eq.s32.totalorder %s27, 1
    %p318 = por %p316, %p317
    %p319 = scmp.ne.s32.totalorder %s310, %s311
    %p320 = scmp.eq.s32.totalorder %s27, 0
    %p321 = por %p319, %p320
    %p322 = scmp.ne.s32.totalorder %s310, %s311
    %p323 = scmp.eq.s32.totalorder %s28, 1
    %p324 = por %p322, %p323
    %p326 = scmp.ne.s32.totalorder %s311, %s325
    %p327 = scmp.eq.s32.totalorder %s28, 0
    %p328 = por %p326, %p327
    %s330 = sadd.s32 %s329, 1
    %p333 = scmp.eq.s32.totalorder %s22, 1
    %p334 = scmp.ne.s32.totalorder %s329, %s331
    %p335 = scmp.eq.s32.totalorder %s22, 0
    %p336 = por %p334, %p335
    %p337 = scmp.ne.s32.totalorder %s329, %s331
    %p338 = scmp.eq.s32.totalorder %s27, 1
    %p339 = por %p337, %p338
    %p340 = scmp.ne.s32.totalorder %s331, %s332
    %p341 = scmp.eq.s32.totalorder %s27, 0
    %p342 = por %p340, %p341
    %p343 = scmp.ne.s32.totalorder %s331, %s332
    %p344 = scmp.eq.s32.totalorder %s28, 1
    %p345 = por %p343, %p344
    %p347 = scmp.ne.s32.totalorder %s332, %s346
    %p348 = scmp.eq.s32.totalorder %s28, 0
    %p349 = por %p347, %p348
    %s351 = sadd.s32 %s350, 1
    %p354 = scmp.eq.s32.totalorder %s22, 1
    %p355 = scmp.ne.s32.totalorder %s350, %s352
    %p356 = scmp.eq.s32.totalorder %s22, 0
    %p357 = por %p355, %p356
    %p358 = scmp.ne.s32.totalorder %s350, %s352
    %p359 = scmp.eq.s32.totalorder %s27, 1
    %p360 = por %p358, %p359
    %p361 = scmp.ne.s32.totalorder %s352, %s353
    %p362 = scmp.eq.s32.totalorder %s27, 0
    %p363 = por %p361, %p362
    %p364 = scmp.ne.s32.totalorder %s352, %s353
    %p365 = scmp.eq.s32.totalorder %s28, 1
    %p366 = por %p364, %p365
    %p368 = scmp.ne.s32.totalorder %s353, %s367
    %p369 = scmp.eq.s32.totalorder %s28, 0
    %p370 = por %p368, %p369
    %s371 = ssub.s32 %s22, %s29
    %p372 = scmp.eq.s32.totalorder %s371, 0
    %s374 = sadd.s32 %s373, 1
    %s375 = scalar_select %p372, %s373, %s374
    %p378 = pneg %p372
    %p379 = scmp.eq.s32.totalorder %s22, 1
    %p380 = por %p378, %p379
    %p381 = scmp.ne.s32.totalorder %s373, %s376
    %p382 = scmp.eq.s32.totalorder %s22, 0
    %p383 = por %p381, %p382
    %p384 = scmp.ne.s32.totalorder %s373, %s376
    %p385 = scmp.eq.s32.totalorder %s27, 1
    %p386 = por %p384, %p385
    %p387 = scmp.ne.s32.totalorder %s376, %s377
    %p388 = scmp.eq.s32.totalorder %s27, 0
    %p389 = por %p387, %p388
    %p390 = scmp.ne.s32.totalorder %s376, %s377
    %p391 = scmp.eq.s32.totalorder %s28, 1
    %p392 = por %p390, %p391
    %p394 = scmp.ne.s32.totalorder %s377, %s393
    %p395 = scmp.eq.s32.totalorder %s28, 0
    %p396 = por %p394, %p395
    %p397 = scmp.le.s32.totalorder 1, %s22
    %p398 = scmp.lt.s32.totalorder %s22, 3
    %p399 = pnand %p397, %p398
    %p400 = pneg %p399
    // Predicated region
    $region9: #{mask_generator_forward.8} parent=5 // pred_check
      _
    $region10: #{mask_generator_forward.8} parent=5 // pred_check_branch
      %402 = sbr.rel (%p399) target = $region12
    $region11: #{mask_generator_forward.8} parent=5 // pred_region
      %s403 = ssub.s32 %s22, 1
      // Predicated region
      $region13: #{mask_generator_forward.8} parent=11 // pred_check
        %p404 = pneg %p69
      $region14: #{mask_generator_forward.8} parent=11 // pred_check_branch
        %406 = sbr.rel (%p404) target = $region16
      $region15: #{mask_generator_forward.8} parent=11 // pred_region
        _
      $region16: #{mask_generator_forward.8} parent=11 // pred_fallthru
        _
      // Predicated region
      $region17: #{mask_generator_forward.8} parent=11 // pred_check
        %p407 = pneg %p90
      $region18: #{mask_generator_forward.8} parent=11 // pred_check_branch
        %409 = sbr.rel (%p407) target = $region20
      $region19: #{mask_generator_forward.8} parent=11 // pred_region
        _
      $region20: #{mask_generator_forward.8} parent=11 // pred_fallthru
        _
      // Predicated region
      $region21: #{mask_generator_forward.8} parent=11 // pred_check
        %p410 = pneg %p111
      $region22: #{mask_generator_forward.8} parent=11 // pred_check_branch
        %412 = sbr.rel (%p410) target = $region24
      $region23: #{mask_generator_forward.8} parent=11 // pred_region
        _
      $region24: #{mask_generator_forward.8} parent=11 // pred_fallthru
        _
      // Predicated region
      $region25: #{mask_generator_forward.8} parent=11 // pred_check
        %p413 = pneg %p132
      $region26: #{mask_generator_forward.8} parent=11 // pred_check_branch
        %415 = sbr.rel (%p413) target = $region28
      $region27: #{mask_generator_forward.8} parent=11 // pred_region
        _
      $region28: #{mask_generator_forward.8} parent=11 // pred_fallthru
        _
      // Predicated region
      $region29: #{mask_generator_forward.8} parent=11 // pred_check
        %p416 = pneg %p153
      $region30: #{mask_generator_forward.8} parent=11 // pred_check_branch
        %418 = sbr.rel (%p416) target = $region32
      $region31: #{mask_generator_forward.8} parent=11 // pred_region
        _
      $region32: #{mask_generator_forward.8} parent=11 // pred_fallthru
        _
      // Predicated region
      $region33: #{mask_generator_forward.8} parent=11 // pred_check
        %p419 = pneg %p174
      $region34: #{mask_generator_forward.8} parent=11 // pred_check_branch
        %421 = sbr.rel (%p419) target = $region36
      $region35: #{mask_generator_forward.8} parent=11 // pred_region
        _
      $region36: #{mask_generator_forward.8} parent=11 // pred_fallthru
        _
      // Predicated region
      $region37: #{mask_generator_forward.8} parent=11 // pred_check
        %p422 = pneg %p195
      $region38: #{mask_generator_forward.8} parent=11 // pred_check_branch
        %424 = sbr.rel (%p422) target = $region40
      $region39: #{mask_generator_forward.8} parent=11 // pred_region
        _
      $region40: #{mask_generator_forward.8} parent=11 // pred_fallthru
        _
      // Predicated region
      $region41: #{mask_generator_forward.8} parent=11 // pred_check
        %p425 = pneg %p216
      $region42: #{mask_generator_forward.8} parent=11 // pred_check_branch
        %427 = sbr.rel (%p425) target = $region44
      $region43: #{mask_generator_forward.8} parent=11 // pred_region
        _
      $region44: #{mask_generator_forward.8} parent=11 // pred_fallthru
        _
      // Predicated region
      $region45: #{mask_generator_forward.8} parent=11 // pred_check
        %p428 = pneg %p237
      $region46: #{mask_generator_forward.8} parent=11 // pred_check_branch
        %430 = sbr.rel (%p428) target = $region48
      $region47: #{mask_generator_forward.8} parent=11 // pred_region
        _
      $region48: #{mask_generator_forward.8} parent=11 // pred_fallthru
        _
      // Predicated region
      $region49: #{mask_generator_forward.8} parent=11 // pred_check
        %p431 = pneg %p258
      $region50: #{mask_generator_forward.8} parent=11 // pred_check_branch
        %433 = sbr.rel (%p431) target = $region52
      $region51: #{mask_generator_forward.8} parent=11 // pred_region
        _
      $region52: #{mask_generator_forward.8} parent=11 // pred_fallthru
        _
      // Predicated region
      $region53: #{mask_generator_forward.8} parent=11 // pred_check
        %p434 = pneg %p279
      $region54: #{mask_generator_forward.8} parent=11 // pred_check_branch
        %436 = sbr.rel (%p434) target = $region56
      $region55: #{mask_generator_forward.8} parent=11 // pred_region
        _
      $region56: #{mask_generator_forward.8} parent=11 // pred_fallthru
        _
      // Predicated region
      $region57: #{mask_generator_forward.8} parent=11 // pred_check
        %p437 = pneg %p300
      $region58: #{mask_generator_forward.8} parent=11 // pred_check_branch
        %439 = sbr.rel (%p437) target = $region60
      $region59: #{mask_generator_forward.8} parent=11 // pred_region
        _
      $region60: #{mask_generator_forward.8} parent=11 // pred_fallthru
        _
      // Predicated region
      $region61: #{mask_generator_forward.8} parent=11 // pred_check
        %p440 = pneg %p321
      $region62: #{mask_generator_forward.8} parent=11 // pred_check_branch
        %442 = sbr.rel (%p440) target = $region64
      $region63: #{mask_generator_forward.8} parent=11 // pred_region
        _
      $region64: #{mask_generator_forward.8} parent=11 // pred_fallthru
        _
      // Predicated region
      $region65: #{mask_generator_forward.8} parent=11 // pred_check
        %p443 = pneg %p342
      $region66: #{mask_generator_forward.8} parent=11 // pred_check_branch
        %445 = sbr.rel (%p443) target = $region68
      $region67: #{mask_generator_forward.8} parent=11 // pred_region
        _
      $region68: #{mask_generator_forward.8} parent=11 // pred_fallthru
        _
      // Predicated region
      $region69: #{mask_generator_forward.8} parent=11 // pred_check
        %p446 = pneg %p363
      $region70: #{mask_generator_forward.8} parent=11 // pred_check_branch
        %448 = sbr.rel (%p446) target = $region72
      $region71: #{mask_generator_forward.8} parent=11 // pred_region
        _
      $region72: #{mask_generator_forward.8} parent=11 // pred_fallthru
        _
    $region12: #{mask_generator_forward.8} parent=5 // pred_fallthru
      _
    %p449 = scmp.lt.s32.totalorder %s22, 2
    // Predicated region
    $region73: #{mask_generator_forward.8} parent=5 // pred_check
      %p450 = pneg %p449
    $region74: #{mask_generator_forward.8} parent=5 // pred_check_branch
      %452 = sbr.rel (%p450) target = $region76
    $region75: #{mask_generator_forward.8} parent=5 // pred_region
      // Predicated region
      $region77: #{mask_generator_forward.8} parent=75 // pred_check
        %p453 = pneg %p42
      $region78: #{mask_generator_forward.8} parent=75 // pred_check_branch
        %455 = sbr.rel (%p453) target = $region80
      $region79: #{mask_generator_forward.8} parent=75 // pred_region
        %s456 = smul.u32 8, %s22
        %p457 = scmp.lt.s32.totalorder %s456, 15
        %s458 = scalar_select %p457, %s456, 15
        %s459 = smul.addr %s458, 8
        %s460 = scalar_lea.vmem %s0, %s459
        %s461 = smul.u32 8, %s22
      $region80: #{mask_generator_forward.8} parent=75 // pred_fallthru
        _
    $region76: #{mask_generator_forward.8} parent=5 // pred_fallthru
      _
    %p462 = scmp.le.s32.totalorder 1, %s22
    %p463 = scmp.lt.s32.totalorder %s22, 3
    %p464 = pnand %p462, %p463
    %p465 = pneg %p464
    // Predicated region
    $region81: #{mask_generator_forward.8} parent=5 // pred_check
      _
    $region82: #{mask_generator_forward.8} parent=5 // pred_check_branch
      %467 = sbr.rel (%p464) target = $region84
    $region83: #{mask_generator_forward.8} parent=5 // pred_region
      %s468 = ssub.s32 %s22, 1
      %s469 = smul.u32 8, %s27
      %p470 = scmp.lt.s32.totalorder %s469, 15
      %s471 = scalar_select %p470, %s469, 15
      %s472 = smul.addr %s471, 8
      %s473 = scalar_lea.vmem %s0, %s472
      %p474 = pneg %p48
      %p475 = pneg %p45
      %p476 = pneg %p69
      %p477 = pneg %p66
      %p478 = pneg %p90
      %p479 = pneg %p87
      %p480 = pneg %p111
      %p481 = pneg %p108
      %p482 = pneg %p132
      %p483 = pneg %p129
      %p484 = pneg %p153
      %p485 = pneg %p150
      %p486 = pneg %p174
      %p487 = pneg %p171
      %p488 = pneg %p195
      %p489 = pneg %p192
      %p490 = pneg %p216
      %p491 = pneg %p213
      %p492 = pneg %p237
      %p493 = pneg %p234
      %p494 = pneg %p258
      %p495 = pneg %p255
      %p496 = pneg %p279
      %p497 = pneg %p276
      %p498 = pneg %p300
      %p499 = pneg %p297
      %p500 = pneg %p321
      %p501 = pneg %p318
      %p502 = pneg %p342
      %p503 = pneg %p339
      %p504 = pneg %p363
      %p505 = pneg %p360
      %p506 = pneg %p389
      %p507 = pneg %p386
      %s508 = smul.u32 8, %s27
      %p509 = scmp.lt.s32.totalorder %s508, 15
      %s510 = scalar_select %p509, %s508, 15
      %s511 = smul.addr %s510, 8
      %s512 = scalar_lea.vmem %s16, %s511
      %s513 = smul.u32 8, %s27
      %p514 = scmp.lt.s32.totalorder %s513, 15
      %s515 = scalar_select %p514, %s513, 15
      %s516 = smul.addr %s515, 8
      %s517 = scalar_lea.vmem %s0, %s516
      %s518 = smul.u32 8, %s27
      %s519 = smul.u32 8, %s27
      %p520 = scmp.lt.s32.totalorder %s519, 15
      %s521 = scalar_select %p520, %s519, 15
      %s522 = smul.addr %s521, 8
      %s523 = scalar_lea.vmem %s16, %s522
      %s524 = smul.u32 8, %s27
      %v526 = vld [vmem:[%s517] sm:$0xff]
      %v527 = vld [vmem:[%s517 + $0x8] sm:$0xff]
      %v528 = vld [vmem:[%s517 + $0x10] sm:$0xff]
      %v529 = vld [vmem:[%s517 + $0x18] sm:$0xff]
      %v530 = vld [vmem:[%s517 + $0x20] sm:$0xff]
      %v531 = vld [vmem:[%s517 + $0x28] sm:$0xff]
      %v532 = vld [vmem:[%s517 + $0x30] sm:$0xff]
      %v533 = vld [vmem:[%s517 + $0x38] sm:$0xff]
      %v534 = vld [vmem:[%s1] sm:$0xff]
      %v535 = vadd.f32 %v526, %v534
      %v536 = vadd.f32 %v527, %v534
      %v537 = vadd.f32 %v528, %v534
      %v538 = vadd.f32 %v529, %v534
      %v539 = vadd.f32 %v530, %v534
      %v540 = vadd.f32 %v531, %v534
      %v541 = vadd.f32 %v532, %v534
      %v542 = vadd.f32 %v533, %v534
      loop: start=0, step=1, limit=8
      $region85: #{mask_generator_forward.8} parent=83 // loop_pre_header
        _
      $region86: #{mask_generator_forward.8} parent=83 // loop_header
        %s544 = sphi 0, %s548
        %p545 = scmp.ge.s32.totalorder %s544, 8
        %v549 = vphi %v535, %v4938
        %v550 = vphi %v536, %v4939
        %v551 = vphi %v537, %v4940
        %v552 = vphi %v538, %v4941
        %v553 = vphi %v539, %v4942
        %v554 = vphi %v540, %v4943
        %v555 = vphi %v541, %v4944
        %v556 = vphi %v542, %v4945
      $region87: #{mask_generator_forward.8} parent=83 // loop_header_branch
        %547 = sbr.rel (%p545) target = $region91
      $region88: #{mask_generator_forward.8} parent=83 // loop_body
        %s557 = scalar_lea.vmem %s2, %s544
        %v558 = vld [vmem:[%s557] sm:$0x1]
        %s559 = scalar_lea.vmem %s3, %s544
        %v560 = vld [vmem:[%s559] sm:$0x1]
        %vm561 = vcmask 261120
        %v562 = vsel %vm561, %v549, 0.0
        %563 = vadd.xlane.f32.xlu0 %v562
        %v564 = vpop.xlane.xlu0 %563
        %v565 = vsel %vm561, %v550, 0.0
        %566 = vadd.xlane.f32.xlu0 %v565
        %v567 = vpop.xlane.xlu0 %566
        %v568 = vsel %vm561, %v551, 0.0
        %569 = vadd.xlane.f32.xlu0 %v568
        %v570 = vpop.xlane.xlu0 %569
        %v571 = vsel %vm561, %v552, 0.0
        %572 = vadd.xlane.f32.xlu0 %v571
        %v573 = vpop.xlane.xlu0 %572
        %v574 = vsel %vm561, %v553, 0.0
        %575 = vadd.xlane.f32.xlu0 %v574
        %v576 = vpop.xlane.xlu0 %575
        %v577 = vsel %vm561, %v554, 0.0
        %578 = vadd.xlane.f32.xlu0 %v577
        %v579 = vpop.xlane.xlu0 %578
        %v580 = vsel %vm561, %v555, 0.0
        %581 = vadd.xlane.f32.xlu0 %v580
        %v582 = vpop.xlane.xlu0 %581
        %v583 = vsel %vm561, %v556, 0.0
        %584 = vadd.xlane.f32.xlu0 %v583
        %v585 = vpop.xlane.xlu0 %584
        %v586 = vrcp.pop 32.0
        %v587 = vmul.f32 %v564, %v586
        %v588 = vmul.f32 %v567, %v586
        %v589 = vmul.f32 %v570, %v586
        %v590 = vmul.f32 %v573, %v586
        %v591 = vmul.f32 %v576, %v586
        %v592 = vmul.f32 %v579, %v586
        %v593 = vmul.f32 %v582, %v586
        %v594 = vmul.f32 %v585, %v586
        %v595 = vsub.f32 %v549, %v587
        %v596 = vsub.f32 %v550, %v588
        %v597 = vsub.f32 %v551, %v589
        %v598 = vsub.f32 %v552, %v590
        %v599 = vsub.f32 %v553, %v591
        %v600 = vsub.f32 %v554, %v592
        %v601 = vsub.f32 %v555, %v593
        %v602 = vsub.f32 %v556, %v594
        %v603 = vmul.f32 %v595, %v595
        %v604 = vmul.f32 %v596, %v596
        %v605 = vmul.f32 %v597, %v597
        %v606 = vmul.f32 %v598, %v598
        %v607 = vmul.f32 %v599, %v599
        %v608 = vmul.f32 %v600, %v600
        %v609 = vmul.f32 %v601, %v601
        %v610 = vmul.f32 %v602, %v602
        %v611 = vsel %vm561, %v603, 0.0
        %612 = vadd.xlane.f32.xlu0 %v611
        %v613 = vpop.xlane.xlu0 %612
        %v614 = vsel %vm561, %v604, 0.0
        %615 = vadd.xlane.f32.xlu0 %v614
        %v616 = vpop.xlane.xlu0 %615
        %v617 = vsel %vm561, %v605, 0.0
        %618 = vadd.xlane.f32.xlu0 %v617
        %v619 = vpop.xlane.xlu0 %618
        %v620 = vsel %vm561, %v606, 0.0
        %621 = vadd.xlane.f32.xlu0 %v620
        %v622 = vpop.xlane.xlu0 %621
        %v623 = vsel %vm561, %v607, 0.0
        %624 = vadd.xlane.f32.xlu0 %v623
        %v625 = vpop.xlane.xlu0 %624
        %v626 = vsel %vm561, %v608, 0.0
        %627 = vadd.xlane.f32.xlu0 %v626
        %v628 = vpop.xlane.xlu0 %627
        %v629 = vsel %vm561, %v609, 0.0
        %630 = vadd.xlane.f32.xlu0 %v629
        %v631 = vpop.xlane.xlu0 %630
        %v632 = vsel %vm561, %v610, 0.0
        %633 = vadd.xlane.f32.xlu0 %v632
        %v634 = vpop.xlane.xlu0 %633
        %v635 = vmul.f32 %v613, %v586
        %v636 = vmul.f32 %v616, %v586
        %v637 = vmul.f32 %v619, %v586
        %v638 = vmul.f32 %v622, %v586
        %v639 = vmul.f32 %v625, %v586
        %v640 = vmul.f32 %v628, %v586
        %v641 = vmul.f32 %v631, %v586
        %v642 = vmul.f32 %v634, %v586
        %v643 = vadd.f32 %v635, 1e-06
        %v644 = vadd.f32 %v636, 1e-06
        %v645 = vadd.f32 %v637, 1e-06
        %v646 = vadd.f32 %v638, 1e-06
        %v647 = vadd.f32 %v639, 1e-06
        %v648 = vadd.f32 %v640, 1e-06
        %v649 = vadd.f32 %v641, 1e-06
        %v650 = vadd.f32 %v642, 1e-06
        %v651 = vrsqrt.pop %v643
        %v652 = vrsqrt.pop %v644
        %v653 = vrsqrt.pop %v645
        %v654 = vrsqrt.pop %v646
        %v655 = vrsqrt.pop %v647
        %v656 = vrsqrt.pop %v648
        %v657 = vrsqrt.pop %v649
        %v658 = vrsqrt.pop %v650
        %v659 = vmul.f32 %v595, %v651
        %v660 = vmul.f32 %v596, %v652
        %v661 = vmul.f32 %v597, %v653
        %v662 = vmul.f32 %v598, %v654
        %v663 = vmul.f32 %v599, %v655
        %v664 = vmul.f32 %v600, %v656
        %v665 = vmul.f32 %v601, %v657
        %v666 = vmul.f32 %v602, %v658
        %v668 = vlaneseq
        %v669 = vshrl.u32 %v668, 7
        %v670 = vsub.s32 0, %v669
        %v671 = vrot.slane %v558, %v670
        %v673 = vmul.f32 %v659, %v671
        %v674 = vmul.f32 %v660, %v671
        %v675 = vmul.f32 %v661, %v671
        %v676 = vmul.f32 %v662, %v671
        %v677 = vmul.f32 %v663, %v671
        %v678 = vmul.f32 %v664, %v671
        %v679 = vmul.f32 %v665, %v671
        %v680 = vmul.f32 %v666, %v671
        %v682 = vlaneseq
        %v683 = vshrl.u32 %v682, 7
        %v684 = vsub.s32 0, %v683
        %v685 = vrot.slane %v560, %v684
        %v687 = vadd.f32 %v673, %v685
        %v688 = vadd.f32 %v674, %v685
        %v689 = vadd.f32 %v675, %v685
        %v690 = vadd.f32 %v676, %v685
        %v691 = vadd.f32 %v677, %v685
        %v692 = vadd.f32 %v678, %v685
        %v693 = vadd.f32 %v679, %v685
        %v694 = vadd.f32 %v680, %v685
        %v695 = vpack.c.bf16 %v688, %v687
        %v696 = vpack.c.bf16 %v690, %v689
        %v697 = vpack.c.bf16 %v692, %v691
        %v698 = vpack.c.bf16 %v694, %v693
        %s699 = smul.u32 %s544, 4
        %s700 = smul.addr %s699, 4
        %s701 = scalar_lea.vmem %s4, %s700
        %v702 = vld [vmem:[%s701] sm:$0xf]
        %v703 = vld [vmem:[%s701 + $0x4] sm:$0xf]
        %v704 = vld [vmem:[%s701 + $0x8] sm:$0xf]
        %v705 = vld [vmem:[%s701 + $0xc] sm:$0xf]
        %s706 = scalar_lea.vmem %s5, %s544
        %v707 = vld [vmem:[%s706] sm:$0x1]
        %v709 = vlaneseq
        %v710 = vshrl.u32 %v709, 7
        %v711 = vsub.s32 0, %v710
        %v712 = vrot.slane %v707, %v711
        %v718 = vunpack.c.l.b16 %v702
        %v719 = vunpack.c.l.b16 %v703
        %v720 = vunpack.c.l.b16 %v704
        %v721 = vunpack.c.l.b16 %v705
        %v722 = vpack.c.b16 %v719, %v718
        %v723 = vpack.c.b16 %v721, %v720
        %v727 = vsel %vm561, %v695, 0
        %v730 = vsel %vm561, %v696, 0
        %v733 = vsel %vm561, %v697, 0
        %v736 = vsel %vm561, %v698, 0
        %738 = vmatprep.subr.bf16.mxu0 0
        %739 = vmatpush1.bf16.msra.mxu0 0
        %740 = vmatprep.subr.bf16.mxu0 0
        %741 = vmatpush1.bf16.msra.mxu0 0
        %742 = vmatprep.subr.bf16.mxu0 0
        %743 = vmatpush1.bf16.msra.mxu0 0
        %744 = vmatprep.subr.bf16.mxu0 0
        %745 = vmatpush1.bf16.msra.mxu0 0
        %746 = vmatprep.subr.bf16.mxu0 0
        %747 = vmatpush1.bf16.msra.mxu0 0
        %748 = vmatprep.subr.bf16.mxu0 0
        %749 = vmatpush1.bf16.msra.mxu0 0
        %750 = vmatprep.subr.bf16.mxu0 0
        %751 = vmatpush1.bf16.msra.mxu0 %v723
        %752 = vmatprep.subr.bf16.mxu0 0
        %753 = vmatpush1.bf16.msra.mxu0 %v722
        %754 = vmatprep.subr.bf16.mxu0 0
        %755 = vmatpush2.bf16.msra.mxu0 0
        %756 = vmatprep.subr.bf16.mxu0 0
        %757 = vmatpush2.bf16.msra.mxu0 0
        %758 = vmatprep.subr.bf16.mxu0 0
        %759 = vmatpush2.bf16.msra.mxu0 0
        %760 = vmatprep.subr.bf16.mxu0 0
        %761 = vmatpush2.bf16.msra.mxu0 0
        %762 = vmatprep.subr.bf16.mxu0 0
        %763 = vmatpush2.bf16.msra.mxu0 0
        %764 = vmatprep.subr.bf16.mxu0 0
        %765 = vmatpush2.bf16.msra.mxu0 0
        %766 = vmatprep.subr.bf16.mxu0 0
        %767 = vmatpush2.bf16.msra.mxu0 0
        %768 = vmatprep.subr.bf16.mxu0 0
        %769 = vmatpush2.bf16.msra.mxu0 0
        %770 = vmatprep.mubr.bf16.mxu0 0
        %771 = vmatmul.mubr.bf16.gmra.mxu0 %v727
        %v772 = vpop.f32.mrf.mxu0
        %v773 = vadd.f32 %v712, %v772
        %v774 = vpop.f32.mrf.mxu0
        %v775 = vpop.f32.mrf.mxu0
        %v776 = vadd.f32 %v712, %v775
        %v777 = vpop.f32.mrf.mxu0
        %778 = vmatprep.mubr.bf16.mxu0 0
        %779 = vmatmul.mubr.bf16.gmra.mxu0 %v730
        %v780 = vpop.f32.mrf.mxu0
        %v781 = vadd.f32 %v712, %v780
        %v782 = vpop.f32.mrf.mxu0
        %v783 = vpop.f32.mrf.mxu0
        %v784 = vadd.f32 %v712, %v783
        %v785 = vpop.f32.mrf.mxu0
        %786 = vmatprep.mubr.bf16.mxu0 0
        %787 = vmatmul.mubr.bf16.gmra.mxu0 %v733
        %v788 = vpop.f32.mrf.mxu0
        %v789 = vadd.f32 %v712, %v788
        %v790 = vpop.f32.mrf.mxu0
        %v791 = vpop.f32.mrf.mxu0
        %v792 = vadd.f32 %v712, %v791
        %v793 = vpop.f32.mrf.mxu0
        %794 = vmatprep.mubr.bf16.mxu0 0
        %795 = vmatmul.mubr.bf16.gmra.mxu0 %v736
        %v796 = vpop.f32.mrf.mxu0
        %v797 = vadd.f32 %v712, %v796
        %v798 = vpop.f32.mrf.mxu0
        %v799 = vpop.f32.mrf.mxu0
        %v800 = vadd.f32 %v712, %v799
        %v801 = vpop.f32.mrf.mxu0
        %802 = vdwg.mxu0
        %v803 = vpack.c.bf16 %v773, %v773
        %v804 = vpack.c.bf16 %v776, %v776
        %v805 = vpack.c.bf16 %v781, %v781
        %v806 = vpack.c.bf16 %v784, %v784
        %v807 = vpack.c.bf16 %v789, %v789
        %v808 = vpack.c.bf16 %v792, %v792
        %v809 = vpack.c.bf16 %v797, %v797
        %v810 = vpack.c.bf16 %v800, %v800
        %812 = vrot.lane.b32.xlu0 %v803, 96
        %v813 = vpop.permute.xlu0 %812
        %vm814 = vcmask 64512
        %v816 = vsel %vm814, %v803, 0
        %v819 = vsel %vm814, %v813, 0
        %821 = vmatprep.subr.bf16.mxu0 0
        %822 = vmatpush1.bf16.xpose.msra.mxu0 0
        %823 = vmatprep.subr.bf16.mxu0 0
        %824 = vmatpush1.bf16.xpose.msra.mxu0 0
        %825 = vmatprep.subr.bf16.mxu0 0
        %826 = vmatpush1.bf16.xpose.msra.mxu0 0
        %827 = vmatprep.subr.bf16.mxu0 0
        %828 = vmatpush1.bf16.xpose.msra.mxu0 0
        %829 = vmatprep.subr.bf16.mxu0 0
        %830 = vmatpush1.bf16.xpose.msra.mxu0 0
        %831 = vmatprep.subr.bf16.mxu0 0
        %832 = vmatpush1.bf16.xpose.msra.mxu0 0
        %833 = vmatprep.subr.bf16.mxu0 0
        %834 = vmatpush1.bf16.xpose.msra.mxu0 0
        %835 = vmatprep.subr.bf16.mxu0 0
        %836 = vmatpush1.bf16.xpose.msra.mxu0 %v819
        %837 = vmatprep.subr.bf16.mxu0 0
        %838 = vmatpush2.bf16.xpose.msra.mxu0 0
        %839 = vmatprep.subr.bf16.mxu0 0
        %840 = vmatpush2.bf16.xpose.msra.mxu0 0
        %841 = vmatprep.subr.bf16.mxu0 0
        %842 = vmatpush2.bf16.xpose.msra.mxu0 0
        %843 = vmatprep.subr.bf16.mxu0 0
        %844 = vmatpush2.bf16.xpose.msra.mxu0 0
        %845 = vmatprep.subr.bf16.mxu0 0
        %846 = vmatpush2.bf16.xpose.msra.mxu0 0
        %847 = vmatprep.subr.bf16.mxu0 0
        %848 = vmatpush2.bf16.xpose.msra.mxu0 0
        %849 = vmatprep.subr.bf16.mxu0 0
        %850 = vmatpush2.bf16.xpose.msra.mxu0 0
        %851 = vmatprep.subr.bf16.mxu0 0
        %852 = vmatpush2.bf16.xpose.msra.mxu0 0
        %853 = vmatprep.mubr.bf16.mxu0 0
        %854 = vmatmul.mubr.bf16.gmra.mxu0 %v816
        %v855 = vpop.f32.mrf.mxu0
        %v856 = vadd.f32 0.0, %v855
        %v857 = vpop.f32.mrf.mxu0
        %v858 = vpop.f32.mrf.mxu0
        %v859 = vpop.f32.mrf.mxu0
        %860 = vdwg.mxu0
        %862 = vrot.lane.b32.xlu0 %v804, 96
        %v863 = vpop.permute.xlu0 %862
        %v865 = vsel %vm814, %v804, 0
        %v868 = vsel %vm814, %v863, 0
        %870 = vmatprep.subr.bf16.mxu0 0
        %871 = vmatpush1.bf16.xpose.msra.mxu0 0
        %872 = vmatprep.subr.bf16.mxu0 0
        %873 = vmatpush1.bf16.xpose.msra.mxu0 0
        %874 = vmatprep.subr.bf16.mxu0 0
        %875 = vmatpush1.bf16.xpose.msra.mxu0 0
        %876 = vmatprep.subr.bf16.mxu0 0
        %877 = vmatpush1.bf16.xpose.msra.mxu0 0
        %878 = vmatprep.subr.bf16.mxu0 0
        %879 = vmatpush1.bf16.xpose.msra.mxu0 0
        %880 = vmatprep.subr.bf16.mxu0 0
        %881 = vmatpush1.bf16.xpose.msra.mxu0 0
        %882 = vmatprep.subr.bf16.mxu0 0
        %883 = vmatpush1.bf16.xpose.msra.mxu0 0
        %884 = vmatprep.subr.bf16.mxu0 0
        %885 = vmatpush1.bf16.xpose.msra.mxu0 %v868
        %886 = vmatprep.subr.bf16.mxu0 0
        %887 = vmatpush2.bf16.xpose.msra.mxu0 0
        %888 = vmatprep.subr.bf16.mxu0 0
        %889 = vmatpush2.bf16.xpose.msra.mxu0 0
        %890 = vmatprep.subr.bf16.mxu0 0
        %891 = vmatpush2.bf16.xpose.msra.mxu0 0
        %892 = vmatprep.subr.bf16.mxu0 0
        %893 = vmatpush2.bf16.xpose.msra.mxu0 0
        %894 = vmatprep.subr.bf16.mxu0 0
        %895 = vmatpush2.bf16.xpose.msra.mxu0 0
        %896 = vmatprep.subr.bf16.mxu0 0
        %897 = vmatpush2.bf16.xpose.msra.mxu0 0
        %898 = vmatprep.subr.bf16.mxu0 0
        %899 = vmatpush2.bf16.xpose.msra.mxu0 0
        %900 = vmatprep.subr.bf16.mxu0 0
        %901 = vmatpush2.bf16.xpose.msra.mxu0 0
        %902 = vmatprep.mubr.bf16.mxu0 0
        %903 = vmatmul.mubr.bf16.gmra.mxu0 %v865
        %v904 = vpop.f32.mrf.mxu0
        %v905 = vadd.f32 0.0, %v904
        %v906 = vpop.f32.mrf.mxu0
        %v907 = vpop.f32.mrf.mxu0
        %v908 = vpop.f32.mrf.mxu0
        %909 = vdwg.mxu0
        %911 = vrot.lane.b32.xlu0 %v805, 96
        %v912 = vpop.permute.xlu0 %911
        %v914 = vsel %vm814, %v805, 0
        %v917 = vsel %vm814, %v912, 0
        %919 = vmatprep.subr.bf16.mxu0 0
        %920 = vmatpush1.bf16.xpose.msra.mxu0 0
        %921 = vmatprep.subr.bf16.mxu0 0
        %922 = vmatpush1.bf16.xpose.msra.mxu0 0
        %923 = vmatprep.subr.bf16.mxu0 0
        %924 = vmatpush1.bf16.xpose.msra.mxu0 0
        %925 = vmatprep.subr.bf16.mxu0 0
        %926 = vmatpush1.bf16.xpose.msra.mxu0 0
        %927 = vmatprep.subr.bf16.mxu0 0
        %928 = vmatpush1.bf16.xpose.msra.mxu0 0
        %929 = vmatprep.subr.bf16.mxu0 0
        %930 = vmatpush1.bf16.xpose.msra.mxu0 0
        %931 = vmatprep.subr.bf16.mxu0 0
        %932 = vmatpush1.bf16.xpose.msra.mxu0 0
        %933 = vmatprep.subr.bf16.mxu0 0
        %934 = vmatpush1.bf16.xpose.msra.mxu0 %v917
        %935 = vmatprep.subr.bf16.mxu0 0
        %936 = vmatpush2.bf16.xpose.msra.mxu0 0
        %937 = vmatprep.subr.bf16.mxu0 0
        %938 = vmatpush2.bf16.xpose.msra.mxu0 0
        %939 = vmatprep.subr.bf16.mxu0 0
        %940 = vmatpush2.bf16.xpose.msra.mxu0 0
        %941 = vmatprep.subr.bf16.mxu0 0
        %942 = vmatpush2.bf16.xpose.msra.mxu0 0
        %943 = vmatprep.subr.bf16.mxu0 0
        %944 = vmatpush2.bf16.xpose.msra.mxu0 0
        %945 = vmatprep.subr.bf16.mxu0 0
        %946 = vmatpush2.bf16.xpose.msra.mxu0 0
        %947 = vmatprep.subr.bf16.mxu0 0
        %948 = vmatpush2.bf16.xpose.msra.mxu0 0
        %949 = vmatprep.subr.bf16.mxu0 0
        %950 = vmatpush2.bf16.xpose.msra.mxu0 0
        %951 = vmatprep.mubr.bf16.mxu0 0
        %952 = vmatmul.mubr.bf16.gmra.mxu0 %v914
        %v953 = vpop.f32.mrf.mxu0
        %v954 = vadd.f32 0.0, %v953
        %v955 = vpop.f32.mrf.mxu0
        %v956 = vpop.f32.mrf.mxu0
        %v957 = vpop.f32.mrf.mxu0
        %958 = vdwg.mxu0
        %960 = vrot.lane.b32.xlu0 %v806, 96
        %v961 = vpop.permute.xlu0 %960
        %v963 = vsel %vm814, %v806, 0
        %v966 = vsel %vm814, %v961, 0
        %968 = vmatprep.subr.bf16.mxu0 0
        %969 = vmatpush1.bf16.xpose.msra.mxu0 0
        %970 = vmatprep.subr.bf16.mxu0 0
        %971 = vmatpush1.bf16.xpose.msra.mxu0 0
        %972 = vmatprep.subr.bf16.mxu0 0
        %973 = vmatpush1.bf16.xpose.msra.mxu0 0
        %974 = vmatprep.subr.bf16.mxu0 0
        %975 = vmatpush1.bf16.xpose.msra.mxu0 0
        %976 = vmatprep.subr.bf16.mxu0 0
        %977 = vmatpush1.bf16.xpose.msra.mxu0 0
        %978 = vmatprep.subr.bf16.mxu0 0
        %979 = vmatpush1.bf16.xpose.msra.mxu0 0
        %980 = vmatprep.subr.bf16.mxu0 0
        %981 = vmatpush1.bf16.xpose.msra.mxu0 0
        %982 = vmatprep.subr.bf16.mxu0 0
        %983 = vmatpush1.bf16.xpose.msra.mxu0 %v966
        %984 = vmatprep.subr.bf16.mxu0 0
        %985 = vmatpush2.bf16.xpose.msra.mxu0 0
        %986 = vmatprep.subr.bf16.mxu0 0
        %987 = vmatpush2.bf16.xpose.msra.mxu0 0
        %988 = vmatprep.subr.bf16.mxu0 0
        %989 = vmatpush2.bf16.xpose.msra.mxu0 0
        %990 = vmatprep.subr.bf16.mxu0 0
        %991 = vmatpush2.bf16.xpose.msra.mxu0 0
        %992 = vmatprep.subr.bf16.mxu0 0
        %993 = vmatpush2.bf16.xpose.msra.mxu0 0
        %994 = vmatprep.subr.bf16.mxu0 0
        %995 = vmatpush2.bf16.xpose.msra.mxu0 0
        %996 = vmatprep.subr.bf16.mxu0 0
        %997 = vmatpush2.bf16.xpose.msra.mxu0 0
        %998 = vmatprep.subr.bf16.mxu0 0
        %999 = vmatpush2.bf16.xpose.msra.mxu0 0
        %1000 = vmatprep.mubr.bf16.mxu0 0
        %1001 = vmatmul.mubr.bf16.gmra.mxu0 %v963
        %v1002 = vpop.f32.mrf.mxu0
        %v1003 = vadd.f32 0.0, %v1002
        %v1004 = vpop.f32.mrf.mxu0
        %v1005 = vpop.f32.mrf.mxu0
        %v1006 = vpop.f32.mrf.mxu0
        %1007 = vdwg.mxu0
        %1009 = vrot.lane.b32.xlu0 %v807, 96
        %v1010 = vpop.permute.xlu0 %1009
        %v1012 = vsel %vm814, %v807, 0
        %v1015 = vsel %vm814, %v1010, 0
        %1017 = vmatprep.subr.bf16.mxu0 0
        %1018 = vmatpush1.bf16.xpose.msra.mxu0 0
        %1019 = vmatprep.subr.bf16.mxu0 0
        %1020 = vmatpush1.bf16.xpose.msra.mxu0 0
        %1021 = vmatprep.subr.bf16.mxu0 0
        %1022 = vmatpush1.bf16.xpose.msra.mxu0 0
        %1023 = vmatprep.subr.bf16.mxu0 0
        %1024 = vmatpush1.bf16.xpose.msra.mxu0 0
        %1025 = vmatprep.subr.bf16.mxu0 0
        %1026 = vmatpush1.bf16.xpose.msra.mxu0 0
        %1027 = vmatprep.subr.bf16.mxu0 0
        %1028 = vmatpush1.bf16.xpose.msra.mxu0 0
        %1029 = vmatprep.subr.bf16.mxu0 0
        %1030 = vmatpush1.bf16.xpose.msra.mxu0 0
        %1031 = vmatprep.subr.bf16.mxu0 0
        %1032 = vmatpush1.bf16.xpose.msra.mxu0 %v1015
        %1033 = vmatprep.subr.bf16.mxu0 0
        %1034 = vmatpush2.bf16.xpose.msra.mxu0 0
        %1035 = vmatprep.subr.bf16.mxu0 0
        %1036 = vmatpush2.bf16.xpose.msra.mxu0 0
        %1037 = vmatprep.subr.bf16.mxu0 0
        %1038 = vmatpush2.bf16.xpose.msra.mxu0 0
        %1039 = vmatprep.subr.bf16.mxu0 0
        %1040 = vmatpush2.bf16.xpose.msra.mxu0 0
        %1041 = vmatprep.subr.bf16.mxu0 0
        %1042 = vmatpush2.bf16.xpose.msra.mxu0 0
        %1043 = vmatprep.subr.bf16.mxu0 0
        %1044 = vmatpush2.bf16.xpose.msra.mxu0 0
        %1045 = vmatprep.subr.bf16.mxu0 0
        %1046 = vmatpush2.bf16.xpose.msra.mxu0 0
        %1047 = vmatprep.subr.bf16.mxu0 0
        %1048 = vmatpush2.bf16.xpose.msra.mxu0 0
        %1049 = vmatprep.mubr.bf16.mxu0 0
        %1050 = vmatmul.mubr.bf16.gmra.mxu0 %v1012
        %v1051 = vpop.f32.mrf.mxu0
        %v1052 = vadd.f32 0.0, %v1051
        %v1053 = vpop.f32.mrf.mxu0
        %v1054 = vpop.f32.mrf.mxu0
        %v1055 = vpop.f32.mrf.mxu0
        %1056 = vdwg.mxu0
        %1058 = vrot.lane.b32.xlu0 %v808, 96
        %v1059 = vpop.permute.xlu0 %1058
        %v1061 = vsel %vm814, %v808, 0
        %v1064 = vsel %vm814, %v1059, 0
        %1066 = vmatprep.subr.bf16.mxu0 0
        %1067 = vmatpush1.bf16.xpose.msra.mxu0 0
        %1068 = vmatprep.subr.bf16.mxu0 0
        %1069 = vmatpush1.bf16.xpose.msra.mxu0 0
        %1070 = vmatprep.subr.bf16.mxu0 0
        %1071 = vmatpush1.bf16.xpose.msra.mxu0 0
        %1072 = vmatprep.subr.bf16.mxu0 0
        %1073 = vmatpush1.bf16.xpose.msra.mxu0 0
        %1074 = vmatprep.subr.bf16.mxu0 0
        %1075 = vmatpush1.bf16.xpose.msra.mxu0 0
        %1076 = vmatprep.subr.bf16.mxu0 0
        %1077 = vmatpush1.bf16.xpose.msra.mxu0 0
        %1078 = vmatprep.subr.bf16.mxu0 0
        %1079 = vmatpush1.bf16.xpose.msra.mxu0 0
        %1080 = vmatprep.subr.bf16.mxu0 0
        %1081 = vmatpush1.bf16.xpose.msra.mxu0 %v1064
        %1082 = vmatprep.subr.bf16.mxu0 0
        %1083 = vmatpush2.bf16.xpose.msra.mxu0 0
        %1084 = vmatprep.subr.bf16.mxu0 0
        %1085 = vmatpush2.bf16.xpose.msra.mxu0 0
        %1086 = vmatprep.subr.bf16.mxu0 0
        %1087 = vmatpush2.bf16.xpose.msra.mxu0 0
        %1088 = vmatprep.subr.bf16.mxu0 0
        %1089 = vmatpush2.bf16.xpose.msra.mxu0 0
        %1090 = vmatprep.subr.bf16.mxu0 0
        %1091 = vmatpush2.bf16.xpose.msra.mxu0 0
        %1092 = vmatprep.subr.bf16.mxu0 0
        %1093 = vmatpush2.bf16.xpose.msra.mxu0 0
        %1094 = vmatprep.subr.bf16.mxu0 0
        %1095 = vmatpush2.bf16.xpose.msra.mxu0 0
        %1096 = vmatprep.subr.bf16.mxu0 0
        %1097 = vmatpush2.bf16.xpose.msra.mxu0 0
        %1098 = vmatprep.mubr.bf16.mxu0 0
        %1099 = vmatmul.mubr.bf16.gmra.mxu0 %v1061
        %v1100 = vpop.f32.mrf.mxu0
        %v1101 = vadd.f32 0.0, %v1100
        %v1102 = vpop.f32.mrf.mxu0
        %v1103 = vpop.f32.mrf.mxu0
        %v1104 = vpop.f32.mrf.mxu0
        %1105 = vdwg.mxu0
        %1107 = vrot.lane.b32.xlu0 %v809, 96
        %v1108 = vpop.permute.xlu0 %1107
        %v1110 = vsel %vm814, %v809, 0
        %v1113 = vsel %vm814, %v1108, 0
        %1115 = vmatprep.subr.bf16.mxu0 0
        %1116 = vmatpush1.bf16.xpose.msra.mxu0 0
        %1117 = vmatprep.subr.bf16.mxu0 0
        %1118 = vmatpush1.bf16.xpose.msra.mxu0 0
        %1119 = vmatprep.subr.bf16.mxu0 0
        %1120 = vmatpush1.bf16.xpose.msra.mxu0 0
        %1121 = vmatprep.subr.bf16.mxu0 0
        %1122 = vmatpush1.bf16.xpose.msra.mxu0 0
        %1123 = vmatprep.subr.bf16.mxu0 0
        %1124 = vmatpush1.bf16.xpose.msra.mxu0 0
        %1125 = vmatprep.subr.bf16.mxu0 0
        %1126 = vmatpush1.bf16.xpose.msra.mxu0 0
        %1127 = vmatprep.subr.bf16.mxu0 0
        %1128 = vmatpush1.bf16.xpose.msra.mxu0 0
        %1129 = vmatprep.subr.bf16.mxu0 0
        %1130 = vmatpush1.bf16.xpose.msra.mxu0 %v1113
        %1131 = vmatprep.subr.bf16.mxu0 0
        %1132 = vmatpush2.bf16.xpose.msra.mxu0 0
        %1133 = vmatprep.subr.bf16.mxu0 0
        %1134 = vmatpush2.bf16.xpose.msra.mxu0 0
        %1135 = vmatprep.subr.bf16.mxu0 0
        %1136 = vmatpush2.bf16.xpose.msra.mxu0 0
        %1137 = vmatprep.subr.bf16.mxu0 0
        %1138 = vmatpush2.bf16.xpose.msra.mxu0 0
        %1139 = vmatprep.subr.bf16.mxu0 0
        %1140 = vmatpush2.bf16.xpose.msra.mxu0 0
        %1141 = vmatprep.subr.bf16.mxu0 0
        %1142 = vmatpush2.bf16.xpose.msra.mxu0 0
        %1143 = vmatprep.subr.bf16.mxu0 0
        %1144 = vmatpush2.bf16.xpose.msra.mxu0 0
        %1145 = vmatprep.subr.bf16.mxu0 0
        %1146 = vmatpush2.bf16.xpose.msra.mxu0 0
        %1147 = vmatprep.mubr.bf16.mxu0 0
        %1148 = vmatmul.mubr.bf16.gmra.mxu0 %v1110
        %v1149 = vpop.f32.mrf.mxu0
        %v1150 = vadd.f32 0.0, %v1149
        %v1151 = vpop.f32.mrf.mxu0
        %v1152 = vpop.f32.mrf.mxu0
        %v1153 = vpop.f32.mrf.mxu0
        %1154 = vdwg.mxu0
        %1156 = vrot.lane.b32.xlu0 %v810, 96
        %v1157 = vpop.permute.xlu0 %1156
        %v1159 = vsel %vm814, %v810, 0
        %v1162 = vsel %vm814, %v1157, 0
        %1164 = vmatprep.subr.bf16.mxu0 0
        %1165 = vmatpush1.bf16.xpose.msra.mxu0 0
        %1166 = vmatprep.subr.bf16.mxu0 0
        %1167 = vmatpush1.bf16.xpose.msra.mxu0 0
        %1168 = vmatprep.subr.bf16.mxu0 0
        %1169 = vmatpush1.bf16.xpose.msra.mxu0 0
        %1170 = vmatprep.subr.bf16.mxu0 0
        %1171 = vmatpush1.bf16.xpose.msra.mxu0 0
        %1172 = vmatprep.subr.bf16.mxu0 0
        %1173 = vmatpush1.bf16.xpose.msra.mxu0 0
        %1174 = vmatprep.subr.bf16.mxu0 0
        %1175 = vmatpush1.bf16.xpose.msra.mxu0 0
        %1176 = vmatprep.subr.bf16.mxu0 0
        %1177 = vmatpush1.bf16.xpose.msra.mxu0 0
        %1178 = vmatprep.subr.bf16.mxu0 0
        %1179 = vmatpush1.bf16.xpose.msra.mxu0 %v1162
        %1180 = vmatprep.subr.bf16.mxu0 0
        %1181 = vmatpush2.bf16.xpose.msra.mxu0 0
        %1182 = vmatprep.subr.bf16.mxu0 0
        %1183 = vmatpush2.bf16.xpose.msra.mxu0 0
        %1184 = vmatprep.subr.bf16.mxu0 0
        %1185 = vmatpush2.bf16.xpose.msra.mxu0 0
        %1186 = vmatprep.subr.bf16.mxu0 0
        %1187 = vmatpush2.bf16.xpose.msra.mxu0 0
        %1188 = vmatprep.subr.bf16.mxu0 0
        %1189 = vmatpush2.bf16.xpose.msra.mxu0 0
        %1190 = vmatprep.subr.bf16.mxu0 0
        %1191 = vmatpush2.bf16.xpose.msra.mxu0 0
        %1192 = vmatprep.subr.bf16.mxu0 0
        %1193 = vmatpush2.bf16.xpose.msra.mxu0 0
        %1194 = vmatprep.subr.bf16.mxu0 0
        %1195 = vmatpush2.bf16.xpose.msra.mxu0 0
        %1196 = vmatprep.mubr.bf16.mxu0 0
        %1197 = vmatmul.mubr.bf16.gmra.mxu0 %v1159
        %v1198 = vpop.f32.mrf.mxu0
        %v1199 = vadd.f32 0.0, %v1198
        %v1200 = vpop.f32.mrf.mxu0
        %v1201 = vpop.f32.mrf.mxu0
        %v1202 = vpop.f32.mrf.mxu0
        %1203 = vdwg.mxu0
        %v1204 = vsel %vm814, %v856, -inf
        %1205 = vmax.xlane.f32.xlu0 %v1204
        %v1206 = vpop.xlane.xlu0 %1205
        %v1207 = vsel %vm814, %v905, -inf
        %1208 = vmax.xlane.f32.xlu0 %v1207
        %v1209 = vpop.xlane.xlu0 %1208
        %v1210 = vsel %vm814, %v954, -inf
        %1211 = vmax.xlane.f32.xlu0 %v1210
        %v1212 = vpop.xlane.xlu0 %1211
        %v1213 = vsel %vm814, %v1003, -inf
        %1214 = vmax.xlane.f32.xlu0 %v1213
        %v1215 = vpop.xlane.xlu0 %1214
        %v1216 = vsel %vm814, %v1052, -inf
        %1217 = vmax.xlane.f32.xlu0 %v1216
        %v1218 = vpop.xlane.xlu0 %1217
        %v1219 = vsel %vm814, %v1101, -inf
        %1220 = vmax.xlane.f32.xlu0 %v1219
        %v1221 = vpop.xlane.xlu0 %1220
        %v1222 = vsel %vm814, %v1150, -inf
        %1223 = vmax.xlane.f32.xlu0 %v1222
        %v1224 = vpop.xlane.xlu0 %1223
        %v1225 = vsel %vm814, %v1199, -inf
        %1226 = vmax.xlane.f32.xlu0 %v1225
        %v1227 = vpop.xlane.xlu0 %1226
        %v1228 = vsub.f32 %v856, %v1206
        %v1229 = vsub.f32 %v905, %v1209
        %v1230 = vsub.f32 %v954, %v1212
        %v1231 = vsub.f32 %v1003, %v1215
        %v1232 = vsub.f32 %v1052, %v1218
        %v1233 = vsub.f32 %v1101, %v1221
        %v1234 = vsub.f32 %v1150, %v1224
        %v1235 = vsub.f32 %v1199, %v1227
        %v1236 = vmul.f32 %v1228, 1.442695
        %v1237 = vpow.pop %v1236
        %v1238 = vmul.f32 %v1229, 1.442695
        %v1239 = vpow.pop %v1238
        %v1240 = vmul.f32 %v1230, 1.442695
        %v1241 = vpow.pop %v1240
        %v1242 = vmul.f32 %v1231, 1.442695
        %v1243 = vpow.pop %v1242
        %v1244 = vmul.f32 %v1232, 1.442695
        %v1245 = vpow.pop %v1244
        %v1246 = vmul.f32 %v1233, 1.442695
        %v1247 = vpow.pop %v1246
        %v1248 = vmul.f32 %v1234, 1.442695
        %v1249 = vpow.pop %v1248
        %v1250 = vmul.f32 %v1235, 1.442695
        %v1251 = vpow.pop %v1250
        %v1252 = vsel %vm814, %v1237, 0.0
        %1253 = vadd.xlane.f32.xlu0 %v1252
        %v1254 = vpop.xlane.xlu0 %1253
        %v1255 = vsel %vm814, %v1239, 0.0
        %1256 = vadd.xlane.f32.xlu0 %v1255
        %v1257 = vpop.xlane.xlu0 %1256
        %v1258 = vsel %vm814, %v1241, 0.0
        %1259 = vadd.xlane.f32.xlu0 %v1258
        %v1260 = vpop.xlane.xlu0 %1259
        %v1261 = vsel %vm814, %v1243, 0.0
        %1262 = vadd.xlane.f32.xlu0 %v1261
        %v1263 = vpop.xlane.xlu0 %1262
        %v1264 = vsel %vm814, %v1245, 0.0
        %1265 = vadd.xlane.f32.xlu0 %v1264
        %v1266 = vpop.xlane.xlu0 %1265
        %v1267 = vsel %vm814, %v1247, 0.0
        %1268 = vadd.xlane.f32.xlu0 %v1267
        %v1269 = vpop.xlane.xlu0 %1268
        %v1270 = vsel %vm814, %v1249, 0.0
        %1271 = vadd.xlane.f32.xlu0 %v1270
        %v1272 = vpop.xlane.xlu0 %1271
        %v1273 = vsel %vm814, %v1251, 0.0
        %1274 = vadd.xlane.f32.xlu0 %v1273
        %v1275 = vpop.xlane.xlu0 %1274
        %v1276 = vrcp.pop %v1254
        %v1277 = vrcp.pop %v1257
        %v1278 = vrcp.pop %v1260
        %v1279 = vrcp.pop %v1263
        %v1280 = vrcp.pop %v1266
        %v1281 = vrcp.pop %v1269
        %v1282 = vrcp.pop %v1272
        %v1283 = vrcp.pop %v1275
        %v1284 = vmul.f32 %v1237, %v1276
        %v1285 = vmul.f32 %v1239, %v1277
        %v1286 = vmul.f32 %v1241, %v1278
        %v1287 = vmul.f32 %v1243, %v1279
        %v1288 = vmul.f32 %v1245, %v1280
        %v1289 = vmul.f32 %v1247, %v1281
        %v1290 = vmul.f32 %v1249, %v1282
        %v1291 = vmul.f32 %v1251, %v1283
        %v1292 = vpack.c.bf16 %v1284, %v1284
        %v1293 = vpack.c.bf16 %v1285, %v1285
        %v1294 = vpack.c.bf16 %v1286, %v1286
        %v1295 = vpack.c.bf16 %v1287, %v1287
        %v1296 = vpack.c.bf16 %v1288, %v1288
        %v1297 = vpack.c.bf16 %v1289, %v1289
        %v1298 = vpack.c.bf16 %v1290, %v1290
        %v1299 = vpack.c.bf16 %v1291, %v1291
        %1300 = vrot.lane.b32.xlu0 %v803, 64
        %v1301 = vpop.permute.xlu0 %1300
        %v1303 = vsel %vm814, %v1292, 0
        %vm1305 = vcmask 1043456
        %v1307 = vsel %vm1305, %v1301, 0
        %1309 = vmatprep.subr.bf16.mxu0 0
        %1310 = vmatpush1.bf16.msra.mxu0 0
        %1311 = vmatprep.subr.bf16.mxu0 0
        %1312 = vmatpush1.bf16.msra.mxu0 0
        %1313 = vmatprep.subr.bf16.mxu0 0
        %1314 = vmatpush1.bf16.msra.mxu0 0
        %1315 = vmatprep.subr.bf16.mxu0 0
        %1316 = vmatpush1.bf16.msra.mxu0 0
        %1317 = vmatprep.subr.bf16.mxu0 0
        %1318 = vmatpush1.bf16.msra.mxu0 0
        %1319 = vmatprep.subr.bf16.mxu0 0
        %1320 = vmatpush1.bf16.msra.mxu0 0
        %1321 = vmatprep.subr.bf16.mxu0 0
        %1322 = vmatpush1.bf16.msra.mxu0 0
        %1323 = vmatprep.subr.bf16.mxu0 0
        %1324 = vmatpush1.bf16.msra.mxu0 %v1307
        %1325 = vmatprep.subr.bf16.mxu0 0
        %1326 = vmatpush2.bf16.msra.mxu0 0
        %1327 = vmatprep.subr.bf16.mxu0 0
        %1328 = vmatpush2.bf16.msra.mxu0 0
        %1329 = vmatprep.subr.bf16.mxu0 0
        %1330 = vmatpush2.bf16.msra.mxu0 0
        %1331 = vmatprep.subr.bf16.mxu0 0
        %1332 = vmatpush2.bf16.msra.mxu0 0
        %1333 = vmatprep.subr.bf16.mxu0 0
        %1334 = vmatpush2.bf16.msra.mxu0 0
        %1335 = vmatprep.subr.bf16.mxu0 0
        %1336 = vmatpush2.bf16.msra.mxu0 0
        %1337 = vmatprep.subr.bf16.mxu0 0
        %1338 = vmatpush2.bf16.msra.mxu0 0
        %1339 = vmatprep.subr.bf16.mxu0 0
        %1340 = vmatpush2.bf16.msra.mxu0 0
        %1341 = vmatprep.mubr.bf16.mxu0 0
        %1342 = vmatmul.mubr.bf16.gmra.mxu0 %v1303
        %v1343 = vpop.f32.mrf.mxu0
        %v1344 = vadd.f32 0.0, %v1343
        %v1345 = vpop.f32.mrf.mxu0
        %v1346 = vpop.f32.mrf.mxu0
        %v1347 = vpop.f32.mrf.mxu0
        %1348 = vdwg.mxu0
        %1349 = vrot.lane.b32.xlu0 %v804, 64
        %v1350 = vpop.permute.xlu0 %1349
        %v1352 = vsel %vm814, %v1293, 0
        %v1355 = vsel %vm1305, %v1350, 0
        %1357 = vmatprep.subr.bf16.mxu0 0
        %1358 = vmatpush1.bf16.msra.mxu0 0
        %1359 = vmatprep.subr.bf16.mxu0 0
        %1360 = vmatpush1.bf16.msra.mxu0 0
        %1361 = vmatprep.subr.bf16.mxu0 0
        %1362 = vmatpush1.bf16.msra.mxu0 0
        %1363 = vmatprep.subr.bf16.mxu0 0
        %1364 = vmatpush1.bf16.msra.mxu0 0
        %1365 = vmatprep.subr.bf16.mxu0 0
        %1366 = vmatpush1.bf16.msra.mxu0 0
        %1367 = vmatprep.subr.bf16.mxu0 0
        %1368 = vmatpush1.bf16.msra.mxu0 0
        %1369 = vmatprep.subr.bf16.mxu0 0
        %1370 = vmatpush1.bf16.msra.mxu0 0
        %1371 = vmatprep.subr.bf16.mxu0 0
        %1372 = vmatpush1.bf16.msra.mxu0 %v1355
        %1373 = vmatprep.subr.bf16.mxu0 0
        %1374 = vmatpush2.bf16.msra.mxu0 0
        %1375 = vmatprep.subr.bf16.mxu0 0
        %1376 = vmatpush2.bf16.msra.mxu0 0
        %1377 = vmatprep.subr.bf16.mxu0 0
        %1378 = vmatpush2.bf16.msra.mxu0 0
        %1379 = vmatprep.subr.bf16.mxu0 0
        %1380 = vmatpush2.bf16.msra.mxu0 0
        %1381 = vmatprep.subr.bf16.mxu0 0
        %1382 = vmatpush2.bf16.msra.mxu0 0
        %1383 = vmatprep.subr.bf16.mxu0 0
        %1384 = vmatpush2.bf16.msra.mxu0 0
        %1385 = vmatprep.subr.bf16.mxu0 0
        %1386 = vmatpush2.bf16.msra.mxu0 0
        %1387 = vmatprep.subr.bf16.mxu0 0
        %1388 = vmatpush2.bf16.msra.mxu0 0
        %1389 = vmatprep.mubr.bf16.mxu0 0
        %1390 = vmatmul.mubr.bf16.gmra.mxu0 %v1352
        %v1391 = vpop.f32.mrf.mxu0
        %v1392 = vadd.f32 0.0, %v1391
        %v1393 = vpop.f32.mrf.mxu0
        %v1394 = vpop.f32.mrf.mxu0
        %v1395 = vpop.f32.mrf.mxu0
        %1396 = vdwg.mxu0
        %1397 = vrot.lane.b32.xlu0 %v805, 64
        %v1398 = vpop.permute.xlu0 %1397
        %v1400 = vsel %vm814, %v1294, 0
        %v1403 = vsel %vm1305, %v1398, 0
        %1405 = vmatprep.subr.bf16.mxu0 0
        %1406 = vmatpush1.bf16.msra.mxu0 0
        %1407 = vmatprep.subr.bf16.mxu0 0
        %1408 = vmatpush1.bf16.msra.mxu0 0
        %1409 = vmatprep.subr.bf16.mxu0 0
        %1410 = vmatpush1.bf16.msra.mxu0 0
        %1411 = vmatprep.subr.bf16.mxu0 0
        %1412 = vmatpush1.bf16.msra.mxu0 0
        %1413 = vmatprep.subr.bf16.mxu0 0
        %1414 = vmatpush1.bf16.msra.mxu0 0
        %1415 = vmatprep.subr.bf16.mxu0 0
        %1416 = vmatpush1.bf16.msra.mxu0 0
        %1417 = vmatprep.subr.bf16.mxu0 0
        %1418 = vmatpush1.bf16.msra.mxu0 0
        %1419 = vmatprep.subr.bf16.mxu0 0
        %1420 = vmatpush1.bf16.msra.mxu0 %v1403
        %1421 = vmatprep.subr.bf16.mxu0 0
        %1422 = vmatpush2.bf16.msra.mxu0 0
        %1423 = vmatprep.subr.bf16.mxu0 0
        %1424 = vmatpush2.bf16.msra.mxu0 0
        %1425 = vmatprep.subr.bf16.mxu0 0
        %1426 = vmatpush2.bf16.msra.mxu0 0
        %1427 = vmatprep.subr.bf16.mxu0 0
        %1428 = vmatpush2.bf16.msra.mxu0 0
        %1429 = vmatprep.subr.bf16.mxu0 0
        %1430 = vmatpush2.bf16.msra.mxu0 0
        %1431 = vmatprep.subr.bf16.mxu0 0
        %1432 = vmatpush2.bf16.msra.mxu0 0
        %1433 = vmatprep.subr.bf16.mxu0 0
        %1434 = vmatpush2.bf16.msra.mxu0 0
        %1435 = vmatprep.subr.bf16.mxu0 0
        %1436 = vmatpush2.bf16.msra.mxu0 0
        %1437 = vmatprep.mubr.bf16.mxu0 0
        %1438 = vmatmul.mubr.bf16.gmra.mxu0 %v1400
        %v1439 = vpop.f32.mrf.mxu0
        %v1440 = vadd.f32 0.0, %v1439
        %v1441 = vpop.f32.mrf.mxu0
        %v1442 = vpop.f32.mrf.mxu0
        %v1443 = vpop.f32.mrf.mxu0
        %1444 = vdwg.mxu0
        %1445 = vrot.lane.b32.xlu0 %v806, 64
        %v1446 = vpop.permute.xlu0 %1445
        %v1448 = vsel %vm814, %v1295, 0
        %v1451 = vsel %vm1305, %v1446, 0
        %1453 = vmatprep.subr.bf16.mxu0 0
        %1454 = vmatpush1.bf16.msra.mxu0 0
        %1455 = vmatprep.subr.bf16.mxu0 0
        %1456 = vmatpush1.bf16.msra.mxu0 0
        %1457 = vmatprep.subr.bf16.mxu0 0
        %1458 = vmatpush1.bf16.msra.mxu0 0
        %1459 = vmatprep.subr.bf16.mxu0 0
        %1460 = vmatpush1.bf16.msra.mxu0 0
        %1461 = vmatprep.subr.bf16.mxu0 0
        %1462 = vmatpush1.bf16.msra.mxu0 0
        %1463 = vmatprep.subr.bf16.mxu0 0
        %1464 = vmatpush1.bf16.msra.mxu0 0
        %1465 = vmatprep.subr.bf16.mxu0 0
        %1466 = vmatpush1.bf16.msra.mxu0 0
        %1467 = vmatprep.subr.bf16.mxu0 0
        %1468 = vmatpush1.bf16.msra.mxu0 %v1451
        %1469 = vmatprep.subr.bf16.mxu0 0
        %1470 = vmatpush2.bf16.msra.mxu0 0
        %1471 = vmatprep.subr.bf16.mxu0 0
        %1472 = vmatpush2.bf16.msra.mxu0 0
        %1473 = vmatprep.subr.bf16.mxu0 0
        %1474 = vmatpush2.bf16.msra.mxu0 0
        %1475 = vmatprep.subr.bf16.mxu0 0
        %1476 = vmatpush2.bf16.msra.mxu0 0
        %1477 = vmatprep.subr.bf16.mxu0 0
        %1478 = vmatpush2.bf16.msra.mxu0 0
        %1479 = vmatprep.subr.bf16.mxu0 0
        %1480 = vmatpush2.bf16.msra.mxu0 0
        %1481 = vmatprep.subr.bf16.mxu0 0
        %1482 = vmatpush2.bf16.msra.mxu0 0
        %1483 = vmatprep.subr.bf16.mxu0 0
        %1484 = vmatpush2.bf16.msra.mxu0 0
        %1485 = vmatprep.mubr.bf16.mxu0 0
        %1486 = vmatmul.mubr.bf16.gmra.mxu0 %v1448
        %v1487 = vpop.f32.mrf.mxu0
        %v1488 = vadd.f32 0.0, %v1487
        %v1489 = vpop.f32.mrf.mxu0
        %v1490 = vpop.f32.mrf.mxu0
        %v1491 = vpop.f32.mrf.mxu0
        %1492 = vdwg.mxu0
        %1493 = vrot.lane.b32.xlu0 %v807, 64
        %v1494 = vpop.permute.xlu0 %1493
        %v1496 = vsel %vm814, %v1296, 0
        %v1499 = vsel %vm1305, %v1494, 0
        %1501 = vmatprep.subr.bf16.mxu0 0
        %1502 = vmatpush1.bf16.msra.mxu0 0
        %1503 = vmatprep.subr.bf16.mxu0 0
        %1504 = vmatpush1.bf16.msra.mxu0 0
        %1505 = vmatprep.subr.bf16.mxu0 0
        %1506 = vmatpush1.bf16.msra.mxu0 0
        %1507 = vmatprep.subr.bf16.mxu0 0
        %1508 = vmatpush1.bf16.msra.mxu0 0
        %1509 = vmatprep.subr.bf16.mxu0 0
        %1510 = vmatpush1.bf16.msra.mxu0 0
        %1511 = vmatprep.subr.bf16.mxu0 0
        %1512 = vmatpush1.bf16.msra.mxu0 0
        %1513 = vmatprep.subr.bf16.mxu0 0
        %1514 = vmatpush1.bf16.msra.mxu0 0
        %1515 = vmatprep.subr.bf16.mxu0 0
        %1516 = vmatpush1.bf16.msra.mxu0 %v1499
        %1517 = vmatprep.subr.bf16.mxu0 0
        %1518 = vmatpush2.bf16.msra.mxu0 0
        %1519 = vmatprep.subr.bf16.mxu0 0
        %1520 = vmatpush2.bf16.msra.mxu0 0
        %1521 = vmatprep.subr.bf16.mxu0 0
        %1522 = vmatpush2.bf16.msra.mxu0 0
        %1523 = vmatprep.subr.bf16.mxu0 0
        %1524 = vmatpush2.bf16.msra.mxu0 0
        %1525 = vmatprep.subr.bf16.mxu0 0
        %1526 = vmatpush2.bf16.msra.mxu0 0
        %1527 = vmatprep.subr.bf16.mxu0 0
        %1528 = vmatpush2.bf16.msra.mxu0 0
        %1529 = vmatprep.subr.bf16.mxu0 0
        %1530 = vmatpush2.bf16.msra.mxu0 0
        %1531 = vmatprep.subr.bf16.mxu0 0
        %1532 = vmatpush2.bf16.msra.mxu0 0
        %1533 = vmatprep.mubr.bf16.mxu0 0
        %1534 = vmatmul.mubr.bf16.gmra.mxu0 %v1496
        %v1535 = vpop.f32.mrf.mxu0
        %v1536 = vadd.f32 0.0, %v1535
        %v1537 = vpop.f32.mrf.mxu0
        %v1538 = vpop.f32.mrf.mxu0
        %v1539 = vpop.f32.mrf.mxu0
        %1540 = vdwg.mxu0
        %1541 = vrot.lane.b32.xlu0 %v808, 64
        %v1542 = vpop.permute.xlu0 %1541
        %v1544 = vsel %vm814, %v1297, 0
        %v1547 = vsel %vm1305, %v1542, 0
        %1549 = vmatprep.subr.bf16.mxu0 0
        %1550 = vmatpush1.bf16.msra.mxu0 0
        %1551 = vmatprep.subr.bf16.mxu0 0
        %1552 = vmatpush1.bf16.msra.mxu0 0
        %1553 = vmatprep.subr.bf16.mxu0 0
        %1554 = vmatpush1.bf16.msra.mxu0 0
        %1555 = vmatprep.subr.bf16.mxu0 0
        %1556 = vmatpush1.bf16.msra.mxu0 0
        %1557 = vmatprep.subr.bf16.mxu0 0
        %1558 = vmatpush1.bf16.msra.mxu0 0
        %1559 = vmatprep.subr.bf16.mxu0 0
        %1560 = vmatpush1.bf16.msra.mxu0 0
        %1561 = vmatprep.subr.bf16.mxu0 0
        %1562 = vmatpush1.bf16.msra.mxu0 0
        %1563 = vmatprep.subr.bf16.mxu0 0
        %1564 = vmatpush1.bf16.msra.mxu0 %v1547
        %1565 = vmatprep.subr.bf16.mxu0 0
        %1566 = vmatpush2.bf16.msra.mxu0 0
        %1567 = vmatprep.subr.bf16.mxu0 0
        %1568 = vmatpush2.bf16.msra.mxu0 0
        %1569 = vmatprep.subr.bf16.mxu0 0
        %1570 = vmatpush2.bf16.msra.mxu0 0
        %1571 = vmatprep.subr.bf16.mxu0 0
        %1572 = vmatpush2.bf16.msra.mxu0 0
        %1573 = vmatprep.subr.bf16.mxu0 0
        %1574 = vmatpush2.bf16.msra.mxu0 0
        %1575 = vmatprep.subr.bf16.mxu0 0
        %1576 = vmatpush2.bf16.msra.mxu0 0
        %1577 = vmatprep.subr.bf16.mxu0 0
        %1578 = vmatpush2.bf16.msra.mxu0 0
        %1579 = vmatprep.subr.bf16.mxu0 0
        %1580 = vmatpush2.bf16.msra.mxu0 0
        %1581 = vmatprep.mubr.bf16.mxu0 0
        %1582 = vmatmul.mubr.bf16.gmra.mxu0 %v1544
        %v1583 = vpop.f32.mrf.mxu0
        %v1584 = vadd.f32 0.0, %v1583
        %v1585 = vpop.f32.mrf.mxu0
        %v1586 = vpop.f32.mrf.mxu0
        %v1587 = vpop.f32.mrf.mxu0
        %1588 = vdwg.mxu0
        %1589 = vrot.lane.b32.xlu0 %v809, 64
        %v1590 = vpop.permute.xlu0 %1589
        %v1592 = vsel %vm814, %v1298, 0
        %v1595 = vsel %vm1305, %v1590, 0
        %1597 = vmatprep.subr.bf16.mxu0 0
        %1598 = vmatpush1.bf16.msra.mxu0 0
        %1599 = vmatprep.subr.bf16.mxu0 0
        %1600 = vmatpush1.bf16.msra.mxu0 0
        %1601 = vmatprep.subr.bf16.mxu0 0
        %1602 = vmatpush1.bf16.msra.mxu0 0
        %1603 = vmatprep.subr.bf16.mxu0 0
        %1604 = vmatpush1.bf16.msra.mxu0 0
        %1605 = vmatprep.subr.bf16.mxu0 0
        %1606 = vmatpush1.bf16.msra.mxu0 0
        %1607 = vmatprep.subr.bf16.mxu0 0
        %1608 = vmatpush1.bf16.msra.mxu0 0
        %1609 = vmatprep.subr.bf16.mxu0 0
        %1610 = vmatpush1.bf16.msra.mxu0 0
        %1611 = vmatprep.subr.bf16.mxu0 0
        %1612 = vmatpush1.bf16.msra.mxu0 %v1595
        %1613 = vmatprep.subr.bf16.mxu0 0
        %1614 = vmatpush2.bf16.msra.mxu0 0
        %1615 = vmatprep.subr.bf16.mxu0 0
        %1616 = vmatpush2.bf16.msra.mxu0 0
        %1617 = vmatprep.subr.bf16.mxu0 0
        %1618 = vmatpush2.bf16.msra.mxu0 0
        %1619 = vmatprep.subr.bf16.mxu0 0
        %1620 = vmatpush2.bf16.msra.mxu0 0
        %1621 = vmatprep.subr.bf16.mxu0 0
        %1622 = vmatpush2.bf16.msra.mxu0 0
        %1623 = vmatprep.subr.bf16.mxu0 0
        %1624 = vmatpush2.bf16.msra.mxu0 0
        %1625 = vmatprep.subr.bf16.mxu0 0
        %1626 = vmatpush2.bf16.msra.mxu0 0
        %1627 = vmatprep.subr.bf16.mxu0 0
        %1628 = vmatpush2.bf16.msra.mxu0 0
        %1629 = vmatprep.mubr.bf16.mxu0 0
        %1630 = vmatmul.mubr.bf16.gmra.mxu0 %v1592
        %v1631 = vpop.f32.mrf.mxu0
        %v1632 = vadd.f32 0.0, %v1631
        %v1633 = vpop.f32.mrf.mxu0
        %v1634 = vpop.f32.mrf.mxu0
        %v1635 = vpop.f32.mrf.mxu0
        %1636 = vdwg.mxu0
        %1637 = vrot.lane.b32.xlu0 %v810, 64
        %v1638 = vpop.permute.xlu0 %1637
        %v1640 = vsel %vm814, %v1299, 0
        %v1643 = vsel %vm1305, %v1638, 0
        %1645 = vmatprep.subr.bf16.mxu0 0
        %1646 = vmatpush1.bf16.msra.mxu0 0
        %1647 = vmatprep.subr.bf16.mxu0 0
        %1648 = vmatpush1.bf16.msra.mxu0 0
        %1649 = vmatprep.subr.bf16.mxu0 0
        %1650 = vmatpush1.bf16.msra.mxu0 0
        %1651 = vmatprep.subr.bf16.mxu0 0
        %1652 = vmatpush1.bf16.msra.mxu0 0
        %1653 = vmatprep.subr.bf16.mxu0 0
        %1654 = vmatpush1.bf16.msra.mxu0 0
        %1655 = vmatprep.subr.bf16.mxu0 0
        %1656 = vmatpush1.bf16.msra.mxu0 0
        %1657 = vmatprep.subr.bf16.mxu0 0
        %1658 = vmatpush1.bf16.msra.mxu0 0
        %1659 = vmatprep.subr.bf16.mxu0 0
        %1660 = vmatpush1.bf16.msra.mxu0 %v1643
        %1661 = vmatprep.subr.bf16.mxu0 0
        %1662 = vmatpush2.bf16.msra.mxu0 0
        %1663 = vmatprep.subr.bf16.mxu0 0
        %1664 = vmatpush2.bf16.msra.mxu0 0
        %1665 = vmatprep.subr.bf16.mxu0 0
        %1666 = vmatpush2.bf16.msra.mxu0 0
        %1667 = vmatprep.subr.bf16.mxu0 0
        %1668 = vmatpush2.bf16.msra.mxu0 0
        %1669 = vmatprep.subr.bf16.mxu0 0
        %1670 = vmatpush2.bf16.msra.mxu0 0
        %1671 = vmatprep.subr.bf16.mxu0 0
        %1672 = vmatpush2.bf16.msra.mxu0 0
        %1673 = vmatprep.subr.bf16.mxu0 0
        %1674 = vmatpush2.bf16.msra.mxu0 0
        %1675 = vmatprep.subr.bf16.mxu0 0
        %1676 = vmatpush2.bf16.msra.mxu0 0
        %1677 = vmatprep.mubr.bf16.mxu0 0
        %1678 = vmatmul.mubr.bf16.gmra.mxu0 %v1640
        %v1679 = vpop.f32.mrf.mxu0
        %v1680 = vadd.f32 0.0, %v1679
        %v1681 = vpop.f32.mrf.mxu0
        %v1682 = vpop.f32.mrf.mxu0
        %v1683 = vpop.f32.mrf.mxu0
        %1684 = vdwg.mxu0
        %1685 = vrot.lane.b32.xlu0 %v803, 120
        %v1686 = vpop.permute.xlu0 %1685
        %1687 = vrot.lane.b32.xlu0 %v803, 88
        %v1688 = vpop.permute.xlu0 %1687
        %v1690 = vsel %vm814, %v1686, 0
        %v1693 = vsel %vm814, %v1688, 0
        %1695 = vmatprep.subr.bf16.mxu0 0
        %1696 = vmatpush1.bf16.xpose.msra.mxu0 0
        %1697 = vmatprep.subr.bf16.mxu0 0
        %1698 = vmatpush1.bf16.xpose.msra.mxu0 0
        %1699 = vmatprep.subr.bf16.mxu0 0
        %1700 = vmatpush1.bf16.xpose.msra.mxu0 0
        %1701 = vmatprep.subr.bf16.mxu0 0
        %1702 = vmatpush1.bf16.xpose.msra.mxu0 0
        %1703 = vmatprep.subr.bf16.mxu0 0
        %1704 = vmatpush1.bf16.xpose.msra.mxu0 0
        %1705 = vmatprep.subr.bf16.mxu0 0
        %1706 = vmatpush1.bf16.xpose.msra.mxu0 0
        %1707 = vmatprep.subr.bf16.mxu0 0
        %1708 = vmatpush1.bf16.xpose.msra.mxu0 0
        %1709 = vmatprep.subr.bf16.mxu0 0
        %1710 = vmatpush1.bf16.xpose.msra.mxu0 %v1693
        %1711 = vmatprep.subr.bf16.mxu0 0
        %1712 = vmatpush2.bf16.xpose.msra.mxu0 0
        %1713 = vmatprep.subr.bf16.mxu0 0
        %1714 = vmatpush2.bf16.xpose.msra.mxu0 0
        %1715 = vmatprep.subr.bf16.mxu0 0
        %1716 = vmatpush2.bf16.xpose.msra.mxu0 0
        %1717 = vmatprep.subr.bf16.mxu0 0
        %1718 = vmatpush2.bf16.xpose.msra.mxu0 0
        %1719 = vmatprep.subr.bf16.mxu0 0
        %1720 = vmatpush2.bf16.xpose.msra.mxu0 0
        %1721 = vmatprep.subr.bf16.mxu0 0
        %1722 = vmatpush2.bf16.xpose.msra.mxu0 0
        %1723 = vmatprep.subr.bf16.mxu0 0
        %1724 = vmatpush2.bf16.xpose.msra.mxu0 0
        %1725 = vmatprep.subr.bf16.mxu0 0
        %1726 = vmatpush2.bf16.xpose.msra.mxu0 0
        %1727 = vmatprep.mubr.bf16.mxu0 0
        %1728 = vmatmul.mubr.bf16.gmra.mxu0 %v1690
        %v1729 = vpop.f32.mrf.mxu0
        %v1730 = vadd.f32 0.0, %v1729
        %v1731 = vpop.f32.mrf.mxu0
        %v1732 = vpop.f32.mrf.mxu0
        %v1733 = vpop.f32.mrf.mxu0
        %1734 = vdwg.mxu0
        %1735 = vrot.lane.b32.xlu0 %v804, 120
        %v1736 = vpop.permute.xlu0 %1735
        %1737 = vrot.lane.b32.xlu0 %v804, 88
        %v1738 = vpop.permute.xlu0 %1737
        %v1740 = vsel %vm814, %v1736, 0
        %v1743 = vsel %vm814, %v1738, 0
        %1745 = vmatprep.subr.bf16.mxu0 0
        %1746 = vmatpush1.bf16.xpose.msra.mxu0 0
        %1747 = vmatprep.subr.bf16.mxu0 0
        %1748 = vmatpush1.bf16.xpose.msra.mxu0 0
        %1749 = vmatprep.subr.bf16.mxu0 0
        %1750 = vmatpush1.bf16.xpose.msra.mxu0 0
        %1751 = vmatprep.subr.bf16.mxu0 0
        %1752 = vmatpush1.bf16.xpose.msra.mxu0 0
        %1753 = vmatprep.subr.bf16.mxu0 0
        %1754 = vmatpush1.bf16.xpose.msra.mxu0 0
        %1755 = vmatprep.subr.bf16.mxu0 0
        %1756 = vmatpush1.bf16.xpose.msra.mxu0 0
        %1757 = vmatprep.subr.bf16.mxu0 0
        %1758 = vmatpush1.bf16.xpose.msra.mxu0 0
        %1759 = vmatprep.subr.bf16.mxu0 0
        %1760 = vmatpush1.bf16.xpose.msra.mxu0 %v1743
        %1761 = vmatprep.subr.bf16.mxu0 0
        %1762 = vmatpush2.bf16.xpose.msra.mxu0 0
        %1763 = vmatprep.subr.bf16.mxu0 0
        %1764 = vmatpush2.bf16.xpose.msra.mxu0 0
        %1765 = vmatprep.subr.bf16.mxu0 0
        %1766 = vmatpush2.bf16.xpose.msra.mxu0 0
        %1767 = vmatprep.subr.bf16.mxu0 0
        %1768 = vmatpush2.bf16.xpose.msra.mxu0 0
        %1769 = vmatprep.subr.bf16.mxu0 0
        %1770 = vmatpush2.bf16.xpose.msra.mxu0 0
        %1771 = vmatprep.subr.bf16.mxu0 0
        %1772 = vmatpush2.bf16.xpose.msra.mxu0 0
        %1773 = vmatprep.subr.bf16.mxu0 0
        %1774 = vmatpush2.bf16.xpose.msra.mxu0 0
        %1775 = vmatprep.subr.bf16.mxu0 0
        %1776 = vmatpush2.bf16.xpose.msra.mxu0 0
        %1777 = vmatprep.mubr.bf16.mxu0 0
        %1778 = vmatmul.mubr.bf16.gmra.mxu0 %v1740
        %v1779 = vpop.f32.mrf.mxu0
        %v1780 = vadd.f32 0.0, %v1779
        %v1781 = vpop.f32.mrf.mxu0
        %v1782 = vpop.f32.mrf.mxu0
        %v1783 = vpop.f32.mrf.mxu0
        %1784 = vdwg.mxu0
        %1785 = vrot.lane.b32.xlu0 %v805, 120
        %v1786 = vpop.permute.xlu0 %1785
        %1787 = vrot.lane.b32.xlu0 %v805, 88
        %v1788 = vpop.permute.xlu0 %1787
        %v1790 = vsel %vm814, %v1786, 0
        %v1793 = vsel %vm814, %v1788, 0
        %1795 = vmatprep.subr.bf16.mxu0 0
        %1796 = vmatpush1.bf16.xpose.msra.mxu0 0
        %1797 = vmatprep.subr.bf16.mxu0 0
        %1798 = vmatpush1.bf16.xpose.msra.mxu0 0
        %1799 = vmatprep.subr.bf16.mxu0 0
        %1800 = vmatpush1.bf16.xpose.msra.mxu0 0
        %1801 = vmatprep.subr.bf16.mxu0 0
        %1802 = vmatpush1.bf16.xpose.msra.mxu0 0
        %1803 = vmatprep.subr.bf16.mxu0 0
        %1804 = vmatpush1.bf16.xpose.msra.mxu0 0
        %1805 = vmatprep.subr.bf16.mxu0 0
        %1806 = vmatpush1.bf16.xpose.msra.mxu0 0
        %1807 = vmatprep.subr.bf16.mxu0 0
        %1808 = vmatpush1.bf16.xpose.msra.mxu0 0
        %1809 = vmatprep.subr.bf16.mxu0 0
        %1810 = vmatpush1.bf16.xpose.msra.mxu0 %v1793
        %1811 = vmatprep.subr.bf16.mxu0 0
        %1812 = vmatpush2.bf16.xpose.msra.mxu0 0
        %1813 = vmatprep.subr.bf16.mxu0 0
        %1814 = vmatpush2.bf16.xpose.msra.mxu0 0
        %1815 = vmatprep.subr.bf16.mxu0 0
        %1816 = vmatpush2.bf16.xpose.msra.mxu0 0
        %1817 = vmatprep.subr.bf16.mxu0 0
        %1818 = vmatpush2.bf16.xpose.msra.mxu0 0
        %1819 = vmatprep.subr.bf16.mxu0 0
        %1820 = vmatpush2.bf16.xpose.msra.mxu0 0
        %1821 = vmatprep.subr.bf16.mxu0 0
        %1822 = vmatpush2.bf16.xpose.msra.mxu0 0
        %1823 = vmatprep.subr.bf16.mxu0 0
        %1824 = vmatpush2.bf16.xpose.msra.mxu0 0
        %1825 = vmatprep.subr.bf16.mxu0 0
        %1826 = vmatpush2.bf16.xpose.msra.mxu0 0
        %1827 = vmatprep.mubr.bf16.mxu0 0
        %1828 = vmatmul.mubr.bf16.gmra.mxu0 %v1790
        %v1829 = vpop.f32.mrf.mxu0
        %v1830 = vadd.f32 0.0, %v1829
        %v1831 = vpop.f32.mrf.mxu0
        %v1832 = vpop.f32.mrf.mxu0
        %v1833 = vpop.f32.mrf.mxu0
        %1834 = vdwg.mxu0
        %1835 = vrot.lane.b32.xlu0 %v806, 120
        %v1836 = vpop.permute.xlu0 %1835
        %1837 = vrot.lane.b32.xlu0 %v806, 88
        %v1838 = vpop.permute.xlu0 %1837
        %v1840 = vsel %vm814, %v1836, 0
        %v1843 = vsel %vm814, %v1838, 0
        %1845 = vmatprep.subr.bf16.mxu0 0
        %1846 = vmatpush1.bf16.xpose.msra.mxu0 0
        %1847 = vmatprep.subr.bf16.mxu0 0
        %1848 = vmatpush1.bf16.xpose.msra.mxu0 0
        %1849 = vmatprep.subr.bf16.mxu0 0
        %1850 = vmatpush1.bf16.xpose.msra.mxu0 0
        %1851 = vmatprep.subr.bf16.mxu0 0
        %1852 = vmatpush1.bf16.xpose.msra.mxu0 0
        %1853 = vmatprep.subr.bf16.mxu0 0
        %1854 = vmatpush1.bf16.xpose.msra.mxu0 0
        %1855 = vmatprep.subr.bf16.mxu0 0
        %1856 = vmatpush1.bf16.xpose.msra.mxu0 0
        %1857 = vmatprep.subr.bf16.mxu0 0
        %1858 = vmatpush1.bf16.xpose.msra.mxu0 0
        %1859 = vmatprep.subr.bf16.mxu0 0
        %1860 = vmatpush1.bf16.xpose.msra.mxu0 %v1843
        %1861 = vmatprep.subr.bf16.mxu0 0
        %1862 = vmatpush2.bf16.xpose.msra.mxu0 0
        %1863 = vmatprep.subr.bf16.mxu0 0
        %1864 = vmatpush2.bf16.xpose.msra.mxu0 0
        %1865 = vmatprep.subr.bf16.mxu0 0
        %1866 = vmatpush2.bf16.xpose.msra.mxu0 0
        %1867 = vmatprep.subr.bf16.mxu0 0
        %1868 = vmatpush2.bf16.xpose.msra.mxu0 0
        %1869 = vmatprep.subr.bf16.mxu0 0
        %1870 = vmatpush2.bf16.xpose.msra.mxu0 0
        %1871 = vmatprep.subr.bf16.mxu0 0
        %1872 = vmatpush2.bf16.xpose.msra.mxu0 0
        %1873 = vmatprep.subr.bf16.mxu0 0
        %1874 = vmatpush2.bf16.xpose.msra.mxu0 0
        %1875 = vmatprep.subr.bf16.mxu0 0
        %1876 = vmatpush2.bf16.xpose.msra.mxu0 0
        %1877 = vmatprep.mubr.bf16.mxu0 0
        %1878 = vmatmul.mubr.bf16.gmra.mxu0 %v1840
        %v1879 = vpop.f32.mrf.mxu0
        %v1880 = vadd.f32 0.0, %v1879
        %v1881 = vpop.f32.mrf.mxu0
        %v1882 = vpop.f32.mrf.mxu0
        %v1883 = vpop.f32.mrf.mxu0
        %1884 = vdwg.mxu0
        %1885 = vrot.lane.b32.xlu0 %v807, 120
        %v1886 = vpop.permute.xlu0 %1885
        %1887 = vrot.lane.b32.xlu0 %v807, 88
        %v1888 = vpop.permute.xlu0 %1887
        %v1890 = vsel %vm814, %v1886, 0
        %v1893 = vsel %vm814, %v1888, 0
        %1895 = vmatprep.subr.bf16.mxu0 0
        %1896 = vmatpush1.bf16.xpose.msra.mxu0 0
        %1897 = vmatprep.subr.bf16.mxu0 0
        %1898 = vmatpush1.bf16.xpose.msra.mxu0 0
        %1899 = vmatprep.subr.bf16.mxu0 0
        %1900 = vmatpush1.bf16.xpose.msra.mxu0 0
        %1901 = vmatprep.subr.bf16.mxu0 0
        %1902 = vmatpush1.bf16.xpose.msra.mxu0 0
        %1903 = vmatprep.subr.bf16.mxu0 0
        %1904 = vmatpush1.bf16.xpose.msra.mxu0 0
        %1905 = vmatprep.subr.bf16.mxu0 0
        %1906 = vmatpush1.bf16.xpose.msra.mxu0 0
        %1907 = vmatprep.subr.bf16.mxu0 0
        %1908 = vmatpush1.bf16.xpose.msra.mxu0 0
        %1909 = vmatprep.subr.bf16.mxu0 0
        %1910 = vmatpush1.bf16.xpose.msra.mxu0 %v1893
        %1911 = vmatprep.subr.bf16.mxu0 0
        %1912 = vmatpush2.bf16.xpose.msra.mxu0 0
        %1913 = vmatprep.subr.bf16.mxu0 0
        %1914 = vmatpush2.bf16.xpose.msra.mxu0 0
        %1915 = vmatprep.subr.bf16.mxu0 0
        %1916 = vmatpush2.bf16.xpose.msra.mxu0 0
        %1917 = vmatprep.subr.bf16.mxu0 0
        %1918 = vmatpush2.bf16.xpose.msra.mxu0 0
        %1919 = vmatprep.subr.bf16.mxu0 0
        %1920 = vmatpush2.bf16.xpose.msra.mxu0 0
        %1921 = vmatprep.subr.bf16.mxu0 0
        %1922 = vmatpush2.bf16.xpose.msra.mxu0 0
        %1923 = vmatprep.subr.bf16.mxu0 0
        %1924 = vmatpush2.bf16.xpose.msra.mxu0 0
        %1925 = vmatprep.subr.bf16.mxu0 0
        %1926 = vmatpush2.bf16.xpose.msra.mxu0 0
        %1927 = vmatprep.mubr.bf16.mxu0 0
        %1928 = vmatmul.mubr.bf16.gmra.mxu0 %v1890
        %v1929 = vpop.f32.mrf.mxu0
        %v1930 = vadd.f32 0.0, %v1929
        %v1931 = vpop.f32.mrf.mxu0
        %v1932 = vpop.f32.mrf.mxu0
        %v1933 = vpop.f32.mrf.mxu0
        %1934 = vdwg.mxu0
        %1935 = vrot.lane.b32.xlu0 %v808, 120
        %v1936 = vpop.permute.xlu0 %1935
        %1937 = vrot.lane.b32.xlu0 %v808, 88
        %v1938 = vpop.permute.xlu0 %1937
        %v1940 = vsel %vm814, %v1936, 0
        %v1943 = vsel %vm814, %v1938, 0
        %1945 = vmatprep.subr.bf16.mxu0 0
        %1946 = vmatpush1.bf16.xpose.msra.mxu0 0
        %1947 = vmatprep.subr.bf16.mxu0 0
        %1948 = vmatpush1.bf16.xpose.msra.mxu0 0
        %1949 = vmatprep.subr.bf16.mxu0 0
        %1950 = vmatpush1.bf16.xpose.msra.mxu0 0
        %1951 = vmatprep.subr.bf16.mxu0 0
        %1952 = vmatpush1.bf16.xpose.msra.mxu0 0
        %1953 = vmatprep.subr.bf16.mxu0 0
        %1954 = vmatpush1.bf16.xpose.msra.mxu0 0
        %1955 = vmatprep.subr.bf16.mxu0 0
        %1956 = vmatpush1.bf16.xpose.msra.mxu0 0
        %1957 = vmatprep.subr.bf16.mxu0 0
        %1958 = vmatpush1.bf16.xpose.msra.mxu0 0
        %1959 = vmatprep.subr.bf16.mxu0 0
        %1960 = vmatpush1.bf16.xpose.msra.mxu0 %v1943
        %1961 = vmatprep.subr.bf16.mxu0 0
        %1962 = vmatpush2.bf16.xpose.msra.mxu0 0
        %1963 = vmatprep.subr.bf16.mxu0 0
        %1964 = vmatpush2.bf16.xpose.msra.mxu0 0
        %1965 = vmatprep.subr.bf16.mxu0 0
        %1966 = vmatpush2.bf16.xpose.msra.mxu0 0
        %1967 = vmatprep.subr.bf16.mxu0 0
        %1968 = vmatpush2.bf16.xpose.msra.mxu0 0
        %1969 = vmatprep.subr.bf16.mxu0 0
        %1970 = vmatpush2.bf16.xpose.msra.mxu0 0
        %1971 = vmatprep.subr.bf16.mxu0 0
        %1972 = vmatpush2.bf16.xpose.msra.mxu0 0
        %1973 = vmatprep.subr.bf16.mxu0 0
        %1974 = vmatpush2.bf16.xpose.msra.mxu0 0
        %1975 = vmatprep.subr.bf16.mxu0 0
        %1976 = vmatpush2.bf16.xpose.msra.mxu0 0
        %1977 = vmatprep.mubr.bf16.mxu0 0
        %1978 = vmatmul.mubr.bf16.gmra.mxu0 %v1940
        %v1979 = vpop.f32.mrf.mxu0
        %v1980 = vadd.f32 0.0, %v1979
        %v1981 = vpop.f32.mrf.mxu0
        %v1982 = vpop.f32.mrf.mxu0
        %v1983 = vpop.f32.mrf.mxu0
        %1984 = vdwg.mxu0
        %1985 = vrot.lane.b32.xlu0 %v809, 120
        %v1986 = vpop.permute.xlu0 %1985
        %1987 = vrot.lane.b32.xlu0 %v809, 88
        %v1988 = vpop.permute.xlu0 %1987
        %v1990 = vsel %vm814, %v1986, 0
        %v1993 = vsel %vm814, %v1988, 0
        %1995 = vmatprep.subr.bf16.mxu0 0
        %1996 = vmatpush1.bf16.xpose.msra.mxu0 0
        %1997 = vmatprep.subr.bf16.mxu0 0
        %1998 = vmatpush1.bf16.xpose.msra.mxu0 0
        %1999 = vmatprep.subr.bf16.mxu0 0
        %2000 = vmatpush1.bf16.xpose.msra.mxu0 0
        %2001 = vmatprep.subr.bf16.mxu0 0
        %2002 = vmatpush1.bf16.xpose.msra.mxu0 0
        %2003 = vmatprep.subr.bf16.mxu0 0
        %2004 = vmatpush1.bf16.xpose.msra.mxu0 0
        %2005 = vmatprep.subr.bf16.mxu0 0
        %2006 = vmatpush1.bf16.xpose.msra.mxu0 0
        %2007 = vmatprep.subr.bf16.mxu0 0
        %2008 = vmatpush1.bf16.xpose.msra.mxu0 0
        %2009 = vmatprep.subr.bf16.mxu0 0
        %2010 = vmatpush1.bf16.xpose.msra.mxu0 %v1993
        %2011 = vmatprep.subr.bf16.mxu0 0
        %2012 = vmatpush2.bf16.xpose.msra.mxu0 0
        %2013 = vmatprep.subr.bf16.mxu0 0
        %2014 = vmatpush2.bf16.xpose.msra.mxu0 0
        %2015 = vmatprep.subr.bf16.mxu0 0
        %2016 = vmatpush2.bf16.xpose.msra.mxu0 0
        %2017 = vmatprep.subr.bf16.mxu0 0
        %2018 = vmatpush2.bf16.xpose.msra.mxu0 0
        %2019 = vmatprep.subr.bf16.mxu0 0
        %2020 = vmatpush2.bf16.xpose.msra.mxu0 0
        %2021 = vmatprep.subr.bf16.mxu0 0
        %2022 = vmatpush2.bf16.xpose.msra.mxu0 0
        %2023 = vmatprep.subr.bf16.mxu0 0
        %2024 = vmatpush2.bf16.xpose.msra.mxu0 0
        %2025 = vmatprep.subr.bf16.mxu0 0
        %2026 = vmatpush2.bf16.xpose.msra.mxu0 0
        %2027 = vmatprep.mubr.bf16.mxu0 0
        %2028 = vmatmul.mubr.bf16.gmra.mxu0 %v1990
        %v2029 = vpop.f32.mrf.mxu0
        %v2030 = vadd.f32 0.0, %v2029
        %v2031 = vpop.f32.mrf.mxu0
        %v2032 = vpop.f32.mrf.mxu0
        %v2033 = vpop.f32.mrf.mxu0
        %2034 = vdwg.mxu0
        %2035 = vrot.lane.b32.xlu0 %v810, 120
        %v2036 = vpop.permute.xlu0 %2035
        %2037 = vrot.lane.b32.xlu0 %v810, 88
        %v2038 = vpop.permute.xlu0 %2037
        %v2040 = vsel %vm814, %v2036, 0
        %v2043 = vsel %vm814, %v2038, 0
        %2045 = vmatprep.subr.bf16.mxu0 0
        %2046 = vmatpush1.bf16.xpose.msra.mxu0 0
        %2047 = vmatprep.subr.bf16.mxu0 0
        %2048 = vmatpush1.bf16.xpose.msra.mxu0 0
        %2049 = vmatprep.subr.bf16.mxu0 0
        %2050 = vmatpush1.bf16.xpose.msra.mxu0 0
        %2051 = vmatprep.subr.bf16.mxu0 0
        %2052 = vmatpush1.bf16.xpose.msra.mxu0 0
        %2053 = vmatprep.subr.bf16.mxu0 0
        %2054 = vmatpush1.bf16.xpose.msra.mxu0 0
        %2055 = vmatprep.subr.bf16.mxu0 0
        %2056 = vmatpush1.bf16.xpose.msra.mxu0 0
        %2057 = vmatprep.subr.bf16.mxu0 0
        %2058 = vmatpush1.bf16.xpose.msra.mxu0 0
        %2059 = vmatprep.subr.bf16.mxu0 0
        %2060 = vmatpush1.bf16.xpose.msra.mxu0 %v2043
        %2061 = vmatprep.subr.bf16.mxu0 0
        %2062 = vmatpush2.bf16.xpose.msra.mxu0 0
        %2063 = vmatprep.subr.bf16.mxu0 0
        %2064 = vmatpush2.bf16.xpose.msra.mxu0 0
        %2065 = vmatprep.subr.bf16.mxu0 0
        %2066 = vmatpush2.bf16.xpose.msra.mxu0 0
        %2067 = vmatprep.subr.bf16.mxu0 0
        %2068 = vmatpush2.bf16.xpose.msra.mxu0 0
        %2069 = vmatprep.subr.bf16.mxu0 0
        %2070 = vmatpush2.bf16.xpose.msra.mxu0 0
        %2071 = vmatprep.subr.bf16.mxu0 0
        %2072 = vmatpush2.bf16.xpose.msra.mxu0 0
        %2073 = vmatprep.subr.bf16.mxu0 0
        %2074 = vmatpush2.bf16.xpose.msra.mxu0 0
        %2075 = vmatprep.subr.bf16.mxu0 0
        %2076 = vmatpush2.bf16.xpose.msra.mxu0 0
        %2077 = vmatprep.mubr.bf16.mxu0 0
        %2078 = vmatmul.mubr.bf16.gmra.mxu0 %v2040
        %v2079 = vpop.f32.mrf.mxu0
        %v2080 = vadd.f32 0.0, %v2079
        %v2081 = vpop.f32.mrf.mxu0
        %v2082 = vpop.f32.mrf.mxu0
        %v2083 = vpop.f32.mrf.mxu0
        %2084 = vdwg.mxu0
        %v2085 = vsel %vm814, %v1730, -inf
        %2086 = vmax.xlane.f32.xlu0 %v2085
        %v2087 = vpop.xlane.xlu0 %2086
        %v2088 = vsel %vm814, %v1780, -inf
        %2089 = vmax.xlane.f32.xlu0 %v2088
        %v2090 = vpop.xlane.xlu0 %2089
        %v2091 = vsel %vm814, %v1830, -inf
        %2092 = vmax.xlane.f32.xlu0 %v2091
        %v2093 = vpop.xlane.xlu0 %2092
        %v2094 = vsel %vm814, %v1880, -inf
        %2095 = vmax.xlane.f32.xlu0 %v2094
        %v2096 = vpop.xlane.xlu0 %2095
        %v2097 = vsel %vm814, %v1930, -inf
        %2098 = vmax.xlane.f32.xlu0 %v2097
        %v2099 = vpop.xlane.xlu0 %2098
        %v2100 = vsel %vm814, %v1980, -inf
        %2101 = vmax.xlane.f32.xlu0 %v2100
        %v2102 = vpop.xlane.xlu0 %2101
        %v2103 = vsel %vm814, %v2030, -inf
        %2104 = vmax.xlane.f32.xlu0 %v2103
        %v2105 = vpop.xlane.xlu0 %2104
        %v2106 = vsel %vm814, %v2080, -inf
        %2107 = vmax.xlane.f32.xlu0 %v2106
        %v2108 = vpop.xlane.xlu0 %2107
        %v2109 = vsub.f32 %v1730, %v2087
        %v2110 = vsub.f32 %v1780, %v2090
        %v2111 = vsub.f32 %v1830, %v2093
        %v2112 = vsub.f32 %v1880, %v2096
        %v2113 = vsub.f32 %v1930, %v2099
        %v2114 = vsub.f32 %v1980, %v2102
        %v2115 = vsub.f32 %v2030, %v2105
        %v2116 = vsub.f32 %v2080, %v2108
        %v2117 = vmul.f32 %v2109, 1.442695
        %v2118 = vpow.pop %v2117
        %v2119 = vmul.f32 %v2110, 1.442695
        %v2120 = vpow.pop %v2119
        %v2121 = vmul.f32 %v2111, 1.442695
        %v2122 = vpow.pop %v2121
        %v2123 = vmul.f32 %v2112, 1.442695
        %v2124 = vpow.pop %v2123
        %v2125 = vmul.f32 %v2113, 1.442695
        %v2126 = vpow.pop %v2125
        %v2127 = vmul.f32 %v2114, 1.442695
        %v2128 = vpow.pop %v2127
        %v2129 = vmul.f32 %v2115, 1.442695
        %v2130 = vpow.pop %v2129
        %v2131 = vmul.f32 %v2116, 1.442695
        %v2132 = vpow.pop %v2131
        %v2133 = vsel %vm814, %v2118, 0.0
        %2134 = vadd.xlane.f32.xlu0 %v2133
        %v2135 = vpop.xlane.xlu0 %2134
        %v2136 = vsel %vm814, %v2120, 0.0
        %2137 = vadd.xlane.f32.xlu0 %v2136
        %v2138 = vpop.xlane.xlu0 %2137
        %v2139 = vsel %vm814, %v2122, 0.0
        %2140 = vadd.xlane.f32.xlu0 %v2139
        %v2141 = vpop.xlane.xlu0 %2140
        %v2142 = vsel %vm814, %v2124, 0.0
        %2143 = vadd.xlane.f32.xlu0 %v2142
        %v2144 = vpop.xlane.xlu0 %2143
        %v2145 = vsel %vm814, %v2126, 0.0
        %2146 = vadd.xlane.f32.xlu0 %v2145
        %v2147 = vpop.xlane.xlu0 %2146
        %v2148 = vsel %vm814, %v2128, 0.0
        %2149 = vadd.xlane.f32.xlu0 %v2148
        %v2150 = vpop.xlane.xlu0 %2149
        %v2151 = vsel %vm814, %v2130, 0.0
        %2152 = vadd.xlane.f32.xlu0 %v2151
        %v2153 = vpop.xlane.xlu0 %2152
        %v2154 = vsel %vm814, %v2132, 0.0
        %2155 = vadd.xlane.f32.xlu0 %v2154
        %v2156 = vpop.xlane.xlu0 %2155
        %v2157 = vrcp.pop %v2135
        %v2158 = vrcp.pop %v2138
        %v2159 = vrcp.pop %v2141
        %v2160 = vrcp.pop %v2144
        %v2161 = vrcp.pop %v2147
        %v2162 = vrcp.pop %v2150
        %v2163 = vrcp.pop %v2153
        %v2164 = vrcp.pop %v2156
        %v2165 = vmul.f32 %v2118, %v2157
        %v2166 = vmul.f32 %v2120, %v2158
        %v2167 = vmul.f32 %v2122, %v2159
        %v2168 = vmul.f32 %v2124, %v2160
        %v2169 = vmul.f32 %v2126, %v2161
        %v2170 = vmul.f32 %v2128, %v2162
        %v2171 = vmul.f32 %v2130, %v2163
        %v2172 = vmul.f32 %v2132, %v2164
        %v2173 = vpack.c.bf16 %v2165, %v2165
        %v2174 = vpack.c.bf16 %v2166, %v2166
        %v2175 = vpack.c.bf16 %v2167, %v2167
        %v2176 = vpack.c.bf16 %v2168, %v2168
        %v2177 = vpack.c.bf16 %v2169, %v2169
        %v2178 = vpack.c.bf16 %v2170, %v2170
        %v2179 = vpack.c.bf16 %v2171, %v2171
        %v2180 = vpack.c.bf16 %v2172, %v2172
        %2181 = vrot.lane.b32.xlu0 %v803, 56
        %v2182 = vpop.permute.xlu0 %2181
        %v2184 = vsel %vm814, %v2173, 0
        %v2187 = vsel %vm1305, %v2182, 0
        %2189 = vmatprep.subr.bf16.mxu0 0
        %2190 = vmatpush1.bf16.msra.mxu0 0
        %2191 = vmatprep.subr.bf16.mxu0 0
        %2192 = vmatpush1.bf16.msra.mxu0 0
        %2193 = vmatprep.subr.bf16.mxu0 0
        %2194 = vmatpush1.bf16.msra.mxu0 0
        %2195 = vmatprep.subr.bf16.mxu0 0
        %2196 = vmatpush1.bf16.msra.mxu0 0
        %2197 = vmatprep.subr.bf16.mxu0 0
        %2198 = vmatpush1.bf16.msra.mxu0 0
        %2199 = vmatprep.subr.bf16.mxu0 0
        %2200 = vmatpush1.bf16.msra.mxu0 0
        %2201 = vmatprep.subr.bf16.mxu0 0
        %2202 = vmatpush1.bf16.msra.mxu0 0
        %2203 = vmatprep.subr.bf16.mxu0 0
        %2204 = vmatpush1.bf16.msra.mxu0 %v2187
        %2205 = vmatprep.subr.bf16.mxu0 0
        %2206 = vmatpush2.bf16.msra.mxu0 0
        %2207 = vmatprep.subr.bf16.mxu0 0
        %2208 = vmatpush2.bf16.msra.mxu0 0
        %2209 = vmatprep.subr.bf16.mxu0 0
        %2210 = vmatpush2.bf16.msra.mxu0 0
        %2211 = vmatprep.subr.bf16.mxu0 0
        %2212 = vmatpush2.bf16.msra.mxu0 0
        %2213 = vmatprep.subr.bf16.mxu0 0
        %2214 = vmatpush2.bf16.msra.mxu0 0
        %2215 = vmatprep.subr.bf16.mxu0 0
        %2216 = vmatpush2.bf16.msra.mxu0 0
        %2217 = vmatprep.subr.bf16.mxu0 0
        %2218 = vmatpush2.bf16.msra.mxu0 0
        %2219 = vmatprep.subr.bf16.mxu0 0
        %2220 = vmatpush2.bf16.msra.mxu0 0
        %2221 = vmatprep.mubr.bf16.mxu0 0
        %2222 = vmatmul.mubr.bf16.gmra.mxu0 %v2184
        %v2223 = vpop.f32.mrf.mxu0
        %v2224 = vadd.f32 0.0, %v2223
        %v2225 = vpop.f32.mrf.mxu0
        %v2226 = vpop.f32.mrf.mxu0
        %v2227 = vpop.f32.mrf.mxu0
        %2228 = vdwg.mxu0
        %2229 = vrot.lane.b32.xlu0 %v804, 56
        %v2230 = vpop.permute.xlu0 %2229
        %v2232 = vsel %vm814, %v2174, 0
        %v2235 = vsel %vm1305, %v2230, 0
        %2237 = vmatprep.subr.bf16.mxu0 0
        %2238 = vmatpush1.bf16.msra.mxu0 0
        %2239 = vmatprep.subr.bf16.mxu0 0
        %2240 = vmatpush1.bf16.msra.mxu0 0
        %2241 = vmatprep.subr.bf16.mxu0 0
        %2242 = vmatpush1.bf16.msra.mxu0 0
        %2243 = vmatprep.subr.bf16.mxu0 0
        %2244 = vmatpush1.bf16.msra.mxu0 0
        %2245 = vmatprep.subr.bf16.mxu0 0
        %2246 = vmatpush1.bf16.msra.mxu0 0
        %2247 = vmatprep.subr.bf16.mxu0 0
        %2248 = vmatpush1.bf16.msra.mxu0 0
        %2249 = vmatprep.subr.bf16.mxu0 0
        %2250 = vmatpush1.bf16.msra.mxu0 0
        %2251 = vmatprep.subr.bf16.mxu0 0
        %2252 = vmatpush1.bf16.msra.mxu0 %v2235
        %2253 = vmatprep.subr.bf16.mxu0 0
        %2254 = vmatpush2.bf16.msra.mxu0 0
        %2255 = vmatprep.subr.bf16.mxu0 0
        %2256 = vmatpush2.bf16.msra.mxu0 0
        %2257 = vmatprep.subr.bf16.mxu0 0
        %2258 = vmatpush2.bf16.msra.mxu0 0
        %2259 = vmatprep.subr.bf16.mxu0 0
        %2260 = vmatpush2.bf16.msra.mxu0 0
        %2261 = vmatprep.subr.bf16.mxu0 0
        %2262 = vmatpush2.bf16.msra.mxu0 0
        %2263 = vmatprep.subr.bf16.mxu0 0
        %2264 = vmatpush2.bf16.msra.mxu0 0
        %2265 = vmatprep.subr.bf16.mxu0 0
        %2266 = vmatpush2.bf16.msra.mxu0 0
        %2267 = vmatprep.subr.bf16.mxu0 0
        %2268 = vmatpush2.bf16.msra.mxu0 0
        %2269 = vmatprep.mubr.bf16.mxu0 0
        %2270 = vmatmul.mubr.bf16.gmra.mxu0 %v2232
        %v2271 = vpop.f32.mrf.mxu0
        %v2272 = vadd.f32 0.0, %v2271
        %v2273 = vpop.f32.mrf.mxu0
        %v2274 = vpop.f32.mrf.mxu0
        %v2275 = vpop.f32.mrf.mxu0
        %2276 = vdwg.mxu0
        %2277 = vrot.lane.b32.xlu0 %v805, 56
        %v2278 = vpop.permute.xlu0 %2277
        %v2280 = vsel %vm814, %v2175, 0
        %v2283 = vsel %vm1305, %v2278, 0
        %2285 = vmatprep.subr.bf16.mxu0 0
        %2286 = vmatpush1.bf16.msra.mxu0 0
        %2287 = vmatprep.subr.bf16.mxu0 0
        %2288 = vmatpush1.bf16.msra.mxu0 0
        %2289 = vmatprep.subr.bf16.mxu0 0
        %2290 = vmatpush1.bf16.msra.mxu0 0
        %2291 = vmatprep.subr.bf16.mxu0 0
        %2292 = vmatpush1.bf16.msra.mxu0 0
        %2293 = vmatprep.subr.bf16.mxu0 0
        %2294 = vmatpush1.bf16.msra.mxu0 0
        %2295 = vmatprep.subr.bf16.mxu0 0
        %2296 = vmatpush1.bf16.msra.mxu0 0
        %2297 = vmatprep.subr.bf16.mxu0 0
        %2298 = vmatpush1.bf16.msra.mxu0 0
        %2299 = vmatprep.subr.bf16.mxu0 0
        %2300 = vmatpush1.bf16.msra.mxu0 %v2283
        %2301 = vmatprep.subr.bf16.mxu0 0
        %2302 = vmatpush2.bf16.msra.mxu0 0
        %2303 = vmatprep.subr.bf16.mxu0 0
        %2304 = vmatpush2.bf16.msra.mxu0 0
        %2305 = vmatprep.subr.bf16.mxu0 0
        %2306 = vmatpush2.bf16.msra.mxu0 0
        %2307 = vmatprep.subr.bf16.mxu0 0
        %2308 = vmatpush2.bf16.msra.mxu0 0
        %2309 = vmatprep.subr.bf16.mxu0 0
        %2310 = vmatpush2.bf16.msra.mxu0 0
        %2311 = vmatprep.subr.bf16.mxu0 0
        %2312 = vmatpush2.bf16.msra.mxu0 0
        %2313 = vmatprep.subr.bf16.mxu0 0
        %2314 = vmatpush2.bf16.msra.mxu0 0
        %2315 = vmatprep.subr.bf16.mxu0 0
        %2316 = vmatpush2.bf16.msra.mxu0 0
        %2317 = vmatprep.mubr.bf16.mxu0 0
        %2318 = vmatmul.mubr.bf16.gmra.mxu0 %v2280
        %v2319 = vpop.f32.mrf.mxu0
        %v2320 = vadd.f32 0.0, %v2319
        %v2321 = vpop.f32.mrf.mxu0
        %v2322 = vpop.f32.mrf.mxu0
        %v2323 = vpop.f32.mrf.mxu0
        %2324 = vdwg.mxu0
        %2325 = vrot.lane.b32.xlu0 %v806, 56
        %v2326 = vpop.permute.xlu0 %2325
        %v2328 = vsel %vm814, %v2176, 0
        %v2331 = vsel %vm1305, %v2326, 0
        %2333 = vmatprep.subr.bf16.mxu0 0
        %2334 = vmatpush1.bf16.msra.mxu0 0
        %2335 = vmatprep.subr.bf16.mxu0 0
        %2336 = vmatpush1.bf16.msra.mxu0 0
        %2337 = vmatprep.subr.bf16.mxu0 0
        %2338 = vmatpush1.bf16.msra.mxu0 0
        %2339 = vmatprep.subr.bf16.mxu0 0
        %2340 = vmatpush1.bf16.msra.mxu0 0
        %2341 = vmatprep.subr.bf16.mxu0 0
        %2342 = vmatpush1.bf16.msra.mxu0 0
        %2343 = vmatprep.subr.bf16.mxu0 0
        %2344 = vmatpush1.bf16.msra.mxu0 0
        %2345 = vmatprep.subr.bf16.mxu0 0
        %2346 = vmatpush1.bf16.msra.mxu0 0
        %2347 = vmatprep.subr.bf16.mxu0 0
        %2348 = vmatpush1.bf16.msra.mxu0 %v2331
        %2349 = vmatprep.subr.bf16.mxu0 0
        %2350 = vmatpush2.bf16.msra.mxu0 0
        %2351 = vmatprep.subr.bf16.mxu0 0
        %2352 = vmatpush2.bf16.msra.mxu0 0
        %2353 = vmatprep.subr.bf16.mxu0 0
        %2354 = vmatpush2.bf16.msra.mxu0 0
        %2355 = vmatprep.subr.bf16.mxu0 0
        %2356 = vmatpush2.bf16.msra.mxu0 0
        %2357 = vmatprep.subr.bf16.mxu0 0
        %2358 = vmatpush2.bf16.msra.mxu0 0
        %2359 = vmatprep.subr.bf16.mxu0 0
        %2360 = vmatpush2.bf16.msra.mxu0 0
        %2361 = vmatprep.subr.bf16.mxu0 0
        %2362 = vmatpush2.bf16.msra.mxu0 0
        %2363 = vmatprep.subr.bf16.mxu0 0
        %2364 = vmatpush2.bf16.msra.mxu0 0
        %2365 = vmatprep.mubr.bf16.mxu0 0
        %2366 = vmatmul.mubr.bf16.gmra.mxu0 %v2328
        %v2367 = vpop.f32.mrf.mxu0
        %v2368 = vadd.f32 0.0, %v2367
        %v2369 = vpop.f32.mrf.mxu0
        %v2370 = vpop.f32.mrf.mxu0
        %v2371 = vpop.f32.mrf.mxu0
        %2372 = vdwg.mxu0
        %2373 = vrot.lane.b32.xlu0 %v807, 56
        %v2374 = vpop.permute.xlu0 %2373
        %v2376 = vsel %vm814, %v2177, 0
        %v2379 = vsel %vm1305, %v2374, 0
        %2381 = vmatprep.subr.bf16.mxu0 0
        %2382 = vmatpush1.bf16.msra.mxu0 0
        %2383 = vmatprep.subr.bf16.mxu0 0
        %2384 = vmatpush1.bf16.msra.mxu0 0
        %2385 = vmatprep.subr.bf16.mxu0 0
        %2386 = vmatpush1.bf16.msra.mxu0 0
        %2387 = vmatprep.subr.bf16.mxu0 0
        %2388 = vmatpush1.bf16.msra.mxu0 0
        %2389 = vmatprep.subr.bf16.mxu0 0
        %2390 = vmatpush1.bf16.msra.mxu0 0
        %2391 = vmatprep.subr.bf16.mxu0 0
        %2392 = vmatpush1.bf16.msra.mxu0 0
        %2393 = vmatprep.subr.bf16.mxu0 0
        %2394 = vmatpush1.bf16.msra.mxu0 0
        %2395 = vmatprep.subr.bf16.mxu0 0
        %2396 = vmatpush1.bf16.msra.mxu0 %v2379
        %2397 = vmatprep.subr.bf16.mxu0 0
        %2398 = vmatpush2.bf16.msra.mxu0 0
        %2399 = vmatprep.subr.bf16.mxu0 0
        %2400 = vmatpush2.bf16.msra.mxu0 0
        %2401 = vmatprep.subr.bf16.mxu0 0
        %2402 = vmatpush2.bf16.msra.mxu0 0
        %2403 = vmatprep.subr.bf16.mxu0 0
        %2404 = vmatpush2.bf16.msra.mxu0 0
        %2405 = vmatprep.subr.bf16.mxu0 0
        %2406 = vmatpush2.bf16.msra.mxu0 0
        %2407 = vmatprep.subr.bf16.mxu0 0
        %2408 = vmatpush2.bf16.msra.mxu0 0
        %2409 = vmatprep.subr.bf16.mxu0 0
        %2410 = vmatpush2.bf16.msra.mxu0 0
        %2411 = vmatprep.subr.bf16.mxu0 0
        %2412 = vmatpush2.bf16.msra.mxu0 0
        %2413 = vmatprep.mubr.bf16.mxu0 0
        %2414 = vmatmul.mubr.bf16.gmra.mxu0 %v2376
        %v2415 = vpop.f32.mrf.mxu0
        %v2416 = vadd.f32 0.0, %v2415
        %v2417 = vpop.f32.mrf.mxu0
        %v2418 = vpop.f32.mrf.mxu0
        %v2419 = vpop.f32.mrf.mxu0
        %2420 = vdwg.mxu0
        %2421 = vrot.lane.b32.xlu0 %v808, 56
        %v2422 = vpop.permute.xlu0 %2421
        %v2424 = vsel %vm814, %v2178, 0
        %v2427 = vsel %vm1305, %v2422, 0
        %2429 = vmatprep.subr.bf16.mxu0 0
        %2430 = vmatpush1.bf16.msra.mxu0 0
        %2431 = vmatprep.subr.bf16.mxu0 0
        %2432 = vmatpush1.bf16.msra.mxu0 0
        %2433 = vmatprep.subr.bf16.mxu0 0
        %2434 = vmatpush1.bf16.msra.mxu0 0
        %2435 = vmatprep.subr.bf16.mxu0 0
        %2436 = vmatpush1.bf16.msra.mxu0 0
        %2437 = vmatprep.subr.bf16.mxu0 0
        %2438 = vmatpush1.bf16.msra.mxu0 0
        %2439 = vmatprep.subr.bf16.mxu0 0
        %2440 = vmatpush1.bf16.msra.mxu0 0
        %2441 = vmatprep.subr.bf16.mxu0 0
        %2442 = vmatpush1.bf16.msra.mxu0 0
        %2443 = vmatprep.subr.bf16.mxu0 0
        %2444 = vmatpush1.bf16.msra.mxu0 %v2427
        %2445 = vmatprep.subr.bf16.mxu0 0
        %2446 = vmatpush2.bf16.msra.mxu0 0
        %2447 = vmatprep.subr.bf16.mxu0 0
        %2448 = vmatpush2.bf16.msra.mxu0 0
        %2449 = vmatprep.subr.bf16.mxu0 0
        %2450 = vmatpush2.bf16.msra.mxu0 0
        %2451 = vmatprep.subr.bf16.mxu0 0
        %2452 = vmatpush2.bf16.msra.mxu0 0
        %2453 = vmatprep.subr.bf16.mxu0 0
        %2454 = vmatpush2.bf16.msra.mxu0 0
        %2455 = vmatprep.subr.bf16.mxu0 0
        %2456 = vmatpush2.bf16.msra.mxu0 0
        %2457 = vmatprep.subr.bf16.mxu0 0
        %2458 = vmatpush2.bf16.msra.mxu0 0
        %2459 = vmatprep.subr.bf16.mxu0 0
        %2460 = vmatpush2.bf16.msra.mxu0 0
        %2461 = vmatprep.mubr.bf16.mxu0 0
        %2462 = vmatmul.mubr.bf16.gmra.mxu0 %v2424
        %v2463 = vpop.f32.mrf.mxu0
        %v2464 = vadd.f32 0.0, %v2463
        %v2465 = vpop.f32.mrf.mxu0
        %v2466 = vpop.f32.mrf.mxu0
        %v2467 = vpop.f32.mrf.mxu0
        %2468 = vdwg.mxu0
        %2469 = vrot.lane.b32.xlu0 %v809, 56
        %v2470 = vpop.permute.xlu0 %2469
        %v2472 = vsel %vm814, %v2179, 0
        %v2475 = vsel %vm1305, %v2470, 0
        %2477 = vmatprep.subr.bf16.mxu0 0
        %2478 = vmatpush1.bf16.msra.mxu0 0
        %2479 = vmatprep.subr.bf16.mxu0 0
        %2480 = vmatpush1.bf16.msra.mxu0 0
        %2481 = vmatprep.subr.bf16.mxu0 0
        %2482 = vmatpush1.bf16.msra.mxu0 0
        %2483 = vmatprep.subr.bf16.mxu0 0
        %2484 = vmatpush1.bf16.msra.mxu0 0
        %2485 = vmatprep.subr.bf16.mxu0 0
        %2486 = vmatpush1.bf16.msra.mxu0 0
        %2487 = vmatprep.subr.bf16.mxu0 0
        %2488 = vmatpush1.bf16.msra.mxu0 0
        %2489 = vmatprep.subr.bf16.mxu0 0
        %2490 = vmatpush1.bf16.msra.mxu0 0
        %2491 = vmatprep.subr.bf16.mxu0 0
        %2492 = vmatpush1.bf16.msra.mxu0 %v2475
        %2493 = vmatprep.subr.bf16.mxu0 0
        %2494 = vmatpush2.bf16.msra.mxu0 0
        %2495 = vmatprep.subr.bf16.mxu0 0
        %2496 = vmatpush2.bf16.msra.mxu0 0
        %2497 = vmatprep.subr.bf16.mxu0 0
        %2498 = vmatpush2.bf16.msra.mxu0 0
        %2499 = vmatprep.subr.bf16.mxu0 0
        %2500 = vmatpush2.bf16.msra.mxu0 0
        %2501 = vmatprep.subr.bf16.mxu0 0
        %2502 = vmatpush2.bf16.msra.mxu0 0
        %2503 = vmatprep.subr.bf16.mxu0 0
        %2504 = vmatpush2.bf16.msra.mxu0 0
        %2505 = vmatprep.subr.bf16.mxu0 0
        %2506 = vmatpush2.bf16.msra.mxu0 0
        %2507 = vmatprep.subr.bf16.mxu0 0
        %2508 = vmatpush2.bf16.msra.mxu0 0
        %2509 = vmatprep.mubr.bf16.mxu0 0
        %2510 = vmatmul.mubr.bf16.gmra.mxu0 %v2472
        %v2511 = vpop.f32.mrf.mxu0
        %v2512 = vadd.f32 0.0, %v2511
        %v2513 = vpop.f32.mrf.mxu0
        %v2514 = vpop.f32.mrf.mxu0
        %v2515 = vpop.f32.mrf.mxu0
        %2516 = vdwg.mxu0
        %2517 = vrot.lane.b32.xlu0 %v810, 56
        %v2518 = vpop.permute.xlu0 %2517
        %v2520 = vsel %vm814, %v2180, 0
        %v2523 = vsel %vm1305, %v2518, 0
        %2525 = vmatprep.subr.bf16.mxu0 0
        %2526 = vmatpush1.bf16.msra.mxu0 0
        %2527 = vmatprep.subr.bf16.mxu0 0
        %2528 = vmatpush1.bf16.msra.mxu0 0
        %2529 = vmatprep.subr.bf16.mxu0 0
        %2530 = vmatpush1.bf16.msra.mxu0 0
        %2531 = vmatprep.subr.bf16.mxu0 0
        %2532 = vmatpush1.bf16.msra.mxu0 0
        %2533 = vmatprep.subr.bf16.mxu0 0
        %2534 = vmatpush1.bf16.msra.mxu0 0
        %2535 = vmatprep.subr.bf16.mxu0 0
        %2536 = vmatpush1.bf16.msra.mxu0 0
        %2537 = vmatprep.subr.bf16.mxu0 0
        %2538 = vmatpush1.bf16.msra.mxu0 0
        %2539 = vmatprep.subr.bf16.mxu0 0
        %2540 = vmatpush1.bf16.msra.mxu0 %v2523
        %2541 = vmatprep.subr.bf16.mxu0 0
        %2542 = vmatpush2.bf16.msra.mxu0 0
        %2543 = vmatprep.subr.bf16.mxu0 0
        %2544 = vmatpush2.bf16.msra.mxu0 0
        %2545 = vmatprep.subr.bf16.mxu0 0
        %2546 = vmatpush2.bf16.msra.mxu0 0
        %2547 = vmatprep.subr.bf16.mxu0 0
        %2548 = vmatpush2.bf16.msra.mxu0 0
        %2549 = vmatprep.subr.bf16.mxu0 0
        %2550 = vmatpush2.bf16.msra.mxu0 0
        %2551 = vmatprep.subr.bf16.mxu0 0
        %2552 = vmatpush2.bf16.msra.mxu0 0
        %2553 = vmatprep.subr.bf16.mxu0 0
        %2554 = vmatpush2.bf16.msra.mxu0 0
        %2555 = vmatprep.subr.bf16.mxu0 0
        %2556 = vmatpush2.bf16.msra.mxu0 0
        %2557 = vmatprep.mubr.bf16.mxu0 0
        %2558 = vmatmul.mubr.bf16.gmra.mxu0 %v2520
        %v2559 = vpop.f32.mrf.mxu0
        %v2560 = vadd.f32 0.0, %v2559
        %v2561 = vpop.f32.mrf.mxu0
        %v2562 = vpop.f32.mrf.mxu0
        %v2563 = vpop.f32.mrf.mxu0
        %2564 = vdwg.mxu0
        %2565 = vrot.lane.b32.xlu0 %v803, 112
        %v2566 = vpop.permute.xlu0 %2565
        %2567 = vrot.lane.b32.xlu0 %v803, 80
        %v2568 = vpop.permute.xlu0 %2567
        %v2570 = vsel %vm814, %v2566, 0
        %v2573 = vsel %vm814, %v2568, 0
        %2575 = vmatprep.subr.bf16.mxu0 0
        %2576 = vmatpush1.bf16.xpose.msra.mxu0 0
        %2577 = vmatprep.subr.bf16.mxu0 0
        %2578 = vmatpush1.bf16.xpose.msra.mxu0 0
        %2579 = vmatprep.subr.bf16.mxu0 0
        %2580 = vmatpush1.bf16.xpose.msra.mxu0 0
        %2581 = vmatprep.subr.bf16.mxu0 0
        %2582 = vmatpush1.bf16.xpose.msra.mxu0 0
        %2583 = vmatprep.subr.bf16.mxu0 0
        %2584 = vmatpush1.bf16.xpose.msra.mxu0 0
        %2585 = vmatprep.subr.bf16.mxu0 0
        %2586 = vmatpush1.bf16.xpose.msra.mxu0 0
        %2587 = vmatprep.subr.bf16.mxu0 0
        %2588 = vmatpush1.bf16.xpose.msra.mxu0 0
        %2589 = vmatprep.subr.bf16.mxu0 0
        %2590 = vmatpush1.bf16.xpose.msra.mxu0 %v2573
        %2591 = vmatprep.subr.bf16.mxu0 0
        %2592 = vmatpush2.bf16.xpose.msra.mxu0 0
        %2593 = vmatprep.subr.bf16.mxu0 0
        %2594 = vmatpush2.bf16.xpose.msra.mxu0 0
        %2595 = vmatprep.subr.bf16.mxu0 0
        %2596 = vmatpush2.bf16.xpose.msra.mxu0 0
        %2597 = vmatprep.subr.bf16.mxu0 0
        %2598 = vmatpush2.bf16.xpose.msra.mxu0 0
        %2599 = vmatprep.subr.bf16.mxu0 0
        %2600 = vmatpush2.bf16.xpose.msra.mxu0 0
        %2601 = vmatprep.subr.bf16.mxu0 0
        %2602 = vmatpush2.bf16.xpose.msra.mxu0 0
        %2603 = vmatprep.subr.bf16.mxu0 0
        %2604 = vmatpush2.bf16.xpose.msra.mxu0 0
        %2605 = vmatprep.subr.bf16.mxu0 0
        %2606 = vmatpush2.bf16.xpose.msra.mxu0 0
        %2607 = vmatprep.mubr.bf16.mxu0 0
        %2608 = vmatmul.mubr.bf16.gmra.mxu0 %v2570
        %v2609 = vpop.f32.mrf.mxu0
        %v2610 = vadd.f32 0.0, %v2609
        %v2611 = vpop.f32.mrf.mxu0
        %v2612 = vpop.f32.mrf.mxu0
        %v2613 = vpop.f32.mrf.mxu0
        %2614 = vdwg.mxu0
        %2615 = vrot.lane.b32.xlu0 %v804, 112
        %v2616 = vpop.permute.xlu0 %2615
        %2617 = vrot.lane.b32.xlu0 %v804, 80
        %v2618 = vpop.permute.xlu0 %2617
        %v2620 = vsel %vm814, %v2616, 0
        %v2623 = vsel %vm814, %v2618, 0
        %2625 = vmatprep.subr.bf16.mxu0 0
        %2626 = vmatpush1.bf16.xpose.msra.mxu0 0
        %2627 = vmatprep.subr.bf16.mxu0 0
        %2628 = vmatpush1.bf16.xpose.msra.mxu0 0
        %2629 = vmatprep.subr.bf16.mxu0 0
        %2630 = vmatpush1.bf16.xpose.msra.mxu0 0
        %2631 = vmatprep.subr.bf16.mxu0 0
        %2632 = vmatpush1.bf16.xpose.msra.mxu0 0
        %2633 = vmatprep.subr.bf16.mxu0 0
        %2634 = vmatpush1.bf16.xpose.msra.mxu0 0
        %2635 = vmatprep.subr.bf16.mxu0 0
        %2636 = vmatpush1.bf16.xpose.msra.mxu0 0
        %2637 = vmatprep.subr.bf16.mxu0 0
        %2638 = vmatpush1.bf16.xpose.msra.mxu0 0
        %2639 = vmatprep.subr.bf16.mxu0 0
        %2640 = vmatpush1.bf16.xpose.msra.mxu0 %v2623
        %2641 = vmatprep.subr.bf16.mxu0 0
        %2642 = vmatpush2.bf16.xpose.msra.mxu0 0
        %2643 = vmatprep.subr.bf16.mxu0 0
        %2644 = vmatpush2.bf16.xpose.msra.mxu0 0
        %2645 = vmatprep.subr.bf16.mxu0 0
        %2646 = vmatpush2.bf16.xpose.msra.mxu0 0
        %2647 = vmatprep.subr.bf16.mxu0 0
        %2648 = vmatpush2.bf16.xpose.msra.mxu0 0
        %2649 = vmatprep.subr.bf16.mxu0 0
        %2650 = vmatpush2.bf16.xpose.msra.mxu0 0
        %2651 = vmatprep.subr.bf16.mxu0 0
        %2652 = vmatpush2.bf16.xpose.msra.mxu0 0
        %2653 = vmatprep.subr.bf16.mxu0 0
        %2654 = vmatpush2.bf16.xpose.msra.mxu0 0
        %2655 = vmatprep.subr.bf16.mxu0 0
        %2656 = vmatpush2.bf16.xpose.msra.mxu0 0
        %2657 = vmatprep.mubr.bf16.mxu0 0
        %2658 = vmatmul.mubr.bf16.gmra.mxu0 %v2620
        %v2659 = vpop.f32.mrf.mxu0
        %v2660 = vadd.f32 0.0, %v2659
        %v2661 = vpop.f32.mrf.mxu0
        %v2662 = vpop.f32.mrf.mxu0
        %v2663 = vpop.f32.mrf.mxu0
        %2664 = vdwg.mxu0
        %2665 = vrot.lane.b32.xlu0 %v805, 112
        %v2666 = vpop.permute.xlu0 %2665
        %2667 = vrot.lane.b32.xlu0 %v805, 80
        %v2668 = vpop.permute.xlu0 %2667
        %v2670 = vsel %vm814, %v2666, 0
        %v2673 = vsel %vm814, %v2668, 0
        %2675 = vmatprep.subr.bf16.mxu0 0
        %2676 = vmatpush1.bf16.xpose.msra.mxu0 0
        %2677 = vmatprep.subr.bf16.mxu0 0
        %2678 = vmatpush1.bf16.xpose.msra.mxu0 0
        %2679 = vmatprep.subr.bf16.mxu0 0
        %2680 = vmatpush1.bf16.xpose.msra.mxu0 0
        %2681 = vmatprep.subr.bf16.mxu0 0
        %2682 = vmatpush1.bf16.xpose.msra.mxu0 0
        %2683 = vmatprep.subr.bf16.mxu0 0
        %2684 = vmatpush1.bf16.xpose.msra.mxu0 0
        %2685 = vmatprep.subr.bf16.mxu0 0
        %2686 = vmatpush1.bf16.xpose.msra.mxu0 0
        %2687 = vmatprep.subr.bf16.mxu0 0
        %2688 = vmatpush1.bf16.xpose.msra.mxu0 0
        %2689 = vmatprep.subr.bf16.mxu0 0
        %2690 = vmatpush1.bf16.xpose.msra.mxu0 %v2673
        %2691 = vmatprep.subr.bf16.mxu0 0
        %2692 = vmatpush2.bf16.xpose.msra.mxu0 0
        %2693 = vmatprep.subr.bf16.mxu0 0
        %2694 = vmatpush2.bf16.xpose.msra.mxu0 0
        %2695 = vmatprep.subr.bf16.mxu0 0
        %2696 = vmatpush2.bf16.xpose.msra.mxu0 0
        %2697 = vmatprep.subr.bf16.mxu0 0
        %2698 = vmatpush2.bf16.xpose.msra.mxu0 0
        %2699 = vmatprep.subr.bf16.mxu0 0
        %2700 = vmatpush2.bf16.xpose.msra.mxu0 0
        %2701 = vmatprep.subr.bf16.mxu0 0
        %2702 = vmatpush2.bf16.xpose.msra.mxu0 0
        %2703 = vmatprep.subr.bf16.mxu0 0
        %2704 = vmatpush2.bf16.xpose.msra.mxu0 0
        %2705 = vmatprep.subr.bf16.mxu0 0
        %2706 = vmatpush2.bf16.xpose.msra.mxu0 0
        %2707 = vmatprep.mubr.bf16.mxu0 0
        %2708 = vmatmul.mubr.bf16.gmra.mxu0 %v2670
        %v2709 = vpop.f32.mrf.mxu0
        %v2710 = vadd.f32 0.0, %v2709
        %v2711 = vpop.f32.mrf.mxu0
        %v2712 = vpop.f32.mrf.mxu0
        %v2713 = vpop.f32.mrf.mxu0
        %2714 = vdwg.mxu0
        %2715 = vrot.lane.b32.xlu0 %v806, 112
        %v2716 = vpop.permute.xlu0 %2715
        %2717 = vrot.lane.b32.xlu0 %v806, 80
        %v2718 = vpop.permute.xlu0 %2717
        %v2720 = vsel %vm814, %v2716, 0
        %v2723 = vsel %vm814, %v2718, 0
        %2725 = vmatprep.subr.bf16.mxu0 0
        %2726 = vmatpush1.bf16.xpose.msra.mxu0 0
        %2727 = vmatprep.subr.bf16.mxu0 0
        %2728 = vmatpush1.bf16.xpose.msra.mxu0 0
        %2729 = vmatprep.subr.bf16.mxu0 0
        %2730 = vmatpush1.bf16.xpose.msra.mxu0 0
        %2731 = vmatprep.subr.bf16.mxu0 0
        %2732 = vmatpush1.bf16.xpose.msra.mxu0 0
        %2733 = vmatprep.subr.bf16.mxu0 0
        %2734 = vmatpush1.bf16.xpose.msra.mxu0 0
        %2735 = vmatprep.subr.bf16.mxu0 0
        %2736 = vmatpush1.bf16.xpose.msra.mxu0 0
        %2737 = vmatprep.subr.bf16.mxu0 0
        %2738 = vmatpush1.bf16.xpose.msra.mxu0 0
        %2739 = vmatprep.subr.bf16.mxu0 0
        %2740 = vmatpush1.bf16.xpose.msra.mxu0 %v2723
        %2741 = vmatprep.subr.bf16.mxu0 0
        %2742 = vmatpush2.bf16.xpose.msra.mxu0 0
        %2743 = vmatprep.subr.bf16.mxu0 0
        %2744 = vmatpush2.bf16.xpose.msra.mxu0 0
        %2745 = vmatprep.subr.bf16.mxu0 0
        %2746 = vmatpush2.bf16.xpose.msra.mxu0 0
        %2747 = vmatprep.subr.bf16.mxu0 0
        %2748 = vmatpush2.bf16.xpose.msra.mxu0 0
        %2749 = vmatprep.subr.bf16.mxu0 0
        %2750 = vmatpush2.bf16.xpose.msra.mxu0 0
        %2751 = vmatprep.subr.bf16.mxu0 0
        %2752 = vmatpush2.bf16.xpose.msra.mxu0 0
        %2753 = vmatprep.subr.bf16.mxu0 0
        %2754 = vmatpush2.bf16.xpose.msra.mxu0 0
        %2755 = vmatprep.subr.bf16.mxu0 0
        %2756 = vmatpush2.bf16.xpose.msra.mxu0 0
        %2757 = vmatprep.mubr.bf16.mxu0 0
        %2758 = vmatmul.mubr.bf16.gmra.mxu0 %v2720
        %v2759 = vpop.f32.mrf.mxu0
        %v2760 = vadd.f32 0.0, %v2759
        %v2761 = vpop.f32.mrf.mxu0
        %v2762 = vpop.f32.mrf.mxu0
        %v2763 = vpop.f32.mrf.mxu0
        %2764 = vdwg.mxu0
        %2765 = vrot.lane.b32.xlu0 %v807, 112
        %v2766 = vpop.permute.xlu0 %2765
        %2767 = vrot.lane.b32.xlu0 %v807, 80
        %v2768 = vpop.permute.xlu0 %2767
        %v2770 = vsel %vm814, %v2766, 0
        %v2773 = vsel %vm814, %v2768, 0
        %2775 = vmatprep.subr.bf16.mxu0 0
        %2776 = vmatpush1.bf16.xpose.msra.mxu0 0
        %2777 = vmatprep.subr.bf16.mxu0 0
        %2778 = vmatpush1.bf16.xpose.msra.mxu0 0
        %2779 = vmatprep.subr.bf16.mxu0 0
        %2780 = vmatpush1.bf16.xpose.msra.mxu0 0
        %2781 = vmatprep.subr.bf16.mxu0 0
        %2782 = vmatpush1.bf16.xpose.msra.mxu0 0
        %2783 = vmatprep.subr.bf16.mxu0 0
        %2784 = vmatpush1.bf16.xpose.msra.mxu0 0
        %2785 = vmatprep.subr.bf16.mxu0 0
        %2786 = vmatpush1.bf16.xpose.msra.mxu0 0
        %2787 = vmatprep.subr.bf16.mxu0 0
        %2788 = vmatpush1.bf16.xpose.msra.mxu0 0
        %2789 = vmatprep.subr.bf16.mxu0 0
        %2790 = vmatpush1.bf16.xpose.msra.mxu0 %v2773
        %2791 = vmatprep.subr.bf16.mxu0 0
        %2792 = vmatpush2.bf16.xpose.msra.mxu0 0
        %2793 = vmatprep.subr.bf16.mxu0 0
        %2794 = vmatpush2.bf16.xpose.msra.mxu0 0
        %2795 = vmatprep.subr.bf16.mxu0 0
        %2796 = vmatpush2.bf16.xpose.msra.mxu0 0
        %2797 = vmatprep.subr.bf16.mxu0 0
        %2798 = vmatpush2.bf16.xpose.msra.mxu0 0
        %2799 = vmatprep.subr.bf16.mxu0 0
        %2800 = vmatpush2.bf16.xpose.msra.mxu0 0
        %2801 = vmatprep.subr.bf16.mxu0 0
        %2802 = vmatpush2.bf16.xpose.msra.mxu0 0
        %2803 = vmatprep.subr.bf16.mxu0 0
        %2804 = vmatpush2.bf16.xpose.msra.mxu0 0
        %2805 = vmatprep.subr.bf16.mxu0 0
        %2806 = vmatpush2.bf16.xpose.msra.mxu0 0
        %2807 = vmatprep.mubr.bf16.mxu0 0
        %2808 = vmatmul.mubr.bf16.gmra.mxu0 %v2770
        %v2809 = vpop.f32.mrf.mxu0
        %v2810 = vadd.f32 0.0, %v2809
        %v2811 = vpop.f32.mrf.mxu0
        %v2812 = vpop.f32.mrf.mxu0
        %v2813 = vpop.f32.mrf.mxu0
        %2814 = vdwg.mxu0
        %2815 = vrot.lane.b32.xlu0 %v808, 112
        %v2816 = vpop.permute.xlu0 %2815
        %2817 = vrot.lane.b32.xlu0 %v808, 80
        %v2818 = vpop.permute.xlu0 %2817
        %v2820 = vsel %vm814, %v2816, 0
        %v2823 = vsel %vm814, %v2818, 0
        %2825 = vmatprep.subr.bf16.mxu0 0
        %2826 = vmatpush1.bf16.xpose.msra.mxu0 0
        %2827 = vmatprep.subr.bf16.mxu0 0
        %2828 = vmatpush1.bf16.xpose.msra.mxu0 0
        %2829 = vmatprep.subr.bf16.mxu0 0
        %2830 = vmatpush1.bf16.xpose.msra.mxu0 0
        %2831 = vmatprep.subr.bf16.mxu0 0
        %2832 = vmatpush1.bf16.xpose.msra.mxu0 0
        %2833 = vmatprep.subr.bf16.mxu0 0
        %2834 = vmatpush1.bf16.xpose.msra.mxu0 0
        %2835 = vmatprep.subr.bf16.mxu0 0
        %2836 = vmatpush1.bf16.xpose.msra.mxu0 0
        %2837 = vmatprep.subr.bf16.mxu0 0
        %2838 = vmatpush1.bf16.xpose.msra.mxu0 0
        %2839 = vmatprep.subr.bf16.mxu0 0
        %2840 = vmatpush1.bf16.xpose.msra.mxu0 %v2823
        %2841 = vmatprep.subr.bf16.mxu0 0
        %2842 = vmatpush2.bf16.xpose.msra.mxu0 0
        %2843 = vmatprep.subr.bf16.mxu0 0
        %2844 = vmatpush2.bf16.xpose.msra.mxu0 0
        %2845 = vmatprep.subr.bf16.mxu0 0
        %2846 = vmatpush2.bf16.xpose.msra.mxu0 0
        %2847 = vmatprep.subr.bf16.mxu0 0
        %2848 = vmatpush2.bf16.xpose.msra.mxu0 0
        %2849 = vmatprep.subr.bf16.mxu0 0
        %2850 = vmatpush2.bf16.xpose.msra.mxu0 0
        %2851 = vmatprep.subr.bf16.mxu0 0
        %2852 = vmatpush2.bf16.xpose.msra.mxu0 0
        %2853 = vmatprep.subr.bf16.mxu0 0
        %2854 = vmatpush2.bf16.xpose.msra.mxu0 0
        %2855 = vmatprep.subr.bf16.mxu0 0
        %2856 = vmatpush2.bf16.xpose.msra.mxu0 0
        %2857 = vmatprep.mubr.bf16.mxu0 0
        %2858 = vmatmul.mubr.bf16.gmra.mxu0 %v2820
        %v2859 = vpop.f32.mrf.mxu0
        %v2860 = vadd.f32 0.0, %v2859
        %v2861 = vpop.f32.mrf.mxu0
        %v2862 = vpop.f32.mrf.mxu0
        %v2863 = vpop.f32.mrf.mxu0
        %2864 = vdwg.mxu0
        %2865 = vrot.lane.b32.xlu0 %v809, 112
        %v2866 = vpop.permute.xlu0 %2865
        %2867 = vrot.lane.b32.xlu0 %v809, 80
        %v2868 = vpop.permute.xlu0 %2867
        %v2870 = vsel %vm814, %v2866, 0
        %v2873 = vsel %vm814, %v2868, 0
        %2875 = vmatprep.subr.bf16.mxu0 0
        %2876 = vmatpush1.bf16.xpose.msra.mxu0 0
        %2877 = vmatprep.subr.bf16.mxu0 0
        %2878 = vmatpush1.bf16.xpose.msra.mxu0 0
        %2879 = vmatprep.subr.bf16.mxu0 0
        %2880 = vmatpush1.bf16.xpose.msra.mxu0 0
        %2881 = vmatprep.subr.bf16.mxu0 0
        %2882 = vmatpush1.bf16.xpose.msra.mxu0 0
        %2883 = vmatprep.subr.bf16.mxu0 0
        %2884 = vmatpush1.bf16.xpose.msra.mxu0 0
        %2885 = vmatprep.subr.bf16.mxu0 0
        %2886 = vmatpush1.bf16.xpose.msra.mxu0 0
        %2887 = vmatprep.subr.bf16.mxu0 0
        %2888 = vmatpush1.bf16.xpose.msra.mxu0 0
        %2889 = vmatprep.subr.bf16.mxu0 0
        %2890 = vmatpush1.bf16.xpose.msra.mxu0 %v2873
        %2891 = vmatprep.subr.bf16.mxu0 0
        %2892 = vmatpush2.bf16.xpose.msra.mxu0 0
        %2893 = vmatprep.subr.bf16.mxu0 0
        %2894 = vmatpush2.bf16.xpose.msra.mxu0 0
        %2895 = vmatprep.subr.bf16.mxu0 0
        %2896 = vmatpush2.bf16.xpose.msra.mxu0 0
        %2897 = vmatprep.subr.bf16.mxu0 0
        %2898 = vmatpush2.bf16.xpose.msra.mxu0 0
        %2899 = vmatprep.subr.bf16.mxu0 0
        %2900 = vmatpush2.bf16.xpose.msra.mxu0 0
        %2901 = vmatprep.subr.bf16.mxu0 0
        %2902 = vmatpush2.bf16.xpose.msra.mxu0 0
        %2903 = vmatprep.subr.bf16.mxu0 0
        %2904 = vmatpush2.bf16.xpose.msra.mxu0 0
        %2905 = vmatprep.subr.bf16.mxu0 0
        %2906 = vmatpush2.bf16.xpose.msra.mxu0 0
        %2907 = vmatprep.mubr.bf16.mxu0 0
        %2908 = vmatmul.mubr.bf16.gmra.mxu0 %v2870
        %v2909 = vpop.f32.mrf.mxu0
        %v2910 = vadd.f32 0.0, %v2909
        %v2911 = vpop.f32.mrf.mxu0
        %v2912 = vpop.f32.mrf.mxu0
        %v2913 = vpop.f32.mrf.mxu0
        %2914 = vdwg.mxu0
        %2915 = vrot.lane.b32.xlu0 %v810, 112
        %v2916 = vpop.permute.xlu0 %2915
        %2917 = vrot.lane.b32.xlu0 %v810, 80
        %v2918 = vpop.permute.xlu0 %2917
        %v2920 = vsel %vm814, %v2916, 0
        %v2923 = vsel %vm814, %v2918, 0
        %2925 = vmatprep.subr.bf16.mxu0 0
        %2926 = vmatpush1.bf16.xpose.msra.mxu0 0
        %2927 = vmatprep.subr.bf16.mxu0 0
        %2928 = vmatpush1.bf16.xpose.msra.mxu0 0
        %2929 = vmatprep.subr.bf16.mxu0 0
        %2930 = vmatpush1.bf16.xpose.msra.mxu0 0
        %2931 = vmatprep.subr.bf16.mxu0 0
        %2932 = vmatpush1.bf16.xpose.msra.mxu0 0
        %2933 = vmatprep.subr.bf16.mxu0 0
        %2934 = vmatpush1.bf16.xpose.msra.mxu0 0
        %2935 = vmatprep.subr.bf16.mxu0 0
        %2936 = vmatpush1.bf16.xpose.msra.mxu0 0
        %2937 = vmatprep.subr.bf16.mxu0 0
        %2938 = vmatpush1.bf16.xpose.msra.mxu0 0
        %2939 = vmatprep.subr.bf16.mxu0 0
        %2940 = vmatpush1.bf16.xpose.msra.mxu0 %v2923
        %2941 = vmatprep.subr.bf16.mxu0 0
        %2942 = vmatpush2.bf16.xpose.msra.mxu0 0
        %2943 = vmatprep.subr.bf16.mxu0 0
        %2944 = vmatpush2.bf16.xpose.msra.mxu0 0
        %2945 = vmatprep.subr.bf16.mxu0 0
        %2946 = vmatpush2.bf16.xpose.msra.mxu0 0
        %2947 = vmatprep.subr.bf16.mxu0 0
        %2948 = vmatpush2.bf16.xpose.msra.mxu0 0
        %2949 = vmatprep.subr.bf16.mxu0 0
        %2950 = vmatpush2.bf16.xpose.msra.mxu0 0
        %2951 = vmatprep.subr.bf16.mxu0 0
        %2952 = vmatpush2.bf16.xpose.msra.mxu0 0
        %2953 = vmatprep.subr.bf16.mxu0 0
        %2954 = vmatpush2.bf16.xpose.msra.mxu0 0
        %2955 = vmatprep.subr.bf16.mxu0 0
        %2956 = vmatpush2.bf16.xpose.msra.mxu0 0
        %2957 = vmatprep.mubr.bf16.mxu0 0
        %2958 = vmatmul.mubr.bf16.gmra.mxu0 %v2920
        %v2959 = vpop.f32.mrf.mxu0
        %v2960 = vadd.f32 0.0, %v2959
        %v2961 = vpop.f32.mrf.mxu0
        %v2962 = vpop.f32.mrf.mxu0
        %v2963 = vpop.f32.mrf.mxu0
        %2964 = vdwg.mxu0
        %v2965 = vsel %vm814, %v2610, -inf
        %2966 = vmax.xlane.f32.xlu0 %v2965
        %v2967 = vpop.xlane.xlu0 %2966
        %v2968 = vsel %vm814, %v2660, -inf
        %2969 = vmax.xlane.f32.xlu0 %v2968
        %v2970 = vpop.xlane.xlu0 %2969
        %v2971 = vsel %vm814, %v2710, -inf
        %2972 = vmax.xlane.f32.xlu0 %v2971
        %v2973 = vpop.xlane.xlu0 %2972
        %v2974 = vsel %vm814, %v2760, -inf
        %2975 = vmax.xlane.f32.xlu0 %v2974
        %v2976 = vpop.xlane.xlu0 %2975
        %v2977 = vsel %vm814, %v2810, -inf
        %2978 = vmax.xlane.f32.xlu0 %v2977
        %v2979 = vpop.xlane.xlu0 %2978
        %v2980 = vsel %vm814, %v2860, -inf
        %2981 = vmax.xlane.f32.xlu0 %v2980
        %v2982 = vpop.xlane.xlu0 %2981
        %v2983 = vsel %vm814, %v2910, -inf
        %2984 = vmax.xlane.f32.xlu0 %v2983
        %v2985 = vpop.xlane.xlu0 %2984
        %v2986 = vsel %vm814, %v2960, -inf
        %2987 = vmax.xlane.f32.xlu0 %v2986
        %v2988 = vpop.xlane.xlu0 %2987
        %v2989 = vsub.f32 %v2610, %v2967
        %v2990 = vsub.f32 %v2660, %v2970
        %v2991 = vsub.f32 %v2710, %v2973
        %v2992 = vsub.f32 %v2760, %v2976
        %v2993 = vsub.f32 %v2810, %v2979
        %v2994 = vsub.f32 %v2860, %v2982
        %v2995 = vsub.f32 %v2910, %v2985
        %v2996 = vsub.f32 %v2960, %v2988
        %v2997 = vmul.f32 %v2989, 1.442695
        %v2998 = vpow.pop %v2997
        %v2999 = vmul.f32 %v2990, 1.442695
        %v3000 = vpow.pop %v2999
        %v3001 = vmul.f32 %v2991, 1.442695
        %v3002 = vpow.pop %v3001
        %v3003 = vmul.f32 %v2992, 1.442695
        %v3004 = vpow.pop %v3003
        %v3005 = vmul.f32 %v2993, 1.442695
        %v3006 = vpow.pop %v3005
        %v3007 = vmul.f32 %v2994, 1.442695
        %v3008 = vpow.pop %v3007
        %v3009 = vmul.f32 %v2995, 1.442695
        %v3010 = vpow.pop %v3009
        %v3011 = vmul.f32 %v2996, 1.442695
        %v3012 = vpow.pop %v3011
        %v3013 = vsel %vm814, %v2998, 0.0
        %3014 = vadd.xlane.f32.xlu0 %v3013
        %v3015 = vpop.xlane.xlu0 %3014
        %v3016 = vsel %vm814, %v3000, 0.0
        %3017 = vadd.xlane.f32.xlu0 %v3016
        %v3018 = vpop.xlane.xlu0 %3017
        %v3019 = vsel %vm814, %v3002, 0.0
        %3020 = vadd.xlane.f32.xlu0 %v3019
        %v3021 = vpop.xlane.xlu0 %3020
        %v3022 = vsel %vm814, %v3004, 0.0
        %3023 = vadd.xlane.f32.xlu0 %v3022
        %v3024 = vpop.xlane.xlu0 %3023
        %v3025 = vsel %vm814, %v3006, 0.0
        %3026 = vadd.xlane.f32.xlu0 %v3025
        %v3027 = vpop.xlane.xlu0 %3026
        %v3028 = vsel %vm814, %v3008, 0.0
        %3029 = vadd.xlane.f32.xlu0 %v3028
        %v3030 = vpop.xlane.xlu0 %3029
        %v3031 = vsel %vm814, %v3010, 0.0
        %3032 = vadd.xlane.f32.xlu0 %v3031
        %v3033 = vpop.xlane.xlu0 %3032
        %v3034 = vsel %vm814, %v3012, 0.0
        %3035 = vadd.xlane.f32.xlu0 %v3034
        %v3036 = vpop.xlane.xlu0 %3035
        %v3037 = vrcp.pop %v3015
        %v3038 = vrcp.pop %v3018
        %v3039 = vrcp.pop %v3021
        %v3040 = vrcp.pop %v3024
        %v3041 = vrcp.pop %v3027
        %v3042 = vrcp.pop %v3030
        %v3043 = vrcp.pop %v3033
        %v3044 = vrcp.pop %v3036
        %v3045 = vmul.f32 %v2998, %v3037
        %v3046 = vmul.f32 %v3000, %v3038
        %v3047 = vmul.f32 %v3002, %v3039
        %v3048 = vmul.f32 %v3004, %v3040
        %v3049 = vmul.f32 %v3006, %v3041
        %v3050 = vmul.f32 %v3008, %v3042
        %v3051 = vmul.f32 %v3010, %v3043
        %v3052 = vmul.f32 %v3012, %v3044
        %v3053 = vpack.c.bf16 %v3045, %v3045
        %v3054 = vpack.c.bf16 %v3046, %v3046
        %v3055 = vpack.c.bf16 %v3047, %v3047
        %v3056 = vpack.c.bf16 %v3048, %v3048
        %v3057 = vpack.c.bf16 %v3049, %v3049
        %v3058 = vpack.c.bf16 %v3050, %v3050
        %v3059 = vpack.c.bf16 %v3051, %v3051
        %v3060 = vpack.c.bf16 %v3052, %v3052
        %3061 = vrot.lane.b32.xlu0 %v803, 48
        %v3062 = vpop.permute.xlu0 %3061
        %v3064 = vsel %vm814, %v3053, 0
        %v3067 = vsel %vm1305, %v3062, 0
        %3069 = vmatprep.subr.bf16.mxu0 0
        %3070 = vmatpush1.bf16.msra.mxu0 0
        %3071 = vmatprep.subr.bf16.mxu0 0
        %3072 = vmatpush1.bf16.msra.mxu0 0
        %3073 = vmatprep.subr.bf16.mxu0 0
        %3074 = vmatpush1.bf16.msra.mxu0 0
        %3075 = vmatprep.subr.bf16.mxu0 0
        %3076 = vmatpush1.bf16.msra.mxu0 0
        %3077 = vmatprep.subr.bf16.mxu0 0
        %3078 = vmatpush1.bf16.msra.mxu0 0
        %3079 = vmatprep.subr.bf16.mxu0 0
        %3080 = vmatpush1.bf16.msra.mxu0 0
        %3081 = vmatprep.subr.bf16.mxu0 0
        %3082 = vmatpush1.bf16.msra.mxu0 0
        %3083 = vmatprep.subr.bf16.mxu0 0
        %3084 = vmatpush1.bf16.msra.mxu0 %v3067
        %3085 = vmatprep.subr.bf16.mxu0 0
        %3086 = vmatpush2.bf16.msra.mxu0 0
        %3087 = vmatprep.subr.bf16.mxu0 0
        %3088 = vmatpush2.bf16.msra.mxu0 0
        %3089 = vmatprep.subr.bf16.mxu0 0
        %3090 = vmatpush2.bf16.msra.mxu0 0
        %3091 = vmatprep.subr.bf16.mxu0 0
        %3092 = vmatpush2.bf16.msra.mxu0 0
        %3093 = vmatprep.subr.bf16.mxu0 0
        %3094 = vmatpush2.bf16.msra.mxu0 0
        %3095 = vmatprep.subr.bf16.mxu0 0
        %3096 = vmatpush2.bf16.msra.mxu0 0
        %3097 = vmatprep.subr.bf16.mxu0 0
        %3098 = vmatpush2.bf16.msra.mxu0 0
        %3099 = vmatprep.subr.bf16.mxu0 0
        %3100 = vmatpush2.bf16.msra.mxu0 0
        %3101 = vmatprep.mubr.bf16.mxu0 0
        %3102 = vmatmul.mubr.bf16.gmra.mxu0 %v3064
        %v3103 = vpop.f32.mrf.mxu0
        %v3104 = vadd.f32 0.0, %v3103
        %v3105 = vpop.f32.mrf.mxu0
        %v3106 = vpop.f32.mrf.mxu0
        %v3107 = vpop.f32.mrf.mxu0
        %3108 = vdwg.mxu0
        %3109 = vrot.lane.b32.xlu0 %v804, 48
        %v3110 = vpop.permute.xlu0 %3109
        %v3112 = vsel %vm814, %v3054, 0
        %v3115 = vsel %vm1305, %v3110, 0
        %3117 = vmatprep.subr.bf16.mxu0 0
        %3118 = vmatpush1.bf16.msra.mxu0 0
        %3119 = vmatprep.subr.bf16.mxu0 0
        %3120 = vmatpush1.bf16.msra.mxu0 0
        %3121 = vmatprep.subr.bf16.mxu0 0
        %3122 = vmatpush1.bf16.msra.mxu0 0
        %3123 = vmatprep.subr.bf16.mxu0 0
        %3124 = vmatpush1.bf16.msra.mxu0 0
        %3125 = vmatprep.subr.bf16.mxu0 0
        %3126 = vmatpush1.bf16.msra.mxu0 0
        %3127 = vmatprep.subr.bf16.mxu0 0
        %3128 = vmatpush1.bf16.msra.mxu0 0
        %3129 = vmatprep.subr.bf16.mxu0 0
        %3130 = vmatpush1.bf16.msra.mxu0 0
        %3131 = vmatprep.subr.bf16.mxu0 0
        %3132 = vmatpush1.bf16.msra.mxu0 %v3115
        %3133 = vmatprep.subr.bf16.mxu0 0
        %3134 = vmatpush2.bf16.msra.mxu0 0
        %3135 = vmatprep.subr.bf16.mxu0 0
        %3136 = vmatpush2.bf16.msra.mxu0 0
        %3137 = vmatprep.subr.bf16.mxu0 0
        %3138 = vmatpush2.bf16.msra.mxu0 0
        %3139 = vmatprep.subr.bf16.mxu0 0
        %3140 = vmatpush2.bf16.msra.mxu0 0
        %3141 = vmatprep.subr.bf16.mxu0 0
        %3142 = vmatpush2.bf16.msra.mxu0 0
        %3143 = vmatprep.subr.bf16.mxu0 0
        %3144 = vmatpush2.bf16.msra.mxu0 0
        %3145 = vmatprep.subr.bf16.mxu0 0
        %3146 = vmatpush2.bf16.msra.mxu0 0
        %3147 = vmatprep.subr.bf16.mxu0 0
        %3148 = vmatpush2.bf16.msra.mxu0 0
        %3149 = vmatprep.mubr.bf16.mxu0 0
        %3150 = vmatmul.mubr.bf16.gmra.mxu0 %v3112
        %v3151 = vpop.f32.mrf.mxu0
        %v3152 = vadd.f32 0.0, %v3151
        %v3153 = vpop.f32.mrf.mxu0
        %v3154 = vpop.f32.mrf.mxu0
        %v3155 = vpop.f32.mrf.mxu0
        %3156 = vdwg.mxu0
        %3157 = vrot.lane.b32.xlu0 %v805, 48
        %v3158 = vpop.permute.xlu0 %3157
        %v3160 = vsel %vm814, %v3055, 0
        %v3163 = vsel %vm1305, %v3158, 0
        %3165 = vmatprep.subr.bf16.mxu0 0
        %3166 = vmatpush1.bf16.msra.mxu0 0
        %3167 = vmatprep.subr.bf16.mxu0 0
        %3168 = vmatpush1.bf16.msra.mxu0 0
        %3169 = vmatprep.subr.bf16.mxu0 0
        %3170 = vmatpush1.bf16.msra.mxu0 0
        %3171 = vmatprep.subr.bf16.mxu0 0
        %3172 = vmatpush1.bf16.msra.mxu0 0
        %3173 = vmatprep.subr.bf16.mxu0 0
        %3174 = vmatpush1.bf16.msra.mxu0 0
        %3175 = vmatprep.subr.bf16.mxu0 0
        %3176 = vmatpush1.bf16.msra.mxu0 0
        %3177 = vmatprep.subr.bf16.mxu0 0
        %3178 = vmatpush1.bf16.msra.mxu0 0
        %3179 = vmatprep.subr.bf16.mxu0 0
        %3180 = vmatpush1.bf16.msra.mxu0 %v3163
        %3181 = vmatprep.subr.bf16.mxu0 0
        %3182 = vmatpush2.bf16.msra.mxu0 0
        %3183 = vmatprep.subr.bf16.mxu0 0
        %3184 = vmatpush2.bf16.msra.mxu0 0
        %3185 = vmatprep.subr.bf16.mxu0 0
        %3186 = vmatpush2.bf16.msra.mxu0 0
        %3187 = vmatprep.subr.bf16.mxu0 0
        %3188 = vmatpush2.bf16.msra.mxu0 0
        %3189 = vmatprep.subr.bf16.mxu0 0
        %3190 = vmatpush2.bf16.msra.mxu0 0
        %3191 = vmatprep.subr.bf16.mxu0 0
        %3192 = vmatpush2.bf16.msra.mxu0 0
        %3193 = vmatprep.subr.bf16.mxu0 0
        %3194 = vmatpush2.bf16.msra.mxu0 0
        %3195 = vmatprep.subr.bf16.mxu0 0
        %3196 = vmatpush2.bf16.msra.mxu0 0
        %3197 = vmatprep.mubr.bf16.mxu0 0
        %3198 = vmatmul.mubr.bf16.gmra.mxu0 %v3160
        %v3199 = vpop.f32.mrf.mxu0
        %v3200 = vadd.f32 0.0, %v3199
        %v3201 = vpop.f32.mrf.mxu0
        %v3202 = vpop.f32.mrf.mxu0
        %v3203 = vpop.f32.mrf.mxu0
        %3204 = vdwg.mxu0
        %3205 = vrot.lane.b32.xlu0 %v806, 48
        %v3206 = vpop.permute.xlu0 %3205
        %v3208 = vsel %vm814, %v3056, 0
        %v3211 = vsel %vm1305, %v3206, 0
        %3213 = vmatprep.subr.bf16.mxu0 0
        %3214 = vmatpush1.bf16.msra.mxu0 0
        %3215 = vmatprep.subr.bf16.mxu0 0
        %3216 = vmatpush1.bf16.msra.mxu0 0
        %3217 = vmatprep.subr.bf16.mxu0 0
        %3218 = vmatpush1.bf16.msra.mxu0 0
        %3219 = vmatprep.subr.bf16.mxu0 0
        %3220 = vmatpush1.bf16.msra.mxu0 0
        %3221 = vmatprep.subr.bf16.mxu0 0
        %3222 = vmatpush1.bf16.msra.mxu0 0
        %3223 = vmatprep.subr.bf16.mxu0 0
        %3224 = vmatpush1.bf16.msra.mxu0 0
        %3225 = vmatprep.subr.bf16.mxu0 0
        %3226 = vmatpush1.bf16.msra.mxu0 0
        %3227 = vmatprep.subr.bf16.mxu0 0
        %3228 = vmatpush1.bf16.msra.mxu0 %v3211
        %3229 = vmatprep.subr.bf16.mxu0 0
        %3230 = vmatpush2.bf16.msra.mxu0 0
        %3231 = vmatprep.subr.bf16.mxu0 0
        %3232 = vmatpush2.bf16.msra.mxu0 0
        %3233 = vmatprep.subr.bf16.mxu0 0
        %3234 = vmatpush2.bf16.msra.mxu0 0
        %3235 = vmatprep.subr.bf16.mxu0 0
        %3236 = vmatpush2.bf16.msra.mxu0 0
        %3237 = vmatprep.subr.bf16.mxu0 0
        %3238 = vmatpush2.bf16.msra.mxu0 0
        %3239 = vmatprep.subr.bf16.mxu0 0
        %3240 = vmatpush2.bf16.msra.mxu0 0
        %3241 = vmatprep.subr.bf16.mxu0 0
        %3242 = vmatpush2.bf16.msra.mxu0 0
        %3243 = vmatprep.subr.bf16.mxu0 0
        %3244 = vmatpush2.bf16.msra.mxu0 0
        %3245 = vmatprep.mubr.bf16.mxu0 0
        %3246 = vmatmul.mubr.bf16.gmra.mxu0 %v3208
        %v3247 = vpop.f32.mrf.mxu0
        %v3248 = vadd.f32 0.0, %v3247
        %v3249 = vpop.f32.mrf.mxu0
        %v3250 = vpop.f32.mrf.mxu0
        %v3251 = vpop.f32.mrf.mxu0
        %3252 = vdwg.mxu0
        %3253 = vrot.lane.b32.xlu0 %v807, 48
        %v3254 = vpop.permute.xlu0 %3253
        %v3256 = vsel %vm814, %v3057, 0
        %v3259 = vsel %vm1305, %v3254, 0
        %3261 = vmatprep.subr.bf16.mxu0 0
        %3262 = vmatpush1.bf16.msra.mxu0 0
        %3263 = vmatprep.subr.bf16.mxu0 0
        %3264 = vmatpush1.bf16.msra.mxu0 0
        %3265 = vmatprep.subr.bf16.mxu0 0
        %3266 = vmatpush1.bf16.msra.mxu0 0
        %3267 = vmatprep.subr.bf16.mxu0 0
        %3268 = vmatpush1.bf16.msra.mxu0 0
        %3269 = vmatprep.subr.bf16.mxu0 0
        %3270 = vmatpush1.bf16.msra.mxu0 0
        %3271 = vmatprep.subr.bf16.mxu0 0
        %3272 = vmatpush1.bf16.msra.mxu0 0
        %3273 = vmatprep.subr.bf16.mxu0 0
        %3274 = vmatpush1.bf16.msra.mxu0 0
        %3275 = vmatprep.subr.bf16.mxu0 0
        %3276 = vmatpush1.bf16.msra.mxu0 %v3259
        %3277 = vmatprep.subr.bf16.mxu0 0
        %3278 = vmatpush2.bf16.msra.mxu0 0
        %3279 = vmatprep.subr.bf16.mxu0 0
        %3280 = vmatpush2.bf16.msra.mxu0 0
        %3281 = vmatprep.subr.bf16.mxu0 0
        %3282 = vmatpush2.bf16.msra.mxu0 0
        %3283 = vmatprep.subr.bf16.mxu0 0
        %3284 = vmatpush2.bf16.msra.mxu0 0
        %3285 = vmatprep.subr.bf16.mxu0 0
        %3286 = vmatpush2.bf16.msra.mxu0 0
        %3287 = vmatprep.subr.bf16.mxu0 0
        %3288 = vmatpush2.bf16.msra.mxu0 0
        %3289 = vmatprep.subr.bf16.mxu0 0
        %3290 = vmatpush2.bf16.msra.mxu0 0
        %3291 = vmatprep.subr.bf16.mxu0 0
        %3292 = vmatpush2.bf16.msra.mxu0 0
        %3293 = vmatprep.mubr.bf16.mxu0 0
        %3294 = vmatmul.mubr.bf16.gmra.mxu0 %v3256
        %v3295 = vpop.f32.mrf.mxu0
        %v3296 = vadd.f32 0.0, %v3295
        %v3297 = vpop.f32.mrf.mxu0
        %v3298 = vpop.f32.mrf.mxu0
        %v3299 = vpop.f32.mrf.mxu0
        %3300 = vdwg.mxu0
        %3301 = vrot.lane.b32.xlu0 %v808, 48
        %v3302 = vpop.permute.xlu0 %3301
        %v3304 = vsel %vm814, %v3058, 0
        %v3307 = vsel %vm1305, %v3302, 0
        %3309 = vmatprep.subr.bf16.mxu0 0
        %3310 = vmatpush1.bf16.msra.mxu0 0
        %3311 = vmatprep.subr.bf16.mxu0 0
        %3312 = vmatpush1.bf16.msra.mxu0 0
        %3313 = vmatprep.subr.bf16.mxu0 0
        %3314 = vmatpush1.bf16.msra.mxu0 0
        %3315 = vmatprep.subr.bf16.mxu0 0
        %3316 = vmatpush1.bf16.msra.mxu0 0
        %3317 = vmatprep.subr.bf16.mxu0 0
        %3318 = vmatpush1.bf16.msra.mxu0 0
        %3319 = vmatprep.subr.bf16.mxu0 0
        %3320 = vmatpush1.bf16.msra.mxu0 0
        %3321 = vmatprep.subr.bf16.mxu0 0
        %3322 = vmatpush1.bf16.msra.mxu0 0
        %3323 = vmatprep.subr.bf16.mxu0 0
        %3324 = vmatpush1.bf16.msra.mxu0 %v3307
        %3325 = vmatprep.subr.bf16.mxu0 0
        %3326 = vmatpush2.bf16.msra.mxu0 0
        %3327 = vmatprep.subr.bf16.mxu0 0
        %3328 = vmatpush2.bf16.msra.mxu0 0
        %3329 = vmatprep.subr.bf16.mxu0 0
        %3330 = vmatpush2.bf16.msra.mxu0 0
        %3331 = vmatprep.subr.bf16.mxu0 0
        %3332 = vmatpush2.bf16.msra.mxu0 0
        %3333 = vmatprep.subr.bf16.mxu0 0
        %3334 = vmatpush2.bf16.msra.mxu0 0
        %3335 = vmatprep.subr.bf16.mxu0 0
        %3336 = vmatpush2.bf16.msra.mxu0 0
        %3337 = vmatprep.subr.bf16.mxu0 0
        %3338 = vmatpush2.bf16.msra.mxu0 0
        %3339 = vmatprep.subr.bf16.mxu0 0
        %3340 = vmatpush2.bf16.msra.mxu0 0
        %3341 = vmatprep.mubr.bf16.mxu0 0
        %3342 = vmatmul.mubr.bf16.gmra.mxu0 %v3304
        %v3343 = vpop.f32.mrf.mxu0
        %v3344 = vadd.f32 0.0, %v3343
        %v3345 = vpop.f32.mrf.mxu0
        %v3346 = vpop.f32.mrf.mxu0
        %v3347 = vpop.f32.mrf.mxu0
        %3348 = vdwg.mxu0
        %3349 = vrot.lane.b32.xlu0 %v809, 48
        %v3350 = vpop.permute.xlu0 %3349
        %v3352 = vsel %vm814, %v3059, 0
        %v3355 = vsel %vm1305, %v3350, 0
        %3357 = vmatprep.subr.bf16.mxu0 0
        %3358 = vmatpush1.bf16.msra.mxu0 0
        %3359 = vmatprep.subr.bf16.mxu0 0
        %3360 = vmatpush1.bf16.msra.mxu0 0
        %3361 = vmatprep.subr.bf16.mxu0 0
        %3362 = vmatpush1.bf16.msra.mxu0 0
        %3363 = vmatprep.subr.bf16.mxu0 0
        %3364 = vmatpush1.bf16.msra.mxu0 0
        %3365 = vmatprep.subr.bf16.mxu0 0
        %3366 = vmatpush1.bf16.msra.mxu0 0
        %3367 = vmatprep.subr.bf16.mxu0 0
        %3368 = vmatpush1.bf16.msra.mxu0 0
        %3369 = vmatprep.subr.bf16.mxu0 0
        %3370 = vmatpush1.bf16.msra.mxu0 0
        %3371 = vmatprep.subr.bf16.mxu0 0
        %3372 = vmatpush1.bf16.msra.mxu0 %v3355
        %3373 = vmatprep.subr.bf16.mxu0 0
        %3374 = vmatpush2.bf16.msra.mxu0 0
        %3375 = vmatprep.subr.bf16.mxu0 0
        %3376 = vmatpush2.bf16.msra.mxu0 0
        %3377 = vmatprep.subr.bf16.mxu0 0
        %3378 = vmatpush2.bf16.msra.mxu0 0
        %3379 = vmatprep.subr.bf16.mxu0 0
        %3380 = vmatpush2.bf16.msra.mxu0 0
        %3381 = vmatprep.subr.bf16.mxu0 0
        %3382 = vmatpush2.bf16.msra.mxu0 0
        %3383 = vmatprep.subr.bf16.mxu0 0
        %3384 = vmatpush2.bf16.msra.mxu0 0
        %3385 = vmatprep.subr.bf16.mxu0 0
        %3386 = vmatpush2.bf16.msra.mxu0 0
        %3387 = vmatprep.subr.bf16.mxu0 0
        %3388 = vmatpush2.bf16.msra.mxu0 0
        %3389 = vmatprep.mubr.bf16.mxu0 0
        %3390 = vmatmul.mubr.bf16.gmra.mxu0 %v3352
        %v3391 = vpop.f32.mrf.mxu0
        %v3392 = vadd.f32 0.0, %v3391
        %v3393 = vpop.f32.mrf.mxu0
        %v3394 = vpop.f32.mrf.mxu0
        %v3395 = vpop.f32.mrf.mxu0
        %3396 = vdwg.mxu0
        %3397 = vrot.lane.b32.xlu0 %v810, 48
        %v3398 = vpop.permute.xlu0 %3397
        %v3400 = vsel %vm814, %v3060, 0
        %v3403 = vsel %vm1305, %v3398, 0
        %3405 = vmatprep.subr.bf16.mxu0 0
        %3406 = vmatpush1.bf16.msra.mxu0 0
        %3407 = vmatprep.subr.bf16.mxu0 0
        %3408 = vmatpush1.bf16.msra.mxu0 0
        %3409 = vmatprep.subr.bf16.mxu0 0
        %3410 = vmatpush1.bf16.msra.mxu0 0
        %3411 = vmatprep.subr.bf16.mxu0 0
        %3412 = vmatpush1.bf16.msra.mxu0 0
        %3413 = vmatprep.subr.bf16.mxu0 0
        %3414 = vmatpush1.bf16.msra.mxu0 0
        %3415 = vmatprep.subr.bf16.mxu0 0
        %3416 = vmatpush1.bf16.msra.mxu0 0
        %3417 = vmatprep.subr.bf16.mxu0 0
        %3418 = vmatpush1.bf16.msra.mxu0 0
        %3419 = vmatprep.subr.bf16.mxu0 0
        %3420 = vmatpush1.bf16.msra.mxu0 %v3403
        %3421 = vmatprep.subr.bf16.mxu0 0
        %3422 = vmatpush2.bf16.msra.mxu0 0
        %3423 = vmatprep.subr.bf16.mxu0 0
        %3424 = vmatpush2.bf16.msra.mxu0 0
        %3425 = vmatprep.subr.bf16.mxu0 0
        %3426 = vmatpush2.bf16.msra.mxu0 0
        %3427 = vmatprep.subr.bf16.mxu0 0
        %3428 = vmatpush2.bf16.msra.mxu0 0
        %3429 = vmatprep.subr.bf16.mxu0 0
        %3430 = vmatpush2.bf16.msra.mxu0 0
        %3431 = vmatprep.subr.bf16.mxu0 0
        %3432 = vmatpush2.bf16.msra.mxu0 0
        %3433 = vmatprep.subr.bf16.mxu0 0
        %3434 = vmatpush2.bf16.msra.mxu0 0
        %3435 = vmatprep.subr.bf16.mxu0 0
        %3436 = vmatpush2.bf16.msra.mxu0 0
        %3437 = vmatprep.mubr.bf16.mxu0 0
        %3438 = vmatmul.mubr.bf16.gmra.mxu0 %v3400
        %v3439 = vpop.f32.mrf.mxu0
        %v3440 = vadd.f32 0.0, %v3439
        %v3441 = vpop.f32.mrf.mxu0
        %v3442 = vpop.f32.mrf.mxu0
        %v3443 = vpop.f32.mrf.mxu0
        %3444 = vdwg.mxu0
        %3445 = vrot.lane.b32.xlu0 %v803, 104
        %v3446 = vpop.permute.xlu0 %3445
        %3447 = vrot.lane.b32.xlu0 %v803, 72
        %v3448 = vpop.permute.xlu0 %3447
        %v3450 = vsel %vm814, %v3446, 0
        %v3453 = vsel %vm814, %v3448, 0
        %3455 = vmatprep.subr.bf16.mxu0 0
        %3456 = vmatpush1.bf16.xpose.msra.mxu0 0
        %3457 = vmatprep.subr.bf16.mxu0 0
        %3458 = vmatpush1.bf16.xpose.msra.mxu0 0
        %3459 = vmatprep.subr.bf16.mxu0 0
        %3460 = vmatpush1.bf16.xpose.msra.mxu0 0
        %3461 = vmatprep.subr.bf16.mxu0 0
        %3462 = vmatpush1.bf16.xpose.msra.mxu0 0
        %3463 = vmatprep.subr.bf16.mxu0 0
        %3464 = vmatpush1.bf16.xpose.msra.mxu0 0
        %3465 = vmatprep.subr.bf16.mxu0 0
        %3466 = vmatpush1.bf16.xpose.msra.mxu0 0
        %3467 = vmatprep.subr.bf16.mxu0 0
        %3468 = vmatpush1.bf16.xpose.msra.mxu0 0
        %3469 = vmatprep.subr.bf16.mxu0 0
        %3470 = vmatpush1.bf16.xpose.msra.mxu0 %v3453
        %3471 = vmatprep.subr.bf16.mxu0 0
        %3472 = vmatpush2.bf16.xpose.msra.mxu0 0
        %3473 = vmatprep.subr.bf16.mxu0 0
        %3474 = vmatpush2.bf16.xpose.msra.mxu0 0
        %3475 = vmatprep.subr.bf16.mxu0 0
        %3476 = vmatpush2.bf16.xpose.msra.mxu0 0
        %3477 = vmatprep.subr.bf16.mxu0 0
        %3478 = vmatpush2.bf16.xpose.msra.mxu0 0
        %3479 = vmatprep.subr.bf16.mxu0 0
        %3480 = vmatpush2.bf16.xpose.msra.mxu0 0
        %3481 = vmatprep.subr.bf16.mxu0 0
        %3482 = vmatpush2.bf16.xpose.msra.mxu0 0
        %3483 = vmatprep.subr.bf16.mxu0 0
        %3484 = vmatpush2.bf16.xpose.msra.mxu0 0
        %3485 = vmatprep.subr.bf16.mxu0 0
        %3486 = vmatpush2.bf16.xpose.msra.mxu0 0
        %3487 = vmatprep.mubr.bf16.mxu0 0
        %3488 = vmatmul.mubr.bf16.gmra.mxu0 %v3450
        %v3489 = vpop.f32.mrf.mxu0
        %v3490 = vadd.f32 0.0, %v3489
        %v3491 = vpop.f32.mrf.mxu0
        %v3492 = vpop.f32.mrf.mxu0
        %v3493 = vpop.f32.mrf.mxu0
        %3494 = vdwg.mxu0
        %3495 = vrot.lane.b32.xlu0 %v804, 104
        %v3496 = vpop.permute.xlu0 %3495
        %3497 = vrot.lane.b32.xlu0 %v804, 72
        %v3498 = vpop.permute.xlu0 %3497
        %v3500 = vsel %vm814, %v3496, 0
        %v3503 = vsel %vm814, %v3498, 0
        %3505 = vmatprep.subr.bf16.mxu0 0
        %3506 = vmatpush1.bf16.xpose.msra.mxu0 0
        %3507 = vmatprep.subr.bf16.mxu0 0
        %3508 = vmatpush1.bf16.xpose.msra.mxu0 0
        %3509 = vmatprep.subr.bf16.mxu0 0
        %3510 = vmatpush1.bf16.xpose.msra.mxu0 0
        %3511 = vmatprep.subr.bf16.mxu0 0
        %3512 = vmatpush1.bf16.xpose.msra.mxu0 0
        %3513 = vmatprep.subr.bf16.mxu0 0
        %3514 = vmatpush1.bf16.xpose.msra.mxu0 0
        %3515 = vmatprep.subr.bf16.mxu0 0
        %3516 = vmatpush1.bf16.xpose.msra.mxu0 0
        %3517 = vmatprep.subr.bf16.mxu0 0
        %3518 = vmatpush1.bf16.xpose.msra.mxu0 0
        %3519 = vmatprep.subr.bf16.mxu0 0
        %3520 = vmatpush1.bf16.xpose.msra.mxu0 %v3503
        %3521 = vmatprep.subr.bf16.mxu0 0
        %3522 = vmatpush2.bf16.xpose.msra.mxu0 0
        %3523 = vmatprep.subr.bf16.mxu0 0
        %3524 = vmatpush2.bf16.xpose.msra.mxu0 0
        %3525 = vmatprep.subr.bf16.mxu0 0
        %3526 = vmatpush2.bf16.xpose.msra.mxu0 0
        %3527 = vmatprep.subr.bf16.mxu0 0
        %3528 = vmatpush2.bf16.xpose.msra.mxu0 0
        %3529 = vmatprep.subr.bf16.mxu0 0
        %3530 = vmatpush2.bf16.xpose.msra.mxu0 0
        %3531 = vmatprep.subr.bf16.mxu0 0
        %3532 = vmatpush2.bf16.xpose.msra.mxu0 0
        %3533 = vmatprep.subr.bf16.mxu0 0
        %3534 = vmatpush2.bf16.xpose.msra.mxu0 0
        %3535 = vmatprep.subr.bf16.mxu0 0
        %3536 = vmatpush2.bf16.xpose.msra.mxu0 0
        %3537 = vmatprep.mubr.bf16.mxu0 0
        %3538 = vmatmul.mubr.bf16.gmra.mxu0 %v3500
        %v3539 = vpop.f32.mrf.mxu0
        %v3540 = vadd.f32 0.0, %v3539
        %v3541 = vpop.f32.mrf.mxu0
        %v3542 = vpop.f32.mrf.mxu0
        %v3543 = vpop.f32.mrf.mxu0
        %3544 = vdwg.mxu0
        %3545 = vrot.lane.b32.xlu0 %v805, 104
        %v3546 = vpop.permute.xlu0 %3545
        %3547 = vrot.lane.b32.xlu0 %v805, 72
        %v3548 = vpop.permute.xlu0 %3547
        %v3550 = vsel %vm814, %v3546, 0
        %v3553 = vsel %vm814, %v3548, 0
        %3555 = vmatprep.subr.bf16.mxu0 0
        %3556 = vmatpush1.bf16.xpose.msra.mxu0 0
        %3557 = vmatprep.subr.bf16.mxu0 0
        %3558 = vmatpush1.bf16.xpose.msra.mxu0 0
        %3559 = vmatprep.subr.bf16.mxu0 0
        %3560 = vmatpush1.bf16.xpose.msra.mxu0 0
        %3561 = vmatprep.subr.bf16.mxu0 0
        %3562 = vmatpush1.bf16.xpose.msra.mxu0 0
        %3563 = vmatprep.subr.bf16.mxu0 0
        %3564 = vmatpush1.bf16.xpose.msra.mxu0 0
        %3565 = vmatprep.subr.bf16.mxu0 0
        %3566 = vmatpush1.bf16.xpose.msra.mxu0 0
        %3567 = vmatprep.subr.bf16.mxu0 0
        %3568 = vmatpush1.bf16.xpose.msra.mxu0 0
        %3569 = vmatprep.subr.bf16.mxu0 0
        %3570 = vmatpush1.bf16.xpose.msra.mxu0 %v3553
        %3571 = vmatprep.subr.bf16.mxu0 0
        %3572 = vmatpush2.bf16.xpose.msra.mxu0 0
        %3573 = vmatprep.subr.bf16.mxu0 0
        %3574 = vmatpush2.bf16.xpose.msra.mxu0 0
        %3575 = vmatprep.subr.bf16.mxu0 0
        %3576 = vmatpush2.bf16.xpose.msra.mxu0 0
        %3577 = vmatprep.subr.bf16.mxu0 0
        %3578 = vmatpush2.bf16.xpose.msra.mxu0 0
        %3579 = vmatprep.subr.bf16.mxu0 0
        %3580 = vmatpush2.bf16.xpose.msra.mxu0 0
        %3581 = vmatprep.subr.bf16.mxu0 0
        %3582 = vmatpush2.bf16.xpose.msra.mxu0 0
        %3583 = vmatprep.subr.bf16.mxu0 0
        %3584 = vmatpush2.bf16.xpose.msra.mxu0 0
        %3585 = vmatprep.subr.bf16.mxu0 0
        %3586 = vmatpush2.bf16.xpose.msra.mxu0 0
        %3587 = vmatprep.mubr.bf16.mxu0 0
        %3588 = vmatmul.mubr.bf16.gmra.mxu0 %v3550
        %v3589 = vpop.f32.mrf.mxu0
        %v3590 = vadd.f32 0.0, %v3589
        %v3591 = vpop.f32.mrf.mxu0
        %v3592 = vpop.f32.mrf.mxu0
        %v3593 = vpop.f32.mrf.mxu0
        %3594 = vdwg.mxu0
        %3595 = vrot.lane.b32.xlu0 %v806, 104
        %v3596 = vpop.permute.xlu0 %3595
        %3597 = vrot.lane.b32.xlu0 %v806, 72
        %v3598 = vpop.permute.xlu0 %3597
        %v3600 = vsel %vm814, %v3596, 0
        %v3603 = vsel %vm814, %v3598, 0
        %3605 = vmatprep.subr.bf16.mxu0 0
        %3606 = vmatpush1.bf16.xpose.msra.mxu0 0
        %3607 = vmatprep.subr.bf16.mxu0 0
        %3608 = vmatpush1.bf16.xpose.msra.mxu0 0
        %3609 = vmatprep.subr.bf16.mxu0 0
        %3610 = vmatpush1.bf16.xpose.msra.mxu0 0
        %3611 = vmatprep.subr.bf16.mxu0 0
        %3612 = vmatpush1.bf16.xpose.msra.mxu0 0
        %3613 = vmatprep.subr.bf16.mxu0 0
        %3614 = vmatpush1.bf16.xpose.msra.mxu0 0
        %3615 = vmatprep.subr.bf16.mxu0 0
        %3616 = vmatpush1.bf16.xpose.msra.mxu0 0
        %3617 = vmatprep.subr.bf16.mxu0 0
        %3618 = vmatpush1.bf16.xpose.msra.mxu0 0
        %3619 = vmatprep.subr.bf16.mxu0 0
        %3620 = vmatpush1.bf16.xpose.msra.mxu0 %v3603
        %3621 = vmatprep.subr.bf16.mxu0 0
        %3622 = vmatpush2.bf16.xpose.msra.mxu0 0
        %3623 = vmatprep.subr.bf16.mxu0 0
        %3624 = vmatpush2.bf16.xpose.msra.mxu0 0
        %3625 = vmatprep.subr.bf16.mxu0 0
        %3626 = vmatpush2.bf16.xpose.msra.mxu0 0
        %3627 = vmatprep.subr.bf16.mxu0 0
        %3628 = vmatpush2.bf16.xpose.msra.mxu0 0
        %3629 = vmatprep.subr.bf16.mxu0 0
        %3630 = vmatpush2.bf16.xpose.msra.mxu0 0
        %3631 = vmatprep.subr.bf16.mxu0 0
        %3632 = vmatpush2.bf16.xpose.msra.mxu0 0
        %3633 = vmatprep.subr.bf16.mxu0 0
        %3634 = vmatpush2.bf16.xpose.msra.mxu0 0
        %3635 = vmatprep.subr.bf16.mxu0 0
        %3636 = vmatpush2.bf16.xpose.msra.mxu0 0
        %3637 = vmatprep.mubr.bf16.mxu0 0
        %3638 = vmatmul.mubr.bf16.gmra.mxu0 %v3600
        %v3639 = vpop.f32.mrf.mxu0
        %v3640 = vadd.f32 0.0, %v3639
        %v3641 = vpop.f32.mrf.mxu0
        %v3642 = vpop.f32.mrf.mxu0
        %v3643 = vpop.f32.mrf.mxu0
        %3644 = vdwg.mxu0
        %3645 = vrot.lane.b32.xlu0 %v807, 104
        %v3646 = vpop.permute.xlu0 %3645
        %3647 = vrot.lane.b32.xlu0 %v807, 72
        %v3648 = vpop.permute.xlu0 %3647
        %v3650 = vsel %vm814, %v3646, 0
        %v3653 = vsel %vm814, %v3648, 0
        %3655 = vmatprep.subr.bf16.mxu0 0
        %3656 = vmatpush1.bf16.xpose.msra.mxu0 0
        %3657 = vmatprep.subr.bf16.mxu0 0
        %3658 = vmatpush1.bf16.xpose.msra.mxu0 0
        %3659 = vmatprep.subr.bf16.mxu0 0
        %3660 = vmatpush1.bf16.xpose.msra.mxu0 0
        %3661 = vmatprep.subr.bf16.mxu0 0
        %3662 = vmatpush1.bf16.xpose.msra.mxu0 0
        %3663 = vmatprep.subr.bf16.mxu0 0
        %3664 = vmatpush1.bf16.xpose.msra.mxu0 0
        %3665 = vmatprep.subr.bf16.mxu0 0
        %3666 = vmatpush1.bf16.xpose.msra.mxu0 0
        %3667 = vmatprep.subr.bf16.mxu0 0
        %3668 = vmatpush1.bf16.xpose.msra.mxu0 0
        %3669 = vmatprep.subr.bf16.mxu0 0
        %3670 = vmatpush1.bf16.xpose.msra.mxu0 %v3653
        %3671 = vmatprep.subr.bf16.mxu0 0
        %3672 = vmatpush2.bf16.xpose.msra.mxu0 0
        %3673 = vmatprep.subr.bf16.mxu0 0
        %3674 = vmatpush2.bf16.xpose.msra.mxu0 0
        %3675 = vmatprep.subr.bf16.mxu0 0
        %3676 = vmatpush2.bf16.xpose.msra.mxu0 0
        %3677 = vmatprep.subr.bf16.mxu0 0
        %3678 = vmatpush2.bf16.xpose.msra.mxu0 0
        %3679 = vmatprep.subr.bf16.mxu0 0
        %3680 = vmatpush2.bf16.xpose.msra.mxu0 0
        %3681 = vmatprep.subr.bf16.mxu0 0
        %3682 = vmatpush2.bf16.xpose.msra.mxu0 0
        %3683 = vmatprep.subr.bf16.mxu0 0
        %3684 = vmatpush2.bf16.xpose.msra.mxu0 0
        %3685 = vmatprep.subr.bf16.mxu0 0
        %3686 = vmatpush2.bf16.xpose.msra.mxu0 0
        %3687 = vmatprep.mubr.bf16.mxu0 0
        %3688 = vmatmul.mubr.bf16.gmra.mxu0 %v3650
        %v3689 = vpop.f32.mrf.mxu0
        %v3690 = vadd.f32 0.0, %v3689
        %v3691 = vpop.f32.mrf.mxu0
        %v3692 = vpop.f32.mrf.mxu0
        %v3693 = vpop.f32.mrf.mxu0
        %3694 = vdwg.mxu0
        %3695 = vrot.lane.b32.xlu0 %v808, 104
        %v3696 = vpop.permute.xlu0 %3695
        %3697 = vrot.lane.b32.xlu0 %v808, 72
        %v3698 = vpop.permute.xlu0 %3697
        %v3700 = vsel %vm814, %v3696, 0
        %v3703 = vsel %vm814, %v3698, 0
        %3705 = vmatprep.subr.bf16.mxu0 0
        %3706 = vmatpush1.bf16.xpose.msra.mxu0 0
        %3707 = vmatprep.subr.bf16.mxu0 0
        %3708 = vmatpush1.bf16.xpose.msra.mxu0 0
        %3709 = vmatprep.subr.bf16.mxu0 0
        %3710 = vmatpush1.bf16.xpose.msra.mxu0 0
        %3711 = vmatprep.subr.bf16.mxu0 0
        %3712 = vmatpush1.bf16.xpose.msra.mxu0 0
        %3713 = vmatprep.subr.bf16.mxu0 0
        %3714 = vmatpush1.bf16.xpose.msra.mxu0 0
        %3715 = vmatprep.subr.bf16.mxu0 0
        %3716 = vmatpush1.bf16.xpose.msra.mxu0 0
        %3717 = vmatprep.subr.bf16.mxu0 0
        %3718 = vmatpush1.bf16.xpose.msra.mxu0 0
        %3719 = vmatprep.subr.bf16.mxu0 0
        %3720 = vmatpush1.bf16.xpose.msra.mxu0 %v3703
        %3721 = vmatprep.subr.bf16.mxu0 0
        %3722 = vmatpush2.bf16.xpose.msra.mxu0 0
        %3723 = vmatprep.subr.bf16.mxu0 0
        %3724 = vmatpush2.bf16.xpose.msra.mxu0 0
        %3725 = vmatprep.subr.bf16.mxu0 0
        %3726 = vmatpush2.bf16.xpose.msra.mxu0 0
        %3727 = vmatprep.subr.bf16.mxu0 0
        %3728 = vmatpush2.bf16.xpose.msra.mxu0 0
        %3729 = vmatprep.subr.bf16.mxu0 0
        %3730 = vmatpush2.bf16.xpose.msra.mxu0 0
        %3731 = vmatprep.subr.bf16.mxu0 0
        %3732 = vmatpush2.bf16.xpose.msra.mxu0 0
        %3733 = vmatprep.subr.bf16.mxu0 0
        %3734 = vmatpush2.bf16.xpose.msra.mxu0 0
        %3735 = vmatprep.subr.bf16.mxu0 0
        %3736 = vmatpush2.bf16.xpose.msra.mxu0 0
        %3737 = vmatprep.mubr.bf16.mxu0 0
        %3738 = vmatmul.mubr.bf16.gmra.mxu0 %v3700
        %v3739 = vpop.f32.mrf.mxu0
        %v3740 = vadd.f32 0.0, %v3739
        %v3741 = vpop.f32.mrf.mxu0
        %v3742 = vpop.f32.mrf.mxu0
        %v3743 = vpop.f32.mrf.mxu0
        %3744 = vdwg.mxu0
        %3745 = vrot.lane.b32.xlu0 %v809, 104
        %v3746 = vpop.permute.xlu0 %3745
        %3747 = vrot.lane.b32.xlu0 %v809, 72
        %v3748 = vpop.permute.xlu0 %3747
        %v3750 = vsel %vm814, %v3746, 0
        %v3753 = vsel %vm814, %v3748, 0
        %3755 = vmatprep.subr.bf16.mxu0 0
        %3756 = vmatpush1.bf16.xpose.msra.mxu0 0
        %3757 = vmatprep.subr.bf16.mxu0 0
        %3758 = vmatpush1.bf16.xpose.msra.mxu0 0
        %3759 = vmatprep.subr.bf16.mxu0 0
        %3760 = vmatpush1.bf16.xpose.msra.mxu0 0
        %3761 = vmatprep.subr.bf16.mxu0 0
        %3762 = vmatpush1.bf16.xpose.msra.mxu0 0
        %3763 = vmatprep.subr.bf16.mxu0 0
        %3764 = vmatpush1.bf16.xpose.msra.mxu0 0
        %3765 = vmatprep.subr.bf16.mxu0 0
        %3766 = vmatpush1.bf16.xpose.msra.mxu0 0
        %3767 = vmatprep.subr.bf16.mxu0 0
        %3768 = vmatpush1.bf16.xpose.msra.mxu0 0
        %3769 = vmatprep.subr.bf16.mxu0 0
        %3770 = vmatpush1.bf16.xpose.msra.mxu0 %v3753
        %3771 = vmatprep.subr.bf16.mxu0 0
        %3772 = vmatpush2.bf16.xpose.msra.mxu0 0
        %3773 = vmatprep.subr.bf16.mxu0 0
        %3774 = vmatpush2.bf16.xpose.msra.mxu0 0
        %3775 = vmatprep.subr.bf16.mxu0 0
        %3776 = vmatpush2.bf16.xpose.msra.mxu0 0
        %3777 = vmatprep.subr.bf16.mxu0 0
        %3778 = vmatpush2.bf16.xpose.msra.mxu0 0
        %3779 = vmatprep.subr.bf16.mxu0 0
        %3780 = vmatpush2.bf16.xpose.msra.mxu0 0
        %3781 = vmatprep.subr.bf16.mxu0 0
        %3782 = vmatpush2.bf16.xpose.msra.mxu0 0
        %3783 = vmatprep.subr.bf16.mxu0 0
        %3784 = vmatpush2.bf16.xpose.msra.mxu0 0
        %3785 = vmatprep.subr.bf16.mxu0 0
        %3786 = vmatpush2.bf16.xpose.msra.mxu0 0
        %3787 = vmatprep.mubr.bf16.mxu0 0
        %3788 = vmatmul.mubr.bf16.gmra.mxu0 %v3750
        %v3789 = vpop.f32.mrf.mxu0
        %v3790 = vadd.f32 0.0, %v3789
        %v3791 = vpop.f32.mrf.mxu0
        %v3792 = vpop.f32.mrf.mxu0
        %v3793 = vpop.f32.mrf.mxu0
        %3794 = vdwg.mxu0
        %3795 = vrot.lane.b32.xlu0 %v810, 104
        %v3796 = vpop.permute.xlu0 %3795
        %3797 = vrot.lane.b32.xlu0 %v810, 72
        %v3798 = vpop.permute.xlu0 %3797
        %v3800 = vsel %vm814, %v3796, 0
        %v3803 = vsel %vm814, %v3798, 0
        %3805 = vmatprep.subr.bf16.mxu0 0
        %3806 = vmatpush1.bf16.xpose.msra.mxu0 0
        %3807 = vmatprep.subr.bf16.mxu0 0
        %3808 = vmatpush1.bf16.xpose.msra.mxu0 0
        %3809 = vmatprep.subr.bf16.mxu0 0
        %3810 = vmatpush1.bf16.xpose.msra.mxu0 0
        %3811 = vmatprep.subr.bf16.mxu0 0
        %3812 = vmatpush1.bf16.xpose.msra.mxu0 0
        %3813 = vmatprep.subr.bf16.mxu0 0
        %3814 = vmatpush1.bf16.xpose.msra.mxu0 0
        %3815 = vmatprep.subr.bf16.mxu0 0
        %3816 = vmatpush1.bf16.xpose.msra.mxu0 0
        %3817 = vmatprep.subr.bf16.mxu0 0
        %3818 = vmatpush1.bf16.xpose.msra.mxu0 0
        %3819 = vmatprep.subr.bf16.mxu0 0
        %3820 = vmatpush1.bf16.xpose.msra.mxu0 %v3803
        %3821 = vmatprep.subr.bf16.mxu0 0
        %3822 = vmatpush2.bf16.xpose.msra.mxu0 0
        %3823 = vmatprep.subr.bf16.mxu0 0
        %3824 = vmatpush2.bf16.xpose.msra.mxu0 0
        %3825 = vmatprep.subr.bf16.mxu0 0
        %3826 = vmatpush2.bf16.xpose.msra.mxu0 0
        %3827 = vmatprep.subr.bf16.mxu0 0
        %3828 = vmatpush2.bf16.xpose.msra.mxu0 0
        %3829 = vmatprep.subr.bf16.mxu0 0
        %3830 = vmatpush2.bf16.xpose.msra.mxu0 0
        %3831 = vmatprep.subr.bf16.mxu0 0
        %3832 = vmatpush2.bf16.xpose.msra.mxu0 0
        %3833 = vmatprep.subr.bf16.mxu0 0
        %3834 = vmatpush2.bf16.xpose.msra.mxu0 0
        %3835 = vmatprep.subr.bf16.mxu0 0
        %3836 = vmatpush2.bf16.xpose.msra.mxu0 0
        %3837 = vmatprep.mubr.bf16.mxu0 0
        %3838 = vmatmul.mubr.bf16.gmra.mxu0 %v3800
        %v3839 = vpop.f32.mrf.mxu0
        %v3840 = vadd.f32 0.0, %v3839
        %v3841 = vpop.f32.mrf.mxu0
        %v3842 = vpop.f32.mrf.mxu0
        %v3843 = vpop.f32.mrf.mxu0
        %3844 = vdwg.mxu0
        %v3845 = vsel %vm814, %v3490, -inf
        %3846 = vmax.xlane.f32.xlu0 %v3845
        %v3847 = vpop.xlane.xlu0 %3846
        %v3848 = vsel %vm814, %v3540, -inf
        %3849 = vmax.xlane.f32.xlu0 %v3848
        %v3850 = vpop.xlane.xlu0 %3849
        %v3851 = vsel %vm814, %v3590, -inf
        %3852 = vmax.xlane.f32.xlu0 %v3851
        %v3853 = vpop.xlane.xlu0 %3852
        %v3854 = vsel %vm814, %v3640, -inf
        %3855 = vmax.xlane.f32.xlu0 %v3854
        %v3856 = vpop.xlane.xlu0 %3855
        %v3857 = vsel %vm814, %v3690, -inf
        %3858 = vmax.xlane.f32.xlu0 %v3857
        %v3859 = vpop.xlane.xlu0 %3858
        %v3860 = vsel %vm814, %v3740, -inf
        %3861 = vmax.xlane.f32.xlu0 %v3860
        %v3862 = vpop.xlane.xlu0 %3861
        %v3863 = vsel %vm814, %v3790, -inf
        %3864 = vmax.xlane.f32.xlu0 %v3863
        %v3865 = vpop.xlane.xlu0 %3864
        %v3866 = vsel %vm814, %v3840, -inf
        %3867 = vmax.xlane.f32.xlu0 %v3866
        %v3868 = vpop.xlane.xlu0 %3867
        %v3869 = vsub.f32 %v3490, %v3847
        %v3870 = vsub.f32 %v3540, %v3850
        %v3871 = vsub.f32 %v3590, %v3853
        %v3872 = vsub.f32 %v3640, %v3856
        %v3873 = vsub.f32 %v3690, %v3859
        %v3874 = vsub.f32 %v3740, %v3862
        %v3875 = vsub.f32 %v3790, %v3865
        %v3876 = vsub.f32 %v3840, %v3868
        %v3877 = vmul.f32 %v3869, 1.442695
        %v3878 = vpow.pop %v3877
        %v3879 = vmul.f32 %v3870, 1.442695
        %v3880 = vpow.pop %v3879
        %v3881 = vmul.f32 %v3871, 1.442695
        %v3882 = vpow.pop %v3881
        %v3883 = vmul.f32 %v3872, 1.442695
        %v3884 = vpow.pop %v3883
        %v3885 = vmul.f32 %v3873, 1.442695
        %v3886 = vpow.pop %v3885
        %v3887 = vmul.f32 %v3874, 1.442695
        %v3888 = vpow.pop %v3887
        %v3889 = vmul.f32 %v3875, 1.442695
        %v3890 = vpow.pop %v3889
        %v3891 = vmul.f32 %v3876, 1.442695
        %v3892 = vpow.pop %v3891
        %v3893 = vsel %vm814, %v3878, 0.0
        %3894 = vadd.xlane.f32.xlu0 %v3893
        %v3895 = vpop.xlane.xlu0 %3894
        %v3896 = vsel %vm814, %v3880, 0.0
        %3897 = vadd.xlane.f32.xlu0 %v3896
        %v3898 = vpop.xlane.xlu0 %3897
        %v3899 = vsel %vm814, %v3882, 0.0
        %3900 = vadd.xlane.f32.xlu0 %v3899
        %v3901 = vpop.xlane.xlu0 %3900
        %v3902 = vsel %vm814, %v3884, 0.0
        %3903 = vadd.xlane.f32.xlu0 %v3902
        %v3904 = vpop.xlane.xlu0 %3903
        %v3905 = vsel %vm814, %v3886, 0.0
        %3906 = vadd.xlane.f32.xlu0 %v3905
        %v3907 = vpop.xlane.xlu0 %3906
        %v3908 = vsel %vm814, %v3888, 0.0
        %3909 = vadd.xlane.f32.xlu0 %v3908
        %v3910 = vpop.xlane.xlu0 %3909
        %v3911 = vsel %vm814, %v3890, 0.0
        %3912 = vadd.xlane.f32.xlu0 %v3911
        %v3913 = vpop.xlane.xlu0 %3912
        %v3914 = vsel %vm814, %v3892, 0.0
        %3915 = vadd.xlane.f32.xlu0 %v3914
        %v3916 = vpop.xlane.xlu0 %3915
        %v3917 = vrcp.pop %v3895
        %v3918 = vrcp.pop %v3898
        %v3919 = vrcp.pop %v3901
        %v3920 = vrcp.pop %v3904
        %v3921 = vrcp.pop %v3907
        %v3922 = vrcp.pop %v3910
        %v3923 = vrcp.pop %v3913
        %v3924 = vrcp.pop %v3916
        %v3925 = vmul.f32 %v3878, %v3917
        %v3926 = vmul.f32 %v3880, %v3918
        %v3927 = vmul.f32 %v3882, %v3919
        %v3928 = vmul.f32 %v3884, %v3920
        %v3929 = vmul.f32 %v3886, %v3921
        %v3930 = vmul.f32 %v3888, %v3922
        %v3931 = vmul.f32 %v3890, %v3923
        %v3932 = vmul.f32 %v3892, %v3924
        %v3933 = vpack.c.bf16 %v3925, %v3925
        %v3934 = vpack.c.bf16 %v3926, %v3926
        %v3935 = vpack.c.bf16 %v3927, %v3927
        %v3936 = vpack.c.bf16 %v3928, %v3928
        %v3937 = vpack.c.bf16 %v3929, %v3929
        %v3938 = vpack.c.bf16 %v3930, %v3930
        %v3939 = vpack.c.bf16 %v3931, %v3931
        %v3940 = vpack.c.bf16 %v3932, %v3932
        %3941 = vrot.lane.b32.xlu0 %v803, 40
        %v3942 = vpop.permute.xlu0 %3941
        %v3944 = vsel %vm814, %v3933, 0
        %v3947 = vsel %vm1305, %v3942, 0
        %3949 = vmatprep.subr.bf16.mxu0 0
        %3950 = vmatpush1.bf16.msra.mxu0 0
        %3951 = vmatprep.subr.bf16.mxu0 0
        %3952 = vmatpush1.bf16.msra.mxu0 0
        %3953 = vmatprep.subr.bf16.mxu0 0
        %3954 = vmatpush1.bf16.msra.mxu0 0
        %3955 = vmatprep.subr.bf16.mxu0 0
        %3956 = vmatpush1.bf16.msra.mxu0 0
        %3957 = vmatprep.subr.bf16.mxu0 0
        %3958 = vmatpush1.bf16.msra.mxu0 0
        %3959 = vmatprep.subr.bf16.mxu0 0
        %3960 = vmatpush1.bf16.msra.mxu0 0
        %3961 = vmatprep.subr.bf16.mxu0 0
        %3962 = vmatpush1.bf16.msra.mxu0 0
        %3963 = vmatprep.subr.bf16.mxu0 0
        %3964 = vmatpush1.bf16.msra.mxu0 %v3947
        %3965 = vmatprep.subr.bf16.mxu0 0
        %3966 = vmatpush2.bf16.msra.mxu0 0
        %3967 = vmatprep.subr.bf16.mxu0 0
        %3968 = vmatpush2.bf16.msra.mxu0 0
        %3969 = vmatprep.subr.bf16.mxu0 0
        %3970 = vmatpush2.bf16.msra.mxu0 0
        %3971 = vmatprep.subr.bf16.mxu0 0
        %3972 = vmatpush2.bf16.msra.mxu0 0
        %3973 = vmatprep.subr.bf16.mxu0 0
        %3974 = vmatpush2.bf16.msra.mxu0 0
        %3975 = vmatprep.subr.bf16.mxu0 0
        %3976 = vmatpush2.bf16.msra.mxu0 0
        %3977 = vmatprep.subr.bf16.mxu0 0
        %3978 = vmatpush2.bf16.msra.mxu0 0
        %3979 = vmatprep.subr.bf16.mxu0 0
        %3980 = vmatpush2.bf16.msra.mxu0 0
        %3981 = vmatprep.mubr.bf16.mxu0 0
        %3982 = vmatmul.mubr.bf16.gmra.mxu0 %v3944
        %v3983 = vpop.f32.mrf.mxu0
        %v3984 = vadd.f32 0.0, %v3983
        %v3985 = vpop.f32.mrf.mxu0
        %v3986 = vpop.f32.mrf.mxu0
        %v3987 = vpop.f32.mrf.mxu0
        %3988 = vdwg.mxu0
        %3989 = vrot.lane.b32.xlu0 %v804, 40
        %v3990 = vpop.permute.xlu0 %3989
        %v3992 = vsel %vm814, %v3934, 0
        %v3995 = vsel %vm1305, %v3990, 0
        %3997 = vmatprep.subr.bf16.mxu0 0
        %3998 = vmatpush1.bf16.msra.mxu0 0
        %3999 = vmatprep.subr.bf16.mxu0 0
        %4000 = vmatpush1.bf16.msra.mxu0 0
        %4001 = vmatprep.subr.bf16.mxu0 0
        %4002 = vmatpush1.bf16.msra.mxu0 0
        %4003 = vmatprep.subr.bf16.mxu0 0
        %4004 = vmatpush1.bf16.msra.mxu0 0
        %4005 = vmatprep.subr.bf16.mxu0 0
        %4006 = vmatpush1.bf16.msra.mxu0 0
        %4007 = vmatprep.subr.bf16.mxu0 0
        %4008 = vmatpush1.bf16.msra.mxu0 0
        %4009 = vmatprep.subr.bf16.mxu0 0
        %4010 = vmatpush1.bf16.msra.mxu0 0
        %4011 = vmatprep.subr.bf16.mxu0 0
        %4012 = vmatpush1.bf16.msra.mxu0 %v3995
        %4013 = vmatprep.subr.bf16.mxu0 0
        %4014 = vmatpush2.bf16.msra.mxu0 0
        %4015 = vmatprep.subr.bf16.mxu0 0
        %4016 = vmatpush2.bf16.msra.mxu0 0
        %4017 = vmatprep.subr.bf16.mxu0 0
        %4018 = vmatpush2.bf16.msra.mxu0 0
        %4019 = vmatprep.subr.bf16.mxu0 0
        %4020 = vmatpush2.bf16.msra.mxu0 0
        %4021 = vmatprep.subr.bf16.mxu0 0
        %4022 = vmatpush2.bf16.msra.mxu0 0
        %4023 = vmatprep.subr.bf16.mxu0 0
        %4024 = vmatpush2.bf16.msra.mxu0 0
        %4025 = vmatprep.subr.bf16.mxu0 0
        %4026 = vmatpush2.bf16.msra.mxu0 0
        %4027 = vmatprep.subr.bf16.mxu0 0
        %4028 = vmatpush2.bf16.msra.mxu0 0
        %4029 = vmatprep.mubr.bf16.mxu0 0
        %4030 = vmatmul.mubr.bf16.gmra.mxu0 %v3992
        %v4031 = vpop.f32.mrf.mxu0
        %v4032 = vadd.f32 0.0, %v4031
        %v4033 = vpop.f32.mrf.mxu0
        %v4034 = vpop.f32.mrf.mxu0
        %v4035 = vpop.f32.mrf.mxu0
        %4036 = vdwg.mxu0
        %4037 = vrot.lane.b32.xlu0 %v805, 40
        %v4038 = vpop.permute.xlu0 %4037
        %v4040 = vsel %vm814, %v3935, 0
        %v4043 = vsel %vm1305, %v4038, 0
        %4045 = vmatprep.subr.bf16.mxu0 0
        %4046 = vmatpush1.bf16.msra.mxu0 0
        %4047 = vmatprep.subr.bf16.mxu0 0
        %4048 = vmatpush1.bf16.msra.mxu0 0
        %4049 = vmatprep.subr.bf16.mxu0 0
        %4050 = vmatpush1.bf16.msra.mxu0 0
        %4051 = vmatprep.subr.bf16.mxu0 0
        %4052 = vmatpush1.bf16.msra.mxu0 0
        %4053 = vmatprep.subr.bf16.mxu0 0
        %4054 = vmatpush1.bf16.msra.mxu0 0
        %4055 = vmatprep.subr.bf16.mxu0 0
        %4056 = vmatpush1.bf16.msra.mxu0 0
        %4057 = vmatprep.subr.bf16.mxu0 0
        %4058 = vmatpush1.bf16.msra.mxu0 0
        %4059 = vmatprep.subr.bf16.mxu0 0
        %4060 = vmatpush1.bf16.msra.mxu0 %v4043
        %4061 = vmatprep.subr.bf16.mxu0 0
        %4062 = vmatpush2.bf16.msra.mxu0 0
        %4063 = vmatprep.subr.bf16.mxu0 0
        %4064 = vmatpush2.bf16.msra.mxu0 0
        %4065 = vmatprep.subr.bf16.mxu0 0
        %4066 = vmatpush2.bf16.msra.mxu0 0
        %4067 = vmatprep.subr.bf16.mxu0 0
        %4068 = vmatpush2.bf16.msra.mxu0 0
        %4069 = vmatprep.subr.bf16.mxu0 0
        %4070 = vmatpush2.bf16.msra.mxu0 0
        %4071 = vmatprep.subr.bf16.mxu0 0
        %4072 = vmatpush2.bf16.msra.mxu0 0
        %4073 = vmatprep.subr.bf16.mxu0 0
        %4074 = vmatpush2.bf16.msra.mxu0 0
        %4075 = vmatprep.subr.bf16.mxu0 0
        %4076 = vmatpush2.bf16.msra.mxu0 0
        %4077 = vmatprep.mubr.bf16.mxu0 0
        %4078 = vmatmul.mubr.bf16.gmra.mxu0 %v4040
        %v4079 = vpop.f32.mrf.mxu0
        %v4080 = vadd.f32 0.0, %v4079
        %v4081 = vpop.f32.mrf.mxu0
        %v4082 = vpop.f32.mrf.mxu0
        %v4083 = vpop.f32.mrf.mxu0
        %4084 = vdwg.mxu0
        %4085 = vrot.lane.b32.xlu0 %v806, 40
        %v4086 = vpop.permute.xlu0 %4085
        %v4088 = vsel %vm814, %v3936, 0
        %v4091 = vsel %vm1305, %v4086, 0
        %4093 = vmatprep.subr.bf16.mxu0 0
        %4094 = vmatpush1.bf16.msra.mxu0 0
        %4095 = vmatprep.subr.bf16.mxu0 0
        %4096 = vmatpush1.bf16.msra.mxu0 0
        %4097 = vmatprep.subr.bf16.mxu0 0
        %4098 = vmatpush1.bf16.msra.mxu0 0
        %4099 = vmatprep.subr.bf16.mxu0 0
        %4100 = vmatpush1.bf16.msra.mxu0 0
        %4101 = vmatprep.subr.bf16.mxu0 0
        %4102 = vmatpush1.bf16.msra.mxu0 0
        %4103 = vmatprep.subr.bf16.mxu0 0
        %4104 = vmatpush1.bf16.msra.mxu0 0
        %4105 = vmatprep.subr.bf16.mxu0 0
        %4106 = vmatpush1.bf16.msra.mxu0 0
        %4107 = vmatprep.subr.bf16.mxu0 0
        %4108 = vmatpush1.bf16.msra.mxu0 %v4091
        %4109 = vmatprep.subr.bf16.mxu0 0
        %4110 = vmatpush2.bf16.msra.mxu0 0
        %4111 = vmatprep.subr.bf16.mxu0 0
        %4112 = vmatpush2.bf16.msra.mxu0 0
        %4113 = vmatprep.subr.bf16.mxu0 0
        %4114 = vmatpush2.bf16.msra.mxu0 0
        %4115 = vmatprep.subr.bf16.mxu0 0
        %4116 = vmatpush2.bf16.msra.mxu0 0
        %4117 = vmatprep.subr.bf16.mxu0 0
        %4118 = vmatpush2.bf16.msra.mxu0 0
        %4119 = vmatprep.subr.bf16.mxu0 0
        %4120 = vmatpush2.bf16.msra.mxu0 0
        %4121 = vmatprep.subr.bf16.mxu0 0
        %4122 = vmatpush2.bf16.msra.mxu0 0
        %4123 = vmatprep.subr.bf16.mxu0 0
        %4124 = vmatpush2.bf16.msra.mxu0 0
        %4125 = vmatprep.mubr.bf16.mxu0 0
        %4126 = vmatmul.mubr.bf16.gmra.mxu0 %v4088
        %v4127 = vpop.f32.mrf.mxu0
        %v4128 = vadd.f32 0.0, %v4127
        %v4129 = vpop.f32.mrf.mxu0
        %v4130 = vpop.f32.mrf.mxu0
        %v4131 = vpop.f32.mrf.mxu0
        %4132 = vdwg.mxu0
        %4133 = vrot.lane.b32.xlu0 %v807, 40
        %v4134 = vpop.permute.xlu0 %4133
        %v4136 = vsel %vm814, %v3937, 0
        %v4139 = vsel %vm1305, %v4134, 0
        %4141 = vmatprep.subr.bf16.mxu0 0
        %4142 = vmatpush1.bf16.msra.mxu0 0
        %4143 = vmatprep.subr.bf16.mxu0 0
        %4144 = vmatpush1.bf16.msra.mxu0 0
        %4145 = vmatprep.subr.bf16.mxu0 0
        %4146 = vmatpush1.bf16.msra.mxu0 0
        %4147 = vmatprep.subr.bf16.mxu0 0
        %4148 = vmatpush1.bf16.msra.mxu0 0
        %4149 = vmatprep.subr.bf16.mxu0 0
        %4150 = vmatpush1.bf16.msra.mxu0 0
        %4151 = vmatprep.subr.bf16.mxu0 0
        %4152 = vmatpush1.bf16.msra.mxu0 0
        %4153 = vmatprep.subr.bf16.mxu0 0
        %4154 = vmatpush1.bf16.msra.mxu0 0
        %4155 = vmatprep.subr.bf16.mxu0 0
        %4156 = vmatpush1.bf16.msra.mxu0 %v4139
        %4157 = vmatprep.subr.bf16.mxu0 0
        %4158 = vmatpush2.bf16.msra.mxu0 0
        %4159 = vmatprep.subr.bf16.mxu0 0
        %4160 = vmatpush2.bf16.msra.mxu0 0
        %4161 = vmatprep.subr.bf16.mxu0 0
        %4162 = vmatpush2.bf16.msra.mxu0 0
        %4163 = vmatprep.subr.bf16.mxu0 0
        %4164 = vmatpush2.bf16.msra.mxu0 0
        %4165 = vmatprep.subr.bf16.mxu0 0
        %4166 = vmatpush2.bf16.msra.mxu0 0
        %4167 = vmatprep.subr.bf16.mxu0 0
        %4168 = vmatpush2.bf16.msra.mxu0 0
        %4169 = vmatprep.subr.bf16.mxu0 0
        %4170 = vmatpush2.bf16.msra.mxu0 0
        %4171 = vmatprep.subr.bf16.mxu0 0
        %4172 = vmatpush2.bf16.msra.mxu0 0
        %4173 = vmatprep.mubr.bf16.mxu0 0
        %4174 = vmatmul.mubr.bf16.gmra.mxu0 %v4136
        %v4175 = vpop.f32.mrf.mxu0
        %v4176 = vadd.f32 0.0, %v4175
        %v4177 = vpop.f32.mrf.mxu0
        %v4178 = vpop.f32.mrf.mxu0
        %v4179 = vpop.f32.mrf.mxu0
        %4180 = vdwg.mxu0
        %4181 = vrot.lane.b32.xlu0 %v808, 40
        %v4182 = vpop.permute.xlu0 %4181
        %v4184 = vsel %vm814, %v3938, 0
        %v4187 = vsel %vm1305, %v4182, 0
        %4189 = vmatprep.subr.bf16.mxu0 0
        %4190 = vmatpush1.bf16.msra.mxu0 0
        %4191 = vmatprep.subr.bf16.mxu0 0
        %4192 = vmatpush1.bf16.msra.mxu0 0
        %4193 = vmatprep.subr.bf16.mxu0 0
        %4194 = vmatpush1.bf16.msra.mxu0 0
        %4195 = vmatprep.subr.bf16.mxu0 0
        %4196 = vmatpush1.bf16.msra.mxu0 0
        %4197 = vmatprep.subr.bf16.mxu0 0
        %4198 = vmatpush1.bf16.msra.mxu0 0
        %4199 = vmatprep.subr.bf16.mxu0 0
        %4200 = vmatpush1.bf16.msra.mxu0 0
        %4201 = vmatprep.subr.bf16.mxu0 0
        %4202 = vmatpush1.bf16.msra.mxu0 0
        %4203 = vmatprep.subr.bf16.mxu0 0
        %4204 = vmatpush1.bf16.msra.mxu0 %v4187
        %4205 = vmatprep.subr.bf16.mxu0 0
        %4206 = vmatpush2.bf16.msra.mxu0 0
        %4207 = vmatprep.subr.bf16.mxu0 0
        %4208 = vmatpush2.bf16.msra.mxu0 0
        %4209 = vmatprep.subr.bf16.mxu0 0
        %4210 = vmatpush2.bf16.msra.mxu0 0
        %4211 = vmatprep.subr.bf16.mxu0 0
        %4212 = vmatpush2.bf16.msra.mxu0 0
        %4213 = vmatprep.subr.bf16.mxu0 0
        %4214 = vmatpush2.bf16.msra.mxu0 0
        %4215 = vmatprep.subr.bf16.mxu0 0
        %4216 = vmatpush2.bf16.msra.mxu0 0
        %4217 = vmatprep.subr.bf16.mxu0 0
        %4218 = vmatpush2.bf16.msra.mxu0 0
        %4219 = vmatprep.subr.bf16.mxu0 0
        %4220 = vmatpush2.bf16.msra.mxu0 0
        %4221 = vmatprep.mubr.bf16.mxu0 0
        %4222 = vmatmul.mubr.bf16.gmra.mxu0 %v4184
        %v4223 = vpop.f32.mrf.mxu0
        %v4224 = vadd.f32 0.0, %v4223
        %v4225 = vpop.f32.mrf.mxu0
        %v4226 = vpop.f32.mrf.mxu0
        %v4227 = vpop.f32.mrf.mxu0
        %4228 = vdwg.mxu0
        %4229 = vrot.lane.b32.xlu0 %v809, 40
        %v4230 = vpop.permute.xlu0 %4229
        %v4232 = vsel %vm814, %v3939, 0
        %v4235 = vsel %vm1305, %v4230, 0
        %4237 = vmatprep.subr.bf16.mxu0 0
        %4238 = vmatpush1.bf16.msra.mxu0 0
        %4239 = vmatprep.subr.bf16.mxu0 0
        %4240 = vmatpush1.bf16.msra.mxu0 0
        %4241 = vmatprep.subr.bf16.mxu0 0
        %4242 = vmatpush1.bf16.msra.mxu0 0
        %4243 = vmatprep.subr.bf16.mxu0 0
        %4244 = vmatpush1.bf16.msra.mxu0 0
        %4245 = vmatprep.subr.bf16.mxu0 0
        %4246 = vmatpush1.bf16.msra.mxu0 0
        %4247 = vmatprep.subr.bf16.mxu0 0
        %4248 = vmatpush1.bf16.msra.mxu0 0
        %4249 = vmatprep.subr.bf16.mxu0 0
        %4250 = vmatpush1.bf16.msra.mxu0 0
        %4251 = vmatprep.subr.bf16.mxu0 0
        %4252 = vmatpush1.bf16.msra.mxu0 %v4235
        %4253 = vmatprep.subr.bf16.mxu0 0
        %4254 = vmatpush2.bf16.msra.mxu0 0
        %4255 = vmatprep.subr.bf16.mxu0 0
        %4256 = vmatpush2.bf16.msra.mxu0 0
        %4257 = vmatprep.subr.bf16.mxu0 0
        %4258 = vmatpush2.bf16.msra.mxu0 0
        %4259 = vmatprep.subr.bf16.mxu0 0
        %4260 = vmatpush2.bf16.msra.mxu0 0
        %4261 = vmatprep.subr.bf16.mxu0 0
        %4262 = vmatpush2.bf16.msra.mxu0 0
        %4263 = vmatprep.subr.bf16.mxu0 0
        %4264 = vmatpush2.bf16.msra.mxu0 0
        %4265 = vmatprep.subr.bf16.mxu0 0
        %4266 = vmatpush2.bf16.msra.mxu0 0
        %4267 = vmatprep.subr.bf16.mxu0 0
        %4268 = vmatpush2.bf16.msra.mxu0 0
        %4269 = vmatprep.mubr.bf16.mxu0 0
        %4270 = vmatmul.mubr.bf16.gmra.mxu0 %v4232
        %v4271 = vpop.f32.mrf.mxu0
        %v4272 = vadd.f32 0.0, %v4271
        %v4273 = vpop.f32.mrf.mxu0
        %v4274 = vpop.f32.mrf.mxu0
        %v4275 = vpop.f32.mrf.mxu0
        %4276 = vdwg.mxu0
        %4277 = vrot.lane.b32.xlu0 %v810, 40
        %v4278 = vpop.permute.xlu0 %4277
        %v4280 = vsel %vm814, %v3940, 0
        %v4283 = vsel %vm1305, %v4278, 0
        %4285 = vmatprep.subr.bf16.mxu0 0
        %4286 = vmatpush1.bf16.msra.mxu0 0
        %4287 = vmatprep.subr.bf16.mxu0 0
        %4288 = vmatpush1.bf16.msra.mxu0 0
        %4289 = vmatprep.subr.bf16.mxu0 0
        %4290 = vmatpush1.bf16.msra.mxu0 0
        %4291 = vmatprep.subr.bf16.mxu0 0
        %4292 = vmatpush1.bf16.msra.mxu0 0
        %4293 = vmatprep.subr.bf16.mxu0 0
        %4294 = vmatpush1.bf16.msra.mxu0 0
        %4295 = vmatprep.subr.bf16.mxu0 0
        %4296 = vmatpush1.bf16.msra.mxu0 0
        %4297 = vmatprep.subr.bf16.mxu0 0
        %4298 = vmatpush1.bf16.msra.mxu0 0
        %4299 = vmatprep.subr.bf16.mxu0 0
        %4300 = vmatpush1.bf16.msra.mxu0 %v4283
        %4301 = vmatprep.subr.bf16.mxu0 0
        %4302 = vmatpush2.bf16.msra.mxu0 0
        %4303 = vmatprep.subr.bf16.mxu0 0
        %4304 = vmatpush2.bf16.msra.mxu0 0
        %4305 = vmatprep.subr.bf16.mxu0 0
        %4306 = vmatpush2.bf16.msra.mxu0 0
        %4307 = vmatprep.subr.bf16.mxu0 0
        %4308 = vmatpush2.bf16.msra.mxu0 0
        %4309 = vmatprep.subr.bf16.mxu0 0
        %4310 = vmatpush2.bf16.msra.mxu0 0
        %4311 = vmatprep.subr.bf16.mxu0 0
        %4312 = vmatpush2.bf16.msra.mxu0 0
        %4313 = vmatprep.subr.bf16.mxu0 0
        %4314 = vmatpush2.bf16.msra.mxu0 0
        %4315 = vmatprep.subr.bf16.mxu0 0
        %4316 = vmatpush2.bf16.msra.mxu0 0
        %4317 = vmatprep.mubr.bf16.mxu0 0
        %4318 = vmatmul.mubr.bf16.gmra.mxu0 %v4280
        %v4319 = vpop.f32.mrf.mxu0
        %v4320 = vadd.f32 0.0, %v4319
        %v4321 = vpop.f32.mrf.mxu0
        %v4322 = vpop.f32.mrf.mxu0
        %v4323 = vpop.f32.mrf.mxu0
        %4324 = vdwg.mxu0
        %4333 = vrot.lane.b32.xlu0 %v2224, 8
        %v4334 = vpop.permute.xlu0 %4333
        %4335 = vrot.lane.b32.xlu0 %v2272, 8
        %v4336 = vpop.permute.xlu0 %4335
        %4337 = vrot.lane.b32.xlu0 %v2320, 8
        %v4338 = vpop.permute.xlu0 %4337
        %4339 = vrot.lane.b32.xlu0 %v2368, 8
        %v4340 = vpop.permute.xlu0 %4339
        %4341 = vrot.lane.b32.xlu0 %v2416, 8
        %v4342 = vpop.permute.xlu0 %4341
        %4343 = vrot.lane.b32.xlu0 %v2464, 8
        %v4344 = vpop.permute.xlu0 %4343
        %4345 = vrot.lane.b32.xlu0 %v2512, 8
        %v4346 = vpop.permute.xlu0 %4345
        %4347 = vrot.lane.b32.xlu0 %v2560, 8
        %v4348 = vpop.permute.xlu0 %4347
        %4365 = vrot.lane.b32.xlu0 %v3104, 16
        %v4366 = vpop.permute.xlu0 %4365
        %4367 = vrot.lane.b32.xlu0 %v3152, 16
        %v4368 = vpop.permute.xlu0 %4367
        %4369 = vrot.lane.b32.xlu0 %v3200, 16
        %v4370 = vpop.permute.xlu0 %4369
        %4371 = vrot.lane.b32.xlu0 %v3248, 16
        %v4372 = vpop.permute.xlu0 %4371
        %4373 = vrot.lane.b32.xlu0 %v3296, 16
        %v4374 = vpop.permute.xlu0 %4373
        %4375 = vrot.lane.b32.xlu0 %v3344, 16
        %v4376 = vpop.permute.xlu0 %4375
        %4377 = vrot.lane.b32.xlu0 %v3392, 16
        %v4378 = vpop.permute.xlu0 %4377
        %4379 = vrot.lane.b32.xlu0 %v3440, 16
        %v4380 = vpop.permute.xlu0 %4379
        %4397 = vrot.lane.b32.xlu0 %v3984, 24
        %v4398 = vpop.permute.xlu0 %4397
        %4399 = vrot.lane.b32.xlu0 %v4032, 24
        %v4400 = vpop.permute.xlu0 %4399
        %4401 = vrot.lane.b32.xlu0 %v4080, 24
        %v4402 = vpop.permute.xlu0 %4401
        %4403 = vrot.lane.b32.xlu0 %v4128, 24
        %v4404 = vpop.permute.xlu0 %4403
        %4405 = vrot.lane.b32.xlu0 %v4176, 24
        %v4406 = vpop.permute.xlu0 %4405
        %4407 = vrot.lane.b32.xlu0 %v4224, 24
        %v4408 = vpop.permute.xlu0 %4407
        %4409 = vrot.lane.b32.xlu0 %v4272, 24
        %v4410 = vpop.permute.xlu0 %4409
        %4411 = vrot.lane.b32.xlu0 %v4320, 24
        %v4412 = vpop.permute.xlu0 %4411
        %v4421 = vsel %vm814, %v1344, %v4334
        %v4422 = vsel %vm814, %v1392, %v4336
        %v4423 = vsel %vm814, %v1440, %v4338
        %v4424 = vsel %vm814, %v1488, %v4340
        %v4425 = vsel %vm814, %v1536, %v4342
        %v4426 = vsel %vm814, %v1584, %v4344
        %v4427 = vsel %vm814, %v1632, %v4346
        %v4428 = vsel %vm814, %v1680, %v4348
        %vm4429 = vcmask 130048
        %v4430 = vsel %vm4429, %v4421, %v4366
        %v4431 = vsel %vm4429, %v4422, %v4368
        %v4432 = vsel %vm4429, %v4423, %v4370
        %v4433 = vsel %vm4429, %v4424, %v4372
        %v4434 = vsel %vm4429, %v4425, %v4374
        %v4435 = vsel %vm4429, %v4426, %v4376
        %v4436 = vsel %vm4429, %v4427, %v4378
        %v4437 = vsel %vm4429, %v4428, %v4380
        %vm4438 = vcmask 195584
        %v4439 = vsel %vm4438, %v4430, %v4398
        %v4440 = vsel %vm4438, %v4431, %v4400
        %v4441 = vsel %vm4438, %v4432, %v4402
        %v4442 = vsel %vm4438, %v4433, %v4404
        %v4443 = vsel %vm4438, %v4434, %v4406
        %v4444 = vsel %vm4438, %v4435, %v4408
        %v4445 = vsel %vm4438, %v4436, %v4410
        %v4446 = vsel %vm4438, %v4437, %v4412
        %v4447 = vpack.c.bf16 %v4440, %v4439
        %v4448 = vpack.c.bf16 %v4442, %v4441
        %v4449 = vpack.c.bf16 %v4444, %v4443
        %v4450 = vpack.c.bf16 %v4446, %v4445
        %s4451 = smul.addr %s699, 4
        %s4452 = scalar_lea.vmem %s6, %s4451
        %v4453 = vld [vmem:[%s4452] sm:$0xf]
        %v4454 = vld [vmem:[%s4452 + $0x4] sm:$0xf]
        %v4455 = vld [vmem:[%s4452 + $0x8] sm:$0xf]
        %v4456 = vld [vmem:[%s4452 + $0xc] sm:$0xf]
        %s4457 = scalar_lea.vmem %s7, %s544
        %v4458 = vld [vmem:[%s4457] sm:$0x1]
        %v4460 = vlaneseq
        %v4461 = vshrl.u32 %v4460, 7
        %v4462 = vsub.s32 0, %v4461
        %v4463 = vrot.slane %v4458, %v4462
        %v4469 = vunpack.c.l.b16 %v4453
        %v4470 = vunpack.c.l.b16 %v4454
        %v4471 = vunpack.c.l.b16 %v4455
        %v4472 = vunpack.c.l.b16 %v4456
        %v4473 = vpack.c.b16 %v4470, %v4469
        %v4474 = vpack.c.b16 %v4472, %v4471
        %v4478 = vsel %vm561, %v4447, 0
        %v4481 = vsel %vm561, %v4448, 0
        %v4484 = vsel %vm561, %v4449, 0
        %v4487 = vsel %vm561, %v4450, 0
        %4489 = vmatprep.subr.bf16.mxu0 0
        %4490 = vmatpush1.bf16.msra.mxu0 0
        %4491 = vmatprep.subr.bf16.mxu0 0
        %4492 = vmatpush1.bf16.msra.mxu0 0
        %4493 = vmatprep.subr.bf16.mxu0 0
        %4494 = vmatpush1.bf16.msra.mxu0 0
        %4495 = vmatprep.subr.bf16.mxu0 0
        %4496 = vmatpush1.bf16.msra.mxu0 0
        %4497 = vmatprep.subr.bf16.mxu0 0
        %4498 = vmatpush1.bf16.msra.mxu0 0
        %4499 = vmatprep.subr.bf16.mxu0 0
        %4500 = vmatpush1.bf16.msra.mxu0 0
        %4501 = vmatprep.subr.bf16.mxu0 0
        %4502 = vmatpush1.bf16.msra.mxu0 %v4474
        %4503 = vmatprep.subr.bf16.mxu0 0
        %4504 = vmatpush1.bf16.msra.mxu0 %v4473
        %4505 = vmatprep.subr.bf16.mxu0 0
        %4506 = vmatpush2.bf16.msra.mxu0 0
        %4507 = vmatprep.subr.bf16.mxu0 0
        %4508 = vmatpush2.bf16.msra.mxu0 0
        %4509 = vmatprep.subr.bf16.mxu0 0
        %4510 = vmatpush2.bf16.msra.mxu0 0
        %4511 = vmatprep.subr.bf16.mxu0 0
        %4512 = vmatpush2.bf16.msra.mxu0 0
        %4513 = vmatprep.subr.bf16.mxu0 0
        %4514 = vmatpush2.bf16.msra.mxu0 0
        %4515 = vmatprep.subr.bf16.mxu0 0
        %4516 = vmatpush2.bf16.msra.mxu0 0
        %4517 = vmatprep.subr.bf16.mxu0 0
        %4518 = vmatpush2.bf16.msra.mxu0 0
        %4519 = vmatprep.subr.bf16.mxu0 0
        %4520 = vmatpush2.bf16.msra.mxu0 0
        %4521 = vmatprep.mubr.bf16.mxu0 0
        %4522 = vmatmul.mubr.bf16.gmra.mxu0 %v4478
        %v4523 = vpop.f32.mrf.mxu0
        %v4524 = vadd.f32 %v4463, %v4523
        %v4525 = vpop.f32.mrf.mxu0
        %v4526 = vpop.f32.mrf.mxu0
        %v4527 = vadd.f32 %v4463, %v4526
        %v4528 = vpop.f32.mrf.mxu0
        %4529 = vmatprep.mubr.bf16.mxu0 0
        %4530 = vmatmul.mubr.bf16.gmra.mxu0 %v4481
        %v4531 = vpop.f32.mrf.mxu0
        %v4532 = vadd.f32 %v4463, %v4531
        %v4533 = vpop.f32.mrf.mxu0
        %v4534 = vpop.f32.mrf.mxu0
        %v4535 = vadd.f32 %v4463, %v4534
        %v4536 = vpop.f32.mrf.mxu0
        %4537 = vmatprep.mubr.bf16.mxu0 0
        %4538 = vmatmul.mubr.bf16.gmra.mxu0 %v4484
        %v4539 = vpop.f32.mrf.mxu0
        %v4540 = vadd.f32 %v4463, %v4539
        %v4541 = vpop.f32.mrf.mxu0
        %v4542 = vpop.f32.mrf.mxu0
        %v4543 = vadd.f32 %v4463, %v4542
        %v4544 = vpop.f32.mrf.mxu0
        %4545 = vmatprep.mubr.bf16.mxu0 0
        %4546 = vmatmul.mubr.bf16.gmra.mxu0 %v4487
        %v4547 = vpop.f32.mrf.mxu0
        %v4548 = vadd.f32 %v4463, %v4547
        %v4549 = vpop.f32.mrf.mxu0
        %v4550 = vpop.f32.mrf.mxu0
        %v4551 = vadd.f32 %v4463, %v4550
        %v4552 = vpop.f32.mrf.mxu0
        %4553 = vdwg.mxu0
        %v4554 = vadd.f32 %v549, %v4524
        %v4555 = vadd.f32 %v550, %v4527
        %v4556 = vadd.f32 %v551, %v4532
        %v4557 = vadd.f32 %v552, %v4535
        %v4558 = vadd.f32 %v553, %v4540
        %v4559 = vadd.f32 %v554, %v4543
        %v4560 = vadd.f32 %v555, %v4548
        %v4561 = vadd.f32 %v556, %v4551
        %s4562 = scalar_lea.vmem %s8, %s544
        %v4563 = vld [vmem:[%s4562] sm:$0x1]
        %s4564 = scalar_lea.vmem %s9, %s544
        %v4565 = vld [vmem:[%s4564] sm:$0x1]
        %v4566 = vsel %vm561, %v4554, 0.0
        %4567 = vadd.xlane.f32.xlu0 %v4566
        %v4568 = vpop.xlane.xlu0 %4567
        %v4569 = vsel %vm561, %v4555, 0.0
        %4570 = vadd.xlane.f32.xlu0 %v4569
        %v4571 = vpop.xlane.xlu0 %4570
        %v4572 = vsel %vm561, %v4556, 0.0
        %4573 = vadd.xlane.f32.xlu0 %v4572
        %v4574 = vpop.xlane.xlu0 %4573
        %v4575 = vsel %vm561, %v4557, 0.0
        %4576 = vadd.xlane.f32.xlu0 %v4575
        %v4577 = vpop.xlane.xlu0 %4576
        %v4578 = vsel %vm561, %v4558, 0.0
        %4579 = vadd.xlane.f32.xlu0 %v4578
        %v4580 = vpop.xlane.xlu0 %4579
        %v4581 = vsel %vm561, %v4559, 0.0
        %4582 = vadd.xlane.f32.xlu0 %v4581
        %v4583 = vpop.xlane.xlu0 %4582
        %v4584 = vsel %vm561, %v4560, 0.0
        %4585 = vadd.xlane.f32.xlu0 %v4584
        %v4586 = vpop.xlane.xlu0 %4585
        %v4587 = vsel %vm561, %v4561, 0.0
        %4588 = vadd.xlane.f32.xlu0 %v4587
        %v4589 = vpop.xlane.xlu0 %4588
        %v4590 = vmul.f32 %v4568, %v586
        %v4591 = vmul.f32 %v4571, %v586
        %v4592 = vmul.f32 %v4574, %v586
        %v4593 = vmul.f32 %v4577, %v586
        %v4594 = vmul.f32 %v4580, %v586
        %v4595 = vmul.f32 %v4583, %v586
        %v4596 = vmul.f32 %v4586, %v586
        %v4597 = vmul.f32 %v4589, %v586
        %v4598 = vsub.f32 %v4554, %v4590
        %v4599 = vsub.f32 %v4555, %v4591
        %v4600 = vsub.f32 %v4556, %v4592
        %v4601 = vsub.f32 %v4557, %v4593
        %v4602 = vsub.f32 %v4558, %v4594
        %v4603 = vsub.f32 %v4559, %v4595
        %v4604 = vsub.f32 %v4560, %v4596
        %v4605 = vsub.f32 %v4561, %v4597
        %v4606 = vmul.f32 %v4598, %v4598
        %v4607 = vmul.f32 %v4599, %v4599
        %v4608 = vmul.f32 %v4600, %v4600
        %v4609 = vmul.f32 %v4601, %v4601
        %v4610 = vmul.f32 %v4602, %v4602
        %v4611 = vmul.f32 %v4603, %v4603
        %v4612 = vmul.f32 %v4604, %v4604
        %v4613 = vmul.f32 %v4605, %v4605
        %v4614 = vsel %vm561, %v4606, 0.0
        %4615 = vadd.xlane.f32.xlu0 %v4614
        %v4616 = vpop.xlane.xlu0 %4615
        %v4617 = vsel %vm561, %v4607, 0.0
        %4618 = vadd.xlane.f32.xlu0 %v4617
        %v4619 = vpop.xlane.xlu0 %4618
        %v4620 = vsel %vm561, %v4608, 0.0
        %4621 = vadd.xlane.f32.xlu0 %v4620
        %v4622 = vpop.xlane.xlu0 %4621
        %v4623 = vsel %vm561, %v4609, 0.0
        %4624 = vadd.xlane.f32.xlu0 %v4623
        %v4625 = vpop.xlane.xlu0 %4624
        %v4626 = vsel %vm561, %v4610, 0.0
        %4627 = vadd.xlane.f32.xlu0 %v4626
        %v4628 = vpop.xlane.xlu0 %4627
        %v4629 = vsel %vm561, %v4611, 0.0
        %4630 = vadd.xlane.f32.xlu0 %v4629
        %v4631 = vpop.xlane.xlu0 %4630
        %v4632 = vsel %vm561, %v4612, 0.0
        %4633 = vadd.xlane.f32.xlu0 %v4632
        %v4634 = vpop.xlane.xlu0 %4633
        %v4635 = vsel %vm561, %v4613, 0.0
        %4636 = vadd.xlane.f32.xlu0 %v4635
        %v4637 = vpop.xlane.xlu0 %4636
        %v4638 = vmul.f32 %v4616, %v586
        %v4639 = vmul.f32 %v4619, %v586
        %v4640 = vmul.f32 %v4622, %v586
        %v4641 = vmul.f32 %v4625, %v586
        %v4642 = vmul.f32 %v4628, %v586
        %v4643 = vmul.f32 %v4631, %v586
        %v4644 = vmul.f32 %v4634, %v586
        %v4645 = vmul.f32 %v4637, %v586
        %v4646 = vadd.f32 %v4638, 1e-06
        %v4647 = vadd.f32 %v4639, 1e-06
        %v4648 = vadd.f32 %v4640, 1e-06
        %v4649 = vadd.f32 %v4641, 1e-06
        %v4650 = vadd.f32 %v4642, 1e-06
        %v4651 = vadd.f32 %v4643, 1e-06
        %v4652 = vadd.f32 %v4644, 1e-06
        %v4653 = vadd.f32 %v4645, 1e-06
        %v4654 = vrsqrt.pop %v4646
        %v4655 = vrsqrt.pop %v4647
        %v4656 = vrsqrt.pop %v4648
        %v4657 = vrsqrt.pop %v4649
        %v4658 = vrsqrt.pop %v4650
        %v4659 = vrsqrt.pop %v4651
        %v4660 = vrsqrt.pop %v4652
        %v4661 = vrsqrt.pop %v4653
        %v4662 = vmul.f32 %v4598, %v4654
        %v4663 = vmul.f32 %v4599, %v4655
        %v4664 = vmul.f32 %v4600, %v4656
        %v4665 = vmul.f32 %v4601, %v4657
        %v4666 = vmul.f32 %v4602, %v4658
        %v4667 = vmul.f32 %v4603, %v4659
        %v4668 = vmul.f32 %v4604, %v4660
        %v4669 = vmul.f32 %v4605, %v4661
        %v4671 = vlaneseq
        %v4672 = vshrl.u32 %v4671, 7
        %v4673 = vsub.s32 0, %v4672
        %v4674 = vrot.slane %v4563, %v4673
        %v4676 = vmul.f32 %v4662, %v4674
        %v4677 = vmul.f32 %v4663, %v4674
        %v4678 = vmul.f32 %v4664, %v4674
        %v4679 = vmul.f32 %v4665, %v4674
        %v4680 = vmul.f32 %v4666, %v4674
        %v4681 = vmul.f32 %v4667, %v4674
        %v4682 = vmul.f32 %v4668, %v4674
        %v4683 = vmul.f32 %v4669, %v4674
        %v4685 = vlaneseq
        %v4686 = vshrl.u32 %v4685, 7
        %v4687 = vsub.s32 0, %v4686
        %v4688 = vrot.slane %v4565, %v4687
        %v4690 = vadd.f32 %v4676, %v4688
        %v4691 = vadd.f32 %v4677, %v4688
        %v4692 = vadd.f32 %v4678, %v4688
        %v4693 = vadd.f32 %v4679, %v4688
        %v4694 = vadd.f32 %v4680, %v4688
        %v4695 = vadd.f32 %v4681, %v4688
        %v4696 = vadd.f32 %v4682, %v4688
        %v4697 = vadd.f32 %v4683, %v4688
        %v4698 = vpack.c.bf16 %v4691, %v4690
        %v4699 = vpack.c.bf16 %v4693, %v4692
        %v4700 = vpack.c.bf16 %v4695, %v4694
        %v4701 = vpack.c.bf16 %v4697, %v4696
        %s4702 = smul.addr %s699, 4
        %s4703 = scalar_lea.vmem %s10, %s4702
        %v4704 = vld [vmem:[%s4703] sm:$0xf]
        %v4705 = vld [vmem:[%s4703 + $0x4] sm:$0xf]
        %v4706 = vld [vmem:[%s4703 + $0x8] sm:$0xf]
        %v4707 = vld [vmem:[%s4703 + $0xc] sm:$0xf]
        %s4708 = scalar_lea.vmem %s11, %s544
        %v4709 = vld [vmem:[%s4708] sm:$0x1]
        %v4711 = vlaneseq
        %v4712 = vshrl.u32 %v4711, 7
        %v4713 = vsub.s32 0, %v4712
        %v4714 = vrot.slane %v4709, %v4713
        %v4720 = vunpack.c.l.b16 %v4704
        %v4721 = vunpack.c.l.b16 %v4705
        %v4722 = vunpack.c.l.b16 %v4706
        %v4723 = vunpack.c.l.b16 %v4707
        %v4724 = vpack.c.b16 %v4721, %v4720
        %v4725 = vpack.c.b16 %v4723, %v4722
        %v4729 = vsel %vm561, %v4698, 0
        %v4732 = vsel %vm561, %v4699, 0
        %v4735 = vsel %vm561, %v4700, 0
        %v4738 = vsel %vm561, %v4701, 0
        %4740 = vmatprep.subr.bf16.mxu0 0
        %4741 = vmatpush1.bf16.msra.mxu0 0
        %4742 = vmatprep.subr.bf16.mxu0 0
        %4743 = vmatpush1.bf16.msra.mxu0 0
        %4744 = vmatprep.subr.bf16.mxu0 0
        %4745 = vmatpush1.bf16.msra.mxu0 0
        %4746 = vmatprep.subr.bf16.mxu0 0
        %4747 = vmatpush1.bf16.msra.mxu0 0
        %4748 = vmatprep.subr.bf16.mxu0 0
        %4749 = vmatpush1.bf16.msra.mxu0 0
        %4750 = vmatprep.subr.bf16.mxu0 0
        %4751 = vmatpush1.bf16.msra.mxu0 0
        %4752 = vmatprep.subr.bf16.mxu0 0
        %4753 = vmatpush1.bf16.msra.mxu0 %v4725
        %4754 = vmatprep.subr.bf16.mxu0 0
        %4755 = vmatpush1.bf16.msra.mxu0 %v4724
        %4756 = vmatprep.subr.bf16.mxu0 0
        %4757 = vmatpush2.bf16.msra.mxu0 0
        %4758 = vmatprep.subr.bf16.mxu0 0
        %4759 = vmatpush2.bf16.msra.mxu0 0
        %4760 = vmatprep.subr.bf16.mxu0 0
        %4761 = vmatpush2.bf16.msra.mxu0 0
        %4762 = vmatprep.subr.bf16.mxu0 0
        %4763 = vmatpush2.bf16.msra.mxu0 0
        %4764 = vmatprep.subr.bf16.mxu0 0
        %4765 = vmatpush2.bf16.msra.mxu0 0
        %4766 = vmatprep.subr.bf16.mxu0 0
        %4767 = vmatpush2.bf16.msra.mxu0 0
        %4768 = vmatprep.subr.bf16.mxu0 0
        %4769 = vmatpush2.bf16.msra.mxu0 0
        %4770 = vmatprep.subr.bf16.mxu0 0
        %4771 = vmatpush2.bf16.msra.mxu0 0
        %4772 = vmatprep.mubr.bf16.mxu0 0
        %4773 = vmatmul.mubr.bf16.gmra.mxu0 %v4729
        %v4774 = vpop.f32.mrf.mxu0
        %v4775 = vadd.f32 %v4714, %v4774
        %v4776 = vpop.f32.mrf.mxu0
        %v4777 = vpop.f32.mrf.mxu0
        %v4778 = vadd.f32 %v4714, %v4777
        %v4779 = vpop.f32.mrf.mxu0
        %4780 = vmatprep.mubr.bf16.mxu0 0
        %4781 = vmatmul.mubr.bf16.gmra.mxu0 %v4732
        %v4782 = vpop.f32.mrf.mxu0
        %v4783 = vadd.f32 %v4714, %v4782
        %v4784 = vpop.f32.mrf.mxu0
        %v4785 = vpop.f32.mrf.mxu0
        %v4786 = vadd.f32 %v4714, %v4785
        %v4787 = vpop.f32.mrf.mxu0
        %4788 = vmatprep.mubr.bf16.mxu0 0
        %4789 = vmatmul.mubr.bf16.gmra.mxu0 %v4735
        %v4790 = vpop.f32.mrf.mxu0
        %v4791 = vadd.f32 %v4714, %v4790
        %v4792 = vpop.f32.mrf.mxu0
        %v4793 = vpop.f32.mrf.mxu0
        %v4794 = vadd.f32 %v4714, %v4793
        %v4795 = vpop.f32.mrf.mxu0
        %4796 = vmatprep.mubr.bf16.mxu0 0
        %4797 = vmatmul.mubr.bf16.gmra.mxu0 %v4738
        %v4798 = vpop.f32.mrf.mxu0
        %v4799 = vadd.f32 %v4714, %v4798
        %v4800 = vpop.f32.mrf.mxu0
        %v4801 = vpop.f32.mrf.mxu0
        %v4802 = vadd.f32 %v4714, %v4801
        %v4803 = vpop.f32.mrf.mxu0
        %4804 = vdwg.mxu0
        %v4805 = vmax.f32 %v4775, 0.0
        %v4806 = vmax.f32 %v4778, 0.0
        %v4807 = vmax.f32 %v4783, 0.0
        %v4808 = vmax.f32 %v4786, 0.0
        %v4809 = vmax.f32 %v4791, 0.0
        %v4810 = vmax.f32 %v4794, 0.0
        %v4811 = vmax.f32 %v4799, 0.0
        %v4812 = vmax.f32 %v4802, 0.0
        %v4813 = vpack.c.bf16 %v4806, %v4805
        %v4814 = vpack.c.bf16 %v4808, %v4807
        %v4815 = vpack.c.bf16 %v4810, %v4809
        %v4816 = vpack.c.bf16 %v4812, %v4811
        %s4817 = smul.u32 %s544, 8
        %s4818 = smul.addr %s4817, 4
        %s4819 = scalar_lea.vmem %s12, %s4818
        %v4820 = vld [vmem:[%s4819] sm:$0xf]
        %v4821 = vld [vmem:[%s4819 + $0x4] sm:$0xf]
        %v4822 = vld [vmem:[%s4819 + $0x8] sm:$0xf]
        %v4823 = vld [vmem:[%s4819 + $0xc] sm:$0xf]
        %v4824 = vld [vmem:[%s4819 + $0x10] sm:$0xf]
        %v4825 = vld [vmem:[%s4819 + $0x14] sm:$0xf]
        %v4826 = vld [vmem:[%s4819 + $0x18] sm:$0xf]
        %v4827 = vld [vmem:[%s4819 + $0x1c] sm:$0xf]
        %s4828 = scalar_lea.vmem %s13, %s544
        %v4829 = vld [vmem:[%s4828] sm:$0x1]
        %v4831 = vlaneseq
        %v4832 = vshrl.u32 %v4831, 7
        %v4833 = vsub.s32 0, %v4832
        %v4834 = vrot.slane %v4829, %v4833
        %v4844 = vunpack.c.l.b16 %v4820
        %v4845 = vunpack.c.l.b16 %v4821
        %v4846 = vunpack.c.l.b16 %v4822
        %v4847 = vunpack.c.l.b16 %v4823
        %v4848 = vunpack.c.l.b16 %v4824
        %v4849 = vunpack.c.l.b16 %v4825
        %v4850 = vunpack.c.l.b16 %v4826
        %v4851 = vunpack.c.l.b16 %v4827
        %v4852 = vpack.c.b16 %v4845, %v4844
        %v4853 = vpack.c.b16 %v4847, %v4846
        %v4854 = vpack.c.b16 %v4849, %v4848
        %v4855 = vpack.c.b16 %v4851, %v4850
        %vm4860 = vcmask 523264
        %v4862 = vsel %vm4860, %v4813, 0
        %v4865 = vsel %vm4860, %v4814, 0
        %v4868 = vsel %vm4860, %v4815, 0
        %v4871 = vsel %vm4860, %v4816, 0
        %4873 = vmatprep.subr.bf16.mxu0 0
        %4874 = vmatpush1.bf16.msra.mxu0 0
        %4875 = vmatprep.subr.bf16.mxu0 0
        %4876 = vmatpush1.bf16.msra.mxu0 0
        %4877 = vmatprep.subr.bf16.mxu0 0
        %4878 = vmatpush1.bf16.msra.mxu0 0
        %4879 = vmatprep.subr.bf16.mxu0 0
        %4880 = vmatpush1.bf16.msra.mxu0 0
        %4881 = vmatprep.subr.bf16.mxu0 0
        %4882 = vmatpush1.bf16.msra.mxu0 %v4855
        %4883 = vmatprep.subr.bf16.mxu0 0
        %4884 = vmatpush1.bf16.msra.mxu0 %v4854
        %4885 = vmatprep.subr.bf16.mxu0 0
        %4886 = vmatpush1.bf16.msra.mxu0 %v4853
        %4887 = vmatprep.subr.bf16.mxu0 0
        %4888 = vmatpush1.bf16.msra.mxu0 %v4852
        %4889 = vmatprep.subr.bf16.mxu0 0
        %4890 = vmatpush2.bf16.msra.mxu0 0
        %4891 = vmatprep.subr.bf16.mxu0 0
        %4892 = vmatpush2.bf16.msra.mxu0 0
        %4893 = vmatprep.subr.bf16.mxu0 0
        %4894 = vmatpush2.bf16.msra.mxu0 0
        %4895 = vmatprep.subr.bf16.mxu0 0
        %4896 = vmatpush2.bf16.msra.mxu0 0
        %4897 = vmatprep.subr.bf16.mxu0 0
        %4898 = vmatpush2.bf16.msra.mxu0 0
        %4899 = vmatprep.subr.bf16.mxu0 0
        %4900 = vmatpush2.bf16.msra.mxu0 0
        %4901 = vmatprep.subr.bf16.mxu0 0
        %4902 = vmatpush2.bf16.msra.mxu0 0
        %4903 = vmatprep.subr.bf16.mxu0 0
        %4904 = vmatpush2.bf16.msra.mxu0 0
        %4905 = vmatprep.mubr.bf16.mxu0 0
        %4906 = vmatmul.mubr.bf16.gmra.mxu0 %v4862
        %v4907 = vpop.f32.mrf.mxu0
        %v4908 = vadd.f32 %v4834, %v4907
        %v4909 = vpop.f32.mrf.mxu0
        %v4910 = vpop.f32.mrf.mxu0
        %v4911 = vadd.f32 %v4834, %v4910
        %v4912 = vpop.f32.mrf.mxu0
        %4913 = vmatprep.mubr.bf16.mxu0 0
        %4914 = vmatmul.mubr.bf16.gmra.mxu0 %v4865
        %v4915 = vpop.f32.mrf.mxu0
        %v4916 = vadd.f32 %v4834, %v4915
        %v4917 = vpop.f32.mrf.mxu0
        %v4918 = vpop.f32.mrf.mxu0
        %v4919 = vadd.f32 %v4834, %v4918
        %v4920 = vpop.f32.mrf.mxu0
        %4921 = vmatprep.mubr.bf16.mxu0 0
        %4922 = vmatmul.mubr.bf16.gmra.mxu0 %v4868
        %v4923 = vpop.f32.mrf.mxu0
        %v4924 = vadd.f32 %v4834, %v4923
        %v4925 = vpop.f32.mrf.mxu0
        %v4926 = vpop.f32.mrf.mxu0
        %v4927 = vadd.f32 %v4834, %v4926
        %v4928 = vpop.f32.mrf.mxu0
        %4929 = vmatprep.mubr.bf16.mxu0 0
        %4930 = vmatmul.mubr.bf16.gmra.mxu0 %v4871
        %v4931 = vpop.f32.mrf.mxu0
        %v4932 = vadd.f32 %v4834, %v4931
        %v4933 = vpop.f32.mrf.mxu0
        %v4934 = vpop.f32.mrf.mxu0
        %v4935 = vadd.f32 %v4834, %v4934
        %v4936 = vpop.f32.mrf.mxu0
        %4937 = vdwg.mxu0
        %v4938 = vadd.f32 %v4554, %v4908
        %v4939 = vadd.f32 %v4555, %v4911
        %v4940 = vadd.f32 %v4556, %v4916
        %v4941 = vadd.f32 %v4557, %v4919
        %v4942 = vadd.f32 %v4558, %v4924
        %v4943 = vadd.f32 %v4559, %v4927
        %v4944 = vadd.f32 %v4560, %v4932
        %v4945 = vadd.f32 %v4561, %v4935
      $region89: #{mask_generator_forward.8} parent=83 // loop_footer
        %s548 = sadd.s32 1, %s544
      $region90: #{mask_generator_forward.8} parent=83 // loop_footer_branch
        %543 = sbr.rel target = $region86
      $region91: #{mask_generator_forward.8} parent=83 // loop_exit
        _
      %v4946 = vld [vmem:[%s14] sm:$0x1]
      %v4947 = vld [vmem:[%s15] sm:$0x1]
      %vm4948 = vcmask 261120
      %v4949 = vsel %vm4948, %v549, 0.0
      %4950 = vadd.xlane.f32.xlu0 %v4949
      %v4951 = vpop.xlane.xlu0 %4950
      %v4952 = vsel %vm4948, %v550, 0.0
      %4953 = vadd.xlane.f32.xlu0 %v4952
      %v4954 = vpop.xlane.xlu0 %4953
      %v4955 = vsel %vm4948, %v551, 0.0
      %4956 = vadd.xlane.f32.xlu0 %v4955
      %v4957 = vpop.xlane.xlu0 %4956
      %v4958 = vsel %vm4948, %v552, 0.0
      %4959 = vadd.xlane.f32.xlu0 %v4958
      %v4960 = vpop.xlane.xlu0 %4959
      %v4961 = vsel %vm4948, %v553, 0.0
      %4962 = vadd.xlane.f32.xlu0 %v4961
      %v4963 = vpop.xlane.xlu0 %4962
      %v4964 = vsel %vm4948, %v554, 0.0
      %4965 = vadd.xlane.f32.xlu0 %v4964
      %v4966 = vpop.xlane.xlu0 %4965
      %v4967 = vsel %vm4948, %v555, 0.0
      %4968 = vadd.xlane.f32.xlu0 %v4967
      %v4969 = vpop.xlane.xlu0 %4968
      %v4970 = vsel %vm4948, %v556, 0.0
      %4971 = vadd.xlane.f32.xlu0 %v4970
      %v4972 = vpop.xlane.xlu0 %4971
      %v4973 = vrcp.pop 32.0
      %v4974 = vmul.f32 %v4951, %v4973
      %v4975 = vmul.f32 %v4954, %v4973
      %v4976 = vmul.f32 %v4957, %v4973
      %v4977 = vmul.f32 %v4960, %v4973
      %v4978 = vmul.f32 %v4963, %v4973
      %v4979 = vmul.f32 %v4966, %v4973
      %v4980 = vmul.f32 %v4969, %v4973
      %v4981 = vmul.f32 %v4972, %v4973
      %v4982 = vsub.f32 %v549, %v4974
      %v4983 = vsub.f32 %v550, %v4975
      %v4984 = vsub.f32 %v551, %v4976
      %v4985 = vsub.f32 %v552, %v4977
      %v4986 = vsub.f32 %v553, %v4978
      %v4987 = vsub.f32 %v554, %v4979
      %v4988 = vsub.f32 %v555, %v4980
      %v4989 = vsub.f32 %v556, %v4981
      %v4990 = vmul.f32 %v4982, %v4982
      %v4991 = vmul.f32 %v4983, %v4983
      %v4992 = vmul.f32 %v4984, %v4984
      %v4993 = vmul.f32 %v4985, %v4985
      %v4994 = vmul.f32 %v4986, %v4986
      %v4995 = vmul.f32 %v4987, %v4987
      %v4996 = vmul.f32 %v4988, %v4988
      %v4997 = vmul.f32 %v4989, %v4989
      %v4998 = vsel %vm4948, %v4990, 0.0
      %4999 = vadd.xlane.f32.xlu0 %v4998
      %v5000 = vpop.xlane.xlu0 %4999
      %v5001 = vsel %vm4948, %v4991, 0.0
      %5002 = vadd.xlane.f32.xlu0 %v5001
      %v5003 = vpop.xlane.xlu0 %5002
      %v5004 = vsel %vm4948, %v4992, 0.0
      %5005 = vadd.xlane.f32.xlu0 %v5004
      %v5006 = vpop.xlane.xlu0 %5005
      %v5007 = vsel %vm4948, %v4993, 0.0
      %5008 = vadd.xlane.f32.xlu0 %v5007
      %v5009 = vpop.xlane.xlu0 %5008
      %v5010 = vsel %vm4948, %v4994, 0.0
      %5011 = vadd.xlane.f32.xlu0 %v5010
      %v5012 = vpop.xlane.xlu0 %5011
      %v5013 = vsel %vm4948, %v4995, 0.0
      %5014 = vadd.xlane.f32.xlu0 %v5013
      %v5015 = vpop.xlane.xlu0 %5014
      %v5016 = vsel %vm4948, %v4996, 0.0
      %5017 = vadd.xlane.f32.xlu0 %v5016
      %v5018 = vpop.xlane.xlu0 %5017
      %v5019 = vsel %vm4948, %v4997, 0.0
      %5020 = vadd.xlane.f32.xlu0 %v5019
      %v5021 = vpop.xlane.xlu0 %5020
      %v5022 = vmul.f32 %v5000, %v4973
      %v5023 = vmul.f32 %v5003, %v4973
      %v5024 = vmul.f32 %v5006, %v4973
      %v5025 = vmul.f32 %v5009, %v4973
      %v5026 = vmul.f32 %v5012, %v4973
      %v5027 = vmul.f32 %v5015, %v4973
      %v5028 = vmul.f32 %v5018, %v4973
      %v5029 = vmul.f32 %v5021, %v4973
      %v5030 = vadd.f32 %v5022, 1e-06
      %v5031 = vadd.f32 %v5023, 1e-06
      %v5032 = vadd.f32 %v5024, 1e-06
      %v5033 = vadd.f32 %v5025, 1e-06
      %v5034 = vadd.f32 %v5026, 1e-06
      %v5035 = vadd.f32 %v5027, 1e-06
      %v5036 = vadd.f32 %v5028, 1e-06
      %v5037 = vadd.f32 %v5029, 1e-06
      %v5038 = vrsqrt.pop %v5030
      %v5039 = vrsqrt.pop %v5031
      %v5040 = vrsqrt.pop %v5032
      %v5041 = vrsqrt.pop %v5033
      %v5042 = vrsqrt.pop %v5034
      %v5043 = vrsqrt.pop %v5035
      %v5044 = vrsqrt.pop %v5036
      %v5045 = vrsqrt.pop %v5037
      %v5046 = vmul.f32 %v4982, %v5038
      %v5047 = vmul.f32 %v4983, %v5039
      %v5048 = vmul.f32 %v4984, %v5040
      %v5049 = vmul.f32 %v4985, %v5041
      %v5050 = vmul.f32 %v4986, %v5042
      %v5051 = vmul.f32 %v4987, %v5043
      %v5052 = vmul.f32 %v4988, %v5044
      %v5053 = vmul.f32 %v4989, %v5045
      %v5055 = vlaneseq
      %v5056 = vshrl.u32 %v5055, 7
      %v5057 = vsub.s32 0, %v5056
      %v5058 = vrot.slane %v4946, %v5057
      %v5060 = vmul.f32 %v5046, %v5058
      %v5061 = vmul.f32 %v5047, %v5058
      %v5062 = vmul.f32 %v5048, %v5058
      %v5063 = vmul.f32 %v5049, %v5058
      %v5064 = vmul.f32 %v5050, %v5058
      %v5065 = vmul.f32 %v5051, %v5058
      %v5066 = vmul.f32 %v5052, %v5058
      %v5067 = vmul.f32 %v5053, %v5058
      %v5069 = vlaneseq
      %v5070 = vshrl.u32 %v5069, 7
      %v5071 = vsub.s32 0, %v5070
      %v5072 = vrot.slane %v4947, %v5071
      %v5074 = vadd.f32 %v5060, %v5072
      %v5075 = vadd.f32 %v5061, %v5072
      %v5076 = vadd.f32 %v5062, %v5072
      %v5077 = vadd.f32 %v5063, %v5072
      %v5078 = vadd.f32 %v5064, %v5072
      %v5079 = vadd.f32 %v5065, %v5072
      %v5080 = vadd.f32 %v5066, %v5072
      %v5081 = vadd.f32 %v5067, %v5072
      %5082 = vst.msk [vmem:[%s523] sm:$0xff] %vm4948, %v5074
      %5083 = vst.msk [vmem:[%s523 + $0x8] sm:$0xff] %vm4948, %v5075
      %5084 = vst.msk [vmem:[%s523 + $0x10] sm:$0xff] %vm4948, %v5076
      %5085 = vst.msk [vmem:[%s523 + $0x18] sm:$0xff] %vm4948, %v5077
      %5086 = vst.msk [vmem:[%s523 + $0x20] sm:$0xff] %vm4948, %v5078
      %5087 = vst.msk [vmem:[%s523 + $0x28] sm:$0xff] %vm4948, %v5079
      %5088 = vst.msk [vmem:[%s523 + $0x30] sm:$0xff] %vm4948, %v5080
      %5089 = vst.msk [vmem:[%s523 + $0x38] sm:$0xff] %vm4948, %v5081
      %s5090 = smul.u32 8, %s27
      %p5091 = scmp.lt.s32.totalorder %s5090, 15
      %s5092 = scalar_select %p5091, %s5090, 15
      %s5093 = smul.addr %s5092, 8
      %s5094 = scalar_lea.vmem %s16, %s5093
      // Predicated region
      $region92: #{mask_generator_forward.8} parent=83 // pred_check
        %p5095 = pneg %p386
      $region93: #{mask_generator_forward.8} parent=83 // pred_check_branch
        %5097 = sbr.rel (%p5095) target = $region95
      $region94: #{mask_generator_forward.8} parent=83 // pred_region
        %s5098 = smul.u32 8, %s27
      $region95: #{mask_generator_forward.8} parent=83 // pred_fallthru
        _
    $region84: #{mask_generator_forward.8} parent=5 // pred_fallthru
      _
    %p5099 = scmp.le.s32.totalorder 2, %s22
    // Predicated region
    $region96: #{mask_generator_forward.8} parent=5 // pred_check
      %p5100 = pneg %p5099
    $region97: #{mask_generator_forward.8} parent=5 // pred_check_branch
      %5102 = sbr.rel (%p5100) target = $region99
    $region98: #{mask_generator_forward.8} parent=5 // pred_region
      %s5103 = ssub.s32 %s22, 2
      // Predicated region
      $region100: #{mask_generator_forward.8} parent=98 // pred_check
        %p5104 = pneg %p392
      $region101: #{mask_generator_forward.8} parent=98 // pred_check_branch
        %5106 = sbr.rel (%p5104) target = $region103
      $region102: #{mask_generator_forward.8} parent=98 // pred_region
        %s5107 = smul.u32 8, %s28
        %p5108 = scmp.lt.s32.totalorder %s5107, 15
        %s5109 = scalar_select %p5108, %s5107, 15
        %s5110 = smul.addr %s5109, 8
        %s5111 = scalar_lea.vmem %s16, %s5110
      $region103: #{mask_generator_forward.8} parent=98 // pred_fallthru
        _
    $region99: #{mask_generator_forward.8} parent=5 // pred_fallthru
      _
  $region6: #{mask_generator_forward.8} parent=0 // loop_footer
    %s26 = sadd.s32 1, %s22
  $region7: #{mask_generator_forward.8} parent=0 // loop_footer_branch
    %21 = sbr.rel target = $region3
  $region8: #{mask_generator_forward.8} parent=0 // loop_exit
    _

</llo_original>
